<compile_context>
chip_gen: v7x
topology: tpu7x:2x2x1
jax: 0.10.0
libtpu: 0.0.40
codegen_flags: <defaults>
</compile_context>

<pallas_src>
import functools

import jax
import jax.numpy as jnp
import numpy as np
from jax.experimental import pallas as pl
from jax.experimental.pallas import tpu as pltpu

# ----------------------------- configuration ------------------------------
B = 2           # batch
SEQ_LEN = 16    # L  (encoder sequence length)
ENC_IN = 4      # E  (configs.enc_in)
C_OUT = 4       # configs.c_out
D_MODEL = 32    # configs.d_model (GRU hidden per stream)
PRED_LEN = 8    # configs.pred_len
MOVING_AVG = 5  # configs.moving_avg (odd kernel)
PAD = (MOVING_AVG - 1) // 2


# ------------------------------ Pallas kernel ------------------------------
def stdrnn_kernel(
    enc_x_ref, x0_ref,
    # fused encoder GRU (block-diag over [seasonal | trend]), split per gate
    ew_i_r_ref, ew_i_z_ref, ew_i_n_ref,
    ew_h_r_ref, ew_h_z_ref, ew_h_n_ref,
    eb_r_ref, eb_z_ref, eb_i_n_ref, eb_h_n_ref,
    # fused decoder GRU (step 0 uses the decomposed input x0)
    dw_i_r_ref, dw_i_z_ref, dw_i_n_ref,
    dw_h_r_ref, dw_h_z_ref, dw_h_n_ref,
    db_r_ref, db_z_ref, db_i_n_ref, db_h_n_ref,
    # decoder with the output-linear feedback folded in (steps 1..P-1)
    wf_r_ref, wf_z_ref, wf_n_ref,
    bf_r_ref, bf_z_ref, bf_n_ref,
    # summed output head (seasonal + trend)
    w_out_ref, b_out_ref,
    out_ref,                                          # (pred_len, B, c_out)
    *, batch, enc_steps, hidden2, pred_len,
):
    f32 = jnp.float32

    def mm(a, w):
        return jnp.dot(a, w, preferred_element_type=f32)

    enc_x = enc_x_ref[...]                            # (enc_steps*B, 2E)
    x0 = x0_ref[...]                                  # (B, 2C)

    ew_h_r, ew_h_z, ew_h_n = ew_h_r_ref[...], ew_h_z_ref[...], ew_h_n_ref[...]
    dw_h_r, dw_h_z, dw_h_n = dw_h_r_ref[...], dw_h_z_ref[...], dw_h_n_ref[...]
    wf_r, wf_z, wf_n = wf_r_ref[...], wf_z_ref[...], wf_n_ref[...]
    w_out = w_out_ref[...]

    # hoist bias broadcasts out of the unrolled loops (JAX does not CSE them)
    eb_h_n = jnp.broadcast_to(eb_h_n_ref[...], (batch, hidden2))
    db_h_n = jnp.broadcast_to(db_h_n_ref[...], (batch, hidden2))
    bf_r = jnp.broadcast_to(bf_r_ref[...], (batch, hidden2))
    bf_z = jnp.broadcast_to(bf_z_ref[...], (batch, hidden2))
    bf_n = jnp.broadcast_to(bf_n_ref[...], (batch, hidden2))
    b_out = jnp.broadcast_to(b_out_ref[...], (batch, w_out.shape[1]))

    # -------- encoder: input projections hoisted off the recurrent chain ----
    gi_r_all = mm(enc_x, ew_i_r_ref[...]) + eb_r_ref[...]    # (enc_steps*B, 2H)
    gi_z_all = mm(enc_x, ew_i_z_ref[...]) + eb_z_ref[...]
    gi_n_all = mm(enc_x, ew_i_n_ref[...]) + eb_i_n_ref[...]

    h = jnp.zeros((batch, hidden2), f32)              # [h_seasonal | h_trend]
    for t in range(enc_steps):                        # static unroll
        lo = t * batch
        r = jax.nn.sigmoid(gi_r_all[lo:lo + batch, :] + mm(h, ew_h_r))
        z = jax.nn.sigmoid(gi_z_all[lo:lo + batch, :] + mm(h, ew_h_z))
        n = jnp.tanh(gi_n_all[lo:lo + batch, :] + r * (mm(h, ew_h_n) + eb_h_n))
        h = (1.0 - z) * n + z * h

    # -------- decoder step 0 (input = last decomposed step) -----------------
    gi_r = mm(x0, dw_i_r_ref[...]) + db_r_ref[...]
    gi_z = mm(x0, dw_i_z_ref[...]) + db_z_ref[...]
    gi_n = mm(x0, dw_i_n_ref[...]) + db_i_n_ref[...]
    r = jax.nn.sigmoid(gi_r + mm(h, dw_h_r))
    z = jax.nn.sigmoid(gi_z + mm(h, dw_h_z))
    n = jnp.tanh(gi_n + r * (mm(h, dw_h_n) + db_h_n))
    h = (1.0 - z) * n + z * h
    outs = [mm(h, w_out) + b_out]                     # out_seasonal + out_trend

    # -------- decoder steps 1..P-1: output linear folded into feedback ------
    for _ in range(1, pred_len):                      # static unroll
        r = jax.nn.sigmoid(mm(h, wf_r) + bf_r)
        z = jax.nn.sigmoid(mm(h, wf_z) + bf_z)
        n = jnp.tanh(mm(h, wf_n) + bf_n + r * (mm(h, dw_h_n) + db_h_n))
        h = (1.0 - z) * n + z * h
        outs.append(mm(h, w_out) + b_out)

    # single store of the whole (pred_len, B, c_out) block
    out_ref[...] = jnp.stack(outs, axis=0).astype(out_ref.dtype)


# ----------------------------- parameter init ------------------------------
def init_gru_params(key, input_size, hidden):
    s = 1.0 / float(np.sqrt(hidden))
    k1, k2, k3, k4 = jax.random.split(key, 4)
    wih = jax.random.uniform(k1, (input_size, 3 * hidden), jnp.float32, -s, s)
    whh = jax.random.uniform(k2, (hidden, 3 * hidden), jnp.float32, -s, s)
    bih = jax.random.uniform(k3, (1, 3 * hidden), jnp.float32, -s, s)
    bhh = jax.random.uniform(k4, (1, 3 * hidden), jnp.float32, -s, s)
    return wih, whh, bih, bhh


def init_linear_params(key, in_f, out_f):
    s = 1.0 / float(np.sqrt(in_f))
    k1, k2 = jax.random.split(key, 2)
    w = jax.random.uniform(k1, (in_f, out_f), jnp.float32, -s, s)
    b = jax.random.uniform(k2, (1, out_f), jnp.float32, -s, s)
    return w, b


def init_all_params(key):
    keys = jax.random.split(key, 6)
    enc_s = init_gru_params(keys[0], ENC_IN, D_MODEL)
    enc_t = init_gru_params(keys[1], ENC_IN, D_MODEL)
    dec_s = init_gru_params(keys[2], C_OUT, D_MODEL)
    dec_t = init_gru_params(keys[3], C_OUT, D_MODEL)
    lin_s = init_linear_params(keys[4], D_MODEL, C_OUT)
    lin_t = init_linear_params(keys[5], D_MODEL, C_OUT)
    return (*enc_s, *enc_t, *dec_s, *dec_t, *lin_s, *lin_t)


# ------------------- host-side weight fusion / folding ---------------------
def _block_diag2(a, b):
    top = jnp.concatenate([a, jnp.zeros((a.shape[0], b.shape[1]), a.dtype)], axis=1)
    bot = jnp.concatenate([jnp.zeros((b.shape[0], a.shape[1]), b.dtype), b], axis=1)
    return jnp.concatenate([top, bot], axis=0)


def fuse_params(params):
    """Pre-split per gate, fuse seasonal/trend block-diagonally, and fold the
    output linears into the decoder feedback projection (done once, host side)."""
    (es_wih, es_whh, es_bih, es_bhh,
     et_wih, et_whh, et_bih, et_bhh,
     ds_wih, ds_whh, ds_bih, ds_bhh,
     dt_wih, dt_whh, dt_bih, dt_bhh,
     ls_w, ls_b, lt_w, lt_b) = params
    H = D_MODEL

    def gates(w):                                    # PyTorch order [r | z | n]
        return w[:, :H], w[:, H:2 * H], w[:, 2 * H:]

    def fuse_gru(s_wih, s_whh, s_bih, s_bhh, t_wih, t_whh, t_bih, t_bhh):
        s_wi, t_wi = gates(s_wih), gates(t_wih)
        s_wh, t_wh = gates(s_whh), gates(t_whh)
        s_bi, t_bi = gates(s_bih), gates(t_bih)
        s_bh, t_bh = gates(s_bhh), gates(t_bhh)
        w_i = tuple(_block_diag2(s_wi[g], t_wi[g]) for g in range(3))
        w_h = tuple(_block_diag2(s_wh[g], t_wh[g]) for g in range(3))
        b_r = jnp.concatenate([s_bi[0] + s_bh[0], t_bi[0] + t_bh[0]], axis=1)
        b_z = jnp.concatenate([s_bi[1] + s_bh[1], t_bi[1] + t_bh[1]], axis=1)
        b_i_n = jnp.concatenate([s_bi[2], t_bi[2]], axis=1)
        b_h_n = jnp.concatenate([s_bh[2], t_bh[2]], axis=1)
        return w_i, w_h, (b_r, b_z, b_i_n, b_h_n)

    ew_i, ew_h, eb = fuse_gru(es_wih, es_whh, es_bih, es_bhh,
                              et_wih, et_whh, et_bih, et_bhh)
    dw_i, dw_h, db = fuse_gru(ds_wih, ds_whh, ds_bih, ds_bhh,
                              dt_wih, dt_whh, dt_bih, dt_bhh)

    # summed output head:   out = h_fused @ [ls_w; lt_w] + (ls_b + lt_b)
    w_out = jnp.concatenate([ls_w, lt_w], axis=0)          # (2H, C)
    b_out = ls_b + lt_b                                    # (1, C)
    # per-stream feedback head: x_{t+1} = h_fused @ Lw + Lb
    Lw = _block_diag2(ls_w, lt_w)                          # (2H, 2C)
    Lb = jnp.concatenate([ls_b, lt_b], axis=1)             # (1, 2C)

    # fold outlinear into the next decoder step's input projection
    wf_r = Lw @ dw_i[0] + dw_h[0]
    wf_z = Lw @ dw_i[1] + dw_h[1]
    wf_n = Lw @ dw_i[2]
    bf_r = Lb @ dw_i[0] + db[0]
    bf_z = Lb @ dw_i[1] + db[1]
    bf_n = Lb @ dw_i[2] + db[2]

    return (ew_i[0], ew_i[1], ew_i[2],
            ew_h[0], ew_h[1], ew_h[2],
            eb[0], eb[1], eb[2], eb[3],
            dw_i[0], dw_i[1], dw_i[2],
            dw_h[0], dw_h[1], dw_h[2],
            db[0], db[1], db[2], db[3],
            wf_r, wf_z, wf_n, bf_r, bf_z, bf_n,
            w_out, b_out)


# --------------------------------- wrapper ---------------------------------
@jax.jit
def stdrnn_forward(x_enc, x_mark_enc, x_dec, x_mark_dec, fused_params):
    # x_mark_enc / x_dec / x_mark_dec are unused in the eval path (kept for
    # signature fidelity with the PyTorch module).
    del x_mark_enc, x_dec, x_mark_dec
    b, l, e = x_enc.shape
    x_enc = x_enc.astype(jnp.float32)

    # --- series decomposition (replicate-pad moving average), vectorized ----
    front = jnp.repeat(x_enc[:, :1, :], PAD, axis=1)
    end = jnp.repeat(x_enc[:, -1:, :], PAD, axis=1)
    x_pad = jnp.concatenate([front, x_enc, end], axis=1)           # (B, L+2p, E)
    csum = jnp.concatenate(
        [jnp.zeros((b, 1, e), jnp.float32), jnp.cumsum(x_pad, axis=1)], axis=1)
    trend = (csum[:, MOVING_AVG:MOVING_AVG + l, :] - csum[:, :l, :]) / MOVING_AVG
    seasonal = x_enc - trend

    # encoder inputs for steps 0..L-2, time-major, streams fused on the lanes
    enc_x = jnp.concatenate([seasonal[:, :l - 1, :], trend[:, :l - 1, :]], axis=-1)
    enc_x = jnp.transpose(enc_x, (1, 0, 2)).reshape((l - 1) * b, 2 * e)

    # decoder initial input: last decomposed step, last c_out features
    x0 = jnp.concatenate([seasonal[:, -1, e - C_OUT:],
                          trend[:, -1, e - C_OUT:]], axis=-1)      # (B, 2C)

    kernel = functools.partial(
        stdrnn_kernel,
        batch=b, enc_steps=l - 1, hidden2=2 * D_MODEL, pred_len=PRED_LEN)
    n_in = 2 + len(fused_params)
    out = pl.pallas_call(
        kernel,
        out_shape=jax.ShapeDtypeStruct((PRED_LEN, b, C_OUT), jnp.float32),
        in_specs=[pl.BlockSpec(memory_space=pltpu.MemorySpace.VMEM)] * n_in,
        out_specs=pl.BlockSpec(memory_space=pltpu.MemorySpace.VMEM),
    )(enc_x, x0, *fused_params)
    return jnp.transpose(out, (1, 0, 2))              # (B, pred_len, c_out)


# --------------------------- pure-JAX reference -----------------------------
def ref_forward(x_enc, params):
    (es_wih, es_whh, es_bih, es_bhh,
     et_wih, et_whh, et_bih, et_bhh,
     ds_wih, ds_whh, ds_bih, ds_bhh,
     dt_wih, dt_whh, dt_bih, dt_bhh,
     ls_w, ls_b, lt_w, lt_b) = params
    H = D_MODEL

    def gru_step(x, h, wih, whh, bih, bhh):
        gi = x @ wih + bih
        gh = h @ whh + bhh
        r = jax.nn.sigmoid(gi[:, :H] + gh[:, :H])
        z = jax.nn.sigmoid(gi[:, H:2 * H] + gh[:, H:2 * H])
        n = jnp.tanh(gi[:, 2 * H:] + r * gh[:, 2 * H:])
        return (1.0 - z) * n + z * h

    bsz, l, e = x_enc.shape
    front = jnp.repeat(x_enc[:, :1, :], PAD, axis=1)
    end = jnp.repeat(x_enc[:, -1:, :], PAD, axis=1)
    x_pad = jnp.concatenate([front, x_enc, end], axis=1)
    trend = jnp.stack(
        [jnp.mean(x_pad[:, t:t + MOVING_AVG, :], axis=1) for t in range(l)], axis=1)
    seasonal = x_enc - trend

    h_es = jnp.zeros((bsz, H), jnp.float32)
    h_et = jnp.zeros((bsz, H), jnp.float32)
    for t in range(l - 1):
        h_es = gru_step(seasonal[:, t, :], h_es, es_wih, es_whh, es_bih, es_bhh)
        h_et = gru_step(trend[:, t, :], h_et, et_wih, et_whh, et_bih, et_bhh)

    x_s = seasonal[:, -1, ENC_IN - C_OUT:]
    x_t = trend[:, -1, ENC_IN - C_OUT:]
    h_ds, h_dt = h_es, h_et
    outs = []
    for _ in range(PRED_LEN):
        h_ds = gru_step(x_s, h_ds, ds_wih, ds_whh, ds_bih, ds_bhh)
        out_s = h_ds @ ls_w + ls_b
        h_dt = gru_step(x_t, h_dt, dt_wih, dt_whh, dt_bih, dt_bhh)
        out_t = h_dt @ lt_w + lt_b
        outs.append(out_s + out_t)
        x_s, x_t = out_s, out_t
    return jnp.stack(outs, axis=1)


# ----------------------------------- main ----------------------------------
if __name__ == "__main__":
    key = jax.random.PRNGKey(0)
    k_param, k_enc, k_dec = jax.random.split(key, 3)

    params = init_all_params(k_param)
    fused = fuse_params(params)          # one-time host-side weight prep

    x_enc = jax.random.normal(k_enc, (B, SEQ_LEN, ENC_IN), jnp.float32)
    x_mark_enc = jnp.zeros((B, SEQ_LEN, 4), jnp.float32)
    x_dec = jax.random.normal(k_dec, (B, PRED_LEN, C_OUT), jnp.float32)
    x_mark_dec = jnp.zeros((B, PRED_LEN, 4), jnp.float32)

    out = stdrnn_forward(x_enc, x_mark_enc, x_dec, x_mark_dec, fused)
    out = jax.block_until_ready(out)

    ref = ref_forward(x_enc, params)
    np.testing.assert_allclose(np.asarray(out), np.asarray(ref),
                               rtol=1e-3, atol=1e-4)
    assert out.shape == (B, PRED_LEN, C_OUT)
    print("KERNEL_OK")
</pallas_src>

<mosaic_0001>
module attributes {stable_mosaic.version = 11 : i64} {
  func.func @stdrnn_kernel(%arg0: memref<30x8xf32, #tpu.memory_space<vmem>>, %arg1: memref<2x8xf32, #tpu.memory_space<vmem>>, %arg2: memref<8x64xf32, #tpu.memory_space<vmem>>, %arg3: memref<8x64xf32, #tpu.memory_space<vmem>>, %arg4: memref<8x64xf32, #tpu.memory_space<vmem>>, %arg5: memref<64x64xf32, #tpu.memory_space<vmem>>, %arg6: memref<64x64xf32, #tpu.memory_space<vmem>>, %arg7: memref<64x64xf32, #tpu.memory_space<vmem>>, %arg8: memref<1x64xf32, #tpu.memory_space<vmem>>, %arg9: memref<1x64xf32, #tpu.memory_space<vmem>>, %arg10: memref<1x64xf32, #tpu.memory_space<vmem>>, %arg11: memref<1x64xf32, #tpu.memory_space<vmem>>, %arg12: memref<8x64xf32, #tpu.memory_space<vmem>>, %arg13: memref<8x64xf32, #tpu.memory_space<vmem>>, %arg14: memref<8x64xf32, #tpu.memory_space<vmem>>, %arg15: memref<64x64xf32, #tpu.memory_space<vmem>>, %arg16: memref<64x64xf32, #tpu.memory_space<vmem>>, %arg17: memref<64x64xf32, #tpu.memory_space<vmem>>, %arg18: memref<1x64xf32, #tpu.memory_space<vmem>>, %arg19: memref<1x64xf32, #tpu.memory_space<vmem>>, %arg20: memref<1x64xf32, #tpu.memory_space<vmem>>, %arg21: memref<1x64xf32, #tpu.memory_space<vmem>>, %arg22: memref<64x64xf32, #tpu.memory_space<vmem>>, %arg23: memref<64x64xf32, #tpu.memory_space<vmem>>, %arg24: memref<64x64xf32, #tpu.memory_space<vmem>>, %arg25: memref<1x64xf32, #tpu.memory_space<vmem>>, %arg26: memref<1x64xf32, #tpu.memory_space<vmem>>, %arg27: memref<1x64xf32, #tpu.memory_space<vmem>>, %arg28: memref<64x4xf32, #tpu.memory_space<vmem>>, %arg29: memref<1x4xf32, #tpu.memory_space<vmem>>, %arg30: memref<8x2x4xf32, #tpu.memory_space<vmem>>) attributes {dimension_semantics = [], scalar_prefetch = 0 : i64, scratch_operands = 0 : i64, tpu.core_type = #tpu.core_type<tc>} {
    %c0 = arith.constant 0 : index
    %c0_0 = arith.constant 0 : index
    %0 = vector.load %arg0[%c0, %c0_0] : memref<30x8xf32, #tpu.memory_space<vmem>>, vector<30x8xf32>
    %c0_1 = arith.constant 0 : index
    %c0_2 = arith.constant 0 : index
    %1 = vector.load %arg1[%c0_1, %c0_2] : memref<2x8xf32, #tpu.memory_space<vmem>>, vector<2x8xf32>
    %c0_3 = arith.constant 0 : index
    %c0_4 = arith.constant 0 : index
    %2 = vector.load %arg5[%c0_3, %c0_4] : memref<64x64xf32, #tpu.memory_space<vmem>>, vector<64x64xf32>
    %c0_5 = arith.constant 0 : index
    %c0_6 = arith.constant 0 : index
    %3 = vector.load %arg6[%c0_5, %c0_6] : memref<64x64xf32, #tpu.memory_space<vmem>>, vector<64x64xf32>
    %c0_7 = arith.constant 0 : index
    %c0_8 = arith.constant 0 : index
    %4 = vector.load %arg7[%c0_7, %c0_8] : memref<64x64xf32, #tpu.memory_space<vmem>>, vector<64x64xf32>
    %c0_9 = arith.constant 0 : index
    %c0_10 = arith.constant 0 : index
    %5 = vector.load %arg15[%c0_9, %c0_10] : memref<64x64xf32, #tpu.memory_space<vmem>>, vector<64x64xf32>
    %c0_11 = arith.constant 0 : index
    %c0_12 = arith.constant 0 : index
    %6 = vector.load %arg16[%c0_11, %c0_12] : memref<64x64xf32, #tpu.memory_space<vmem>>, vector<64x64xf32>
    %c0_13 = arith.constant 0 : index
    %c0_14 = arith.constant 0 : index
    %7 = vector.load %arg17[%c0_13, %c0_14] : memref<64x64xf32, #tpu.memory_space<vmem>>, vector<64x64xf32>
    %c0_15 = arith.constant 0 : index
    %c0_16 = arith.constant 0 : index
    %8 = vector.load %arg22[%c0_15, %c0_16] : memref<64x64xf32, #tpu.memory_space<vmem>>, vector<64x64xf32>
    %c0_17 = arith.constant 0 : index
    %c0_18 = arith.constant 0 : index
    %9 = vector.load %arg23[%c0_17, %c0_18] : memref<64x64xf32, #tpu.memory_space<vmem>>, vector<64x64xf32>
    %c0_19 = arith.constant 0 : index
    %c0_20 = arith.constant 0 : index
    %10 = vector.load %arg24[%c0_19, %c0_20] : memref<64x64xf32, #tpu.memory_space<vmem>>, vector<64x64xf32>
    %c0_21 = arith.constant 0 : index
    %c0_22 = arith.constant 0 : index
    %11 = vector.load %arg28[%c0_21, %c0_22] : memref<64x4xf32, #tpu.memory_space<vmem>>, vector<64x4xf32>
    %c0_23 = arith.constant 0 : index
    %c0_24 = arith.constant 0 : index
    %12 = vector.load %arg11[%c0_23, %c0_24] : memref<1x64xf32, #tpu.memory_space<vmem>>, vector<1x64xf32>
    %13 = vector.shape_cast %12 : vector<1x64xf32> to vector<1x64xf32>
    %14 = vector.broadcast %13 : vector<1x64xf32> to vector<2x64xf32>
    %c0_25 = arith.constant 0 : index
    %c0_26 = arith.constant 0 : index
    %15 = vector.load %arg21[%c0_25, %c0_26] : memref<1x64xf32, #tpu.memory_space<vmem>>, vector<1x64xf32>
    %16 = vector.shape_cast %15 : vector<1x64xf32> to vector<1x64xf32>
    %17 = vector.broadcast %16 : vector<1x64xf32> to vector<2x64xf32>
    %c0_27 = arith.constant 0 : index
    %c0_28 = arith.constant 0 : index
    %18 = vector.load %arg25[%c0_27, %c0_28] : memref<1x64xf32, #tpu.memory_space<vmem>>, vector<1x64xf32>
    %19 = vector.shape_cast %18 : vector<1x64xf32> to vector<1x64xf32>
    %20 = vector.broadcast %19 : vector<1x64xf32> to vector<2x64xf32>
    %c0_29 = arith.constant 0 : index
    %c0_30 = arith.constant 0 : index
    %21 = vector.load %arg26[%c0_29, %c0_30] : memref<1x64xf32, #tpu.memory_space<vmem>>, vector<1x64xf32>
    %22 = vector.shape_cast %21 : vector<1x64xf32> to vector<1x64xf32>
    %23 = vector.broadcast %22 : vector<1x64xf32> to vector<2x64xf32>
    %c0_31 = arith.constant 0 : index
    %c0_32 = arith.constant 0 : index
    %24 = vector.load %arg27[%c0_31, %c0_32] : memref<1x64xf32, #tpu.memory_space<vmem>>, vector<1x64xf32>
    %25 = vector.shape_cast %24 : vector<1x64xf32> to vector<1x64xf32>
    %26 = vector.broadcast %25 : vector<1x64xf32> to vector<2x64xf32>
    %c0_33 = arith.constant 0 : index
    %c0_34 = arith.constant 0 : index
    %27 = vector.load %arg29[%c0_33, %c0_34] : memref<1x4xf32, #tpu.memory_space<vmem>>, vector<1x4xf32>
    %28 = vector.shape_cast %27 : vector<1x4xf32> to vector<1x4xf32>
    %29 = vector.broadcast %28 : vector<1x4xf32> to vector<2x4xf32>
    %c0_35 = arith.constant 0 : index
    %c0_36 = arith.constant 0 : index
    %30 = vector.load %arg2[%c0_35, %c0_36] : memref<8x64xf32, #tpu.memory_space<vmem>>, vector<8x64xf32>
    %cst = arith.constant dense<0.000000e+00> : vector<30x64xf32>
    %31 = tpu.matmul %0, %30, %cst {dimension_numbers = #tpu.dot_dimension_numbers<[1], [0], [0], [1], [0, 0, 1, 1], [], []>} : vector<30x8xf32>, vector<8x64xf32>, vector<30x64xf32> -> vector<30x64xf32>
    %c0_37 = arith.constant 0 : index
    %c0_38 = arith.constant 0 : index
    %32 = vector.load %arg8[%c0_37, %c0_38] : memref<1x64xf32, #tpu.memory_space<vmem>>, vector<1x64xf32>
    %33 = vector.broadcast %32 : vector<1x64xf32> to vector<30x64xf32>
    %34 = arith.addf %31, %33 : vector<30x64xf32>
    %c0_39 = arith.constant 0 : index
    %c0_40 = arith.constant 0 : index
    %35 = vector.load %arg3[%c0_39, %c0_40] : memref<8x64xf32, #tpu.memory_space<vmem>>, vector<8x64xf32>
    %cst_41 = arith.constant dense<0.000000e+00> : vector<30x64xf32>
    %36 = tpu.matmul %0, %35, %cst_41 {dimension_numbers = #tpu.dot_dimension_numbers<[1], [0], [0], [1], [0, 0, 1, 1], [], []>} : vector<30x8xf32>, vector<8x64xf32>, vector<30x64xf32> -> vector<30x64xf32>
    %c0_42 = arith.constant 0 : index
    %c0_43 = arith.constant 0 : index
    %37 = vector.load %arg9[%c0_42, %c0_43] : memref<1x64xf32, #tpu.memory_space<vmem>>, vector<1x64xf32>
    %38 = vector.broadcast %37 : vector<1x64xf32> to vector<30x64xf32>
    %39 = arith.addf %36, %38 : vector<30x64xf32>
    %c0_44 = arith.constant 0 : index
    %c0_45 = arith.constant 0 : index
    %40 = vector.load %arg4[%c0_44, %c0_45] : memref<8x64xf32, #tpu.memory_space<vmem>>, vector<8x64xf32>
    %cst_46 = arith.constant dense<0.000000e+00> : vector<30x64xf32>
    %41 = tpu.matmul %0, %40, %cst_46 {dimension_numbers = #tpu.dot_dimension_numbers<[1], [0], [0], [1], [0, 0, 1, 1], [], []>} : vector<30x8xf32>, vector<8x64xf32>, vector<30x64xf32> -> vector<30x64xf32>
    %c0_47 = arith.constant 0 : index
    %c0_48 = arith.constant 0 : index
    %42 = vector.load %arg10[%c0_47, %c0_48] : memref<1x64xf32, #tpu.memory_space<vmem>>, vector<1x64xf32>
    %43 = vector.broadcast %42 : vector<1x64xf32> to vector<30x64xf32>
    %44 = arith.addf %41, %43 : vector<30x64xf32>
    %cst_49 = arith.constant 0.000000e+00 : f32
    %45 = vector.broadcast %cst_49 : f32 to vector<2x64xf32>
    %46 = vector.extract_strided_slice %34 {offsets = [0, 0], sizes = [2, 64], strides = [1, 1]} : vector<30x64xf32> to vector<2x64xf32>
    %cst_50 = arith.constant dense<0.000000e+00> : vector<2x64xf32>
    %47 = tpu.matmul %45, %2, %cst_50 {dimension_numbers = #tpu.dot_dimension_numbers<[1], [0], [0], [1], [0, 0, 1, 1], [], []>} : vector<2x64xf32>, vector<64x64xf32>, vector<2x64xf32> -> vector<2x64xf32>
    %48 = arith.addf %46, %47 : vector<2x64xf32>
    %49 = arith.negf %48 : vector<2x64xf32>
    %50 = math.exp %49 : vector<2x64xf32>
    %cst_51 = arith.constant 1.000000e+00 : f32
    %51 = vector.broadcast %cst_51 : f32 to vector<2x64xf32>
    %52 = arith.addf %51, %50 : vector<2x64xf32>
    %53 = arith.divf %51, %52 : vector<2x64xf32>
    %54 = vector.extract_strided_slice %39 {offsets = [0, 0], sizes = [2, 64], strides = [1, 1]} : vector<30x64xf32> to vector<2x64xf32>
    %cst_52 = arith.constant dense<0.000000e+00> : vector<2x64xf32>
    %55 = tpu.matmul %45, %3, %cst_52 {dimension_numbers = #tpu.dot_dimension_numbers<[1], [0], [0], [1], [0, 0, 1, 1], [], []>} : vector<2x64xf32>, vector<64x64xf32>, vector<2x64xf32> -> vector<2x64xf32>
    %56 = arith.addf %54, %55 : vector<2x64xf32>
    %57 = arith.negf %56 : vector<2x64xf32>
    %58 = math.exp %57 : vector<2x64xf32>
    %cst_53 = arith.constant 1.000000e+00 : f32
    %59 = vector.broadcast %cst_53 : f32 to vector<2x64xf32>
    %60 = arith.addf %59, %58 : vector<2x64xf32>
    %61 = arith.divf %59, %60 : vector<2x64xf32>
    %62 = vector.extract_strided_slice %44 {offsets = [0, 0], sizes = [2, 64], strides = [1, 1]} : vector<30x64xf32> to vector<2x64xf32>
    %cst_54 = arith.constant dense<0.000000e+00> : vector<2x64xf32>
    %63 = tpu.matmul %45, %4, %cst_54 {dimension_numbers = #tpu.dot_dimension_numbers<[1], [0], [0], [1], [0, 0, 1, 1], [], []>} : vector<2x64xf32>, vector<64x64xf32>, vector<2x64xf32> -> vector<2x64xf32>
    %64 = arith.addf %63, %14 : vector<2x64xf32>
    %65 = arith.mulf %53, %64 : vector<2x64xf32>
    %66 = arith.addf %62, %65 : vector<2x64xf32>
    %67 = math.tanh %66 : vector<2x64xf32>
    %cst_55 = arith.constant 1.000000e+00 : f32
    %68 = vector.broadcast %cst_55 : f32 to vector<2x64xf32>
    %69 = arith.subf %68, %61 : vector<2x64xf32>
    %70 = arith.mulf %69, %67 : vector<2x64xf32>
    %71 = arith.mulf %61, %45 : vector<2x64xf32>
    %72 = arith.addf %70, %71 : vector<2x64xf32>
    %73 = vector.extract_strided_slice %34 {offsets = [2, 0], sizes = [2, 64], strides = [1, 1]} : vector<30x64xf32> to vector<2x64xf32>
    %cst_56 = arith.constant dense<0.000000e+00> : vector<2x64xf32>
    %74 = tpu.matmul %72, %2, %cst_56 {dimension_numbers = #tpu.dot_dimension_numbers<[1], [0], [0], [1], [0, 0, 1, 1], [], []>} : vector<2x64xf32>, vector<64x64xf32>, vector<2x64xf32> -> vector<2x64xf32>
    %75 = arith.addf %73, %74 : vector<2x64xf32>
    %76 = arith.negf %75 : vector<2x64xf32>
    %77 = math.exp %76 : vector<2x64xf32>
    %cst_57 = arith.constant 1.000000e+00 : f32
    %78 = vector.broadcast %cst_57 : f32 to vector<2x64xf32>
    %79 = arith.addf %78, %77 : vector<2x64xf32>
    %80 = arith.divf %78, %79 : vector<2x64xf32>
    %81 = vector.extract_strided_slice %39 {offsets = [2, 0], sizes = [2, 64], strides = [1, 1]} : vector<30x64xf32> to vector<2x64xf32>
    %cst_58 = arith.constant dense<0.000000e+00> : vector<2x64xf32>
    %82 = tpu.matmul %72, %3, %cst_58 {dimension_numbers = #tpu.dot_dimension_numbers<[1], [0], [0], [1], [0, 0, 1, 1], [], []>} : vector<2x64xf32>, vector<64x64xf32>, vector<2x64xf32> -> vector<2x64xf32>
    %83 = arith.addf %81, %82 : vector<2x64xf32>
    %84 = arith.negf %83 : vector<2x64xf32>
    %85 = math.exp %84 : vector<2x64xf32>
    %cst_59 = arith.constant 1.000000e+00 : f32
    %86 = vector.broadcast %cst_59 : f32 to vector<2x64xf32>
    %87 = arith.addf %86, %85 : vector<2x64xf32>
    %88 = arith.divf %86, %87 : vector<2x64xf32>
    %89 = vector.extract_strided_slice %44 {offsets = [2, 0], sizes = [2, 64], strides = [1, 1]} : vector<30x64xf32> to vector<2x64xf32>
    %cst_60 = arith.constant dense<0.000000e+00> : vector<2x64xf32>
    %90 = tpu.matmul %72, %4, %cst_60 {dimension_numbers = #tpu.dot_dimension_numbers<[1], [0], [0], [1], [0, 0, 1, 1], [], []>} : vector<2x64xf32>, vector<64x64xf32>, vector<2x64xf32> -> vector<2x64xf32>
    %91 = arith.addf %90, %14 : vector<2x64xf32>
    %92 = arith.mulf %80, %91 : vector<2x64xf32>
    %93 = arith.addf %89, %92 : vector<2x64xf32>
    %94 = math.tanh %93 : vector<2x64xf32>
    %cst_61 = arith.constant 1.000000e+00 : f32
    %95 = vector.broadcast %cst_61 : f32 to vector<2x64xf32>
    %96 = arith.subf %95, %88 : vector<2x64xf32>
    %97 = arith.mulf %96, %94 : vector<2x64xf32>
    %98 = arith.mulf %88, %72 : vector<2x64xf32>
    %99 = arith.addf %97, %98 : vector<2x64xf32>
    %100 = vector.extract_strided_slice %34 {offsets = [4, 0], sizes = [2, 64], strides = [1, 1]} : vector<30x64xf32> to vector<2x64xf32>
    %cst_62 = arith.constant dense<0.000000e+00> : vector<2x64xf32>
    %101 = tpu.matmul %99, %2, %cst_62 {dimension_numbers = #tpu.dot_dimension_numbers<[1], [0], [0], [1], [0, 0, 1, 1], [], []>} : vector<2x64xf32>, vector<64x64xf32>, vector<2x64xf32> -> vector<2x64xf32>
    %102 = arith.addf %100, %101 : vector<2x64xf32>
    %103 = arith.negf %102 : vector<2x64xf32>
    %104 = math.exp %103 : vector<2x64xf32>
    %cst_63 = arith.constant 1.000000e+00 : f32
    %105 = vector.broadcast %cst_63 : f32 to vector<2x64xf32>
    %106 = arith.addf %105, %104 : vector<2x64xf32>
    %107 = arith.divf %105, %106 : vector<2x64xf32>
    %108 = vector.extract_strided_slice %39 {offsets = [4, 0], sizes = [2, 64], strides = [1, 1]} : vector<30x64xf32> to vector<2x64xf32>
    %cst_64 = arith.constant dense<0.000000e+00> : vector<2x64xf32>
    %109 = tpu.matmul %99, %3, %cst_64 {dimension_numbers = #tpu.dot_dimension_numbers<[1], [0], [0], [1], [0, 0, 1, 1], [], []>} : vector<2x64xf32>, vector<64x64xf32>, vector<2x64xf32> -> vector<2x64xf32>
    %110 = arith.addf %108, %109 : vector<2x64xf32>
    %111 = arith.negf %110 : vector<2x64xf32>
    %112 = math.exp %111 : vector<2x64xf32>
    %cst_65 = arith.constant 1.000000e+00 : f32
    %113 = vector.broadcast %cst_65 : f32 to vector<2x64xf32>
    %114 = arith.addf %113, %112 : vector<2x64xf32>
    %115 = arith.divf %113, %114 : vector<2x64xf32>
    %116 = vector.extract_strided_slice %44 {offsets = [4, 0], sizes = [2, 64], strides = [1, 1]} : vector<30x64xf32> to vector<2x64xf32>
    %cst_66 = arith.constant dense<0.000000e+00> : vector<2x64xf32>
    %117 = tpu.matmul %99, %4, %cst_66 {dimension_numbers = #tpu.dot_dimension_numbers<[1], [0], [0], [1], [0, 0, 1, 1], [], []>} : vector<2x64xf32>, vector<64x64xf32>, vector<2x64xf32> -> vector<2x64xf32>
    %118 = arith.addf %117, %14 : vector<2x64xf32>
    %119 = arith.mulf %107, %118 : vector<2x64xf32>
    %120 = arith.addf %116, %119 : vector<2x64xf32>
    %121 = math.tanh %120 : vector<2x64xf32>
    %cst_67 = arith.constant 1.000000e+00 : f32
    %122 = vector.broadcast %cst_67 : f32 to vector<2x64xf32>
    %123 = arith.subf %122, %115 : vector<2x64xf32>
    %124 = arith.mulf %123, %121 : vector<2x64xf32>
    %125 = arith.mulf %115, %99 : vector<2x64xf32>
    %126 = arith.addf %124, %125 : vector<2x64xf32>
    %127 = vector.extract_strided_slice %34 {offsets = [6, 0], sizes = [2, 64], strides = [1, 1]} : vector<30x64xf32> to vector<2x64xf32>
    %cst_68 = arith.constant dense<0.000000e+00> : vector<2x64xf32>
    %128 = tpu.matmul %126, %2, %cst_68 {dimension_numbers = #tpu.dot_dimension_numbers<[1], [0], [0], [1], [0, 0, 1, 1], [], []>} : vector<2x64xf32>, vector<64x64xf32>, vector<2x64xf32> -> vector<2x64xf32>
    %129 = arith.addf %127, %128 : vector<2x64xf32>
    %130 = arith.negf %129 : vector<2x64xf32>
    %131 = math.exp %130 : vector<2x64xf32>
    %cst_69 = arith.constant 1.000000e+00 : f32
    %132 = vector.broadcast %cst_69 : f32 to vector<2x64xf32>
    %133 = arith.addf %132, %131 : vector<2x64xf32>
    %134 = arith.divf %132, %133 : vector<2x64xf32>
    %135 = vector.extract_strided_slice %39 {offsets = [6, 0], sizes = [2, 64], strides = [1, 1]} : vector<30x64xf32> to vector<2x64xf32>
    %cst_70 = arith.constant dense<0.000000e+00> : vector<2x64xf32>
    %136 = tpu.matmul %126, %3, %cst_70 {dimension_numbers = #tpu.dot_dimension_numbers<[1], [0], [0], [1], [0, 0, 1, 1], [], []>} : vector<2x64xf32>, vector<64x64xf32>, vector<2x64xf32> -> vector<2x64xf32>
    %137 = arith.addf %135, %136 : vector<2x64xf32>
    %138 = arith.negf %137 : vector<2x64xf32>
    %139 = math.exp %138 : vector<2x64xf32>
    %cst_71 = arith.constant 1.000000e+00 : f32
    %140 = vector.broadcast %cst_71 : f32 to vector<2x64xf32>
    %141 = arith.addf %140, %139 : vector<2x64xf32>
    %142 = arith.divf %140, %141 : vector<2x64xf32>
    %143 = vector.extract_strided_slice %44 {offsets = [6, 0], sizes = [2, 64], strides = [1, 1]} : vector<30x64xf32> to vector<2x64xf32>
    %cst_72 = arith.constant dense<0.000000e+00> : vector<2x64xf32>
    %144 = tpu.matmul %126, %4, %cst_72 {dimension_numbers = #tpu.dot_dimension_numbers<[1], [0], [0], [1], [0, 0, 1, 1], [], []>} : vector<2x64xf32>, vector<64x64xf32>, vector<2x64xf32> -> vector<2x64xf32>
    %145 = arith.addf %144, %14 : vector<2x64xf32>
    %146 = arith.mulf %134, %145 : vector<2x64xf32>
    %147 = arith.addf %143, %146 : vector<2x64xf32>
    %148 = math.tanh %147 : vector<2x64xf32>
    %cst_73 = arith.constant 1.000000e+00 : f32
    %149 = vector.broadcast %cst_73 : f32 to vector<2x64xf32>
    %150 = arith.subf %149, %142 : vector<2x64xf32>
    %151 = arith.mulf %150, %148 : vector<2x64xf32>
    %152 = arith.mulf %142, %126 : vector<2x64xf32>
    %153 = arith.addf %151, %152 : vector<2x64xf32>
    %154 = vector.extract_strided_slice %34 {offsets = [8, 0], sizes = [2, 64], strides = [1, 1]} : vector<30x64xf32> to vector<2x64xf32>
    %cst_74 = arith.constant dense<0.000000e+00> : vector<2x64xf32>
    %155 = tpu.matmul %153, %2, %cst_74 {dimension_numbers = #tpu.dot_dimension_numbers<[1], [0], [0], [1], [0, 0, 1, 1], [], []>} : vector<2x64xf32>, vector<64x64xf32>, vector<2x64xf32> -> vector<2x64xf32>
    %156 = arith.addf %154, %155 : vector<2x64xf32>
    %157 = arith.negf %156 : vector<2x64xf32>
    %158 = math.exp %157 : vector<2x64xf32>
    %cst_75 = arith.constant 1.000000e+00 : f32
    %159 = vector.broadcast %cst_75 : f32 to vector<2x64xf32>
    %160 = arith.addf %159, %158 : vector<2x64xf32>
    %161 = arith.divf %159, %160 : vector<2x64xf32>
    %162 = vector.extract_strided_slice %39 {offsets = [8, 0], sizes = [2, 64], strides = [1, 1]} : vector<30x64xf32> to vector<2x64xf32>
    %cst_76 = arith.constant dense<0.000000e+00> : vector<2x64xf32>
    %163 = tpu.matmul %153, %3, %cst_76 {dimension_numbers = #tpu.dot_dimension_numbers<[1], [0], [0], [1], [0, 0, 1, 1], [], []>} : vector<2x64xf32>, vector<64x64xf32>, vector<2x64xf32> -> vector<2x64xf32>
    %164 = arith.addf %162, %163 : vector<2x64xf32>
    %165 = arith.negf %164 : vector<2x64xf32>
    %166 = math.exp %165 : vector<2x64xf32>
    %cst_77 = arith.constant 1.000000e+00 : f32
    %167 = vector.broadcast %cst_77 : f32 to vector<2x64xf32>
    %168 = arith.addf %167, %166 : vector<2x64xf32>
    %169 = arith.divf %167, %168 : vector<2x64xf32>
    %170 = vector.extract_strided_slice %44 {offsets = [8, 0], sizes = [2, 64], strides = [1, 1]} : vector<30x64xf32> to vector<2x64xf32>
    %cst_78 = arith.constant dense<0.000000e+00> : vector<2x64xf32>
    %171 = tpu.matmul %153, %4, %cst_78 {dimension_numbers = #tpu.dot_dimension_numbers<[1], [0], [0], [1], [0, 0, 1, 1], [], []>} : vector<2x64xf32>, vector<64x64xf32>, vector<2x64xf32> -> vector<2x64xf32>
    %172 = arith.addf %171, %14 : vector<2x64xf32>
    %173 = arith.mulf %161, %172 : vector<2x64xf32>
    %174 = arith.addf %170, %173 : vector<2x64xf32>
    %175 = math.tanh %174 : vector<2x64xf32>
    %cst_79 = arith.constant 1.000000e+00 : f32
    %176 = vector.broadcast %cst_79 : f32 to vector<2x64xf32>
    %177 = arith.subf %176, %169 : vector<2x64xf32>
    %178 = arith.mulf %177, %175 : vector<2x64xf32>
    %179 = arith.mulf %169, %153 : vector<2x64xf32>
    %180 = arith.addf %178, %179 : vector<2x64xf32>
    %181 = vector.extract_strided_slice %34 {offsets = [10, 0], sizes = [2, 64], strides = [1, 1]} : vector<30x64xf32> to vector<2x64xf32>
    %cst_80 = arith.constant dense<0.000000e+00> : vector<2x64xf32>
    %182 = tpu.matmul %180, %2, %cst_80 {dimension_numbers = #tpu.dot_dimension_numbers<[1], [0], [0], [1], [0, 0, 1, 1], [], []>} : vector<2x64xf32>, vector<64x64xf32>, vector<2x64xf32> -> vector<2x64xf32>
    %183 = arith.addf %181, %182 : vector<2x64xf32>
    %184 = arith.negf %183 : vector<2x64xf32>
    %185 = math.exp %184 : vector<2x64xf32>
    %cst_81 = arith.constant 1.000000e+00 : f32
    %186 = vector.broadcast %cst_81 : f32 to vector<2x64xf32>
    %187 = arith.addf %186, %185 : vector<2x64xf32>
    %188 = arith.divf %186, %187 : vector<2x64xf32>
    %189 = vector.extract_strided_slice %39 {offsets = [10, 0], sizes = [2, 64], strides = [1, 1]} : vector<30x64xf32> to vector<2x64xf32>
    %cst_82 = arith.constant dense<0.000000e+00> : vector<2x64xf32>
    %190 = tpu.matmul %180, %3, %cst_82 {dimension_numbers = #tpu.dot_dimension_numbers<[1], [0], [0], [1], [0, 0, 1, 1], [], []>} : vector<2x64xf32>, vector<64x64xf32>, vector<2x64xf32> -> vector<2x64xf32>
    %191 = arith.addf %189, %190 : vector<2x64xf32>
    %192 = arith.negf %191 : vector<2x64xf32>
    %193 = math.exp %192 : vector<2x64xf32>
    %cst_83 = arith.constant 1.000000e+00 : f32
    %194 = vector.broadcast %cst_83 : f32 to vector<2x64xf32>
    %195 = arith.addf %194, %193 : vector<2x64xf32>
    %196 = arith.divf %194, %195 : vector<2x64xf32>
    %197 = vector.extract_strided_slice %44 {offsets = [10, 0], sizes = [2, 64], strides = [1, 1]} : vector<30x64xf32> to vector<2x64xf32>
    %cst_84 = arith.constant dense<0.000000e+00> : vector<2x64xf32>
    %198 = tpu.matmul %180, %4, %cst_84 {dimension_numbers = #tpu.dot_dimension_numbers<[1], [0], [0], [1], [0, 0, 1, 1], [], []>} : vector<2x64xf32>, vector<64x64xf32>, vector<2x64xf32> -> vector<2x64xf32>
    %199 = arith.addf %198, %14 : vector<2x64xf32>
    %200 = arith.mulf %188, %199 : vector<2x64xf32>
    %201 = arith.addf %197, %200 : vector<2x64xf32>
    %202 = math.tanh %201 : vector<2x64xf32>
    %cst_85 = arith.constant 1.000000e+00 : f32
    %203 = vector.broadcast %cst_85 : f32 to vector<2x64xf32>
    %204 = arith.subf %203, %196 : vector<2x64xf32>
    %205 = arith.mulf %204, %202 : vector<2x64xf32>
    %206 = arith.mulf %196, %180 : vector<2x64xf32>
    %207 = arith.addf %205, %206 : vector<2x64xf32>
    %208 = vector.extract_strided_slice %34 {offsets = [12, 0], sizes = [2, 64], strides = [1, 1]} : vector<30x64xf32> to vector<2x64xf32>
    %cst_86 = arith.constant dense<0.000000e+00> : vector<2x64xf32>
    %209 = tpu.matmul %207, %2, %cst_86 {dimension_numbers = #tpu.dot_dimension_numbers<[1], [0], [0], [1], [0, 0, 1, 1], [], []>} : vector<2x64xf32>, vector<64x64xf32>, vector<2x64xf32> -> vector<2x64xf32>
    %210 = arith.addf %208, %209 : vector<2x64xf32>
    %211 = arith.negf %210 : vector<2x64xf32>
    %212 = math.exp %211 : vector<2x64xf32>
    %cst_87 = arith.constant 1.000000e+00 : f32
    %213 = vector.broadcast %cst_87 : f32 to vector<2x64xf32>
    %214 = arith.addf %213, %212 : vector<2x64xf32>
    %215 = arith.divf %213, %214 : vector<2x64xf32>
    %216 = vector.extract_strided_slice %39 {offsets = [12, 0], sizes = [2, 64], strides = [1, 1]} : vector<30x64xf32> to vector<2x64xf32>
    %cst_88 = arith.constant dense<0.000000e+00> : vector<2x64xf32>
    %217 = tpu.matmul %207, %3, %cst_88 {dimension_numbers = #tpu.dot_dimension_numbers<[1], [0], [0], [1], [0, 0, 1, 1], [], []>} : vector<2x64xf32>, vector<64x64xf32>, vector<2x64xf32> -> vector<2x64xf32>
    %218 = arith.addf %216, %217 : vector<2x64xf32>
    %219 = arith.negf %218 : vector<2x64xf32>
    %220 = math.exp %219 : vector<2x64xf32>
    %cst_89 = arith.constant 1.000000e+00 : f32
    %221 = vector.broadcast %cst_89 : f32 to vector<2x64xf32>
    %222 = arith.addf %221, %220 : vector<2x64xf32>
    %223 = arith.divf %221, %222 : vector<2x64xf32>
    %224 = vector.extract_strided_slice %44 {offsets = [12, 0], sizes = [2, 64], strides = [1, 1]} : vector<30x64xf32> to vector<2x64xf32>
    %cst_90 = arith.constant dense<0.000000e+00> : vector<2x64xf32>
    %225 = tpu.matmul %207, %4, %cst_90 {dimension_numbers = #tpu.dot_dimension_numbers<[1], [0], [0], [1], [0, 0, 1, 1], [], []>} : vector<2x64xf32>, vector<64x64xf32>, vector<2x64xf32> -> vector<2x64xf32>
    %226 = arith.addf %225, %14 : vector<2x64xf32>
    %227 = arith.mulf %215, %226 : vector<2x64xf32>
    %228 = arith.addf %224, %227 : vector<2x64xf32>
    %229 = math.tanh %228 : vector<2x64xf32>
    %cst_91 = arith.constant 1.000000e+00 : f32
    %230 = vector.broadcast %cst_91 : f32 to vector<2x64xf32>
    %231 = arith.subf %230, %223 : vector<2x64xf32>
    %232 = arith.mulf %231, %229 : vector<2x64xf32>
    %233 = arith.mulf %223, %207 : vector<2x64xf32>
    %234 = arith.addf %232, %233 : vector<2x64xf32>
    %235 = vector.extract_strided_slice %34 {offsets = [14, 0], sizes = [2, 64], strides = [1, 1]} : vector<30x64xf32> to vector<2x64xf32>
    %cst_92 = arith.constant dense<0.000000e+00> : vector<2x64xf32>
    %236 = tpu.matmul %234, %2, %cst_92 {dimension_numbers = #tpu.dot_dimension_numbers<[1], [0], [0], [1], [0, 0, 1, 1], [], []>} : vector<2x64xf32>, vector<64x64xf32>, vector<2x64xf32> -> vector<2x64xf32>
    %237 = arith.addf %235, %236 : vector<2x64xf32>
    %238 = arith.negf %237 : vector<2x64xf32>
    %239 = math.exp %238 : vector<2x64xf32>
    %cst_93 = arith.constant 1.000000e+00 : f32
    %240 = vector.broadcast %cst_93 : f32 to vector<2x64xf32>
    %241 = arith.addf %240, %239 : vector<2x64xf32>
    %242 = arith.divf %240, %241 : vector<2x64xf32>
    %243 = vector.extract_strided_slice %39 {offsets = [14, 0], sizes = [2, 64], strides = [1, 1]} : vector<30x64xf32> to vector<2x64xf32>
    %cst_94 = arith.constant dense<0.000000e+00> : vector<2x64xf32>
    %244 = tpu.matmul %234, %3, %cst_94 {dimension_numbers = #tpu.dot_dimension_numbers<[1], [0], [0], [1], [0, 0, 1, 1], [], []>} : vector<2x64xf32>, vector<64x64xf32>, vector<2x64xf32> -> vector<2x64xf32>
    %245 = arith.addf %243, %244 : vector<2x64xf32>
    %246 = arith.negf %245 : vector<2x64xf32>
    %247 = math.exp %246 : vector<2x64xf32>
    %cst_95 = arith.constant 1.000000e+00 : f32
    %248 = vector.broadcast %cst_95 : f32 to vector<2x64xf32>
    %249 = arith.addf %248, %247 : vector<2x64xf32>
    %250 = arith.divf %248, %249 : vector<2x64xf32>
    %251 = vector.extract_strided_slice %44 {offsets = [14, 0], sizes = [2, 64], strides = [1, 1]} : vector<30x64xf32> to vector<2x64xf32>
    %cst_96 = arith.constant dense<0.000000e+00> : vector<2x64xf32>
    %252 = tpu.matmul %234, %4, %cst_96 {dimension_numbers = #tpu.dot_dimension_numbers<[1], [0], [0], [1], [0, 0, 1, 1], [], []>} : vector<2x64xf32>, vector<64x64xf32>, vector<2x64xf32> -> vector<2x64xf32>
    %253 = arith.addf %252, %14 : vector<2x64xf32>
    %254 = arith.mulf %242, %253 : vector<2x64xf32>
    %255 = arith.addf %251, %254 : vector<2x64xf32>
    %256 = math.tanh %255 : vector<2x64xf32>
    %cst_97 = arith.constant 1.000000e+00 : f32
    %257 = vector.broadcast %cst_97 : f32 to vector<2x64xf32>
    %258 = arith.subf %257, %250 : vector<2x64xf32>
    %259 = arith.mulf %258, %256 : vector<2x64xf32>
    %260 = arith.mulf %250, %234 : vector<2x64xf32>
    %261 = arith.addf %259, %260 : vector<2x64xf32>
    %262 = vector.extract_strided_slice %34 {offsets = [16, 0], sizes = [2, 64], strides = [1, 1]} : vector<30x64xf32> to vector<2x64xf32>
    %cst_98 = arith.constant dense<0.000000e+00> : vector<2x64xf32>
    %263 = tpu.matmul %261, %2, %cst_98 {dimension_numbers = #tpu.dot_dimension_numbers<[1], [0], [0], [1], [0, 0, 1, 1], [], []>} : vector<2x64xf32>, vector<64x64xf32>, vector<2x64xf32> -> vector<2x64xf32>
    %264 = arith.addf %262, %263 : vector<2x64xf32>
    %265 = arith.negf %264 : vector<2x64xf32>
    %266 = math.exp %265 : vector<2x64xf32>
    %cst_99 = arith.constant 1.000000e+00 : f32
    %267 = vector.broadcast %cst_99 : f32 to vector<2x64xf32>
    %268 = arith.addf %267, %266 : vector<2x64xf32>
    %269 = arith.divf %267, %268 : vector<2x64xf32>
    %270 = vector.extract_strided_slice %39 {offsets = [16, 0], sizes = [2, 64], strides = [1, 1]} : vector<30x64xf32> to vector<2x64xf32>
    %cst_100 = arith.constant dense<0.000000e+00> : vector<2x64xf32>
    %271 = tpu.matmul %261, %3, %cst_100 {dimension_numbers = #tpu.dot_dimension_numbers<[1], [0], [0], [1], [0, 0, 1, 1], [], []>} : vector<2x64xf32>, vector<64x64xf32>, vector<2x64xf32> -> vector<2x64xf32>
    %272 = arith.addf %270, %271 : vector<2x64xf32>
    %273 = arith.negf %272 : vector<2x64xf32>
    %274 = math.exp %273 : vector<2x64xf32>
    %cst_101 = arith.constant 1.000000e+00 : f32
    %275 = vector.broadcast %cst_101 : f32 to vector<2x64xf32>
    %276 = arith.addf %275, %274 : vector<2x64xf32>
    %277 = arith.divf %275, %276 : vector<2x64xf32>
    %278 = vector.extract_strided_slice %44 {offsets = [16, 0], sizes = [2, 64], strides = [1, 1]} : vector<30x64xf32> to vector<2x64xf32>
    %cst_102 = arith.constant dense<0.000000e+00> : vector<2x64xf32>
    %279 = tpu.matmul %261, %4, %cst_102 {dimension_numbers = #tpu.dot_dimension_numbers<[1], [0], [0], [1], [0, 0, 1, 1], [], []>} : vector<2x64xf32>, vector<64x64xf32>, vector<2x64xf32> -> vector<2x64xf32>
    %280 = arith.addf %279, %14 : vector<2x64xf32>
    %281 = arith.mulf %269, %280 : vector<2x64xf32>
    %282 = arith.addf %278, %281 : vector<2x64xf32>
    %283 = math.tanh %282 : vector<2x64xf32>
    %cst_103 = arith.constant 1.000000e+00 : f32
    %284 = vector.broadcast %cst_103 : f32 to vector<2x64xf32>
    %285 = arith.subf %284, %277 : vector<2x64xf32>
    %286 = arith.mulf %285, %283 : vector<2x64xf32>
    %287 = arith.mulf %277, %261 : vector<2x64xf32>
    %288 = arith.addf %286, %287 : vector<2x64xf32>
    %289 = vector.extract_strided_slice %34 {offsets = [18, 0], sizes = [2, 64], strides = [1, 1]} : vector<30x64xf32> to vector<2x64xf32>
    %cst_104 = arith.constant dense<0.000000e+00> : vector<2x64xf32>
    %290 = tpu.matmul %288, %2, %cst_104 {dimension_numbers = #tpu.dot_dimension_numbers<[1], [0], [0], [1], [0, 0, 1, 1], [], []>} : vector<2x64xf32>, vector<64x64xf32>, vector<2x64xf32> -> vector<2x64xf32>
    %291 = arith.addf %289, %290 : vector<2x64xf32>
    %292 = arith.negf %291 : vector<2x64xf32>
    %293 = math.exp %292 : vector<2x64xf32>
    %cst_105 = arith.constant 1.000000e+00 : f32
    %294 = vector.broadcast %cst_105 : f32 to vector<2x64xf32>
    %295 = arith.addf %294, %293 : vector<2x64xf32>
    %296 = arith.divf %294, %295 : vector<2x64xf32>
    %297 = vector.extract_strided_slice %39 {offsets = [18, 0], sizes = [2, 64], strides = [1, 1]} : vector<30x64xf32> to vector<2x64xf32>
    %cst_106 = arith.constant dense<0.000000e+00> : vector<2x64xf32>
    %298 = tpu.matmul %288, %3, %cst_106 {dimension_numbers = #tpu.dot_dimension_numbers<[1], [0], [0], [1], [0, 0, 1, 1], [], []>} : vector<2x64xf32>, vector<64x64xf32>, vector<2x64xf32> -> vector<2x64xf32>
    %299 = arith.addf %297, %298 : vector<2x64xf32>
    %300 = arith.negf %299 : vector<2x64xf32>
    %301 = math.exp %300 : vector<2x64xf32>
    %cst_107 = arith.constant 1.000000e+00 : f32
    %302 = vector.broadcast %cst_107 : f32 to vector<2x64xf32>
    %303 = arith.addf %302, %301 : vector<2x64xf32>
    %304 = arith.divf %302, %303 : vector<2x64xf32>
    %305 = vector.extract_strided_slice %44 {offsets = [18, 0], sizes = [2, 64], strides = [1, 1]} : vector<30x64xf32> to vector<2x64xf32>
    %cst_108 = arith.constant dense<0.000000e+00> : vector<2x64xf32>
    %306 = tpu.matmul %288, %4, %cst_108 {dimension_numbers = #tpu.dot_dimension_numbers<[1], [0], [0], [1], [0, 0, 1, 1], [], []>} : vector<2x64xf32>, vector<64x64xf32>, vector<2x64xf32> -> vector<2x64xf32>
    %307 = arith.addf %306, %14 : vector<2x64xf32>
    %308 = arith.mulf %296, %307 : vector<2x64xf32>
    %309 = arith.addf %305, %308 : vector<2x64xf32>
    %310 = math.tanh %309 : vector<2x64xf32>
    %cst_109 = arith.constant 1.000000e+00 : f32
    %311 = vector.broadcast %cst_109 : f32 to vector<2x64xf32>
    %312 = arith.subf %311, %304 : vector<2x64xf32>
    %313 = arith.mulf %312, %310 : vector<2x64xf32>
    %314 = arith.mulf %304, %288 : vector<2x64xf32>
    %315 = arith.addf %313, %314 : vector<2x64xf32>
    %316 = vector.extract_strided_slice %34 {offsets = [20, 0], sizes = [2, 64], strides = [1, 1]} : vector<30x64xf32> to vector<2x64xf32>
    %cst_110 = arith.constant dense<0.000000e+00> : vector<2x64xf32>
    %317 = tpu.matmul %315, %2, %cst_110 {dimension_numbers = #tpu.dot_dimension_numbers<[1], [0], [0], [1], [0, 0, 1, 1], [], []>} : vector<2x64xf32>, vector<64x64xf32>, vector<2x64xf32> -> vector<2x64xf32>
    %318 = arith.addf %316, %317 : vector<2x64xf32>
    %319 = arith.negf %318 : vector<2x64xf32>
    %320 = math.exp %319 : vector<2x64xf32>
    %cst_111 = arith.constant 1.000000e+00 : f32
    %321 = vector.broadcast %cst_111 : f32 to vector<2x64xf32>
    %322 = arith.addf %321, %320 : vector<2x64xf32>
    %323 = arith.divf %321, %322 : vector<2x64xf32>
    %324 = vector.extract_strided_slice %39 {offsets = [20, 0], sizes = [2, 64], strides = [1, 1]} : vector<30x64xf32> to vector<2x64xf32>
    %cst_112 = arith.constant dense<0.000000e+00> : vector<2x64xf32>
    %325 = tpu.matmul %315, %3, %cst_112 {dimension_numbers = #tpu.dot_dimension_numbers<[1], [0], [0], [1], [0, 0, 1, 1], [], []>} : vector<2x64xf32>, vector<64x64xf32>, vector<2x64xf32> -> vector<2x64xf32>
    %326 = arith.addf %324, %325 : vector<2x64xf32>
    %327 = arith.negf %326 : vector<2x64xf32>
    %328 = math.exp %327 : vector<2x64xf32>
    %cst_113 = arith.constant 1.000000e+00 : f32
    %329 = vector.broadcast %cst_113 : f32 to vector<2x64xf32>
    %330 = arith.addf %329, %328 : vector<2x64xf32>
    %331 = arith.divf %329, %330 : vector<2x64xf32>
    %332 = vector.extract_strided_slice %44 {offsets = [20, 0], sizes = [2, 64], strides = [1, 1]} : vector<30x64xf32> to vector<2x64xf32>
    %cst_114 = arith.constant dense<0.000000e+00> : vector<2x64xf32>
    %333 = tpu.matmul %315, %4, %cst_114 {dimension_numbers = #tpu.dot_dimension_numbers<[1], [0], [0], [1], [0, 0, 1, 1], [], []>} : vector<2x64xf32>, vector<64x64xf32>, vector<2x64xf32> -> vector<2x64xf32>
    %334 = arith.addf %333, %14 : vector<2x64xf32>
    %335 = arith.mulf %323, %334 : vector<2x64xf32>
    %336 = arith.addf %332, %335 : vector<2x64xf32>
    %337 = math.tanh %336 : vector<2x64xf32>
    %cst_115 = arith.constant 1.000000e+00 : f32
    %338 = vector.broadcast %cst_115 : f32 to vector<2x64xf32>
    %339 = arith.subf %338, %331 : vector<2x64xf32>
    %340 = arith.mulf %339, %337 : vector<2x64xf32>
    %341 = arith.mulf %331, %315 : vector<2x64xf32>
    %342 = arith.addf %340, %341 : vector<2x64xf32>
    %343 = vector.extract_strided_slice %34 {offsets = [22, 0], sizes = [2, 64], strides = [1, 1]} : vector<30x64xf32> to vector<2x64xf32>
    %cst_116 = arith.constant dense<0.000000e+00> : vector<2x64xf32>
    %344 = tpu.matmul %342, %2, %cst_116 {dimension_numbers = #tpu.dot_dimension_numbers<[1], [0], [0], [1], [0, 0, 1, 1], [], []>} : vector<2x64xf32>, vector<64x64xf32>, vector<2x64xf32> -> vector<2x64xf32>
    %345 = arith.addf %343, %344 : vector<2x64xf32>
    %346 = arith.negf %345 : vector<2x64xf32>
    %347 = math.exp %346 : vector<2x64xf32>
    %cst_117 = arith.constant 1.000000e+00 : f32
    %348 = vector.broadcast %cst_117 : f32 to vector<2x64xf32>
    %349 = arith.addf %348, %347 : vector<2x64xf32>
    %350 = arith.divf %348, %349 : vector<2x64xf32>
    %351 = vector.extract_strided_slice %39 {offsets = [22, 0], sizes = [2, 64], strides = [1, 1]} : vector<30x64xf32> to vector<2x64xf32>
    %cst_118 = arith.constant dense<0.000000e+00> : vector<2x64xf32>
    %352 = tpu.matmul %342, %3, %cst_118 {dimension_numbers = #tpu.dot_dimension_numbers<[1], [0], [0], [1], [0, 0, 1, 1], [], []>} : vector<2x64xf32>, vector<64x64xf32>, vector<2x64xf32> -> vector<2x64xf32>
    %353 = arith.addf %351, %352 : vector<2x64xf32>
    %354 = arith.negf %353 : vector<2x64xf32>
    %355 = math.exp %354 : vector<2x64xf32>
    %cst_119 = arith.constant 1.000000e+00 : f32
    %356 = vector.broadcast %cst_119 : f32 to vector<2x64xf32>
    %357 = arith.addf %356, %355 : vector<2x64xf32>
    %358 = arith.divf %356, %357 : vector<2x64xf32>
    %359 = vector.extract_strided_slice %44 {offsets = [22, 0], sizes = [2, 64], strides = [1, 1]} : vector<30x64xf32> to vector<2x64xf32>
    %cst_120 = arith.constant dense<0.000000e+00> : vector<2x64xf32>
    %360 = tpu.matmul %342, %4, %cst_120 {dimension_numbers = #tpu.dot_dimension_numbers<[1], [0], [0], [1], [0, 0, 1, 1], [], []>} : vector<2x64xf32>, vector<64x64xf32>, vector<2x64xf32> -> vector<2x64xf32>
    %361 = arith.addf %360, %14 : vector<2x64xf32>
    %362 = arith.mulf %350, %361 : vector<2x64xf32>
    %363 = arith.addf %359, %362 : vector<2x64xf32>
    %364 = math.tanh %363 : vector<2x64xf32>
    %cst_121 = arith.constant 1.000000e+00 : f32
    %365 = vector.broadcast %cst_121 : f32 to vector<2x64xf32>
    %366 = arith.subf %365, %358 : vector<2x64xf32>
    %367 = arith.mulf %366, %364 : vector<2x64xf32>
    %368 = arith.mulf %358, %342 : vector<2x64xf32>
    %369 = arith.addf %367, %368 : vector<2x64xf32>
    %370 = vector.extract_strided_slice %34 {offsets = [24, 0], sizes = [2, 64], strides = [1, 1]} : vector<30x64xf32> to vector<2x64xf32>
    %cst_122 = arith.constant dense<0.000000e+00> : vector<2x64xf32>
    %371 = tpu.matmul %369, %2, %cst_122 {dimension_numbers = #tpu.dot_dimension_numbers<[1], [0], [0], [1], [0, 0, 1, 1], [], []>} : vector<2x64xf32>, vector<64x64xf32>, vector<2x64xf32> -> vector<2x64xf32>
    %372 = arith.addf %370, %371 : vector<2x64xf32>
    %373 = arith.negf %372 : vector<2x64xf32>
    %374 = math.exp %373 : vector<2x64xf32>
    %cst_123 = arith.constant 1.000000e+00 : f32
    %375 = vector.broadcast %cst_123 : f32 to vector<2x64xf32>
    %376 = arith.addf %375, %374 : vector<2x64xf32>
    %377 = arith.divf %375, %376 : vector<2x64xf32>
    %378 = vector.extract_strided_slice %39 {offsets = [24, 0], sizes = [2, 64], strides = [1, 1]} : vector<30x64xf32> to vector<2x64xf32>
    %cst_124 = arith.constant dense<0.000000e+00> : vector<2x64xf32>
    %379 = tpu.matmul %369, %3, %cst_124 {dimension_numbers = #tpu.dot_dimension_numbers<[1], [0], [0], [1], [0, 0, 1, 1], [], []>} : vector<2x64xf32>, vector<64x64xf32>, vector<2x64xf32> -> vector<2x64xf32>
    %380 = arith.addf %378, %379 : vector<2x64xf32>
    %381 = arith.negf %380 : vector<2x64xf32>
    %382 = math.exp %381 : vector<2x64xf32>
    %cst_125 = arith.constant 1.000000e+00 : f32
    %383 = vector.broadcast %cst_125 : f32 to vector<2x64xf32>
    %384 = arith.addf %383, %382 : vector<2x64xf32>
    %385 = arith.divf %383, %384 : vector<2x64xf32>
    %386 = vector.extract_strided_slice %44 {offsets = [24, 0], sizes = [2, 64], strides = [1, 1]} : vector<30x64xf32> to vector<2x64xf32>
    %cst_126 = arith.constant dense<0.000000e+00> : vector<2x64xf32>
    %387 = tpu.matmul %369, %4, %cst_126 {dimension_numbers = #tpu.dot_dimension_numbers<[1], [0], [0], [1], [0, 0, 1, 1], [], []>} : vector<2x64xf32>, vector<64x64xf32>, vector<2x64xf32> -> vector<2x64xf32>
    %388 = arith.addf %387, %14 : vector<2x64xf32>
    %389 = arith.mulf %377, %388 : vector<2x64xf32>
    %390 = arith.addf %386, %389 : vector<2x64xf32>
    %391 = math.tanh %390 : vector<2x64xf32>
    %cst_127 = arith.constant 1.000000e+00 : f32
    %392 = vector.broadcast %cst_127 : f32 to vector<2x64xf32>
    %393 = arith.subf %392, %385 : vector<2x64xf32>
    %394 = arith.mulf %393, %391 : vector<2x64xf32>
    %395 = arith.mulf %385, %369 : vector<2x64xf32>
    %396 = arith.addf %394, %395 : vector<2x64xf32>
    %397 = vector.extract_strided_slice %34 {offsets = [26, 0], sizes = [2, 64], strides = [1, 1]} : vector<30x64xf32> to vector<2x64xf32>
    %cst_128 = arith.constant dense<0.000000e+00> : vector<2x64xf32>
    %398 = tpu.matmul %396, %2, %cst_128 {dimension_numbers = #tpu.dot_dimension_numbers<[1], [0], [0], [1], [0, 0, 1, 1], [], []>} : vector<2x64xf32>, vector<64x64xf32>, vector<2x64xf32> -> vector<2x64xf32>
    %399 = arith.addf %397, %398 : vector<2x64xf32>
    %400 = arith.negf %399 : vector<2x64xf32>
    %401 = math.exp %400 : vector<2x64xf32>
    %cst_129 = arith.constant 1.000000e+00 : f32
    %402 = vector.broadcast %cst_129 : f32 to vector<2x64xf32>
    %403 = arith.addf %402, %401 : vector<2x64xf32>
    %404 = arith.divf %402, %403 : vector<2x64xf32>
    %405 = vector.extract_strided_slice %39 {offsets = [26, 0], sizes = [2, 64], strides = [1, 1]} : vector<30x64xf32> to vector<2x64xf32>
    %cst_130 = arith.constant dense<0.000000e+00> : vector<2x64xf32>
    %406 = tpu.matmul %396, %3, %cst_130 {dimension_numbers = #tpu.dot_dimension_numbers<[1], [0], [0], [1], [0, 0, 1, 1], [], []>} : vector<2x64xf32>, vector<64x64xf32>, vector<2x64xf32> -> vector<2x64xf32>
    %407 = arith.addf %405, %406 : vector<2x64xf32>
    %408 = arith.negf %407 : vector<2x64xf32>
    %409 = math.exp %408 : vector<2x64xf32>
    %cst_131 = arith.constant 1.000000e+00 : f32
    %410 = vector.broadcast %cst_131 : f32 to vector<2x64xf32>
    %411 = arith.addf %410, %409 : vector<2x64xf32>
    %412 = arith.divf %410, %411 : vector<2x64xf32>
    %413 = vector.extract_strided_slice %44 {offsets = [26, 0], sizes = [2, 64], strides = [1, 1]} : vector<30x64xf32> to vector<2x64xf32>
    %cst_132 = arith.constant dense<0.000000e+00> : vector<2x64xf32>
    %414 = tpu.matmul %396, %4, %cst_132 {dimension_numbers = #tpu.dot_dimension_numbers<[1], [0], [0], [1], [0, 0, 1, 1], [], []>} : vector<2x64xf32>, vector<64x64xf32>, vector<2x64xf32> -> vector<2x64xf32>
    %415 = arith.addf %414, %14 : vector<2x64xf32>
    %416 = arith.mulf %404, %415 : vector<2x64xf32>
    %417 = arith.addf %413, %416 : vector<2x64xf32>
    %418 = math.tanh %417 : vector<2x64xf32>
    %cst_133 = arith.constant 1.000000e+00 : f32
    %419 = vector.broadcast %cst_133 : f32 to vector<2x64xf32>
    %420 = arith.subf %419, %412 : vector<2x64xf32>
    %421 = arith.mulf %420, %418 : vector<2x64xf32>
    %422 = arith.mulf %412, %396 : vector<2x64xf32>
    %423 = arith.addf %421, %422 : vector<2x64xf32>
    %424 = vector.extract_strided_slice %34 {offsets = [28, 0], sizes = [2, 64], strides = [1, 1]} : vector<30x64xf32> to vector<2x64xf32>
    %cst_134 = arith.constant dense<0.000000e+00> : vector<2x64xf32>
    %425 = tpu.matmul %423, %2, %cst_134 {dimension_numbers = #tpu.dot_dimension_numbers<[1], [0], [0], [1], [0, 0, 1, 1], [], []>} : vector<2x64xf32>, vector<64x64xf32>, vector<2x64xf32> -> vector<2x64xf32>
    %426 = arith.addf %424, %425 : vector<2x64xf32>
    %427 = arith.negf %426 : vector<2x64xf32>
    %428 = math.exp %427 : vector<2x64xf32>
    %cst_135 = arith.constant 1.000000e+00 : f32
    %429 = vector.broadcast %cst_135 : f32 to vector<2x64xf32>
    %430 = arith.addf %429, %428 : vector<2x64xf32>
    %431 = arith.divf %429, %430 : vector<2x64xf32>
    %432 = vector.extract_strided_slice %39 {offsets = [28, 0], sizes = [2, 64], strides = [1, 1]} : vector<30x64xf32> to vector<2x64xf32>
    %cst_136 = arith.constant dense<0.000000e+00> : vector<2x64xf32>
    %433 = tpu.matmul %423, %3, %cst_136 {dimension_numbers = #tpu.dot_dimension_numbers<[1], [0], [0], [1], [0, 0, 1, 1], [], []>} : vector<2x64xf32>, vector<64x64xf32>, vector<2x64xf32> -> vector<2x64xf32>
    %434 = arith.addf %432, %433 : vector<2x64xf32>
    %435 = arith.negf %434 : vector<2x64xf32>
    %436 = math.exp %435 : vector<2x64xf32>
    %cst_137 = arith.constant 1.000000e+00 : f32
    %437 = vector.broadcast %cst_137 : f32 to vector<2x64xf32>
    %438 = arith.addf %437, %436 : vector<2x64xf32>
    %439 = arith.divf %437, %438 : vector<2x64xf32>
    %440 = vector.extract_strided_slice %44 {offsets = [28, 0], sizes = [2, 64], strides = [1, 1]} : vector<30x64xf32> to vector<2x64xf32>
    %cst_138 = arith.constant dense<0.000000e+00> : vector<2x64xf32>
    %441 = tpu.matmul %423, %4, %cst_138 {dimension_numbers = #tpu.dot_dimension_numbers<[1], [0], [0], [1], [0, 0, 1, 1], [], []>} : vector<2x64xf32>, vector<64x64xf32>, vector<2x64xf32> -> vector<2x64xf32>
    %442 = arith.addf %441, %14 : vector<2x64xf32>
    %443 = arith.mulf %431, %442 : vector<2x64xf32>
    %444 = arith.addf %440, %443 : vector<2x64xf32>
    %445 = math.tanh %444 : vector<2x64xf32>
    %cst_139 = arith.constant 1.000000e+00 : f32
    %446 = vector.broadcast %cst_139 : f32 to vector<2x64xf32>
    %447 = arith.subf %446, %439 : vector<2x64xf32>
    %448 = arith.mulf %447, %445 : vector<2x64xf32>
    %449 = arith.mulf %439, %423 : vector<2x64xf32>
    %450 = arith.addf %448, %449 : vector<2x64xf32>
    %c0_140 = arith.constant 0 : index
    %c0_141 = arith.constant 0 : index
    %451 = vector.load %arg12[%c0_140, %c0_141] : memref<8x64xf32, #tpu.memory_space<vmem>>, vector<8x64xf32>
    %cst_142 = arith.constant dense<0.000000e+00> : vector<2x64xf32>
    %452 = tpu.matmul %1, %451, %cst_142 {dimension_numbers = #tpu.dot_dimension_numbers<[1], [0], [0], [1], [0, 0, 1, 1], [], []>} : vector<2x8xf32>, vector<8x64xf32>, vector<2x64xf32> -> vector<2x64xf32>
    %c0_143 = arith.constant 0 : index
    %c0_144 = arith.constant 0 : index
    %453 = vector.load %arg18[%c0_143, %c0_144] : memref<1x64xf32, #tpu.memory_space<vmem>>, vector<1x64xf32>
    %454 = vector.broadcast %453 : vector<1x64xf32> to vector<2x64xf32>
    %455 = arith.addf %452, %454 : vector<2x64xf32>
    %c0_145 = arith.constant 0 : index
    %c0_146 = arith.constant 0 : index
    %456 = vector.load %arg13[%c0_145, %c0_146] : memref<8x64xf32, #tpu.memory_space<vmem>>, vector<8x64xf32>
    %cst_147 = arith.constant dense<0.000000e+00> : vector<2x64xf32>
    %457 = tpu.matmul %1, %456, %cst_147 {dimension_numbers = #tpu.dot_dimension_numbers<[1], [0], [0], [1], [0, 0, 1, 1], [], []>} : vector<2x8xf32>, vector<8x64xf32>, vector<2x64xf32> -> vector<2x64xf32>
    %c0_148 = arith.constant 0 : index
    %c0_149 = arith.constant 0 : index
    %458 = vector.load %arg19[%c0_148, %c0_149] : memref<1x64xf32, #tpu.memory_space<vmem>>, vector<1x64xf32>
    %459 = vector.broadcast %458 : vector<1x64xf32> to vector<2x64xf32>
    %460 = arith.addf %457, %459 : vector<2x64xf32>
    %c0_150 = arith.constant 0 : index
    %c0_151 = arith.constant 0 : index
    %461 = vector.load %arg14[%c0_150, %c0_151] : memref<8x64xf32, #tpu.memory_space<vmem>>, vector<8x64xf32>
    %cst_152 = arith.constant dense<0.000000e+00> : vector<2x64xf32>
    %462 = tpu.matmul %1, %461, %cst_152 {dimension_numbers = #tpu.dot_dimension_numbers<[1], [0], [0], [1], [0, 0, 1, 1], [], []>} : vector<2x8xf32>, vector<8x64xf32>, vector<2x64xf32> -> vector<2x64xf32>
    %c0_153 = arith.constant 0 : index
    %c0_154 = arith.constant 0 : index
    %463 = vector.load %arg20[%c0_153, %c0_154] : memref<1x64xf32, #tpu.memory_space<vmem>>, vector<1x64xf32>
    %464 = vector.broadcast %463 : vector<1x64xf32> to vector<2x64xf32>
    %465 = arith.addf %462, %464 : vector<2x64xf32>
    %cst_155 = arith.constant dense<0.000000e+00> : vector<2x64xf32>
    %466 = tpu.matmul %450, %5, %cst_155 {dimension_numbers = #tpu.dot_dimension_numbers<[1], [0], [0], [1], [0, 0, 1, 1], [], []>} : vector<2x64xf32>, vector<64x64xf32>, vector<2x64xf32> -> vector<2x64xf32>
    %467 = arith.addf %455, %466 : vector<2x64xf32>
    %468 = arith.negf %467 : vector<2x64xf32>
    %469 = math.exp %468 : vector<2x64xf32>
    %cst_156 = arith.constant 1.000000e+00 : f32
    %470 = vector.broadcast %cst_156 : f32 to vector<2x64xf32>
    %471 = arith.addf %470, %469 : vector<2x64xf32>
    %472 = arith.divf %470, %471 : vector<2x64xf32>
    %cst_157 = arith.constant dense<0.000000e+00> : vector<2x64xf32>
    %473 = tpu.matmul %450, %6, %cst_157 {dimension_numbers = #tpu.dot_dimension_numbers<[1], [0], [0], [1], [0, 0, 1, 1], [], []>} : vector<2x64xf32>, vector<64x64xf32>, vector<2x64xf32> -> vector<2x64xf32>
    %474 = arith.addf %460, %473 : vector<2x64xf32>
    %475 = arith.negf %474 : vector<2x64xf32>
    %476 = math.exp %475 : vector<2x64xf32>
    %cst_158 = arith.constant 1.000000e+00 : f32
    %477 = vector.broadcast %cst_158 : f32 to vector<2x64xf32>
    %478 = arith.addf %477, %476 : vector<2x64xf32>
    %479 = arith.divf %477, %478 : vector<2x64xf32>
    %cst_159 = arith.constant dense<0.000000e+00> : vector<2x64xf32>
    %480 = tpu.matmul %450, %7, %cst_159 {dimension_numbers = #tpu.dot_dimension_numbers<[1], [0], [0], [1], [0, 0, 1, 1], [], []>} : vector<2x64xf32>, vector<64x64xf32>, vector<2x64xf32> -> vector<2x64xf32>
    %481 = arith.addf %480, %17 : vector<2x64xf32>
    %482 = arith.mulf %472, %481 : vector<2x64xf32>
    %483 = arith.addf %465, %482 : vector<2x64xf32>
    %484 = math.tanh %483 : vector<2x64xf32>
    %cst_160 = arith.constant 1.000000e+00 : f32
    %485 = vector.broadcast %cst_160 : f32 to vector<2x64xf32>
    %486 = arith.subf %485, %479 : vector<2x64xf32>
    %487 = arith.mulf %486, %484 : vector<2x64xf32>
    %488 = arith.mulf %479, %450 : vector<2x64xf32>
    %489 = arith.addf %487, %488 : vector<2x64xf32>
    %cst_161 = arith.constant dense<0.000000e+00> : vector<2x4xf32>
    %490 = tpu.matmul %489, %11, %cst_161 {dimension_numbers = #tpu.dot_dimension_numbers<[1], [0], [0], [1], [0, 0, 1, 1], [], []>} : vector<2x64xf32>, vector<64x4xf32>, vector<2x4xf32> -> vector<2x4xf32>
    %491 = arith.addf %490, %29 : vector<2x4xf32>
    %cst_162 = arith.constant dense<0.000000e+00> : vector<2x64xf32>
    %492 = tpu.matmul %489, %8, %cst_162 {dimension_numbers = #tpu.dot_dimension_numbers<[1], [0], [0], [1], [0, 0, 1, 1], [], []>} : vector<2x64xf32>, vector<64x64xf32>, vector<2x64xf32> -> vector<2x64xf32>
    %493 = arith.addf %492, %20 : vector<2x64xf32>
    %494 = arith.negf %493 : vector<2x64xf32>
    %495 = math.exp %494 : vector<2x64xf32>
    %cst_163 = arith.constant 1.000000e+00 : f32
    %496 = vector.broadcast %cst_163 : f32 to vector<2x64xf32>
    %497 = arith.addf %496, %495 : vector<2x64xf32>
    %498 = arith.divf %496, %497 : vector<2x64xf32>
    %cst_164 = arith.constant dense<0.000000e+00> : vector<2x64xf32>
    %499 = tpu.matmul %489, %9, %cst_164 {dimension_numbers = #tpu.dot_dimension_numbers<[1], [0], [0], [1], [0, 0, 1, 1], [], []>} : vector<2x64xf32>, vector<64x64xf32>, vector<2x64xf32> -> vector<2x64xf32>
    %500 = arith.addf %499, %23 : vector<2x64xf32>
    %501 = arith.negf %500 : vector<2x64xf32>
    %502 = math.exp %501 : vector<2x64xf32>
    %cst_165 = arith.constant 1.000000e+00 : f32
    %503 = vector.broadcast %cst_165 : f32 to vector<2x64xf32>
    %504 = arith.addf %503, %502 : vector<2x64xf32>
    %505 = arith.divf %503, %504 : vector<2x64xf32>
    %cst_166 = arith.constant dense<0.000000e+00> : vector<2x64xf32>
    %506 = tpu.matmul %489, %10, %cst_166 {dimension_numbers = #tpu.dot_dimension_numbers<[1], [0], [0], [1], [0, 0, 1, 1], [], []>} : vector<2x64xf32>, vector<64x64xf32>, vector<2x64xf32> -> vector<2x64xf32>
    %507 = arith.addf %506, %26 : vector<2x64xf32>
    %cst_167 = arith.constant dense<0.000000e+00> : vector<2x64xf32>
    %508 = tpu.matmul %489, %7, %cst_167 {dimension_numbers = #tpu.dot_dimension_numbers<[1], [0], [0], [1], [0, 0, 1, 1], [], []>} : vector<2x64xf32>, vector<64x64xf32>, vector<2x64xf32> -> vector<2x64xf32>
    %509 = arith.addf %508, %17 : vector<2x64xf32>
    %510 = arith.mulf %498, %509 : vector<2x64xf32>
    %511 = arith.addf %507, %510 : vector<2x64xf32>
    %512 = math.tanh %511 : vector<2x64xf32>
    %cst_168 = arith.constant 1.000000e+00 : f32
    %513 = vector.broadcast %cst_168 : f32 to vector<2x64xf32>
    %514 = arith.subf %513, %505 : vector<2x64xf32>
    %515 = arith.mulf %514, %512 : vector<2x64xf32>
    %516 = arith.mulf %505, %489 : vector<2x64xf32>
    %517 = arith.addf %515, %516 : vector<2x64xf32>
    %cst_169 = arith.constant dense<0.000000e+00> : vector<2x4xf32>
    %518 = tpu.matmul %517, %11, %cst_169 {dimension_numbers = #tpu.dot_dimension_numbers<[1], [0], [0], [1], [0, 0, 1, 1], [], []>} : vector<2x64xf32>, vector<64x4xf32>, vector<2x4xf32> -> vector<2x4xf32>
    %519 = arith.addf %518, %29 : vector<2x4xf32>
    %cst_170 = arith.constant dense<0.000000e+00> : vector<2x64xf32>
    %520 = tpu.matmul %517, %8, %cst_170 {dimension_numbers = #tpu.dot_dimension_numbers<[1], [0], [0], [1], [0, 0, 1, 1], [], []>} : vector<2x64xf32>, vector<64x64xf32>, vector<2x64xf32> -> vector<2x64xf32>
    %521 = arith.addf %520, %20 : vector<2x64xf32>
    %522 = arith.negf %521 : vector<2x64xf32>
    %523 = math.exp %522 : vector<2x64xf32>
    %cst_171 = arith.constant 1.000000e+00 : f32
    %524 = vector.broadcast %cst_171 : f32 to vector<2x64xf32>
    %525 = arith.addf %524, %523 : vector<2x64xf32>
    %526 = arith.divf %524, %525 : vector<2x64xf32>
    %cst_172 = arith.constant dense<0.000000e+00> : vector<2x64xf32>
    %527 = tpu.matmul %517, %9, %cst_172 {dimension_numbers = #tpu.dot_dimension_numbers<[1], [0], [0], [1], [0, 0, 1, 1], [], []>} : vector<2x64xf32>, vector<64x64xf32>, vector<2x64xf32> -> vector<2x64xf32>
    %528 = arith.addf %527, %23 : vector<2x64xf32>
    %529 = arith.negf %528 : vector<2x64xf32>
    %530 = math.exp %529 : vector<2x64xf32>
    %cst_173 = arith.constant 1.000000e+00 : f32
    %531 = vector.broadcast %cst_173 : f32 to vector<2x64xf32>
    %532 = arith.addf %531, %530 : vector<2x64xf32>
    %533 = arith.divf %531, %532 : vector<2x64xf32>
    %cst_174 = arith.constant dense<0.000000e+00> : vector<2x64xf32>
    %534 = tpu.matmul %517, %10, %cst_174 {dimension_numbers = #tpu.dot_dimension_numbers<[1], [0], [0], [1], [0, 0, 1, 1], [], []>} : vector<2x64xf32>, vector<64x64xf32>, vector<2x64xf32> -> vector<2x64xf32>
    %535 = arith.addf %534, %26 : vector<2x64xf32>
    %cst_175 = arith.constant dense<0.000000e+00> : vector<2x64xf32>
    %536 = tpu.matmul %517, %7, %cst_175 {dimension_numbers = #tpu.dot_dimension_numbers<[1], [0], [0], [1], [0, 0, 1, 1], [], []>} : vector<2x64xf32>, vector<64x64xf32>, vector<2x64xf32> -> vector<2x64xf32>
    %537 = arith.addf %536, %17 : vector<2x64xf32>
    %538 = arith.mulf %526, %537 : vector<2x64xf32>
    %539 = arith.addf %535, %538 : vector<2x64xf32>
    %540 = math.tanh %539 : vector<2x64xf32>
    %cst_176 = arith.constant 1.000000e+00 : f32
    %541 = vector.broadcast %cst_176 : f32 to vector<2x64xf32>
    %542 = arith.subf %541, %533 : vector<2x64xf32>
    %543 = arith.mulf %542, %540 : vector<2x64xf32>
    %544 = arith.mulf %533, %517 : vector<2x64xf32>
    %545 = arith.addf %543, %544 : vector<2x64xf32>
    %cst_177 = arith.constant dense<0.000000e+00> : vector<2x4xf32>
    %546 = tpu.matmul %545, %11, %cst_177 {dimension_numbers = #tpu.dot_dimension_numbers<[1], [0], [0], [1], [0, 0, 1, 1], [], []>} : vector<2x64xf32>, vector<64x4xf32>, vector<2x4xf32> -> vector<2x4xf32>
    %547 = arith.addf %546, %29 : vector<2x4xf32>
    %cst_178 = arith.constant dense<0.000000e+00> : vector<2x64xf32>
    %548 = tpu.matmul %545, %8, %cst_178 {dimension_numbers = #tpu.dot_dimension_numbers<[1], [0], [0], [1], [0, 0, 1, 1], [], []>} : vector<2x64xf32>, vector<64x64xf32>, vector<2x64xf32> -> vector<2x64xf32>
    %549 = arith.addf %548, %20 : vector<2x64xf32>
    %550 = arith.negf %549 : vector<2x64xf32>
    %551 = math.exp %550 : vector<2x64xf32>
    %cst_179 = arith.constant 1.000000e+00 : f32
    %552 = vector.broadcast %cst_179 : f32 to vector<2x64xf32>
    %553 = arith.addf %552, %551 : vector<2x64xf32>
    %554 = arith.divf %552, %553 : vector<2x64xf32>
    %cst_180 = arith.constant dense<0.000000e+00> : vector<2x64xf32>
    %555 = tpu.matmul %545, %9, %cst_180 {dimension_numbers = #tpu.dot_dimension_numbers<[1], [0], [0], [1], [0, 0, 1, 1], [], []>} : vector<2x64xf32>, vector<64x64xf32>, vector<2x64xf32> -> vector<2x64xf32>
    %556 = arith.addf %555, %23 : vector<2x64xf32>
    %557 = arith.negf %556 : vector<2x64xf32>
    %558 = math.exp %557 : vector<2x64xf32>
    %cst_181 = arith.constant 1.000000e+00 : f32
    %559 = vector.broadcast %cst_181 : f32 to vector<2x64xf32>
    %560 = arith.addf %559, %558 : vector<2x64xf32>
    %561 = arith.divf %559, %560 : vector<2x64xf32>
    %cst_182 = arith.constant dense<0.000000e+00> : vector<2x64xf32>
    %562 = tpu.matmul %545, %10, %cst_182 {dimension_numbers = #tpu.dot_dimension_numbers<[1], [0], [0], [1], [0, 0, 1, 1], [], []>} : vector<2x64xf32>, vector<64x64xf32>, vector<2x64xf32> -> vector<2x64xf32>
    %563 = arith.addf %562, %26 : vector<2x64xf32>
    %cst_183 = arith.constant dense<0.000000e+00> : vector<2x64xf32>
    %564 = tpu.matmul %545, %7, %cst_183 {dimension_numbers = #tpu.dot_dimension_numbers<[1], [0], [0], [1], [0, 0, 1, 1], [], []>} : vector<2x64xf32>, vector<64x64xf32>, vector<2x64xf32> -> vector<2x64xf32>
    %565 = arith.addf %564, %17 : vector<2x64xf32>
    %566 = arith.mulf %554, %565 : vector<2x64xf32>
    %567 = arith.addf %563, %566 : vector<2x64xf32>
    %568 = math.tanh %567 : vector<2x64xf32>
    %cst_184 = arith.constant 1.000000e+00 : f32
    %569 = vector.broadcast %cst_184 : f32 to vector<2x64xf32>
    %570 = arith.subf %569, %561 : vector<2x64xf32>
    %571 = arith.mulf %570, %568 : vector<2x64xf32>
    %572 = arith.mulf %561, %545 : vector<2x64xf32>
    %573 = arith.addf %571, %572 : vector<2x64xf32>
    %cst_185 = arith.constant dense<0.000000e+00> : vector<2x4xf32>
    %574 = tpu.matmul %573, %11, %cst_185 {dimension_numbers = #tpu.dot_dimension_numbers<[1], [0], [0], [1], [0, 0, 1, 1], [], []>} : vector<2x64xf32>, vector<64x4xf32>, vector<2x4xf32> -> vector<2x4xf32>
    %575 = arith.addf %574, %29 : vector<2x4xf32>
    %cst_186 = arith.constant dense<0.000000e+00> : vector<2x64xf32>
    %576 = tpu.matmul %573, %8, %cst_186 {dimension_numbers = #tpu.dot_dimension_numbers<[1], [0], [0], [1], [0, 0, 1, 1], [], []>} : vector<2x64xf32>, vector<64x64xf32>, vector<2x64xf32> -> vector<2x64xf32>
    %577 = arith.addf %576, %20 : vector<2x64xf32>
    %578 = arith.negf %577 : vector<2x64xf32>
    %579 = math.exp %578 : vector<2x64xf32>
    %cst_187 = arith.constant 1.000000e+00 : f32
    %580 = vector.broadcast %cst_187 : f32 to vector<2x64xf32>
    %581 = arith.addf %580, %579 : vector<2x64xf32>
    %582 = arith.divf %580, %581 : vector<2x64xf32>
    %cst_188 = arith.constant dense<0.000000e+00> : vector<2x64xf32>
    %583 = tpu.matmul %573, %9, %cst_188 {dimension_numbers = #tpu.dot_dimension_numbers<[1], [0], [0], [1], [0, 0, 1, 1], [], []>} : vector<2x64xf32>, vector<64x64xf32>, vector<2x64xf32> -> vector<2x64xf32>
    %584 = arith.addf %583, %23 : vector<2x64xf32>
    %585 = arith.negf %584 : vector<2x64xf32>
    %586 = math.exp %585 : vector<2x64xf32>
    %cst_189 = arith.constant 1.000000e+00 : f32
    %587 = vector.broadcast %cst_189 : f32 to vector<2x64xf32>
    %588 = arith.addf %587, %586 : vector<2x64xf32>
    %589 = arith.divf %587, %588 : vector<2x64xf32>
    %cst_190 = arith.constant dense<0.000000e+00> : vector<2x64xf32>
    %590 = tpu.matmul %573, %10, %cst_190 {dimension_numbers = #tpu.dot_dimension_numbers<[1], [0], [0], [1], [0, 0, 1, 1], [], []>} : vector<2x64xf32>, vector<64x64xf32>, vector<2x64xf32> -> vector<2x64xf32>
    %591 = arith.addf %590, %26 : vector<2x64xf32>
    %cst_191 = arith.constant dense<0.000000e+00> : vector<2x64xf32>
    %592 = tpu.matmul %573, %7, %cst_191 {dimension_numbers = #tpu.dot_dimension_numbers<[1], [0], [0], [1], [0, 0, 1, 1], [], []>} : vector<2x64xf32>, vector<64x64xf32>, vector<2x64xf32> -> vector<2x64xf32>
    %593 = arith.addf %592, %17 : vector<2x64xf32>
    %594 = arith.mulf %582, %593 : vector<2x64xf32>
    %595 = arith.addf %591, %594 : vector<2x64xf32>
    %596 = math.tanh %595 : vector<2x64xf32>
    %cst_192 = arith.constant 1.000000e+00 : f32
    %597 = vector.broadcast %cst_192 : f32 to vector<2x64xf32>
    %598 = arith.subf %597, %589 : vector<2x64xf32>
    %599 = arith.mulf %598, %596 : vector<2x64xf32>
    %600 = arith.mulf %589, %573 : vector<2x64xf32>
    %601 = arith.addf %599, %600 : vector<2x64xf32>
    %cst_193 = arith.constant dense<0.000000e+00> : vector<2x4xf32>
    %602 = tpu.matmul %601, %11, %cst_193 {dimension_numbers = #tpu.dot_dimension_numbers<[1], [0], [0], [1], [0, 0, 1, 1], [], []>} : vector<2x64xf32>, vector<64x4xf32>, vector<2x4xf32> -> vector<2x4xf32>
    %603 = arith.addf %602, %29 : vector<2x4xf32>
    %cst_194 = arith.constant dense<0.000000e+00> : vector<2x64xf32>
    %604 = tpu.matmul %601, %8, %cst_194 {dimension_numbers = #tpu.dot_dimension_numbers<[1], [0], [0], [1], [0, 0, 1, 1], [], []>} : vector<2x64xf32>, vector<64x64xf32>, vector<2x64xf32> -> vector<2x64xf32>
    %605 = arith.addf %604, %20 : vector<2x64xf32>
    %606 = arith.negf %605 : vector<2x64xf32>
    %607 = math.exp %606 : vector<2x64xf32>
    %cst_195 = arith.constant 1.000000e+00 : f32
    %608 = vector.broadcast %cst_195 : f32 to vector<2x64xf32>
    %609 = arith.addf %608, %607 : vector<2x64xf32>
    %610 = arith.divf %608, %609 : vector<2x64xf32>
    %cst_196 = arith.constant dense<0.000000e+00> : vector<2x64xf32>
    %611 = tpu.matmul %601, %9, %cst_196 {dimension_numbers = #tpu.dot_dimension_numbers<[1], [0], [0], [1], [0, 0, 1, 1], [], []>} : vector<2x64xf32>, vector<64x64xf32>, vector<2x64xf32> -> vector<2x64xf32>
    %612 = arith.addf %611, %23 : vector<2x64xf32>
    %613 = arith.negf %612 : vector<2x64xf32>
    %614 = math.exp %613 : vector<2x64xf32>
    %cst_197 = arith.constant 1.000000e+00 : f32
    %615 = vector.broadcast %cst_197 : f32 to vector<2x64xf32>
    %616 = arith.addf %615, %614 : vector<2x64xf32>
    %617 = arith.divf %615, %616 : vector<2x64xf32>
    %cst_198 = arith.constant dense<0.000000e+00> : vector<2x64xf32>
    %618 = tpu.matmul %601, %10, %cst_198 {dimension_numbers = #tpu.dot_dimension_numbers<[1], [0], [0], [1], [0, 0, 1, 1], [], []>} : vector<2x64xf32>, vector<64x64xf32>, vector<2x64xf32> -> vector<2x64xf32>
    %619 = arith.addf %618, %26 : vector<2x64xf32>
    %cst_199 = arith.constant dense<0.000000e+00> : vector<2x64xf32>
    %620 = tpu.matmul %601, %7, %cst_199 {dimension_numbers = #tpu.dot_dimension_numbers<[1], [0], [0], [1], [0, 0, 1, 1], [], []>} : vector<2x64xf32>, vector<64x64xf32>, vector<2x64xf32> -> vector<2x64xf32>
    %621 = arith.addf %620, %17 : vector<2x64xf32>
    %622 = arith.mulf %610, %621 : vector<2x64xf32>
    %623 = arith.addf %619, %622 : vector<2x64xf32>
    %624 = math.tanh %623 : vector<2x64xf32>
    %cst_200 = arith.constant 1.000000e+00 : f32
    %625 = vector.broadcast %cst_200 : f32 to vector<2x64xf32>
    %626 = arith.subf %625, %617 : vector<2x64xf32>
    %627 = arith.mulf %626, %624 : vector<2x64xf32>
    %628 = arith.mulf %617, %601 : vector<2x64xf32>
    %629 = arith.addf %627, %628 : vector<2x64xf32>
    %cst_201 = arith.constant dense<0.000000e+00> : vector<2x4xf32>
    %630 = tpu.matmul %629, %11, %cst_201 {dimension_numbers = #tpu.dot_dimension_numbers<[1], [0], [0], [1], [0, 0, 1, 1], [], []>} : vector<2x64xf32>, vector<64x4xf32>, vector<2x4xf32> -> vector<2x4xf32>
    %631 = arith.addf %630, %29 : vector<2x4xf32>
    %cst_202 = arith.constant dense<0.000000e+00> : vector<2x64xf32>
    %632 = tpu.matmul %629, %8, %cst_202 {dimension_numbers = #tpu.dot_dimension_numbers<[1], [0], [0], [1], [0, 0, 1, 1], [], []>} : vector<2x64xf32>, vector<64x64xf32>, vector<2x64xf32> -> vector<2x64xf32>
    %633 = arith.addf %632, %20 : vector<2x64xf32>
    %634 = arith.negf %633 : vector<2x64xf32>
    %635 = math.exp %634 : vector<2x64xf32>
    %cst_203 = arith.constant 1.000000e+00 : f32
    %636 = vector.broadcast %cst_203 : f32 to vector<2x64xf32>
    %637 = arith.addf %636, %635 : vector<2x64xf32>
    %638 = arith.divf %636, %637 : vector<2x64xf32>
    %cst_204 = arith.constant dense<0.000000e+00> : vector<2x64xf32>
    %639 = tpu.matmul %629, %9, %cst_204 {dimension_numbers = #tpu.dot_dimension_numbers<[1], [0], [0], [1], [0, 0, 1, 1], [], []>} : vector<2x64xf32>, vector<64x64xf32>, vector<2x64xf32> -> vector<2x64xf32>
    %640 = arith.addf %639, %23 : vector<2x64xf32>
    %641 = arith.negf %640 : vector<2x64xf32>
    %642 = math.exp %641 : vector<2x64xf32>
    %cst_205 = arith.constant 1.000000e+00 : f32
    %643 = vector.broadcast %cst_205 : f32 to vector<2x64xf32>
    %644 = arith.addf %643, %642 : vector<2x64xf32>
    %645 = arith.divf %643, %644 : vector<2x64xf32>
    %cst_206 = arith.constant dense<0.000000e+00> : vector<2x64xf32>
    %646 = tpu.matmul %629, %10, %cst_206 {dimension_numbers = #tpu.dot_dimension_numbers<[1], [0], [0], [1], [0, 0, 1, 1], [], []>} : vector<2x64xf32>, vector<64x64xf32>, vector<2x64xf32> -> vector<2x64xf32>
    %647 = arith.addf %646, %26 : vector<2x64xf32>
    %cst_207 = arith.constant dense<0.000000e+00> : vector<2x64xf32>
    %648 = tpu.matmul %629, %7, %cst_207 {dimension_numbers = #tpu.dot_dimension_numbers<[1], [0], [0], [1], [0, 0, 1, 1], [], []>} : vector<2x64xf32>, vector<64x64xf32>, vector<2x64xf32> -> vector<2x64xf32>
    %649 = arith.addf %648, %17 : vector<2x64xf32>
    %650 = arith.mulf %638, %649 : vector<2x64xf32>
    %651 = arith.addf %647, %650 : vector<2x64xf32>
    %652 = math.tanh %651 : vector<2x64xf32>
    %cst_208 = arith.constant 1.000000e+00 : f32
    %653 = vector.broadcast %cst_208 : f32 to vector<2x64xf32>
    %654 = arith.subf %653, %645 : vector<2x64xf32>
    %655 = arith.mulf %654, %652 : vector<2x64xf32>
    %656 = arith.mulf %645, %629 : vector<2x64xf32>
    %657 = arith.addf %655, %656 : vector<2x64xf32>
    %cst_209 = arith.constant dense<0.000000e+00> : vector<2x4xf32>
    %658 = tpu.matmul %657, %11, %cst_209 {dimension_numbers = #tpu.dot_dimension_numbers<[1], [0], [0], [1], [0, 0, 1, 1], [], []>} : vector<2x64xf32>, vector<64x4xf32>, vector<2x4xf32> -> vector<2x4xf32>
    %659 = arith.addf %658, %29 : vector<2x4xf32>
    %cst_210 = arith.constant dense<0.000000e+00> : vector<2x64xf32>
    %660 = tpu.matmul %657, %8, %cst_210 {dimension_numbers = #tpu.dot_dimension_numbers<[1], [0], [0], [1], [0, 0, 1, 1], [], []>} : vector<2x64xf32>, vector<64x64xf32>, vector<2x64xf32> -> vector<2x64xf32>
    %661 = arith.addf %660, %20 : vector<2x64xf32>
    %662 = arith.negf %661 : vector<2x64xf32>
    %663 = math.exp %662 : vector<2x64xf32>
    %cst_211 = arith.constant 1.000000e+00 : f32
    %664 = vector.broadcast %cst_211 : f32 to vector<2x64xf32>
    %665 = arith.addf %664, %663 : vector<2x64xf32>
    %666 = arith.divf %664, %665 : vector<2x64xf32>
    %cst_212 = arith.constant dense<0.000000e+00> : vector<2x64xf32>
    %667 = tpu.matmul %657, %9, %cst_212 {dimension_numbers = #tpu.dot_dimension_numbers<[1], [0], [0], [1], [0, 0, 1, 1], [], []>} : vector<2x64xf32>, vector<64x64xf32>, vector<2x64xf32> -> vector<2x64xf32>
    %668 = arith.addf %667, %23 : vector<2x64xf32>
    %669 = arith.negf %668 : vector<2x64xf32>
    %670 = math.exp %669 : vector<2x64xf32>
    %cst_213 = arith.constant 1.000000e+00 : f32
    %671 = vector.broadcast %cst_213 : f32 to vector<2x64xf32>
    %672 = arith.addf %671, %670 : vector<2x64xf32>
    %673 = arith.divf %671, %672 : vector<2x64xf32>
    %cst_214 = arith.constant dense<0.000000e+00> : vector<2x64xf32>
    %674 = tpu.matmul %657, %10, %cst_214 {dimension_numbers = #tpu.dot_dimension_numbers<[1], [0], [0], [1], [0, 0, 1, 1], [], []>} : vector<2x64xf32>, vector<64x64xf32>, vector<2x64xf32> -> vector<2x64xf32>
    %675 = arith.addf %674, %26 : vector<2x64xf32>
    %cst_215 = arith.constant dense<0.000000e+00> : vector<2x64xf32>
    %676 = tpu.matmul %657, %7, %cst_215 {dimension_numbers = #tpu.dot_dimension_numbers<[1], [0], [0], [1], [0, 0, 1, 1], [], []>} : vector<2x64xf32>, vector<64x64xf32>, vector<2x64xf32> -> vector<2x64xf32>
    %677 = arith.addf %676, %17 : vector<2x64xf32>
    %678 = arith.mulf %666, %677 : vector<2x64xf32>
    %679 = arith.addf %675, %678 : vector<2x64xf32>
    %680 = math.tanh %679 : vector<2x64xf32>
    %cst_216 = arith.constant 1.000000e+00 : f32
    %681 = vector.broadcast %cst_216 : f32 to vector<2x64xf32>
    %682 = arith.subf %681, %673 : vector<2x64xf32>
    %683 = arith.mulf %682, %680 : vector<2x64xf32>
    %684 = arith.mulf %673, %657 : vector<2x64xf32>
    %685 = arith.addf %683, %684 : vector<2x64xf32>
    %cst_217 = arith.constant dense<0.000000e+00> : vector<2x4xf32>
    %686 = tpu.matmul %685, %11, %cst_217 {dimension_numbers = #tpu.dot_dimension_numbers<[1], [0], [0], [1], [0, 0, 1, 1], [], []>} : vector<2x64xf32>, vector<64x4xf32>, vector<2x4xf32> -> vector<2x4xf32>
    %687 = arith.addf %686, %29 : vector<2x4xf32>
    %688 = vector.shape_cast %491 : vector<2x4xf32> to vector<1x2x4xf32>
    %689 = vector.shape_cast %519 : vector<2x4xf32> to vector<1x2x4xf32>
    %690 = vector.shape_cast %547 : vector<2x4xf32> to vector<1x2x4xf32>
    %691 = vector.shape_cast %575 : vector<2x4xf32> to vector<1x2x4xf32>
    %692 = vector.shape_cast %603 : vector<2x4xf32> to vector<1x2x4xf32>
    %693 = vector.shape_cast %631 : vector<2x4xf32> to vector<1x2x4xf32>
    %694 = vector.shape_cast %659 : vector<2x4xf32> to vector<1x2x4xf32>
    %695 = vector.shape_cast %687 : vector<2x4xf32> to vector<1x2x4xf32>
    %696 = tpu.concatenate %688, %689, %690, %691, %692, %693, %694, %695 in 0 : vector<1x2x4xf32>, vector<1x2x4xf32>, vector<1x2x4xf32>, vector<1x2x4xf32>, vector<1x2x4xf32>, vector<1x2x4xf32>, vector<1x2x4xf32>, vector<1x2x4xf32> -> vector<8x2x4xf32>
    %c0_218 = arith.constant 0 : index
    %c0_219 = arith.constant 0 : index
    %c0_220 = arith.constant 0 : index
    %697 = vector.load %arg30[%c0_218, %c0_219, %c0_220] : memref<8x2x4xf32, #tpu.memory_space<vmem>>, vector<8x2x4xf32>
    tpu.vector_store %arg30[%c0_218, %c0_219, %c0_220], %696 {strides = array<i32>} : memref<8x2x4xf32, #tpu.memory_space<vmem>>, vector<8x2x4xf32>,
    return
  }
}

</mosaic_0001>

<llo_original>
// kernel: stdrnn_forward.1
$region0: #{stdrnn_forward.1}
  #allocation0 [shape = 'u32[]', space=smem, size = 0x4, offset = 0x4, fixed_abs, tag = 'smem constant byte address 0x4 - core index']
  #allocation1 [shape = 'u32[144,128]{1,0:T(1,128)}', space=vmem, size = 0x12000, scoped, tag = 'internal scratch']
  %s0 = inlined_call_operand.smem [shape: u32[31], index: -1, kind: input, shape index: {}]
  %s1 = sld [smem:[%s0]]
  %s2 = scalar_lea.smem %s0, 1
  %s3 = sld [smem:[%s2]]
  %s4 = scalar_lea.smem %s0, 2
  %s5 = sld [smem:[%s4]]
  %s6 = scalar_lea.smem %s0, 3
  %s7 = sld [smem:[%s6]]
  %s8 = scalar_lea.smem %s0, 4
  %s9 = sld [smem:[%s8]]
  %s10 = scalar_lea.smem %s0, 5
  %s11 = sld [smem:[%s10]]
  %s12 = scalar_lea.smem %s0, 6
  %s13 = sld [smem:[%s12]]
  %s14 = scalar_lea.smem %s0, 7
  %s15 = sld [smem:[%s14]]
  %s16 = scalar_lea.smem %s0, 8
  %s17 = sld [smem:[%s16]]
  %s18 = scalar_lea.smem %s0, 9
  %s19 = sld [smem:[%s18]]
  %s20 = scalar_lea.smem %s0, 10
  %s21 = sld [smem:[%s20]]
  %s22 = scalar_lea.smem %s0, 11
  %s23 = sld [smem:[%s22]]
  %s24 = scalar_lea.smem %s0, 12
  %s25 = sld [smem:[%s24]]
  %s26 = scalar_lea.smem %s0, 13
  %s27 = sld [smem:[%s26]]
  %s28 = scalar_lea.smem %s0, 14
  %s29 = sld [smem:[%s28]]
  %s30 = scalar_lea.smem %s0, 15
  %s31 = sld [smem:[%s30]]
  %s32 = scalar_lea.smem %s0, 16
  %s33 = sld [smem:[%s32]]
  %s34 = scalar_lea.smem %s0, 17
  %s35 = sld [smem:[%s34]]
  %s36 = scalar_lea.smem %s0, 18
  %s37 = sld [smem:[%s36]]
  %s38 = scalar_lea.smem %s0, 19
  %s39 = sld [smem:[%s38]]
  %s40 = scalar_lea.smem %s0, 20
  %s41 = sld [smem:[%s40]]
  %s42 = scalar_lea.smem %s0, 21
  %s43 = sld [smem:[%s42]]
  %s44 = scalar_lea.smem %s0, 22
  %s45 = sld [smem:[%s44]]
  %s46 = scalar_lea.smem %s0, 23
  %s47 = sld [smem:[%s46]]
  %s48 = scalar_lea.smem %s0, 24
  %s49 = sld [smem:[%s48]]
  %s50 = scalar_lea.smem %s0, 25
  %s51 = sld [smem:[%s50]]
  %s52 = scalar_lea.smem %s0, 26
  %s53 = sld [smem:[%s52]]
  %s54 = scalar_lea.smem %s0, 27
  %s55 = sld [smem:[%s54]]
  %s56 = scalar_lea.smem %s0, 28
  %s57 = sld [smem:[%s56]]
  %s58 = scalar_lea.smem %s0, 29
  %s59 = sld [smem:[%s58]]
  %s60 = scalar_lea.smem %s0, 30
  %s61 = sld [smem:[%s60]]
  %s62 = sld [smem:[#allocation0]]
  $region130: #{stdrnn_forward.1} parent=0
    _
  %s64 = ssub.s32 1, %s62
  %s65 = scalar_select 0, %s64, %s62
  // Predicated region
  $region2: #{stdrnn_forward.1} parent=0 // pred_check
    _
  $region3: #{stdrnn_forward.1} parent=0 // pred_check_branch
    %67 = sbr.rel (0) target = $region5
  $region4: #{stdrnn_forward.1} parent=0 // pred_region
    _
  $region5: #{stdrnn_forward.1} parent=0 // pred_fallthru
    _
  // Predicated region
  $region6: #{stdrnn_forward.1} parent=0 // pred_check
    _
  $region7: #{stdrnn_forward.1} parent=0 // pred_check_branch
    %69 = sbr.rel (0) target = $region9
  $region8: #{stdrnn_forward.1} parent=0 // pred_region
    _
  $region9: #{stdrnn_forward.1} parent=0 // pred_fallthru
    _
  // Predicated region
  $region10: #{stdrnn_forward.1} parent=0 // pred_check
    _
  $region11: #{stdrnn_forward.1} parent=0 // pred_check_branch
    %71 = sbr.rel (0) target = $region13
  $region12: #{stdrnn_forward.1} parent=0 // pred_region
    _
  $region13: #{stdrnn_forward.1} parent=0 // pred_fallthru
    _
  // Predicated region
  $region14: #{stdrnn_forward.1} parent=0 // pred_check
    _
  $region15: #{stdrnn_forward.1} parent=0 // pred_check_branch
    %73 = sbr.rel (0) target = $region17
  $region16: #{stdrnn_forward.1} parent=0 // pred_region
    _
  $region17: #{stdrnn_forward.1} parent=0 // pred_fallthru
    _
  // Predicated region
  $region18: #{stdrnn_forward.1} parent=0 // pred_check
    _
  $region19: #{stdrnn_forward.1} parent=0 // pred_check_branch
    %75 = sbr.rel (0) target = $region21
  $region20: #{stdrnn_forward.1} parent=0 // pred_region
    _
  $region21: #{stdrnn_forward.1} parent=0 // pred_fallthru
    _
  // Predicated region
  $region22: #{stdrnn_forward.1} parent=0 // pred_check
    _
  $region23: #{stdrnn_forward.1} parent=0 // pred_check_branch
    %77 = sbr.rel (0) target = $region25
  $region24: #{stdrnn_forward.1} parent=0 // pred_region
    _
  $region25: #{stdrnn_forward.1} parent=0 // pred_fallthru
    _
  // Predicated region
  $region26: #{stdrnn_forward.1} parent=0 // pred_check
    _
  $region27: #{stdrnn_forward.1} parent=0 // pred_check_branch
    %79 = sbr.rel (0) target = $region29
  $region28: #{stdrnn_forward.1} parent=0 // pred_region
    _
  $region29: #{stdrnn_forward.1} parent=0 // pred_fallthru
    _
  // Predicated region
  $region30: #{stdrnn_forward.1} parent=0 // pred_check
    _
  $region31: #{stdrnn_forward.1} parent=0 // pred_check_branch
    %81 = sbr.rel (0) target = $region33
  $region32: #{stdrnn_forward.1} parent=0 // pred_region
    _
  $region33: #{stdrnn_forward.1} parent=0 // pred_fallthru
    _
  // Predicated region
  $region34: #{stdrnn_forward.1} parent=0 // pred_check
    _
  $region35: #{stdrnn_forward.1} parent=0 // pred_check_branch
    %83 = sbr.rel (0) target = $region37
  $region36: #{stdrnn_forward.1} parent=0 // pred_region
    _
  $region37: #{stdrnn_forward.1} parent=0 // pred_fallthru
    _
  // Predicated region
  $region38: #{stdrnn_forward.1} parent=0 // pred_check
    _
  $region39: #{stdrnn_forward.1} parent=0 // pred_check_branch
    %85 = sbr.rel (0) target = $region41
  $region40: #{stdrnn_forward.1} parent=0 // pred_region
    _
  $region41: #{stdrnn_forward.1} parent=0 // pred_fallthru
    _
  // Predicated region
  $region42: #{stdrnn_forward.1} parent=0 // pred_check
    _
  $region43: #{stdrnn_forward.1} parent=0 // pred_check_branch
    %87 = sbr.rel (0) target = $region45
  $region44: #{stdrnn_forward.1} parent=0 // pred_region
    _
  $region45: #{stdrnn_forward.1} parent=0 // pred_fallthru
    _
  // Predicated region
  $region46: #{stdrnn_forward.1} parent=0 // pred_check
    _
  $region47: #{stdrnn_forward.1} parent=0 // pred_check_branch
    %89 = sbr.rel (0) target = $region49
  $region48: #{stdrnn_forward.1} parent=0 // pred_region
    _
  $region49: #{stdrnn_forward.1} parent=0 // pred_fallthru
    _
  // Predicated region
  $region50: #{stdrnn_forward.1} parent=0 // pred_check
    _
  $region51: #{stdrnn_forward.1} parent=0 // pred_check_branch
    %91 = sbr.rel (0) target = $region53
  $region52: #{stdrnn_forward.1} parent=0 // pred_region
    _
  $region53: #{stdrnn_forward.1} parent=0 // pred_fallthru
    _
  // Predicated region
  $region54: #{stdrnn_forward.1} parent=0 // pred_check
    _
  $region55: #{stdrnn_forward.1} parent=0 // pred_check_branch
    %93 = sbr.rel (0) target = $region57
  $region56: #{stdrnn_forward.1} parent=0 // pred_region
    _
  $region57: #{stdrnn_forward.1} parent=0 // pred_fallthru
    _
  // Predicated region
  $region58: #{stdrnn_forward.1} parent=0 // pred_check
    _
  $region59: #{stdrnn_forward.1} parent=0 // pred_check_branch
    %95 = sbr.rel (0) target = $region61
  $region60: #{stdrnn_forward.1} parent=0 // pred_region
    _
  $region61: #{stdrnn_forward.1} parent=0 // pred_fallthru
    _
  // Predicated region
  $region62: #{stdrnn_forward.1} parent=0 // pred_check
    _
  $region63: #{stdrnn_forward.1} parent=0 // pred_check_branch
    %97 = sbr.rel (0) target = $region65
  $region64: #{stdrnn_forward.1} parent=0 // pred_region
    _
  $region65: #{stdrnn_forward.1} parent=0 // pred_fallthru
    _
  // Predicated region
  $region66: #{stdrnn_forward.1} parent=0 // pred_check
    _
  $region67: #{stdrnn_forward.1} parent=0 // pred_check_branch
    %99 = sbr.rel (0) target = $region69
  $region68: #{stdrnn_forward.1} parent=0 // pred_region
    _
  $region69: #{stdrnn_forward.1} parent=0 // pred_fallthru
    _
  // Predicated region
  $region70: #{stdrnn_forward.1} parent=0 // pred_check
    _
  $region71: #{stdrnn_forward.1} parent=0 // pred_check_branch
    %101 = sbr.rel (0) target = $region73
  $region72: #{stdrnn_forward.1} parent=0 // pred_region
    _
  $region73: #{stdrnn_forward.1} parent=0 // pred_fallthru
    _
  // Predicated region
  $region74: #{stdrnn_forward.1} parent=0 // pred_check
    _
  $region75: #{stdrnn_forward.1} parent=0 // pred_check_branch
    %103 = sbr.rel (0) target = $region77
  $region76: #{stdrnn_forward.1} parent=0 // pred_region
    _
  $region77: #{stdrnn_forward.1} parent=0 // pred_fallthru
    _
  // Predicated region
  $region78: #{stdrnn_forward.1} parent=0 // pred_check
    _
  $region79: #{stdrnn_forward.1} parent=0 // pred_check_branch
    %105 = sbr.rel (0) target = $region81
  $region80: #{stdrnn_forward.1} parent=0 // pred_region
    _
  $region81: #{stdrnn_forward.1} parent=0 // pred_fallthru
    _
  // Predicated region
  $region82: #{stdrnn_forward.1} parent=0 // pred_check
    _
  $region83: #{stdrnn_forward.1} parent=0 // pred_check_branch
    %107 = sbr.rel (0) target = $region85
  $region84: #{stdrnn_forward.1} parent=0 // pred_region
    _
  $region85: #{stdrnn_forward.1} parent=0 // pred_fallthru
    _
  // Predicated region
  $region86: #{stdrnn_forward.1} parent=0 // pred_check
    _
  $region87: #{stdrnn_forward.1} parent=0 // pred_check_branch
    %109 = sbr.rel (0) target = $region89
  $region88: #{stdrnn_forward.1} parent=0 // pred_region
    _
  $region89: #{stdrnn_forward.1} parent=0 // pred_fallthru
    _
  // Predicated region
  $region90: #{stdrnn_forward.1} parent=0 // pred_check
    _
  $region91: #{stdrnn_forward.1} parent=0 // pred_check_branch
    %111 = sbr.rel (0) target = $region93
  $region92: #{stdrnn_forward.1} parent=0 // pred_region
    _
  $region93: #{stdrnn_forward.1} parent=0 // pred_fallthru
    _
  // Predicated region
  $region94: #{stdrnn_forward.1} parent=0 // pred_check
    _
  $region95: #{stdrnn_forward.1} parent=0 // pred_check_branch
    %113 = sbr.rel (0) target = $region97
  $region96: #{stdrnn_forward.1} parent=0 // pred_region
    _
  $region97: #{stdrnn_forward.1} parent=0 // pred_fallthru
    _
  // Predicated region
  $region98: #{stdrnn_forward.1} parent=0 // pred_check
    _
  $region99: #{stdrnn_forward.1} parent=0 // pred_check_branch
    %115 = sbr.rel (0) target = $region101
  $region100: #{stdrnn_forward.1} parent=0 // pred_region
    _
  $region101: #{stdrnn_forward.1} parent=0 // pred_fallthru
    _
  // Predicated region
  $region102: #{stdrnn_forward.1} parent=0 // pred_check
    _
  $region103: #{stdrnn_forward.1} parent=0 // pred_check_branch
    %117 = sbr.rel (0) target = $region105
  $region104: #{stdrnn_forward.1} parent=0 // pred_region
    _
  $region105: #{stdrnn_forward.1} parent=0 // pred_fallthru
    _
  // Predicated region
  $region106: #{stdrnn_forward.1} parent=0 // pred_check
    _
  $region107: #{stdrnn_forward.1} parent=0 // pred_check_branch
    %119 = sbr.rel (0) target = $region109
  $region108: #{stdrnn_forward.1} parent=0 // pred_region
    _
  $region109: #{stdrnn_forward.1} parent=0 // pred_fallthru
    _
  // Predicated region
  $region110: #{stdrnn_forward.1} parent=0 // pred_check
    _
  $region111: #{stdrnn_forward.1} parent=0 // pred_check_branch
    %121 = sbr.rel (0) target = $region113
  $region112: #{stdrnn_forward.1} parent=0 // pred_region
    _
  $region113: #{stdrnn_forward.1} parent=0 // pred_fallthru
    _
  // Predicated region
  $region114: #{stdrnn_forward.1} parent=0 // pred_check
    _
  $region115: #{stdrnn_forward.1} parent=0 // pred_check_branch
    %123 = sbr.rel (0) target = $region117
  $region116: #{stdrnn_forward.1} parent=0 // pred_region
    _
  $region117: #{stdrnn_forward.1} parent=0 // pred_fallthru
    _
  // Predicated region
  $region118: #{stdrnn_forward.1} parent=0 // pred_check
    _
  $region119: #{stdrnn_forward.1} parent=0 // pred_check_branch
    %125 = sbr.rel (0) target = $region121
  $region120: #{stdrnn_forward.1} parent=0 // pred_region
    _
  $region121: #{stdrnn_forward.1} parent=0 // pred_fallthru
    _
  %v126 = vld [vmem:[%s1] sm:$0xff]
  %v127 = vld [vmem:[%s1 + $0x8] sm:$0xff]
  %v128 = vld [vmem:[%s1 + $0x10] sm:$0xff]
  %v129 = vld [vmem:[%s1 + $0x18] sm:$0x3f]
  %v130 = vld [vmem:[%s3] sm:$0x3]
  %v131 = vld [vmem:[%s11] sm:$0xff]
  %v132 = vld [vmem:[%s11 + $0x8] sm:$0xff]
  %v133 = vld [vmem:[%s11 + $0x10] sm:$0xff]
  %v134 = vld [vmem:[%s11 + $0x18] sm:$0xff]
  %v135 = vld [vmem:[%s11 + $0x20] sm:$0xff]
  %v136 = vld [vmem:[%s11 + $0x28] sm:$0xff]
  %v137 = vld [vmem:[%s11 + $0x30] sm:$0xff]
  %v138 = vld [vmem:[%s11 + $0x38] sm:$0xff]
  %v139 = vld [vmem:[%s13] sm:$0xff]
  %v140 = vld [vmem:[%s13 + $0x8] sm:$0xff]
  %v141 = vld [vmem:[%s13 + $0x10] sm:$0xff]
  %v142 = vld [vmem:[%s13 + $0x18] sm:$0xff]
  %v143 = vld [vmem:[%s13 + $0x20] sm:$0xff]
  %v144 = vld [vmem:[%s13 + $0x28] sm:$0xff]
  %v145 = vld [vmem:[%s13 + $0x30] sm:$0xff]
  %v146 = vld [vmem:[%s13 + $0x38] sm:$0xff]
  %v147 = vld [vmem:[%s15] sm:$0xff]
  %v148 = vld [vmem:[%s15 + $0x8] sm:$0xff]
  %v149 = vld [vmem:[%s15 + $0x10] sm:$0xff]
  %v150 = vld [vmem:[%s15 + $0x18] sm:$0xff]
  %v151 = vld [vmem:[%s15 + $0x20] sm:$0xff]
  %v152 = vld [vmem:[%s15 + $0x28] sm:$0xff]
  %v153 = vld [vmem:[%s15 + $0x30] sm:$0xff]
  %v154 = vld [vmem:[%s15 + $0x38] sm:$0xff]
  %v155 = vld [vmem:[%s31] sm:$0xff]
  %v156 = vld [vmem:[%s31 + $0x8] sm:$0xff]
  %v157 = vld [vmem:[%s31 + $0x10] sm:$0xff]
  %v158 = vld [vmem:[%s31 + $0x18] sm:$0xff]
  %v159 = vld [vmem:[%s31 + $0x20] sm:$0xff]
  %v160 = vld [vmem:[%s31 + $0x28] sm:$0xff]
  %v161 = vld [vmem:[%s31 + $0x30] sm:$0xff]
  %v162 = vld [vmem:[%s31 + $0x38] sm:$0xff]
  %v163 = vld [vmem:[%s33] sm:$0xff]
  %v164 = vld [vmem:[%s33 + $0x8] sm:$0xff]
  %v165 = vld [vmem:[%s33 + $0x10] sm:$0xff]
  %v166 = vld [vmem:[%s33 + $0x18] sm:$0xff]
  %v167 = vld [vmem:[%s33 + $0x20] sm:$0xff]
  %v168 = vld [vmem:[%s33 + $0x28] sm:$0xff]
  %v169 = vld [vmem:[%s33 + $0x30] sm:$0xff]
  %v170 = vld [vmem:[%s33 + $0x38] sm:$0xff]
  %v171 = vld [vmem:[%s35] sm:$0xff]
  %v172 = vld [vmem:[%s35 + $0x8] sm:$0xff]
  %v173 = vld [vmem:[%s35 + $0x10] sm:$0xff]
  %v174 = vld [vmem:[%s35 + $0x18] sm:$0xff]
  %v175 = vld [vmem:[%s35 + $0x20] sm:$0xff]
  %v176 = vld [vmem:[%s35 + $0x28] sm:$0xff]
  %v177 = vld [vmem:[%s35 + $0x30] sm:$0xff]
  %v178 = vld [vmem:[%s35 + $0x38] sm:$0xff]
  %v179 = vld [vmem:[%s45] sm:$0xff]
  %v180 = vld [vmem:[%s45 + $0x8] sm:$0xff]
  %v181 = vld [vmem:[%s45 + $0x10] sm:$0xff]
  %v182 = vld [vmem:[%s45 + $0x18] sm:$0xff]
  %v183 = vld [vmem:[%s45 + $0x20] sm:$0xff]
  %v184 = vld [vmem:[%s45 + $0x28] sm:$0xff]
  %v185 = vld [vmem:[%s45 + $0x30] sm:$0xff]
  %v186 = vld [vmem:[%s45 + $0x38] sm:$0xff]
  %v187 = vld [vmem:[%s47] sm:$0xff]
  %v188 = vld [vmem:[%s47 + $0x8] sm:$0xff]
  %v189 = vld [vmem:[%s47 + $0x10] sm:$0xff]
  %v190 = vld [vmem:[%s47 + $0x18] sm:$0xff]
  %v191 = vld [vmem:[%s47 + $0x20] sm:$0xff]
  %v192 = vld [vmem:[%s47 + $0x28] sm:$0xff]
  %v193 = vld [vmem:[%s47 + $0x30] sm:$0xff]
  %v194 = vld [vmem:[%s47 + $0x38] sm:$0xff]
  %v195 = vld [vmem:[%s49] sm:$0xff]
  %v196 = vld [vmem:[%s49 + $0x8] sm:$0xff]
  %v197 = vld [vmem:[%s49 + $0x10] sm:$0xff]
  %v198 = vld [vmem:[%s49 + $0x18] sm:$0xff]
  %v199 = vld [vmem:[%s49 + $0x20] sm:$0xff]
  %v200 = vld [vmem:[%s49 + $0x28] sm:$0xff]
  %v201 = vld [vmem:[%s49 + $0x30] sm:$0xff]
  %v202 = vld [vmem:[%s49 + $0x38] sm:$0xff]
  %v203 = vld [vmem:[%s57] sm:$0xff]
  %v204 = vld [vmem:[%s57 + $0x8] sm:$0xff]
  %v205 = vld [vmem:[%s57 + $0x10] sm:$0xff]
  %v206 = vld [vmem:[%s57 + $0x18] sm:$0xff]
  %v207 = vld [vmem:[%s57 + $0x20] sm:$0xff]
  %v208 = vld [vmem:[%s57 + $0x28] sm:$0xff]
  %v209 = vld [vmem:[%s57 + $0x30] sm:$0xff]
  %v210 = vld [vmem:[%s57 + $0x38] sm:$0xff]
  %v211 = vld [vmem:[%s23] sm:$0x1]
  %v213 = vlaneseq
  %v214 = vshrl.u32 %v213, 7
  %v215 = vsub.s32 0, %v214
  %v216 = vrot.slane %v211, %v215
  %v218 = vld [vmem:[%s43] sm:$0x1]
  %v220 = vlaneseq
  %v221 = vshrl.u32 %v220, 7
  %v222 = vsub.s32 0, %v221
  %v223 = vrot.slane %v218, %v222
  %v225 = vld [vmem:[%s51] sm:$0x1]
  %v227 = vlaneseq
  %v228 = vshrl.u32 %v227, 7
  %v229 = vsub.s32 0, %v228
  %v230 = vrot.slane %v225, %v229
  %v232 = vld [vmem:[%s53] sm:$0x1]
  %v234 = vlaneseq
  %v235 = vshrl.u32 %v234, 7
  %v236 = vsub.s32 0, %v235
  %v237 = vrot.slane %v232, %v236
  %v239 = vld [vmem:[%s55] sm:$0x1]
  %v241 = vlaneseq
  %v242 = vshrl.u32 %v241, 7
  %v243 = vsub.s32 0, %v242
  %v244 = vrot.slane %v239, %v243
  %v246 = vld [vmem:[%s59] sm:$0x1]
  %v248 = vlaneseq
  %v249 = vshrl.u32 %v248, 7
  %v250 = vsub.s32 0, %v249
  %v251 = vrot.slane %v246, %v250
  %v253 = vld [vmem:[%s5] sm:$0xff]
  %v254 = vld [vmem:[%s17] sm:$0x1]
  %v256 = vlaneseq
  %v257 = vshrl.u32 %v256, 7
  %v258 = vsub.s32 0, %v257
  %v259 = vrot.slane %v254, %v258
  %vm261 = vcmask 64512
  %v263 = vsel %vm261, %v126, 0
  %v266 = vsel %vm261, %v127, 0
  %v269 = vsel %vm261, %v128, 0
  %v272 = vsel %vm261, %v129, 0
  %274 = vmatprep.subr.mxu0 0.0
  %275 = vmatpush1.msra.mxu0 %v253
  %276 = vmatprep.subr.mxu0 0.0
  %277 = vmatpush1.msra.mxu0 0.0
  %278 = vmatprep.subr.mxu0 0.0
  %279 = vmatpush1.msra.mxu0 0.0
  %280 = vmatprep.subr.mxu0 0.0
  %281 = vmatpush1.msra.mxu0 0.0
  %282 = vmatprep.subr.mxu0 0.0
  %283 = vmatpush1.msra.mxu0 0.0
  %284 = vmatprep.subr.mxu0 0.0
  %285 = vmatpush1.msra.mxu0 0.0
  %286 = vmatprep.subr.mxu0 0.0
  %287 = vmatpush1.msra.mxu0 0.0
  %288 = vmatprep.subr.mxu0 0.0
  %289 = vmatpush1.msra.mxu0 0.0
  %290 = vmatprep.subr.mxu0 0.0
  %291 = vmatpush1.msra.mxu0 0.0
  %292 = vmatprep.subr.mxu0 0.0
  %293 = vmatpush1.msra.mxu0 0.0
  %294 = vmatprep.subr.mxu0 0.0
  %295 = vmatpush1.msra.mxu0 0.0
  %296 = vmatprep.subr.mxu0 0.0
  %297 = vmatpush1.msra.mxu0 0.0
  %298 = vmatprep.subr.mxu0 0.0
  %299 = vmatpush1.msra.mxu0 0.0
  %300 = vmatprep.subr.mxu0 0.0
  %301 = vmatpush1.msra.mxu0 0.0
  %302 = vmatprep.subr.mxu0 0.0
  %303 = vmatpush1.msra.mxu0 0.0
  %304 = vmatprep.subr.mxu0 0.0
  %305 = vmatpush1.msra.mxu0 0.0
  %306 = vmatprep.subr.mxu0 0.0
  %307 = vmatpush1.msra.mxu0 0.0
  %308 = vmatprep.subr.mxu0 0.0
  %309 = vmatpush1.msra.mxu0 0.0
  %310 = vmatprep.subr.mxu0 0.0
  %311 = vmatpush1.msra.mxu0 0.0
  %312 = vmatprep.subr.mxu0 0.0
  %313 = vmatpush1.msra.mxu0 0.0
  %314 = vmatprep.subr.mxu0 0.0
  %315 = vmatpush1.msra.mxu0 0.0
  %316 = vmatprep.subr.mxu0 0.0
  %317 = vmatpush1.msra.mxu0 0.0
  %318 = vmatprep.subr.mxu0 0.0
  %319 = vmatpush1.msra.mxu0 0.0
  %320 = vmatprep.subr.mxu0 0.0
  %321 = vmatpush1.msra.mxu0 0.0
  %322 = vmatprep.subr.mxu0 0.0
  %323 = vmatpush1.msra.mxu0 0.0
  %324 = vmatprep.subr.mxu0 0.0
  %325 = vmatpush1.msra.mxu0 0.0
  %326 = vmatprep.subr.mxu0 0.0
  %327 = vmatpush1.msra.mxu0 0.0
  %328 = vmatprep.subr.mxu0 0.0
  %329 = vmatpush1.msra.mxu0 0.0
  %330 = vmatprep.subr.mxu0 0.0
  %331 = vmatpush1.msra.mxu0 0.0
  %332 = vmatprep.subr.mxu0 0.0
  %333 = vmatpush1.msra.mxu0 0.0
  %334 = vmatprep.subr.mxu0 0.0
  %335 = vmatpush1.msra.mxu0 0.0
  %336 = vmatprep.subr.mxu0 0.0
  %337 = vmatpush1.msra.mxu0 0.0
  %338 = vmatprep.mubr.f32.mxu0 0.0
  %339 = vmatmul.mubr.f32.gmra.mrb[0].mxu0 %v263
  %v340 = vpop.f32.mrb[0].mxu0
  %v341 = vadd.f32 %v259, %v340
  %v342 = vpop.f32.mrb[0].mxu0
  %343 = vmatprep.mubr.f32.mxu0 0.0
  %344 = vmatmul.mubr.f32.gmra.mrb[0].mxu0 %v266
  %v345 = vpop.f32.mrb[0].mxu0
  %v346 = vadd.f32 %v259, %v345
  %v347 = vpop.f32.mrb[0].mxu0
  %348 = vmatprep.mubr.f32.mxu0 0.0
  %349 = vmatmul.mubr.f32.gmra.mrb[0].mxu0 %v269
  %v350 = vpop.f32.mrb[0].mxu0
  %v351 = vadd.f32 %v259, %v350
  %v352 = vpop.f32.mrb[0].mxu0
  %353 = vmatprep.mubr.f32.mxu0 0.0
  %354 = vmatmul.mubr.f32.gmra.mrb[0].mxu0 %v272
  %v355 = vpop.f32.mrb[0].mxu0
  %v356 = vadd.f32 %v259, %v355
  %v357 = vpop.f32.mrb[0].mxu0
  %358 = vdwg.mxu0
  %v359 = vld [vmem:[%s7] sm:$0xff]
  %v360 = vld [vmem:[%s19] sm:$0x1]
  %v362 = vlaneseq
  %v363 = vshrl.u32 %v362, 7
  %v364 = vsub.s32 0, %v363
  %v365 = vrot.slane %v360, %v364
  %367 = vmatprep.subr.mxu0 0.0
  %368 = vmatpush1.msra.mxu0 %v359
  %369 = vmatprep.subr.mxu0 0.0
  %370 = vmatpush1.msra.mxu0 0.0
  %371 = vmatprep.subr.mxu0 0.0
  %372 = vmatpush1.msra.mxu0 0.0
  %373 = vmatprep.subr.mxu0 0.0
  %374 = vmatpush1.msra.mxu0 0.0
  %375 = vmatprep.subr.mxu0 0.0
  %376 = vmatpush1.msra.mxu0 0.0
  %377 = vmatprep.subr.mxu0 0.0
  %378 = vmatpush1.msra.mxu0 0.0
  %379 = vmatprep.subr.mxu0 0.0
  %380 = vmatpush1.msra.mxu0 0.0
  %381 = vmatprep.subr.mxu0 0.0
  %382 = vmatpush1.msra.mxu0 0.0
  %383 = vmatprep.subr.mxu0 0.0
  %384 = vmatpush1.msra.mxu0 0.0
  %385 = vmatprep.subr.mxu0 0.0
  %386 = vmatpush1.msra.mxu0 0.0
  %387 = vmatprep.subr.mxu0 0.0
  %388 = vmatpush1.msra.mxu0 0.0
  %389 = vmatprep.subr.mxu0 0.0
  %390 = vmatpush1.msra.mxu0 0.0
  %391 = vmatprep.subr.mxu0 0.0
  %392 = vmatpush1.msra.mxu0 0.0
  %393 = vmatprep.subr.mxu0 0.0
  %394 = vmatpush1.msra.mxu0 0.0
  %395 = vmatprep.subr.mxu0 0.0
  %396 = vmatpush1.msra.mxu0 0.0
  %397 = vmatprep.subr.mxu0 0.0
  %398 = vmatpush1.msra.mxu0 0.0
  %399 = vmatprep.subr.mxu0 0.0
  %400 = vmatpush1.msra.mxu0 0.0
  %401 = vmatprep.subr.mxu0 0.0
  %402 = vmatpush1.msra.mxu0 0.0
  %403 = vmatprep.subr.mxu0 0.0
  %404 = vmatpush1.msra.mxu0 0.0
  %405 = vmatprep.subr.mxu0 0.0
  %406 = vmatpush1.msra.mxu0 0.0
  %407 = vmatprep.subr.mxu0 0.0
  %408 = vmatpush1.msra.mxu0 0.0
  %409 = vmatprep.subr.mxu0 0.0
  %410 = vmatpush1.msra.mxu0 0.0
  %411 = vmatprep.subr.mxu0 0.0
  %412 = vmatpush1.msra.mxu0 0.0
  %413 = vmatprep.subr.mxu0 0.0
  %414 = vmatpush1.msra.mxu0 0.0
  %415 = vmatprep.subr.mxu0 0.0
  %416 = vmatpush1.msra.mxu0 0.0
  %417 = vmatprep.subr.mxu0 0.0
  %418 = vmatpush1.msra.mxu0 0.0
  %419 = vmatprep.subr.mxu0 0.0
  %420 = vmatpush1.msra.mxu0 0.0
  %421 = vmatprep.subr.mxu0 0.0
  %422 = vmatpush1.msra.mxu0 0.0
  %423 = vmatprep.subr.mxu0 0.0
  %424 = vmatpush1.msra.mxu0 0.0
  %425 = vmatprep.subr.mxu0 0.0
  %426 = vmatpush1.msra.mxu0 0.0
  %427 = vmatprep.subr.mxu0 0.0
  %428 = vmatpush1.msra.mxu0 0.0
  %429 = vmatprep.subr.mxu0 0.0
  %430 = vmatpush1.msra.mxu0 0.0
  %431 = vmatprep.mubr.f32.mxu0 0.0
  %432 = vmatmul.mubr.f32.gmra.mrb[0].mxu0 %v263
  %v433 = vpop.f32.mrb[0].mxu0
  %v434 = vadd.f32 %v365, %v433
  %v435 = vpop.f32.mrb[0].mxu0
  %436 = vmatprep.mubr.f32.mxu0 0.0
  %437 = vmatmul.mubr.f32.gmra.mrb[0].mxu0 %v266
  %v438 = vpop.f32.mrb[0].mxu0
  %v439 = vadd.f32 %v365, %v438
  %v440 = vpop.f32.mrb[0].mxu0
  %441 = vmatprep.mubr.f32.mxu0 0.0
  %442 = vmatmul.mubr.f32.gmra.mrb[0].mxu0 %v269
  %v443 = vpop.f32.mrb[0].mxu0
  %v444 = vadd.f32 %v365, %v443
  %v445 = vpop.f32.mrb[0].mxu0
  %446 = vmatprep.mubr.f32.mxu0 0.0
  %447 = vmatmul.mubr.f32.gmra.mrb[0].mxu0 %v272
  %v448 = vpop.f32.mrb[0].mxu0
  %v449 = vadd.f32 %v365, %v448
  %v450 = vpop.f32.mrb[0].mxu0
  %451 = vdwg.mxu0
  %v452 = vld [vmem:[%s9] sm:$0xff]
  %v453 = vld [vmem:[%s21] sm:$0x1]
  %v455 = vlaneseq
  %v456 = vshrl.u32 %v455, 7
  %v457 = vsub.s32 0, %v456
  %v458 = vrot.slane %v453, %v457
  %460 = vmatprep.subr.mxu0 0.0
  %461 = vmatpush1.msra.mxu0 %v452
  %462 = vmatprep.subr.mxu0 0.0
  %463 = vmatpush1.msra.mxu0 0.0
  %464 = vmatprep.subr.mxu0 0.0
  %465 = vmatpush1.msra.mxu0 0.0
  %466 = vmatprep.subr.mxu0 0.0
  %467 = vmatpush1.msra.mxu0 0.0
  %468 = vmatprep.subr.mxu0 0.0
  %469 = vmatpush1.msra.mxu0 0.0
  %470 = vmatprep.subr.mxu0 0.0
  %471 = vmatpush1.msra.mxu0 0.0
  %472 = vmatprep.subr.mxu0 0.0
  %473 = vmatpush1.msra.mxu0 0.0
  %474 = vmatprep.subr.mxu0 0.0
  %475 = vmatpush1.msra.mxu0 0.0
  %476 = vmatprep.subr.mxu0 0.0
  %477 = vmatpush1.msra.mxu0 0.0
  %478 = vmatprep.subr.mxu0 0.0
  %479 = vmatpush1.msra.mxu0 0.0
  %480 = vmatprep.subr.mxu0 0.0
  %481 = vmatpush1.msra.mxu0 0.0
  %482 = vmatprep.subr.mxu0 0.0
  %483 = vmatpush1.msra.mxu0 0.0
  %484 = vmatprep.subr.mxu0 0.0
  %485 = vmatpush1.msra.mxu0 0.0
  %486 = vmatprep.subr.mxu0 0.0
  %487 = vmatpush1.msra.mxu0 0.0
  %488 = vmatprep.subr.mxu0 0.0
  %489 = vmatpush1.msra.mxu0 0.0
  %490 = vmatprep.subr.mxu0 0.0
  %491 = vmatpush1.msra.mxu0 0.0
  %492 = vmatprep.subr.mxu0 0.0
  %493 = vmatpush1.msra.mxu0 0.0
  %494 = vmatprep.subr.mxu0 0.0
  %495 = vmatpush1.msra.mxu0 0.0
  %496 = vmatprep.subr.mxu0 0.0
  %497 = vmatpush1.msra.mxu0 0.0
  %498 = vmatprep.subr.mxu0 0.0
  %499 = vmatpush1.msra.mxu0 0.0
  %500 = vmatprep.subr.mxu0 0.0
  %501 = vmatpush1.msra.mxu0 0.0
  %502 = vmatprep.subr.mxu0 0.0
  %503 = vmatpush1.msra.mxu0 0.0
  %504 = vmatprep.subr.mxu0 0.0
  %505 = vmatpush1.msra.mxu0 0.0
  %506 = vmatprep.subr.mxu0 0.0
  %507 = vmatpush1.msra.mxu0 0.0
  %508 = vmatprep.subr.mxu0 0.0
  %509 = vmatpush1.msra.mxu0 0.0
  %510 = vmatprep.subr.mxu0 0.0
  %511 = vmatpush1.msra.mxu0 0.0
  %512 = vmatprep.subr.mxu0 0.0
  %513 = vmatpush1.msra.mxu0 0.0
  %514 = vmatprep.subr.mxu0 0.0
  %515 = vmatpush1.msra.mxu0 0.0
  %516 = vmatprep.subr.mxu0 0.0
  %517 = vmatpush1.msra.mxu0 0.0
  %518 = vmatprep.subr.mxu0 0.0
  %519 = vmatpush1.msra.mxu0 0.0
  %520 = vmatprep.subr.mxu0 0.0
  %521 = vmatpush1.msra.mxu0 0.0
  %522 = vmatprep.subr.mxu0 0.0
  %523 = vmatpush1.msra.mxu0 0.0
  %524 = vmatprep.mubr.f32.mxu0 0.0
  %525 = vmatmul.mubr.f32.gmra.mrb[0].mxu0 %v263
  %v526 = vpop.f32.mrb[0].mxu0
  %v527 = vadd.f32 %v458, %v526
  %v528 = vpop.f32.mrb[0].mxu0
  %529 = vmatprep.mubr.f32.mxu0 0.0
  %530 = vmatmul.mubr.f32.gmra.mrb[0].mxu0 %v266
  %v531 = vpop.f32.mrb[0].mxu0
  %v532 = vadd.f32 %v458, %v531
  %v533 = vpop.f32.mrb[0].mxu0
  %534 = vmatprep.mubr.f32.mxu0 0.0
  %535 = vmatmul.mubr.f32.gmra.mrb[0].mxu0 %v269
  %v536 = vpop.f32.mrb[0].mxu0
  %v537 = vadd.f32 %v458, %v536
  %v538 = vpop.f32.mrb[0].mxu0
  %539 = vmatprep.mubr.f32.mxu0 0.0
  %540 = vmatmul.mubr.f32.gmra.mrb[0].mxu0 %v272
  %v541 = vpop.f32.mrb[0].mxu0
  %v542 = vadd.f32 %v458, %v541
  %v543 = vpop.f32.mrb[0].mxu0
  %544 = vdwg.mxu0
  %vm545 = vcmask 523264
  %v547 = vsel %vm545, 0.0, 0
  %549 = vmatprep.subr.mxu0 0.0
  %550 = vmatpush1.msra.mxu0 %v131
  %551 = vmatprep.subr.mxu0 0.0
  %552 = vmatpush1.msra.mxu0 %v132
  %553 = vmatprep.subr.mxu0 0.0
  %554 = vmatpush1.msra.mxu0 %v133
  %555 = vmatprep.subr.mxu0 0.0
  %556 = vmatpush1.msra.mxu0 %v134
  %557 = vmatprep.subr.mxu0 0.0
  %558 = vmatpush1.msra.mxu0 %v135
  %559 = vmatprep.subr.mxu0 0.0
  %560 = vmatpush1.msra.mxu0 %v136
  %561 = vmatprep.subr.mxu0 0.0
  %562 = vmatpush1.msra.mxu0 %v137
  %563 = vmatprep.subr.mxu0 0.0
  %564 = vmatpush1.msra.mxu0 %v138
  %565 = vmatprep.subr.mxu0 0.0
  %566 = vmatpush1.msra.mxu0 0.0
  %567 = vmatprep.subr.mxu0 0.0
  %568 = vmatpush1.msra.mxu0 0.0
  %569 = vmatprep.subr.mxu0 0.0
  %570 = vmatpush1.msra.mxu0 0.0
  %571 = vmatprep.subr.mxu0 0.0
  %572 = vmatpush1.msra.mxu0 0.0
  %573 = vmatprep.subr.mxu0 0.0
  %574 = vmatpush1.msra.mxu0 0.0
  %575 = vmatprep.subr.mxu0 0.0
  %576 = vmatpush1.msra.mxu0 0.0
  %577 = vmatprep.subr.mxu0 0.0
  %578 = vmatpush1.msra.mxu0 0.0
  %579 = vmatprep.subr.mxu0 0.0
  %580 = vmatpush1.msra.mxu0 0.0
  %581 = vmatprep.subr.mxu0 0.0
  %582 = vmatpush1.msra.mxu0 0.0
  %583 = vmatprep.subr.mxu0 0.0
  %584 = vmatpush1.msra.mxu0 0.0
  %585 = vmatprep.subr.mxu0 0.0
  %586 = vmatpush1.msra.mxu0 0.0
  %587 = vmatprep.subr.mxu0 0.0
  %588 = vmatpush1.msra.mxu0 0.0
  %589 = vmatprep.subr.mxu0 0.0
  %590 = vmatpush1.msra.mxu0 0.0
  %591 = vmatprep.subr.mxu0 0.0
  %592 = vmatpush1.msra.mxu0 0.0
  %593 = vmatprep.subr.mxu0 0.0
  %594 = vmatpush1.msra.mxu0 0.0
  %595 = vmatprep.subr.mxu0 0.0
  %596 = vmatpush1.msra.mxu0 0.0
  %597 = vmatprep.subr.mxu0 0.0
  %598 = vmatpush1.msra.mxu0 0.0
  %599 = vmatprep.subr.mxu0 0.0
  %600 = vmatpush1.msra.mxu0 0.0
  %601 = vmatprep.subr.mxu0 0.0
  %602 = vmatpush1.msra.mxu0 0.0
  %603 = vmatprep.subr.mxu0 0.0
  %604 = vmatpush1.msra.mxu0 0.0
  %605 = vmatprep.subr.mxu0 0.0
  %606 = vmatpush1.msra.mxu0 0.0
  %607 = vmatprep.subr.mxu0 0.0
  %608 = vmatpush1.msra.mxu0 0.0
  %609 = vmatprep.subr.mxu0 0.0
  %610 = vmatpush1.msra.mxu0 0.0
  %611 = vmatprep.subr.mxu0 0.0
  %612 = vmatpush1.msra.mxu0 0.0
  %613 = vmatprep.mubr.f32.mxu0 0.0
  %614 = vmatmul.mubr.f32.gmra.mrb[0].mxu0 %v547
  %v615 = vpop.f32.mrb[0].mxu0
  %v616 = vadd.f32 0.0, %v615
  %v617 = vpop.f32.mrb[0].mxu0
  %618 = vdwg.mxu0
  %v619 = vadd.f32 %v341, %v616
  %v620 = vxor.u32 %v619, 2147483648
  %v621 = vmul.f32 %v620, 1.442695
  %v622 = vpow.pop %v621
  %v623 = vadd.f32 %v622, 1.0
  %v624 = vrcp.pop %v623
  %v625 = vmul.f32 1.0, %v624
  %626 = vmatprep.subr.mxu0 0.0
  %627 = vmatpush1.msra.mxu0 %v139
  %628 = vmatprep.subr.mxu0 0.0
  %629 = vmatpush1.msra.mxu0 %v140
  %630 = vmatprep.subr.mxu0 0.0
  %631 = vmatpush1.msra.mxu0 %v141
  %632 = vmatprep.subr.mxu0 0.0
  %633 = vmatpush1.msra.mxu0 %v142
  %634 = vmatprep.subr.mxu0 0.0
  %635 = vmatpush1.msra.mxu0 %v143
  %636 = vmatprep.subr.mxu0 0.0
  %637 = vmatpush1.msra.mxu0 %v144
  %638 = vmatprep.subr.mxu0 0.0
  %639 = vmatpush1.msra.mxu0 %v145
  %640 = vmatprep.subr.mxu0 0.0
  %641 = vmatpush1.msra.mxu0 %v146
  %642 = vmatprep.subr.mxu0 0.0
  %643 = vmatpush1.msra.mxu0 0.0
  %644 = vmatprep.subr.mxu0 0.0
  %645 = vmatpush1.msra.mxu0 0.0
  %646 = vmatprep.subr.mxu0 0.0
  %647 = vmatpush1.msra.mxu0 0.0
  %648 = vmatprep.subr.mxu0 0.0
  %649 = vmatpush1.msra.mxu0 0.0
  %650 = vmatprep.subr.mxu0 0.0
  %651 = vmatpush1.msra.mxu0 0.0
  %652 = vmatprep.subr.mxu0 0.0
  %653 = vmatpush1.msra.mxu0 0.0
  %654 = vmatprep.subr.mxu0 0.0
  %655 = vmatpush1.msra.mxu0 0.0
  %656 = vmatprep.subr.mxu0 0.0
  %657 = vmatpush1.msra.mxu0 0.0
  %658 = vmatprep.subr.mxu0 0.0
  %659 = vmatpush1.msra.mxu0 0.0
  %660 = vmatprep.subr.mxu0 0.0
  %661 = vmatpush1.msra.mxu0 0.0
  %662 = vmatprep.subr.mxu0 0.0
  %663 = vmatpush1.msra.mxu0 0.0
  %664 = vmatprep.subr.mxu0 0.0
  %665 = vmatpush1.msra.mxu0 0.0
  %666 = vmatprep.subr.mxu0 0.0
  %667 = vmatpush1.msra.mxu0 0.0
  %668 = vmatprep.subr.mxu0 0.0
  %669 = vmatpush1.msra.mxu0 0.0
  %670 = vmatprep.subr.mxu0 0.0
  %671 = vmatpush1.msra.mxu0 0.0
  %672 = vmatprep.subr.mxu0 0.0
  %673 = vmatpush1.msra.mxu0 0.0
  %674 = vmatprep.subr.mxu0 0.0
  %675 = vmatpush1.msra.mxu0 0.0
  %676 = vmatprep.subr.mxu0 0.0
  %677 = vmatpush1.msra.mxu0 0.0
  %678 = vmatprep.subr.mxu0 0.0
  %679 = vmatpush1.msra.mxu0 0.0
  %680 = vmatprep.subr.mxu0 0.0
  %681 = vmatpush1.msra.mxu0 0.0
  %682 = vmatprep.subr.mxu0 0.0
  %683 = vmatpush1.msra.mxu0 0.0
  %684 = vmatprep.subr.mxu0 0.0
  %685 = vmatpush1.msra.mxu0 0.0
  %686 = vmatprep.subr.mxu0 0.0
  %687 = vmatpush1.msra.mxu0 0.0
  %688 = vmatprep.subr.mxu0 0.0
  %689 = vmatpush1.msra.mxu0 0.0
  %690 = vmatprep.mubr.f32.mxu0 0.0
  %691 = vmatmul.mubr.f32.gmra.mrb[0].mxu0 %v547
  %v692 = vpop.f32.mrb[0].mxu0
  %v693 = vadd.f32 0.0, %v692
  %v694 = vpop.f32.mrb[0].mxu0
  %695 = vdwg.mxu0
  %v696 = vadd.f32 %v434, %v693
  %v697 = vxor.u32 %v696, 2147483648
  %v698 = vmul.f32 %v697, 1.442695
  %v699 = vpow.pop %v698
  %v700 = vadd.f32 %v699, 1.0
  %v701 = vrcp.pop %v700
  %v702 = vmul.f32 1.0, %v701
  %703 = vmatprep.subr.mxu0 0.0
  %704 = vmatpush1.msra.mxu0 %v147
  %705 = vmatprep.subr.mxu0 0.0
  %706 = vmatpush1.msra.mxu0 %v148
  %707 = vmatprep.subr.mxu0 0.0
  %708 = vmatpush1.msra.mxu0 %v149
  %709 = vmatprep.subr.mxu0 0.0
  %710 = vmatpush1.msra.mxu0 %v150
  %711 = vmatprep.subr.mxu0 0.0
  %712 = vmatpush1.msra.mxu0 %v151
  %713 = vmatprep.subr.mxu0 0.0
  %714 = vmatpush1.msra.mxu0 %v152
  %715 = vmatprep.subr.mxu0 0.0
  %716 = vmatpush1.msra.mxu0 %v153
  %717 = vmatprep.subr.mxu0 0.0
  %718 = vmatpush1.msra.mxu0 %v154
  %719 = vmatprep.subr.mxu0 0.0
  %720 = vmatpush1.msra.mxu0 0.0
  %721 = vmatprep.subr.mxu0 0.0
  %722 = vmatpush1.msra.mxu0 0.0
  %723 = vmatprep.subr.mxu0 0.0
  %724 = vmatpush1.msra.mxu0 0.0
  %725 = vmatprep.subr.mxu0 0.0
  %726 = vmatpush1.msra.mxu0 0.0
  %727 = vmatprep.subr.mxu0 0.0
  %728 = vmatpush1.msra.mxu0 0.0
  %729 = vmatprep.subr.mxu0 0.0
  %730 = vmatpush1.msra.mxu0 0.0
  %731 = vmatprep.subr.mxu0 0.0
  %732 = vmatpush1.msra.mxu0 0.0
  %733 = vmatprep.subr.mxu0 0.0
  %734 = vmatpush1.msra.mxu0 0.0
  %735 = vmatprep.subr.mxu0 0.0
  %736 = vmatpush1.msra.mxu0 0.0
  %737 = vmatprep.subr.mxu0 0.0
  %738 = vmatpush1.msra.mxu0 0.0
  %739 = vmatprep.subr.mxu0 0.0
  %740 = vmatpush1.msra.mxu0 0.0
  %741 = vmatprep.subr.mxu0 0.0
  %742 = vmatpush1.msra.mxu0 0.0
  %743 = vmatprep.subr.mxu0 0.0
  %744 = vmatpush1.msra.mxu0 0.0
  %745 = vmatprep.subr.mxu0 0.0
  %746 = vmatpush1.msra.mxu0 0.0
  %747 = vmatprep.subr.mxu0 0.0
  %748 = vmatpush1.msra.mxu0 0.0
  %749 = vmatprep.subr.mxu0 0.0
  %750 = vmatpush1.msra.mxu0 0.0
  %751 = vmatprep.subr.mxu0 0.0
  %752 = vmatpush1.msra.mxu0 0.0
  %753 = vmatprep.subr.mxu0 0.0
  %754 = vmatpush1.msra.mxu0 0.0
  %755 = vmatprep.subr.mxu0 0.0
  %756 = vmatpush1.msra.mxu0 0.0
  %757 = vmatprep.subr.mxu0 0.0
  %758 = vmatpush1.msra.mxu0 0.0
  %759 = vmatprep.subr.mxu0 0.0
  %760 = vmatpush1.msra.mxu0 0.0
  %761 = vmatprep.subr.mxu0 0.0
  %762 = vmatpush1.msra.mxu0 0.0
  %763 = vmatprep.subr.mxu0 0.0
  %764 = vmatpush1.msra.mxu0 0.0
  %765 = vmatprep.subr.mxu0 0.0
  %766 = vmatpush1.msra.mxu0 0.0
  %767 = vmatprep.mubr.f32.mxu0 0.0
  %768 = vmatmul.mubr.f32.gmra.mrb[0].mxu0 %v547
  %v769 = vpop.f32.mrb[0].mxu0
  %v770 = vadd.f32 %v216, %v769
  %v771 = vpop.f32.mrb[0].mxu0
  %772 = vdwg.mxu0
  %v773 = vmul.f32 %v625, %v770
  %v774 = vadd.f32 %v527, %v773
  %v775 = vtanh.pop %v774
  %v776 = vsub.f32 1.0, %v702
  %v777 = vmul.f32 %v776, %v775
  %v778 = vmul.f32 %v702, 0.0
  %v779 = vadd.f32 %v777, %v778
  %v781 = vsel %vm545, %v779, 0
  %783 = vmatprep.subr.mxu0 0.0
  %784 = vmatpush1.msra.mxu0 %v131
  %785 = vmatprep.subr.mxu0 0.0
  %786 = vmatpush1.msra.mxu0 %v132
  %787 = vmatprep.subr.mxu0 0.0
  %788 = vmatpush1.msra.mxu0 %v133
  %789 = vmatprep.subr.mxu0 0.0
  %790 = vmatpush1.msra.mxu0 %v134
  %791 = vmatprep.subr.mxu0 0.0
  %792 = vmatpush1.msra.mxu0 %v135
  %793 = vmatprep.subr.mxu0 0.0
  %794 = vmatpush1.msra.mxu0 %v136
  %795 = vmatprep.subr.mxu0 0.0
  %796 = vmatpush1.msra.mxu0 %v137
  %797 = vmatprep.subr.mxu0 0.0
  %798 = vmatpush1.msra.mxu0 %v138
  %799 = vmatprep.subr.mxu0 0.0
  %800 = vmatpush1.msra.mxu0 0.0
  %801 = vmatprep.subr.mxu0 0.0
  %802 = vmatpush1.msra.mxu0 0.0
  %803 = vmatprep.subr.mxu0 0.0
  %804 = vmatpush1.msra.mxu0 0.0
  %805 = vmatprep.subr.mxu0 0.0
  %806 = vmatpush1.msra.mxu0 0.0
  %807 = vmatprep.subr.mxu0 0.0
  %808 = vmatpush1.msra.mxu0 0.0
  %809 = vmatprep.subr.mxu0 0.0
  %810 = vmatpush1.msra.mxu0 0.0
  %811 = vmatprep.subr.mxu0 0.0
  %812 = vmatpush1.msra.mxu0 0.0
  %813 = vmatprep.subr.mxu0 0.0
  %814 = vmatpush1.msra.mxu0 0.0
  %815 = vmatprep.subr.mxu0 0.0
  %816 = vmatpush1.msra.mxu0 0.0
  %817 = vmatprep.subr.mxu0 0.0
  %818 = vmatpush1.msra.mxu0 0.0
  %819 = vmatprep.subr.mxu0 0.0
  %820 = vmatpush1.msra.mxu0 0.0
  %821 = vmatprep.subr.mxu0 0.0
  %822 = vmatpush1.msra.mxu0 0.0
  %823 = vmatprep.subr.mxu0 0.0
  %824 = vmatpush1.msra.mxu0 0.0
  %825 = vmatprep.subr.mxu0 0.0
  %826 = vmatpush1.msra.mxu0 0.0
  %827 = vmatprep.subr.mxu0 0.0
  %828 = vmatpush1.msra.mxu0 0.0
  %829 = vmatprep.subr.mxu0 0.0
  %830 = vmatpush1.msra.mxu0 0.0
  %831 = vmatprep.subr.mxu0 0.0
  %832 = vmatpush1.msra.mxu0 0.0
  %833 = vmatprep.subr.mxu0 0.0
  %834 = vmatpush1.msra.mxu0 0.0
  %835 = vmatprep.subr.mxu0 0.0
  %836 = vmatpush1.msra.mxu0 0.0
  %837 = vmatprep.subr.mxu0 0.0
  %838 = vmatpush1.msra.mxu0 0.0
  %839 = vmatprep.subr.mxu0 0.0
  %840 = vmatpush1.msra.mxu0 0.0
  %841 = vmatprep.subr.mxu0 0.0
  %842 = vmatpush1.msra.mxu0 0.0
  %843 = vmatprep.subr.mxu0 0.0
  %844 = vmatpush1.msra.mxu0 0.0
  %845 = vmatprep.subr.mxu0 0.0
  %846 = vmatpush1.msra.mxu0 0.0
  %847 = vmatprep.mubr.f32.mxu0 0.0
  %848 = vmatmul.mubr.f32.gmra.mrb[0].mxu0 %v781
  %v849 = vpop.f32.mrb[0].mxu0
  %v850 = vadd.f32 0.0, %v849
  %v851 = vpop.f32.mrb[0].mxu0
  %852 = vdwg.mxu0
  %v854 = vrot.slane %v850, 6
  %v856 = vadd.f32 %v341, %v854
  %v857 = vxor.u32 %v856, 2147483648
  %v858 = vmul.f32 %v857, 1.442695
  %v859 = vpow.pop %v858
  %v860 = vadd.f32 %v859, 1.0
  %v861 = vrcp.pop %v860
  %v862 = vmul.f32 1.0, %v861
  %863 = vmatprep.subr.mxu0 0.0
  %864 = vmatpush1.msra.mxu0 %v139
  %865 = vmatprep.subr.mxu0 0.0
  %866 = vmatpush1.msra.mxu0 %v140
  %867 = vmatprep.subr.mxu0 0.0
  %868 = vmatpush1.msra.mxu0 %v141
  %869 = vmatprep.subr.mxu0 0.0
  %870 = vmatpush1.msra.mxu0 %v142
  %871 = vmatprep.subr.mxu0 0.0
  %872 = vmatpush1.msra.mxu0 %v143
  %873 = vmatprep.subr.mxu0 0.0
  %874 = vmatpush1.msra.mxu0 %v144
  %875 = vmatprep.subr.mxu0 0.0
  %876 = vmatpush1.msra.mxu0 %v145
  %877 = vmatprep.subr.mxu0 0.0
  %878 = vmatpush1.msra.mxu0 %v146
  %879 = vmatprep.subr.mxu0 0.0
  %880 = vmatpush1.msra.mxu0 0.0
  %881 = vmatprep.subr.mxu0 0.0
  %882 = vmatpush1.msra.mxu0 0.0
  %883 = vmatprep.subr.mxu0 0.0
  %884 = vmatpush1.msra.mxu0 0.0
  %885 = vmatprep.subr.mxu0 0.0
  %886 = vmatpush1.msra.mxu0 0.0
  %887 = vmatprep.subr.mxu0 0.0
  %888 = vmatpush1.msra.mxu0 0.0
  %889 = vmatprep.subr.mxu0 0.0
  %890 = vmatpush1.msra.mxu0 0.0
  %891 = vmatprep.subr.mxu0 0.0
  %892 = vmatpush1.msra.mxu0 0.0
  %893 = vmatprep.subr.mxu0 0.0
  %894 = vmatpush1.msra.mxu0 0.0
  %895 = vmatprep.subr.mxu0 0.0
  %896 = vmatpush1.msra.mxu0 0.0
  %897 = vmatprep.subr.mxu0 0.0
  %898 = vmatpush1.msra.mxu0 0.0
  %899 = vmatprep.subr.mxu0 0.0
  %900 = vmatpush1.msra.mxu0 0.0
  %901 = vmatprep.subr.mxu0 0.0
  %902 = vmatpush1.msra.mxu0 0.0
  %903 = vmatprep.subr.mxu0 0.0
  %904 = vmatpush1.msra.mxu0 0.0
  %905 = vmatprep.subr.mxu0 0.0
  %906 = vmatpush1.msra.mxu0 0.0
  %907 = vmatprep.subr.mxu0 0.0
  %908 = vmatpush1.msra.mxu0 0.0
  %909 = vmatprep.subr.mxu0 0.0
  %910 = vmatpush1.msra.mxu0 0.0
  %911 = vmatprep.subr.mxu0 0.0
  %912 = vmatpush1.msra.mxu0 0.0
  %913 = vmatprep.subr.mxu0 0.0
  %914 = vmatpush1.msra.mxu0 0.0
  %915 = vmatprep.subr.mxu0 0.0
  %916 = vmatpush1.msra.mxu0 0.0
  %917 = vmatprep.subr.mxu0 0.0
  %918 = vmatpush1.msra.mxu0 0.0
  %919 = vmatprep.subr.mxu0 0.0
  %920 = vmatpush1.msra.mxu0 0.0
  %921 = vmatprep.subr.mxu0 0.0
  %922 = vmatpush1.msra.mxu0 0.0
  %923 = vmatprep.subr.mxu0 0.0
  %924 = vmatpush1.msra.mxu0 0.0
  %925 = vmatprep.subr.mxu0 0.0
  %926 = vmatpush1.msra.mxu0 0.0
  %927 = vmatprep.mubr.f32.mxu0 0.0
  %928 = vmatmul.mubr.f32.gmra.mrb[0].mxu0 %v781
  %v929 = vpop.f32.mrb[0].mxu0
  %v930 = vadd.f32 0.0, %v929
  %v931 = vpop.f32.mrb[0].mxu0
  %932 = vdwg.mxu0
  %v934 = vrot.slane %v930, 6
  %v936 = vadd.f32 %v434, %v934
  %v937 = vxor.u32 %v936, 2147483648
  %v938 = vmul.f32 %v937, 1.442695
  %v939 = vpow.pop %v938
  %v940 = vadd.f32 %v939, 1.0
  %v941 = vrcp.pop %v940
  %v942 = vmul.f32 1.0, %v941
  %943 = vmatprep.subr.mxu0 0.0
  %944 = vmatpush1.msra.mxu0 %v147
  %945 = vmatprep.subr.mxu0 0.0
  %946 = vmatpush1.msra.mxu0 %v148
  %947 = vmatprep.subr.mxu0 0.0
  %948 = vmatpush1.msra.mxu0 %v149
  %949 = vmatprep.subr.mxu0 0.0
  %950 = vmatpush1.msra.mxu0 %v150
  %951 = vmatprep.subr.mxu0 0.0
  %952 = vmatpush1.msra.mxu0 %v151
  %953 = vmatprep.subr.mxu0 0.0
  %954 = vmatpush1.msra.mxu0 %v152
  %955 = vmatprep.subr.mxu0 0.0
  %956 = vmatpush1.msra.mxu0 %v153
  %957 = vmatprep.subr.mxu0 0.0
  %958 = vmatpush1.msra.mxu0 %v154
  %959 = vmatprep.subr.mxu0 0.0
  %960 = vmatpush1.msra.mxu0 0.0
  %961 = vmatprep.subr.mxu0 0.0
  %962 = vmatpush1.msra.mxu0 0.0
  %963 = vmatprep.subr.mxu0 0.0
  %964 = vmatpush1.msra.mxu0 0.0
  %965 = vmatprep.subr.mxu0 0.0
  %966 = vmatpush1.msra.mxu0 0.0
  %967 = vmatprep.subr.mxu0 0.0
  %968 = vmatpush1.msra.mxu0 0.0
  %969 = vmatprep.subr.mxu0 0.0
  %970 = vmatpush1.msra.mxu0 0.0
  %971 = vmatprep.subr.mxu0 0.0
  %972 = vmatpush1.msra.mxu0 0.0
  %973 = vmatprep.subr.mxu0 0.0
  %974 = vmatpush1.msra.mxu0 0.0
  %975 = vmatprep.subr.mxu0 0.0
  %976 = vmatpush1.msra.mxu0 0.0
  %977 = vmatprep.subr.mxu0 0.0
  %978 = vmatpush1.msra.mxu0 0.0
  %979 = vmatprep.subr.mxu0 0.0
  %980 = vmatpush1.msra.mxu0 0.0
  %981 = vmatprep.subr.mxu0 0.0
  %982 = vmatpush1.msra.mxu0 0.0
  %983 = vmatprep.subr.mxu0 0.0
  %984 = vmatpush1.msra.mxu0 0.0
  %985 = vmatprep.subr.mxu0 0.0
  %986 = vmatpush1.msra.mxu0 0.0
  %987 = vmatprep.subr.mxu0 0.0
  %988 = vmatpush1.msra.mxu0 0.0
  %989 = vmatprep.subr.mxu0 0.0
  %990 = vmatpush1.msra.mxu0 0.0
  %991 = vmatprep.subr.mxu0 0.0
  %992 = vmatpush1.msra.mxu0 0.0
  %993 = vmatprep.subr.mxu0 0.0
  %994 = vmatpush1.msra.mxu0 0.0
  %995 = vmatprep.subr.mxu0 0.0
  %996 = vmatpush1.msra.mxu0 0.0
  %997 = vmatprep.subr.mxu0 0.0
  %998 = vmatpush1.msra.mxu0 0.0
  %999 = vmatprep.subr.mxu0 0.0
  %1000 = vmatpush1.msra.mxu0 0.0
  %1001 = vmatprep.subr.mxu0 0.0
  %1002 = vmatpush1.msra.mxu0 0.0
  %1003 = vmatprep.subr.mxu0 0.0
  %1004 = vmatpush1.msra.mxu0 0.0
  %1005 = vmatprep.subr.mxu0 0.0
  %1006 = vmatpush1.msra.mxu0 0.0
  %1007 = vmatprep.mubr.f32.mxu0 0.0
  %1008 = vmatmul.mubr.f32.gmra.mrb[0].mxu0 %v781
  %v1009 = vpop.f32.mrb[0].mxu0
  %v1010 = vadd.f32 %v216, %v1009
  %v1011 = vpop.f32.mrb[0].mxu0
  %1012 = vdwg.mxu0
  %v1014 = vrot.slane %v1010, 6
  %v1016 = vmul.f32 %v862, %v1014
  %v1017 = vadd.f32 %v527, %v1016
  %v1018 = vtanh.pop %v1017
  %v1019 = vsub.f32 1.0, %v942
  %v1020 = vmul.f32 %v1019, %v1018
  %v1021 = vrot.slane %v779, 6
  %v1023 = vmul.f32 %v942, %v1021
  %v1024 = vadd.f32 %v1020, %v1023
  %v1026 = vrot.slane %v1024, 2
  %v1027 = vsel %vm545, %v1026, 0
  %1029 = vmatprep.subr.mxu0 0.0
  %1030 = vmatpush1.msra.mxu0 %v131
  %1031 = vmatprep.subr.mxu0 0.0
  %1032 = vmatpush1.msra.mxu0 %v132
  %1033 = vmatprep.subr.mxu0 0.0
  %1034 = vmatpush1.msra.mxu0 %v133
  %1035 = vmatprep.subr.mxu0 0.0
  %1036 = vmatpush1.msra.mxu0 %v134
  %1037 = vmatprep.subr.mxu0 0.0
  %1038 = vmatpush1.msra.mxu0 %v135
  %1039 = vmatprep.subr.mxu0 0.0
  %1040 = vmatpush1.msra.mxu0 %v136
  %1041 = vmatprep.subr.mxu0 0.0
  %1042 = vmatpush1.msra.mxu0 %v137
  %1043 = vmatprep.subr.mxu0 0.0
  %1044 = vmatpush1.msra.mxu0 %v138
  %1045 = vmatprep.subr.mxu0 0.0
  %1046 = vmatpush1.msra.mxu0 0.0
  %1047 = vmatprep.subr.mxu0 0.0
  %1048 = vmatpush1.msra.mxu0 0.0
  %1049 = vmatprep.subr.mxu0 0.0
  %1050 = vmatpush1.msra.mxu0 0.0
  %1051 = vmatprep.subr.mxu0 0.0
  %1052 = vmatpush1.msra.mxu0 0.0
  %1053 = vmatprep.subr.mxu0 0.0
  %1054 = vmatpush1.msra.mxu0 0.0
  %1055 = vmatprep.subr.mxu0 0.0
  %1056 = vmatpush1.msra.mxu0 0.0
  %1057 = vmatprep.subr.mxu0 0.0
  %1058 = vmatpush1.msra.mxu0 0.0
  %1059 = vmatprep.subr.mxu0 0.0
  %1060 = vmatpush1.msra.mxu0 0.0
  %1061 = vmatprep.subr.mxu0 0.0
  %1062 = vmatpush1.msra.mxu0 0.0
  %1063 = vmatprep.subr.mxu0 0.0
  %1064 = vmatpush1.msra.mxu0 0.0
  %1065 = vmatprep.subr.mxu0 0.0
  %1066 = vmatpush1.msra.mxu0 0.0
  %1067 = vmatprep.subr.mxu0 0.0
  %1068 = vmatpush1.msra.mxu0 0.0
  %1069 = vmatprep.subr.mxu0 0.0
  %1070 = vmatpush1.msra.mxu0 0.0
  %1071 = vmatprep.subr.mxu0 0.0
  %1072 = vmatpush1.msra.mxu0 0.0
  %1073 = vmatprep.subr.mxu0 0.0
  %1074 = vmatpush1.msra.mxu0 0.0
  %1075 = vmatprep.subr.mxu0 0.0
  %1076 = vmatpush1.msra.mxu0 0.0
  %1077 = vmatprep.subr.mxu0 0.0
  %1078 = vmatpush1.msra.mxu0 0.0
  %1079 = vmatprep.subr.mxu0 0.0
  %1080 = vmatpush1.msra.mxu0 0.0
  %1081 = vmatprep.subr.mxu0 0.0
  %1082 = vmatpush1.msra.mxu0 0.0
  %1083 = vmatprep.subr.mxu0 0.0
  %1084 = vmatpush1.msra.mxu0 0.0
  %1085 = vmatprep.subr.mxu0 0.0
  %1086 = vmatpush1.msra.mxu0 0.0
  %1087 = vmatprep.subr.mxu0 0.0
  %1088 = vmatpush1.msra.mxu0 0.0
  %1089 = vmatprep.subr.mxu0 0.0
  %1090 = vmatpush1.msra.mxu0 0.0
  %1091 = vmatprep.subr.mxu0 0.0
  %1092 = vmatpush1.msra.mxu0 0.0
  %1093 = vmatprep.mubr.f32.mxu0 0.0
  %1094 = vmatmul.mubr.f32.gmra.mrb[0].mxu0 %v1027
  %v1095 = vpop.f32.mrb[0].mxu0
  %v1096 = vadd.f32 0.0, %v1095
  %v1097 = vpop.f32.mrb[0].mxu0
  %1098 = vdwg.mxu0
  %v1100 = vrot.slane %v1096, 4
  %v1102 = vadd.f32 %v341, %v1100
  %v1103 = vxor.u32 %v1102, 2147483648
  %v1104 = vmul.f32 %v1103, 1.442695
  %v1105 = vpow.pop %v1104
  %v1106 = vadd.f32 %v1105, 1.0
  %v1107 = vrcp.pop %v1106
  %v1108 = vmul.f32 1.0, %v1107
  %1109 = vmatprep.subr.mxu0 0.0
  %1110 = vmatpush1.msra.mxu0 %v139
  %1111 = vmatprep.subr.mxu0 0.0
  %1112 = vmatpush1.msra.mxu0 %v140
  %1113 = vmatprep.subr.mxu0 0.0
  %1114 = vmatpush1.msra.mxu0 %v141
  %1115 = vmatprep.subr.mxu0 0.0
  %1116 = vmatpush1.msra.mxu0 %v142
  %1117 = vmatprep.subr.mxu0 0.0
  %1118 = vmatpush1.msra.mxu0 %v143
  %1119 = vmatprep.subr.mxu0 0.0
  %1120 = vmatpush1.msra.mxu0 %v144
  %1121 = vmatprep.subr.mxu0 0.0
  %1122 = vmatpush1.msra.mxu0 %v145
  %1123 = vmatprep.subr.mxu0 0.0
  %1124 = vmatpush1.msra.mxu0 %v146
  %1125 = vmatprep.subr.mxu0 0.0
  %1126 = vmatpush1.msra.mxu0 0.0
  %1127 = vmatprep.subr.mxu0 0.0
  %1128 = vmatpush1.msra.mxu0 0.0
  %1129 = vmatprep.subr.mxu0 0.0
  %1130 = vmatpush1.msra.mxu0 0.0
  %1131 = vmatprep.subr.mxu0 0.0
  %1132 = vmatpush1.msra.mxu0 0.0
  %1133 = vmatprep.subr.mxu0 0.0
  %1134 = vmatpush1.msra.mxu0 0.0
  %1135 = vmatprep.subr.mxu0 0.0
  %1136 = vmatpush1.msra.mxu0 0.0
  %1137 = vmatprep.subr.mxu0 0.0
  %1138 = vmatpush1.msra.mxu0 0.0
  %1139 = vmatprep.subr.mxu0 0.0
  %1140 = vmatpush1.msra.mxu0 0.0
  %1141 = vmatprep.subr.mxu0 0.0
  %1142 = vmatpush1.msra.mxu0 0.0
  %1143 = vmatprep.subr.mxu0 0.0
  %1144 = vmatpush1.msra.mxu0 0.0
  %1145 = vmatprep.subr.mxu0 0.0
  %1146 = vmatpush1.msra.mxu0 0.0
  %1147 = vmatprep.subr.mxu0 0.0
  %1148 = vmatpush1.msra.mxu0 0.0
  %1149 = vmatprep.subr.mxu0 0.0
  %1150 = vmatpush1.msra.mxu0 0.0
  %1151 = vmatprep.subr.mxu0 0.0
  %1152 = vmatpush1.msra.mxu0 0.0
  %1153 = vmatprep.subr.mxu0 0.0
  %1154 = vmatpush1.msra.mxu0 0.0
  %1155 = vmatprep.subr.mxu0 0.0
  %1156 = vmatpush1.msra.mxu0 0.0
  %1157 = vmatprep.subr.mxu0 0.0
  %1158 = vmatpush1.msra.mxu0 0.0
  %1159 = vmatprep.subr.mxu0 0.0
  %1160 = vmatpush1.msra.mxu0 0.0
  %1161 = vmatprep.subr.mxu0 0.0
  %1162 = vmatpush1.msra.mxu0 0.0
  %1163 = vmatprep.subr.mxu0 0.0
  %1164 = vmatpush1.msra.mxu0 0.0
  %1165 = vmatprep.subr.mxu0 0.0
  %1166 = vmatpush1.msra.mxu0 0.0
  %1167 = vmatprep.subr.mxu0 0.0
  %1168 = vmatpush1.msra.mxu0 0.0
  %1169 = vmatprep.subr.mxu0 0.0
  %1170 = vmatpush1.msra.mxu0 0.0
  %1171 = vmatprep.subr.mxu0 0.0
  %1172 = vmatpush1.msra.mxu0 0.0
  %1173 = vmatprep.mubr.f32.mxu0 0.0
  %1174 = vmatmul.mubr.f32.gmra.mrb[0].mxu0 %v1027
  %v1175 = vpop.f32.mrb[0].mxu0
  %v1176 = vadd.f32 0.0, %v1175
  %v1177 = vpop.f32.mrb[0].mxu0
  %1178 = vdwg.mxu0
  %v1180 = vrot.slane %v1176, 4
  %v1182 = vadd.f32 %v434, %v1180
  %v1183 = vxor.u32 %v1182, 2147483648
  %v1184 = vmul.f32 %v1183, 1.442695
  %v1185 = vpow.pop %v1184
  %v1186 = vadd.f32 %v1185, 1.0
  %v1187 = vrcp.pop %v1186
  %v1188 = vmul.f32 1.0, %v1187
  %1189 = vmatprep.subr.mxu0 0.0
  %1190 = vmatpush1.msra.mxu0 %v147
  %1191 = vmatprep.subr.mxu0 0.0
  %1192 = vmatpush1.msra.mxu0 %v148
  %1193 = vmatprep.subr.mxu0 0.0
  %1194 = vmatpush1.msra.mxu0 %v149
  %1195 = vmatprep.subr.mxu0 0.0
  %1196 = vmatpush1.msra.mxu0 %v150
  %1197 = vmatprep.subr.mxu0 0.0
  %1198 = vmatpush1.msra.mxu0 %v151
  %1199 = vmatprep.subr.mxu0 0.0
  %1200 = vmatpush1.msra.mxu0 %v152
  %1201 = vmatprep.subr.mxu0 0.0
  %1202 = vmatpush1.msra.mxu0 %v153
  %1203 = vmatprep.subr.mxu0 0.0
  %1204 = vmatpush1.msra.mxu0 %v154
  %1205 = vmatprep.subr.mxu0 0.0
  %1206 = vmatpush1.msra.mxu0 0.0
  %1207 = vmatprep.subr.mxu0 0.0
  %1208 = vmatpush1.msra.mxu0 0.0
  %1209 = vmatprep.subr.mxu0 0.0
  %1210 = vmatpush1.msra.mxu0 0.0
  %1211 = vmatprep.subr.mxu0 0.0
  %1212 = vmatpush1.msra.mxu0 0.0
  %1213 = vmatprep.subr.mxu0 0.0
  %1214 = vmatpush1.msra.mxu0 0.0
  %1215 = vmatprep.subr.mxu0 0.0
  %1216 = vmatpush1.msra.mxu0 0.0
  %1217 = vmatprep.subr.mxu0 0.0
  %1218 = vmatpush1.msra.mxu0 0.0
  %1219 = vmatprep.subr.mxu0 0.0
  %1220 = vmatpush1.msra.mxu0 0.0
  %1221 = vmatprep.subr.mxu0 0.0
  %1222 = vmatpush1.msra.mxu0 0.0
  %1223 = vmatprep.subr.mxu0 0.0
  %1224 = vmatpush1.msra.mxu0 0.0
  %1225 = vmatprep.subr.mxu0 0.0
  %1226 = vmatpush1.msra.mxu0 0.0
  %1227 = vmatprep.subr.mxu0 0.0
  %1228 = vmatpush1.msra.mxu0 0.0
  %1229 = vmatprep.subr.mxu0 0.0
  %1230 = vmatpush1.msra.mxu0 0.0
  %1231 = vmatprep.subr.mxu0 0.0
  %1232 = vmatpush1.msra.mxu0 0.0
  %1233 = vmatprep.subr.mxu0 0.0
  %1234 = vmatpush1.msra.mxu0 0.0
  %1235 = vmatprep.subr.mxu0 0.0
  %1236 = vmatpush1.msra.mxu0 0.0
  %1237 = vmatprep.subr.mxu0 0.0
  %1238 = vmatpush1.msra.mxu0 0.0
  %1239 = vmatprep.subr.mxu0 0.0
  %1240 = vmatpush1.msra.mxu0 0.0
  %1241 = vmatprep.subr.mxu0 0.0
  %1242 = vmatpush1.msra.mxu0 0.0
  %1243 = vmatprep.subr.mxu0 0.0
  %1244 = vmatpush1.msra.mxu0 0.0
  %1245 = vmatprep.subr.mxu0 0.0
  %1246 = vmatpush1.msra.mxu0 0.0
  %1247 = vmatprep.subr.mxu0 0.0
  %1248 = vmatpush1.msra.mxu0 0.0
  %1249 = vmatprep.subr.mxu0 0.0
  %1250 = vmatpush1.msra.mxu0 0.0
  %1251 = vmatprep.subr.mxu0 0.0
  %1252 = vmatpush1.msra.mxu0 0.0
  %1253 = vmatprep.mubr.f32.mxu0 0.0
  %1254 = vmatmul.mubr.f32.gmra.mrb[0].mxu0 %v1027
  %v1255 = vpop.f32.mrb[0].mxu0
  %v1256 = vadd.f32 %v216, %v1255
  %v1257 = vpop.f32.mrb[0].mxu0
  %1258 = vdwg.mxu0
  %v1260 = vrot.slane %v1256, 4
  %v1262 = vmul.f32 %v1108, %v1260
  %v1263 = vadd.f32 %v527, %v1262
  %v1264 = vtanh.pop %v1263
  %v1265 = vsub.f32 1.0, %v1188
  %v1266 = vmul.f32 %v1265, %v1264
  %v1267 = vrot.slane %v1024, 6
  %v1269 = vmul.f32 %v1188, %v1267
  %v1270 = vadd.f32 %v1266, %v1269
  %v1272 = vrot.slane %v1270, 4
  %v1273 = vsel %vm545, %v1272, 0
  %1275 = vmatprep.subr.mxu0 0.0
  %1276 = vmatpush1.msra.mxu0 %v131
  %1277 = vmatprep.subr.mxu0 0.0
  %1278 = vmatpush1.msra.mxu0 %v132
  %1279 = vmatprep.subr.mxu0 0.0
  %1280 = vmatpush1.msra.mxu0 %v133
  %1281 = vmatprep.subr.mxu0 0.0
  %1282 = vmatpush1.msra.mxu0 %v134
  %1283 = vmatprep.subr.mxu0 0.0
  %1284 = vmatpush1.msra.mxu0 %v135
  %1285 = vmatprep.subr.mxu0 0.0
  %1286 = vmatpush1.msra.mxu0 %v136
  %1287 = vmatprep.subr.mxu0 0.0
  %1288 = vmatpush1.msra.mxu0 %v137
  %1289 = vmatprep.subr.mxu0 0.0
  %1290 = vmatpush1.msra.mxu0 %v138
  %1291 = vmatprep.subr.mxu0 0.0
  %1292 = vmatpush1.msra.mxu0 0.0
  %1293 = vmatprep.subr.mxu0 0.0
  %1294 = vmatpush1.msra.mxu0 0.0
  %1295 = vmatprep.subr.mxu0 0.0
  %1296 = vmatpush1.msra.mxu0 0.0
  %1297 = vmatprep.subr.mxu0 0.0
  %1298 = vmatpush1.msra.mxu0 0.0
  %1299 = vmatprep.subr.mxu0 0.0
  %1300 = vmatpush1.msra.mxu0 0.0
  %1301 = vmatprep.subr.mxu0 0.0
  %1302 = vmatpush1.msra.mxu0 0.0
  %1303 = vmatprep.subr.mxu0 0.0
  %1304 = vmatpush1.msra.mxu0 0.0
  %1305 = vmatprep.subr.mxu0 0.0
  %1306 = vmatpush1.msra.mxu0 0.0
  %1307 = vmatprep.subr.mxu0 0.0
  %1308 = vmatpush1.msra.mxu0 0.0
  %1309 = vmatprep.subr.mxu0 0.0
  %1310 = vmatpush1.msra.mxu0 0.0
  %1311 = vmatprep.subr.mxu0 0.0
  %1312 = vmatpush1.msra.mxu0 0.0
  %1313 = vmatprep.subr.mxu0 0.0
  %1314 = vmatpush1.msra.mxu0 0.0
  %1315 = vmatprep.subr.mxu0 0.0
  %1316 = vmatpush1.msra.mxu0 0.0
  %1317 = vmatprep.subr.mxu0 0.0
  %1318 = vmatpush1.msra.mxu0 0.0
  %1319 = vmatprep.subr.mxu0 0.0
  %1320 = vmatpush1.msra.mxu0 0.0
  %1321 = vmatprep.subr.mxu0 0.0
  %1322 = vmatpush1.msra.mxu0 0.0
  %1323 = vmatprep.subr.mxu0 0.0
  %1324 = vmatpush1.msra.mxu0 0.0
  %1325 = vmatprep.subr.mxu0 0.0
  %1326 = vmatpush1.msra.mxu0 0.0
  %1327 = vmatprep.subr.mxu0 0.0
  %1328 = vmatpush1.msra.mxu0 0.0
  %1329 = vmatprep.subr.mxu0 0.0
  %1330 = vmatpush1.msra.mxu0 0.0
  %1331 = vmatprep.subr.mxu0 0.0
  %1332 = vmatpush1.msra.mxu0 0.0
  %1333 = vmatprep.subr.mxu0 0.0
  %1334 = vmatpush1.msra.mxu0 0.0
  %1335 = vmatprep.subr.mxu0 0.0
  %1336 = vmatpush1.msra.mxu0 0.0
  %1337 = vmatprep.subr.mxu0 0.0
  %1338 = vmatpush1.msra.mxu0 0.0
  %1339 = vmatprep.mubr.f32.mxu0 0.0
  %1340 = vmatmul.mubr.f32.gmra.mrb[0].mxu0 %v1273
  %v1341 = vpop.f32.mrb[0].mxu0
  %v1342 = vadd.f32 0.0, %v1341
  %v1343 = vpop.f32.mrb[0].mxu0
  %1344 = vdwg.mxu0
  %v1346 = vrot.slane %v1342, 2
  %v1348 = vadd.f32 %v341, %v1346
  %v1349 = vxor.u32 %v1348, 2147483648
  %v1350 = vmul.f32 %v1349, 1.442695
  %v1351 = vpow.pop %v1350
  %v1352 = vadd.f32 %v1351, 1.0
  %v1353 = vrcp.pop %v1352
  %v1354 = vmul.f32 1.0, %v1353
  %1355 = vmatprep.subr.mxu0 0.0
  %1356 = vmatpush1.msra.mxu0 %v139
  %1357 = vmatprep.subr.mxu0 0.0
  %1358 = vmatpush1.msra.mxu0 %v140
  %1359 = vmatprep.subr.mxu0 0.0
  %1360 = vmatpush1.msra.mxu0 %v141
  %1361 = vmatprep.subr.mxu0 0.0
  %1362 = vmatpush1.msra.mxu0 %v142
  %1363 = vmatprep.subr.mxu0 0.0
  %1364 = vmatpush1.msra.mxu0 %v143
  %1365 = vmatprep.subr.mxu0 0.0
  %1366 = vmatpush1.msra.mxu0 %v144
  %1367 = vmatprep.subr.mxu0 0.0
  %1368 = vmatpush1.msra.mxu0 %v145
  %1369 = vmatprep.subr.mxu0 0.0
  %1370 = vmatpush1.msra.mxu0 %v146
  %1371 = vmatprep.subr.mxu0 0.0
  %1372 = vmatpush1.msra.mxu0 0.0
  %1373 = vmatprep.subr.mxu0 0.0
  %1374 = vmatpush1.msra.mxu0 0.0
  %1375 = vmatprep.subr.mxu0 0.0
  %1376 = vmatpush1.msra.mxu0 0.0
  %1377 = vmatprep.subr.mxu0 0.0
  %1378 = vmatpush1.msra.mxu0 0.0
  %1379 = vmatprep.subr.mxu0 0.0
  %1380 = vmatpush1.msra.mxu0 0.0
  %1381 = vmatprep.subr.mxu0 0.0
  %1382 = vmatpush1.msra.mxu0 0.0
  %1383 = vmatprep.subr.mxu0 0.0
  %1384 = vmatpush1.msra.mxu0 0.0
  %1385 = vmatprep.subr.mxu0 0.0
  %1386 = vmatpush1.msra.mxu0 0.0
  %1387 = vmatprep.subr.mxu0 0.0
  %1388 = vmatpush1.msra.mxu0 0.0
  %1389 = vmatprep.subr.mxu0 0.0
  %1390 = vmatpush1.msra.mxu0 0.0
  %1391 = vmatprep.subr.mxu0 0.0
  %1392 = vmatpush1.msra.mxu0 0.0
  %1393 = vmatprep.subr.mxu0 0.0
  %1394 = vmatpush1.msra.mxu0 0.0
  %1395 = vmatprep.subr.mxu0 0.0
  %1396 = vmatpush1.msra.mxu0 0.0
  %1397 = vmatprep.subr.mxu0 0.0
  %1398 = vmatpush1.msra.mxu0 0.0
  %1399 = vmatprep.subr.mxu0 0.0
  %1400 = vmatpush1.msra.mxu0 0.0
  %1401 = vmatprep.subr.mxu0 0.0
  %1402 = vmatpush1.msra.mxu0 0.0
  %1403 = vmatprep.subr.mxu0 0.0
  %1404 = vmatpush1.msra.mxu0 0.0
  %1405 = vmatprep.subr.mxu0 0.0
  %1406 = vmatpush1.msra.mxu0 0.0
  %1407 = vmatprep.subr.mxu0 0.0
  %1408 = vmatpush1.msra.mxu0 0.0
  %1409 = vmatprep.subr.mxu0 0.0
  %1410 = vmatpush1.msra.mxu0 0.0
  %1411 = vmatprep.subr.mxu0 0.0
  %1412 = vmatpush1.msra.mxu0 0.0
  %1413 = vmatprep.subr.mxu0 0.0
  %1414 = vmatpush1.msra.mxu0 0.0
  %1415 = vmatprep.subr.mxu0 0.0
  %1416 = vmatpush1.msra.mxu0 0.0
  %1417 = vmatprep.subr.mxu0 0.0
  %1418 = vmatpush1.msra.mxu0 0.0
  %1419 = vmatprep.mubr.f32.mxu0 0.0
  %1420 = vmatmul.mubr.f32.gmra.mrb[0].mxu0 %v1273
  %v1421 = vpop.f32.mrb[0].mxu0
  %v1422 = vadd.f32 0.0, %v1421
  %v1423 = vpop.f32.mrb[0].mxu0
  %1424 = vdwg.mxu0
  %v1426 = vrot.slane %v1422, 2
  %v1428 = vadd.f32 %v434, %v1426
  %v1429 = vxor.u32 %v1428, 2147483648
  %v1430 = vmul.f32 %v1429, 1.442695
  %v1431 = vpow.pop %v1430
  %v1432 = vadd.f32 %v1431, 1.0
  %v1433 = vrcp.pop %v1432
  %v1434 = vmul.f32 1.0, %v1433
  %1435 = vmatprep.subr.mxu0 0.0
  %1436 = vmatpush1.msra.mxu0 %v147
  %1437 = vmatprep.subr.mxu0 0.0
  %1438 = vmatpush1.msra.mxu0 %v148
  %1439 = vmatprep.subr.mxu0 0.0
  %1440 = vmatpush1.msra.mxu0 %v149
  %1441 = vmatprep.subr.mxu0 0.0
  %1442 = vmatpush1.msra.mxu0 %v150
  %1443 = vmatprep.subr.mxu0 0.0
  %1444 = vmatpush1.msra.mxu0 %v151
  %1445 = vmatprep.subr.mxu0 0.0
  %1446 = vmatpush1.msra.mxu0 %v152
  %1447 = vmatprep.subr.mxu0 0.0
  %1448 = vmatpush1.msra.mxu0 %v153
  %1449 = vmatprep.subr.mxu0 0.0
  %1450 = vmatpush1.msra.mxu0 %v154
  %1451 = vmatprep.subr.mxu0 0.0
  %1452 = vmatpush1.msra.mxu0 0.0
  %1453 = vmatprep.subr.mxu0 0.0
  %1454 = vmatpush1.msra.mxu0 0.0
  %1455 = vmatprep.subr.mxu0 0.0
  %1456 = vmatpush1.msra.mxu0 0.0
  %1457 = vmatprep.subr.mxu0 0.0
  %1458 = vmatpush1.msra.mxu0 0.0
  %1459 = vmatprep.subr.mxu0 0.0
  %1460 = vmatpush1.msra.mxu0 0.0
  %1461 = vmatprep.subr.mxu0 0.0
  %1462 = vmatpush1.msra.mxu0 0.0
  %1463 = vmatprep.subr.mxu0 0.0
  %1464 = vmatpush1.msra.mxu0 0.0
  %1465 = vmatprep.subr.mxu0 0.0
  %1466 = vmatpush1.msra.mxu0 0.0
  %1467 = vmatprep.subr.mxu0 0.0
  %1468 = vmatpush1.msra.mxu0 0.0
  %1469 = vmatprep.subr.mxu0 0.0
  %1470 = vmatpush1.msra.mxu0 0.0
  %1471 = vmatprep.subr.mxu0 0.0
  %1472 = vmatpush1.msra.mxu0 0.0
  %1473 = vmatprep.subr.mxu0 0.0
  %1474 = vmatpush1.msra.mxu0 0.0
  %1475 = vmatprep.subr.mxu0 0.0
  %1476 = vmatpush1.msra.mxu0 0.0
  %1477 = vmatprep.subr.mxu0 0.0
  %1478 = vmatpush1.msra.mxu0 0.0
  %1479 = vmatprep.subr.mxu0 0.0
  %1480 = vmatpush1.msra.mxu0 0.0
  %1481 = vmatprep.subr.mxu0 0.0
  %1482 = vmatpush1.msra.mxu0 0.0
  %1483 = vmatprep.subr.mxu0 0.0
  %1484 = vmatpush1.msra.mxu0 0.0
  %1485 = vmatprep.subr.mxu0 0.0
  %1486 = vmatpush1.msra.mxu0 0.0
  %1487 = vmatprep.subr.mxu0 0.0
  %1488 = vmatpush1.msra.mxu0 0.0
  %1489 = vmatprep.subr.mxu0 0.0
  %1490 = vmatpush1.msra.mxu0 0.0
  %1491 = vmatprep.subr.mxu0 0.0
  %1492 = vmatpush1.msra.mxu0 0.0
  %1493 = vmatprep.subr.mxu0 0.0
  %1494 = vmatpush1.msra.mxu0 0.0
  %1495 = vmatprep.subr.mxu0 0.0
  %1496 = vmatpush1.msra.mxu0 0.0
  %1497 = vmatprep.subr.mxu0 0.0
  %1498 = vmatpush1.msra.mxu0 0.0
  %1499 = vmatprep.mubr.f32.mxu0 0.0
  %1500 = vmatmul.mubr.f32.gmra.mrb[0].mxu0 %v1273
  %v1501 = vpop.f32.mrb[0].mxu0
  %v1502 = vadd.f32 %v216, %v1501
  %v1503 = vpop.f32.mrb[0].mxu0
  %1504 = vdwg.mxu0
  %v1506 = vrot.slane %v1502, 2
  %v1508 = vmul.f32 %v1354, %v1506
  %v1509 = vadd.f32 %v527, %v1508
  %v1510 = vtanh.pop %v1509
  %v1511 = vsub.f32 1.0, %v1434
  %v1512 = vmul.f32 %v1511, %v1510
  %v1513 = vrot.slane %v1270, 6
  %v1515 = vmul.f32 %v1434, %v1513
  %v1516 = vadd.f32 %v1512, %v1515
  %v1518 = vrot.slane %v1516, 6
  %v1519 = vsel %vm545, %v1518, 0
  %1521 = vmatprep.subr.mxu0 0.0
  %1522 = vmatpush1.msra.mxu0 %v131
  %1523 = vmatprep.subr.mxu0 0.0
  %1524 = vmatpush1.msra.mxu0 %v132
  %1525 = vmatprep.subr.mxu0 0.0
  %1526 = vmatpush1.msra.mxu0 %v133
  %1527 = vmatprep.subr.mxu0 0.0
  %1528 = vmatpush1.msra.mxu0 %v134
  %1529 = vmatprep.subr.mxu0 0.0
  %1530 = vmatpush1.msra.mxu0 %v135
  %1531 = vmatprep.subr.mxu0 0.0
  %1532 = vmatpush1.msra.mxu0 %v136
  %1533 = vmatprep.subr.mxu0 0.0
  %1534 = vmatpush1.msra.mxu0 %v137
  %1535 = vmatprep.subr.mxu0 0.0
  %1536 = vmatpush1.msra.mxu0 %v138
  %1537 = vmatprep.subr.mxu0 0.0
  %1538 = vmatpush1.msra.mxu0 0.0
  %1539 = vmatprep.subr.mxu0 0.0
  %1540 = vmatpush1.msra.mxu0 0.0
  %1541 = vmatprep.subr.mxu0 0.0
  %1542 = vmatpush1.msra.mxu0 0.0
  %1543 = vmatprep.subr.mxu0 0.0
  %1544 = vmatpush1.msra.mxu0 0.0
  %1545 = vmatprep.subr.mxu0 0.0
  %1546 = vmatpush1.msra.mxu0 0.0
  %1547 = vmatprep.subr.mxu0 0.0
  %1548 = vmatpush1.msra.mxu0 0.0
  %1549 = vmatprep.subr.mxu0 0.0
  %1550 = vmatpush1.msra.mxu0 0.0
  %1551 = vmatprep.subr.mxu0 0.0
  %1552 = vmatpush1.msra.mxu0 0.0
  %1553 = vmatprep.subr.mxu0 0.0
  %1554 = vmatpush1.msra.mxu0 0.0
  %1555 = vmatprep.subr.mxu0 0.0
  %1556 = vmatpush1.msra.mxu0 0.0
  %1557 = vmatprep.subr.mxu0 0.0
  %1558 = vmatpush1.msra.mxu0 0.0
  %1559 = vmatprep.subr.mxu0 0.0
  %1560 = vmatpush1.msra.mxu0 0.0
  %1561 = vmatprep.subr.mxu0 0.0
  %1562 = vmatpush1.msra.mxu0 0.0
  %1563 = vmatprep.subr.mxu0 0.0
  %1564 = vmatpush1.msra.mxu0 0.0
  %1565 = vmatprep.subr.mxu0 0.0
  %1566 = vmatpush1.msra.mxu0 0.0
  %1567 = vmatprep.subr.mxu0 0.0
  %1568 = vmatpush1.msra.mxu0 0.0
  %1569 = vmatprep.subr.mxu0 0.0
  %1570 = vmatpush1.msra.mxu0 0.0
  %1571 = vmatprep.subr.mxu0 0.0
  %1572 = vmatpush1.msra.mxu0 0.0
  %1573 = vmatprep.subr.mxu0 0.0
  %1574 = vmatpush1.msra.mxu0 0.0
  %1575 = vmatprep.subr.mxu0 0.0
  %1576 = vmatpush1.msra.mxu0 0.0
  %1577 = vmatprep.subr.mxu0 0.0
  %1578 = vmatpush1.msra.mxu0 0.0
  %1579 = vmatprep.subr.mxu0 0.0
  %1580 = vmatpush1.msra.mxu0 0.0
  %1581 = vmatprep.subr.mxu0 0.0
  %1582 = vmatpush1.msra.mxu0 0.0
  %1583 = vmatprep.subr.mxu0 0.0
  %1584 = vmatpush1.msra.mxu0 0.0
  %1585 = vmatprep.mubr.f32.mxu0 0.0
  %1586 = vmatmul.mubr.f32.gmra.mrb[0].mxu0 %v1519
  %v1587 = vpop.f32.mrb[0].mxu0
  %v1588 = vadd.f32 0.0, %v1587
  %v1589 = vpop.f32.mrb[0].mxu0
  %1590 = vdwg.mxu0
  %v1591 = vadd.f32 %v346, %v1588
  %v1592 = vxor.u32 %v1591, 2147483648
  %v1593 = vmul.f32 %v1592, 1.442695
  %v1594 = vpow.pop %v1593
  %v1595 = vadd.f32 %v1594, 1.0
  %v1596 = vrcp.pop %v1595
  %v1597 = vmul.f32 1.0, %v1596
  %1598 = vmatprep.subr.mxu0 0.0
  %1599 = vmatpush1.msra.mxu0 %v139
  %1600 = vmatprep.subr.mxu0 0.0
  %1601 = vmatpush1.msra.mxu0 %v140
  %1602 = vmatprep.subr.mxu0 0.0
  %1603 = vmatpush1.msra.mxu0 %v141
  %1604 = vmatprep.subr.mxu0 0.0
  %1605 = vmatpush1.msra.mxu0 %v142
  %1606 = vmatprep.subr.mxu0 0.0
  %1607 = vmatpush1.msra.mxu0 %v143
  %1608 = vmatprep.subr.mxu0 0.0
  %1609 = vmatpush1.msra.mxu0 %v144
  %1610 = vmatprep.subr.mxu0 0.0
  %1611 = vmatpush1.msra.mxu0 %v145
  %1612 = vmatprep.subr.mxu0 0.0
  %1613 = vmatpush1.msra.mxu0 %v146
  %1614 = vmatprep.subr.mxu0 0.0
  %1615 = vmatpush1.msra.mxu0 0.0
  %1616 = vmatprep.subr.mxu0 0.0
  %1617 = vmatpush1.msra.mxu0 0.0
  %1618 = vmatprep.subr.mxu0 0.0
  %1619 = vmatpush1.msra.mxu0 0.0
  %1620 = vmatprep.subr.mxu0 0.0
  %1621 = vmatpush1.msra.mxu0 0.0
  %1622 = vmatprep.subr.mxu0 0.0
  %1623 = vmatpush1.msra.mxu0 0.0
  %1624 = vmatprep.subr.mxu0 0.0
  %1625 = vmatpush1.msra.mxu0 0.0
  %1626 = vmatprep.subr.mxu0 0.0
  %1627 = vmatpush1.msra.mxu0 0.0
  %1628 = vmatprep.subr.mxu0 0.0
  %1629 = vmatpush1.msra.mxu0 0.0
  %1630 = vmatprep.subr.mxu0 0.0
  %1631 = vmatpush1.msra.mxu0 0.0
  %1632 = vmatprep.subr.mxu0 0.0
  %1633 = vmatpush1.msra.mxu0 0.0
  %1634 = vmatprep.subr.mxu0 0.0
  %1635 = vmatpush1.msra.mxu0 0.0
  %1636 = vmatprep.subr.mxu0 0.0
  %1637 = vmatpush1.msra.mxu0 0.0
  %1638 = vmatprep.subr.mxu0 0.0
  %1639 = vmatpush1.msra.mxu0 0.0
  %1640 = vmatprep.subr.mxu0 0.0
  %1641 = vmatpush1.msra.mxu0 0.0
  %1642 = vmatprep.subr.mxu0 0.0
  %1643 = vmatpush1.msra.mxu0 0.0
  %1644 = vmatprep.subr.mxu0 0.0
  %1645 = vmatpush1.msra.mxu0 0.0
  %1646 = vmatprep.subr.mxu0 0.0
  %1647 = vmatpush1.msra.mxu0 0.0
  %1648 = vmatprep.subr.mxu0 0.0
  %1649 = vmatpush1.msra.mxu0 0.0
  %1650 = vmatprep.subr.mxu0 0.0
  %1651 = vmatpush1.msra.mxu0 0.0
  %1652 = vmatprep.subr.mxu0 0.0
  %1653 = vmatpush1.msra.mxu0 0.0
  %1654 = vmatprep.subr.mxu0 0.0
  %1655 = vmatpush1.msra.mxu0 0.0
  %1656 = vmatprep.subr.mxu0 0.0
  %1657 = vmatpush1.msra.mxu0 0.0
  %1658 = vmatprep.subr.mxu0 0.0
  %1659 = vmatpush1.msra.mxu0 0.0
  %1660 = vmatprep.subr.mxu0 0.0
  %1661 = vmatpush1.msra.mxu0 0.0
  %1662 = vmatprep.mubr.f32.mxu0 0.0
  %1663 = vmatmul.mubr.f32.gmra.mrb[0].mxu0 %v1519
  %v1664 = vpop.f32.mrb[0].mxu0
  %v1665 = vadd.f32 0.0, %v1664
  %v1666 = vpop.f32.mrb[0].mxu0
  %1667 = vdwg.mxu0
  %v1668 = vadd.f32 %v439, %v1665
  %v1669 = vxor.u32 %v1668, 2147483648
  %v1670 = vmul.f32 %v1669, 1.442695
  %v1671 = vpow.pop %v1670
  %v1672 = vadd.f32 %v1671, 1.0
  %v1673 = vrcp.pop %v1672
  %v1674 = vmul.f32 1.0, %v1673
  %1675 = vmatprep.subr.mxu0 0.0
  %1676 = vmatpush1.msra.mxu0 %v147
  %1677 = vmatprep.subr.mxu0 0.0
  %1678 = vmatpush1.msra.mxu0 %v148
  %1679 = vmatprep.subr.mxu0 0.0
  %1680 = vmatpush1.msra.mxu0 %v149
  %1681 = vmatprep.subr.mxu0 0.0
  %1682 = vmatpush1.msra.mxu0 %v150
  %1683 = vmatprep.subr.mxu0 0.0
  %1684 = vmatpush1.msra.mxu0 %v151
  %1685 = vmatprep.subr.mxu0 0.0
  %1686 = vmatpush1.msra.mxu0 %v152
  %1687 = vmatprep.subr.mxu0 0.0
  %1688 = vmatpush1.msra.mxu0 %v153
  %1689 = vmatprep.subr.mxu0 0.0
  %1690 = vmatpush1.msra.mxu0 %v154
  %1691 = vmatprep.subr.mxu0 0.0
  %1692 = vmatpush1.msra.mxu0 0.0
  %1693 = vmatprep.subr.mxu0 0.0
  %1694 = vmatpush1.msra.mxu0 0.0
  %1695 = vmatprep.subr.mxu0 0.0
  %1696 = vmatpush1.msra.mxu0 0.0
  %1697 = vmatprep.subr.mxu0 0.0
  %1698 = vmatpush1.msra.mxu0 0.0
  %1699 = vmatprep.subr.mxu0 0.0
  %1700 = vmatpush1.msra.mxu0 0.0
  %1701 = vmatprep.subr.mxu0 0.0
  %1702 = vmatpush1.msra.mxu0 0.0
  %1703 = vmatprep.subr.mxu0 0.0
  %1704 = vmatpush1.msra.mxu0 0.0
  %1705 = vmatprep.subr.mxu0 0.0
  %1706 = vmatpush1.msra.mxu0 0.0
  %1707 = vmatprep.subr.mxu0 0.0
  %1708 = vmatpush1.msra.mxu0 0.0
  %1709 = vmatprep.subr.mxu0 0.0
  %1710 = vmatpush1.msra.mxu0 0.0
  %1711 = vmatprep.subr.mxu0 0.0
  %1712 = vmatpush1.msra.mxu0 0.0
  %1713 = vmatprep.subr.mxu0 0.0
  %1714 = vmatpush1.msra.mxu0 0.0
  %1715 = vmatprep.subr.mxu0 0.0
  %1716 = vmatpush1.msra.mxu0 0.0
  %1717 = vmatprep.subr.mxu0 0.0
  %1718 = vmatpush1.msra.mxu0 0.0
  %1719 = vmatprep.subr.mxu0 0.0
  %1720 = vmatpush1.msra.mxu0 0.0
  %1721 = vmatprep.subr.mxu0 0.0
  %1722 = vmatpush1.msra.mxu0 0.0
  %1723 = vmatprep.subr.mxu0 0.0
  %1724 = vmatpush1.msra.mxu0 0.0
  %1725 = vmatprep.subr.mxu0 0.0
  %1726 = vmatpush1.msra.mxu0 0.0
  %1727 = vmatprep.subr.mxu0 0.0
  %1728 = vmatpush1.msra.mxu0 0.0
  %1729 = vmatprep.subr.mxu0 0.0
  %1730 = vmatpush1.msra.mxu0 0.0
  %1731 = vmatprep.subr.mxu0 0.0
  %1732 = vmatpush1.msra.mxu0 0.0
  %1733 = vmatprep.subr.mxu0 0.0
  %1734 = vmatpush1.msra.mxu0 0.0
  %1735 = vmatprep.subr.mxu0 0.0
  %1736 = vmatpush1.msra.mxu0 0.0
  %1737 = vmatprep.subr.mxu0 0.0
  %1738 = vmatpush1.msra.mxu0 0.0
  %1739 = vmatprep.mubr.f32.mxu0 0.0
  %1740 = vmatmul.mubr.f32.gmra.mrb[0].mxu0 %v1519
  %v1741 = vpop.f32.mrb[0].mxu0
  %v1742 = vadd.f32 %v216, %v1741
  %v1743 = vpop.f32.mrb[0].mxu0
  %1744 = vdwg.mxu0
  %v1745 = vmul.f32 %v1597, %v1742
  %v1746 = vadd.f32 %v532, %v1745
  %v1747 = vtanh.pop %v1746
  %v1748 = vsub.f32 1.0, %v1674
  %v1749 = vmul.f32 %v1748, %v1747
  %v1751 = vmul.f32 %v1674, %v1518
  %v1752 = vadd.f32 %v1749, %v1751
  %v1754 = vsel %vm545, %v1752, 0
  %1756 = vmatprep.subr.mxu0 0.0
  %1757 = vmatpush1.msra.mxu0 %v131
  %1758 = vmatprep.subr.mxu0 0.0
  %1759 = vmatpush1.msra.mxu0 %v132
  %1760 = vmatprep.subr.mxu0 0.0
  %1761 = vmatpush1.msra.mxu0 %v133
  %1762 = vmatprep.subr.mxu0 0.0
  %1763 = vmatpush1.msra.mxu0 %v134
  %1764 = vmatprep.subr.mxu0 0.0
  %1765 = vmatpush1.msra.mxu0 %v135
  %1766 = vmatprep.subr.mxu0 0.0
  %1767 = vmatpush1.msra.mxu0 %v136
  %1768 = vmatprep.subr.mxu0 0.0
  %1769 = vmatpush1.msra.mxu0 %v137
  %1770 = vmatprep.subr.mxu0 0.0
  %1771 = vmatpush1.msra.mxu0 %v138
  %1772 = vmatprep.subr.mxu0 0.0
  %1773 = vmatpush1.msra.mxu0 0.0
  %1774 = vmatprep.subr.mxu0 0.0
  %1775 = vmatpush1.msra.mxu0 0.0
  %1776 = vmatprep.subr.mxu0 0.0
  %1777 = vmatpush1.msra.mxu0 0.0
  %1778 = vmatprep.subr.mxu0 0.0
  %1779 = vmatpush1.msra.mxu0 0.0
  %1780 = vmatprep.subr.mxu0 0.0
  %1781 = vmatpush1.msra.mxu0 0.0
  %1782 = vmatprep.subr.mxu0 0.0
  %1783 = vmatpush1.msra.mxu0 0.0
  %1784 = vmatprep.subr.mxu0 0.0
  %1785 = vmatpush1.msra.mxu0 0.0
  %1786 = vmatprep.subr.mxu0 0.0
  %1787 = vmatpush1.msra.mxu0 0.0
  %1788 = vmatprep.subr.mxu0 0.0
  %1789 = vmatpush1.msra.mxu0 0.0
  %1790 = vmatprep.subr.mxu0 0.0
  %1791 = vmatpush1.msra.mxu0 0.0
  %1792 = vmatprep.subr.mxu0 0.0
  %1793 = vmatpush1.msra.mxu0 0.0
  %1794 = vmatprep.subr.mxu0 0.0
  %1795 = vmatpush1.msra.mxu0 0.0
  %1796 = vmatprep.subr.mxu0 0.0
  %1797 = vmatpush1.msra.mxu0 0.0
  %1798 = vmatprep.subr.mxu0 0.0
  %1799 = vmatpush1.msra.mxu0 0.0
  %1800 = vmatprep.subr.mxu0 0.0
  %1801 = vmatpush1.msra.mxu0 0.0
  %1802 = vmatprep.subr.mxu0 0.0
  %1803 = vmatpush1.msra.mxu0 0.0
  %1804 = vmatprep.subr.mxu0 0.0
  %1805 = vmatpush1.msra.mxu0 0.0
  %1806 = vmatprep.subr.mxu0 0.0
  %1807 = vmatpush1.msra.mxu0 0.0
  %1808 = vmatprep.subr.mxu0 0.0
  %1809 = vmatpush1.msra.mxu0 0.0
  %1810 = vmatprep.subr.mxu0 0.0
  %1811 = vmatpush1.msra.mxu0 0.0
  %1812 = vmatprep.subr.mxu0 0.0
  %1813 = vmatpush1.msra.mxu0 0.0
  %1814 = vmatprep.subr.mxu0 0.0
  %1815 = vmatpush1.msra.mxu0 0.0
  %1816 = vmatprep.subr.mxu0 0.0
  %1817 = vmatpush1.msra.mxu0 0.0
  %1818 = vmatprep.subr.mxu0 0.0
  %1819 = vmatpush1.msra.mxu0 0.0
  %1820 = vmatprep.mubr.f32.mxu0 0.0
  %1821 = vmatmul.mubr.f32.gmra.mrb[0].mxu0 %v1754
  %v1822 = vpop.f32.mrb[0].mxu0
  %v1823 = vadd.f32 0.0, %v1822
  %v1824 = vpop.f32.mrb[0].mxu0
  %1825 = vdwg.mxu0
  %v1827 = vrot.slane %v1823, 6
  %v1829 = vadd.f32 %v346, %v1827
  %v1830 = vxor.u32 %v1829, 2147483648
  %v1831 = vmul.f32 %v1830, 1.442695
  %v1832 = vpow.pop %v1831
  %v1833 = vadd.f32 %v1832, 1.0
  %v1834 = vrcp.pop %v1833
  %v1835 = vmul.f32 1.0, %v1834
  %1836 = vmatprep.subr.mxu0 0.0
  %1837 = vmatpush1.msra.mxu0 %v139
  %1838 = vmatprep.subr.mxu0 0.0
  %1839 = vmatpush1.msra.mxu0 %v140
  %1840 = vmatprep.subr.mxu0 0.0
  %1841 = vmatpush1.msra.mxu0 %v141
  %1842 = vmatprep.subr.mxu0 0.0
  %1843 = vmatpush1.msra.mxu0 %v142
  %1844 = vmatprep.subr.mxu0 0.0
  %1845 = vmatpush1.msra.mxu0 %v143
  %1846 = vmatprep.subr.mxu0 0.0
  %1847 = vmatpush1.msra.mxu0 %v144
  %1848 = vmatprep.subr.mxu0 0.0
  %1849 = vmatpush1.msra.mxu0 %v145
  %1850 = vmatprep.subr.mxu0 0.0
  %1851 = vmatpush1.msra.mxu0 %v146
  %1852 = vmatprep.subr.mxu0 0.0
  %1853 = vmatpush1.msra.mxu0 0.0
  %1854 = vmatprep.subr.mxu0 0.0
  %1855 = vmatpush1.msra.mxu0 0.0
  %1856 = vmatprep.subr.mxu0 0.0
  %1857 = vmatpush1.msra.mxu0 0.0
  %1858 = vmatprep.subr.mxu0 0.0
  %1859 = vmatpush1.msra.mxu0 0.0
  %1860 = vmatprep.subr.mxu0 0.0
  %1861 = vmatpush1.msra.mxu0 0.0
  %1862 = vmatprep.subr.mxu0 0.0
  %1863 = vmatpush1.msra.mxu0 0.0
  %1864 = vmatprep.subr.mxu0 0.0
  %1865 = vmatpush1.msra.mxu0 0.0
  %1866 = vmatprep.subr.mxu0 0.0
  %1867 = vmatpush1.msra.mxu0 0.0
  %1868 = vmatprep.subr.mxu0 0.0
  %1869 = vmatpush1.msra.mxu0 0.0
  %1870 = vmatprep.subr.mxu0 0.0
  %1871 = vmatpush1.msra.mxu0 0.0
  %1872 = vmatprep.subr.mxu0 0.0
  %1873 = vmatpush1.msra.mxu0 0.0
  %1874 = vmatprep.subr.mxu0 0.0
  %1875 = vmatpush1.msra.mxu0 0.0
  %1876 = vmatprep.subr.mxu0 0.0
  %1877 = vmatpush1.msra.mxu0 0.0
  %1878 = vmatprep.subr.mxu0 0.0
  %1879 = vmatpush1.msra.mxu0 0.0
  %1880 = vmatprep.subr.mxu0 0.0
  %1881 = vmatpush1.msra.mxu0 0.0
  %1882 = vmatprep.subr.mxu0 0.0
  %1883 = vmatpush1.msra.mxu0 0.0
  %1884 = vmatprep.subr.mxu0 0.0
  %1885 = vmatpush1.msra.mxu0 0.0
  %1886 = vmatprep.subr.mxu0 0.0
  %1887 = vmatpush1.msra.mxu0 0.0
  %1888 = vmatprep.subr.mxu0 0.0
  %1889 = vmatpush1.msra.mxu0 0.0
  %1890 = vmatprep.subr.mxu0 0.0
  %1891 = vmatpush1.msra.mxu0 0.0
  %1892 = vmatprep.subr.mxu0 0.0
  %1893 = vmatpush1.msra.mxu0 0.0
  %1894 = vmatprep.subr.mxu0 0.0
  %1895 = vmatpush1.msra.mxu0 0.0
  %1896 = vmatprep.subr.mxu0 0.0
  %1897 = vmatpush1.msra.mxu0 0.0
  %1898 = vmatprep.subr.mxu0 0.0
  %1899 = vmatpush1.msra.mxu0 0.0
  %1900 = vmatprep.mubr.f32.mxu0 0.0
  %1901 = vmatmul.mubr.f32.gmra.mrb[0].mxu0 %v1754
  %v1902 = vpop.f32.mrb[0].mxu0
  %v1903 = vadd.f32 0.0, %v1902
  %v1904 = vpop.f32.mrb[0].mxu0
  %1905 = vdwg.mxu0
  %v1907 = vrot.slane %v1903, 6
  %v1909 = vadd.f32 %v439, %v1907
  %v1910 = vxor.u32 %v1909, 2147483648
  %v1911 = vmul.f32 %v1910, 1.442695
  %v1912 = vpow.pop %v1911
  %v1913 = vadd.f32 %v1912, 1.0
  %v1914 = vrcp.pop %v1913
  %v1915 = vmul.f32 1.0, %v1914
  %1916 = vmatprep.subr.mxu0 0.0
  %1917 = vmatpush1.msra.mxu0 %v147
  %1918 = vmatprep.subr.mxu0 0.0
  %1919 = vmatpush1.msra.mxu0 %v148
  %1920 = vmatprep.subr.mxu0 0.0
  %1921 = vmatpush1.msra.mxu0 %v149
  %1922 = vmatprep.subr.mxu0 0.0
  %1923 = vmatpush1.msra.mxu0 %v150
  %1924 = vmatprep.subr.mxu0 0.0
  %1925 = vmatpush1.msra.mxu0 %v151
  %1926 = vmatprep.subr.mxu0 0.0
  %1927 = vmatpush1.msra.mxu0 %v152
  %1928 = vmatprep.subr.mxu0 0.0
  %1929 = vmatpush1.msra.mxu0 %v153
  %1930 = vmatprep.subr.mxu0 0.0
  %1931 = vmatpush1.msra.mxu0 %v154
  %1932 = vmatprep.subr.mxu0 0.0
  %1933 = vmatpush1.msra.mxu0 0.0
  %1934 = vmatprep.subr.mxu0 0.0
  %1935 = vmatpush1.msra.mxu0 0.0
  %1936 = vmatprep.subr.mxu0 0.0
  %1937 = vmatpush1.msra.mxu0 0.0
  %1938 = vmatprep.subr.mxu0 0.0
  %1939 = vmatpush1.msra.mxu0 0.0
  %1940 = vmatprep.subr.mxu0 0.0
  %1941 = vmatpush1.msra.mxu0 0.0
  %1942 = vmatprep.subr.mxu0 0.0
  %1943 = vmatpush1.msra.mxu0 0.0
  %1944 = vmatprep.subr.mxu0 0.0
  %1945 = vmatpush1.msra.mxu0 0.0
  %1946 = vmatprep.subr.mxu0 0.0
  %1947 = vmatpush1.msra.mxu0 0.0
  %1948 = vmatprep.subr.mxu0 0.0
  %1949 = vmatpush1.msra.mxu0 0.0
  %1950 = vmatprep.subr.mxu0 0.0
  %1951 = vmatpush1.msra.mxu0 0.0
  %1952 = vmatprep.subr.mxu0 0.0
  %1953 = vmatpush1.msra.mxu0 0.0
  %1954 = vmatprep.subr.mxu0 0.0
  %1955 = vmatpush1.msra.mxu0 0.0
  %1956 = vmatprep.subr.mxu0 0.0
  %1957 = vmatpush1.msra.mxu0 0.0
  %1958 = vmatprep.subr.mxu0 0.0
  %1959 = vmatpush1.msra.mxu0 0.0
  %1960 = vmatprep.subr.mxu0 0.0
  %1961 = vmatpush1.msra.mxu0 0.0
  %1962 = vmatprep.subr.mxu0 0.0
  %1963 = vmatpush1.msra.mxu0 0.0
  %1964 = vmatprep.subr.mxu0 0.0
  %1965 = vmatpush1.msra.mxu0 0.0
  %1966 = vmatprep.subr.mxu0 0.0
  %1967 = vmatpush1.msra.mxu0 0.0
  %1968 = vmatprep.subr.mxu0 0.0
  %1969 = vmatpush1.msra.mxu0 0.0
  %1970 = vmatprep.subr.mxu0 0.0
  %1971 = vmatpush1.msra.mxu0 0.0
  %1972 = vmatprep.subr.mxu0 0.0
  %1973 = vmatpush1.msra.mxu0 0.0
  %1974 = vmatprep.subr.mxu0 0.0
  %1975 = vmatpush1.msra.mxu0 0.0
  %1976 = vmatprep.subr.mxu0 0.0
  %1977 = vmatpush1.msra.mxu0 0.0
  %1978 = vmatprep.subr.mxu0 0.0
  %1979 = vmatpush1.msra.mxu0 0.0
  %1980 = vmatprep.mubr.f32.mxu0 0.0
  %1981 = vmatmul.mubr.f32.gmra.mrb[0].mxu0 %v1754
  %v1982 = vpop.f32.mrb[0].mxu0
  %v1983 = vadd.f32 %v216, %v1982
  %v1984 = vpop.f32.mrb[0].mxu0
  %1985 = vdwg.mxu0
  %v1987 = vrot.slane %v1983, 6
  %v1989 = vmul.f32 %v1835, %v1987
  %v1990 = vadd.f32 %v532, %v1989
  %v1991 = vtanh.pop %v1990
  %v1992 = vsub.f32 1.0, %v1915
  %v1993 = vmul.f32 %v1992, %v1991
  %v1994 = vrot.slane %v1752, 6
  %v1996 = vmul.f32 %v1915, %v1994
  %v1997 = vadd.f32 %v1993, %v1996
  %v1999 = vrot.slane %v1997, 2
  %v2000 = vsel %vm545, %v1999, 0
  %2002 = vmatprep.subr.mxu0 0.0
  %2003 = vmatpush1.msra.mxu0 %v131
  %2004 = vmatprep.subr.mxu0 0.0
  %2005 = vmatpush1.msra.mxu0 %v132
  %2006 = vmatprep.subr.mxu0 0.0
  %2007 = vmatpush1.msra.mxu0 %v133
  %2008 = vmatprep.subr.mxu0 0.0
  %2009 = vmatpush1.msra.mxu0 %v134
  %2010 = vmatprep.subr.mxu0 0.0
  %2011 = vmatpush1.msra.mxu0 %v135
  %2012 = vmatprep.subr.mxu0 0.0
  %2013 = vmatpush1.msra.mxu0 %v136
  %2014 = vmatprep.subr.mxu0 0.0
  %2015 = vmatpush1.msra.mxu0 %v137
  %2016 = vmatprep.subr.mxu0 0.0
  %2017 = vmatpush1.msra.mxu0 %v138
  %2018 = vmatprep.subr.mxu0 0.0
  %2019 = vmatpush1.msra.mxu0 0.0
  %2020 = vmatprep.subr.mxu0 0.0
  %2021 = vmatpush1.msra.mxu0 0.0
  %2022 = vmatprep.subr.mxu0 0.0
  %2023 = vmatpush1.msra.mxu0 0.0
  %2024 = vmatprep.subr.mxu0 0.0
  %2025 = vmatpush1.msra.mxu0 0.0
  %2026 = vmatprep.subr.mxu0 0.0
  %2027 = vmatpush1.msra.mxu0 0.0
  %2028 = vmatprep.subr.mxu0 0.0
  %2029 = vmatpush1.msra.mxu0 0.0
  %2030 = vmatprep.subr.mxu0 0.0
  %2031 = vmatpush1.msra.mxu0 0.0
  %2032 = vmatprep.subr.mxu0 0.0
  %2033 = vmatpush1.msra.mxu0 0.0
  %2034 = vmatprep.subr.mxu0 0.0
  %2035 = vmatpush1.msra.mxu0 0.0
  %2036 = vmatprep.subr.mxu0 0.0
  %2037 = vmatpush1.msra.mxu0 0.0
  %2038 = vmatprep.subr.mxu0 0.0
  %2039 = vmatpush1.msra.mxu0 0.0
  %2040 = vmatprep.subr.mxu0 0.0
  %2041 = vmatpush1.msra.mxu0 0.0
  %2042 = vmatprep.subr.mxu0 0.0
  %2043 = vmatpush1.msra.mxu0 0.0
  %2044 = vmatprep.subr.mxu0 0.0
  %2045 = vmatpush1.msra.mxu0 0.0
  %2046 = vmatprep.subr.mxu0 0.0
  %2047 = vmatpush1.msra.mxu0 0.0
  %2048 = vmatprep.subr.mxu0 0.0
  %2049 = vmatpush1.msra.mxu0 0.0
  %2050 = vmatprep.subr.mxu0 0.0
  %2051 = vmatpush1.msra.mxu0 0.0
  %2052 = vmatprep.subr.mxu0 0.0
  %2053 = vmatpush1.msra.mxu0 0.0
  %2054 = vmatprep.subr.mxu0 0.0
  %2055 = vmatpush1.msra.mxu0 0.0
  %2056 = vmatprep.subr.mxu0 0.0
  %2057 = vmatpush1.msra.mxu0 0.0
  %2058 = vmatprep.subr.mxu0 0.0
  %2059 = vmatpush1.msra.mxu0 0.0
  %2060 = vmatprep.subr.mxu0 0.0
  %2061 = vmatpush1.msra.mxu0 0.0
  %2062 = vmatprep.subr.mxu0 0.0
  %2063 = vmatpush1.msra.mxu0 0.0
  %2064 = vmatprep.subr.mxu0 0.0
  %2065 = vmatpush1.msra.mxu0 0.0
  %2066 = vmatprep.mubr.f32.mxu0 0.0
  %2067 = vmatmul.mubr.f32.gmra.mrb[0].mxu0 %v2000
  %v2068 = vpop.f32.mrb[0].mxu0
  %v2069 = vadd.f32 0.0, %v2068
  %v2070 = vpop.f32.mrb[0].mxu0
  %2071 = vdwg.mxu0
  %v2073 = vrot.slane %v2069, 4
  %v2075 = vadd.f32 %v346, %v2073
  %v2076 = vxor.u32 %v2075, 2147483648
  %v2077 = vmul.f32 %v2076, 1.442695
  %v2078 = vpow.pop %v2077
  %v2079 = vadd.f32 %v2078, 1.0
  %v2080 = vrcp.pop %v2079
  %v2081 = vmul.f32 1.0, %v2080
  %2082 = vmatprep.subr.mxu0 0.0
  %2083 = vmatpush1.msra.mxu0 %v139
  %2084 = vmatprep.subr.mxu0 0.0
  %2085 = vmatpush1.msra.mxu0 %v140
  %2086 = vmatprep.subr.mxu0 0.0
  %2087 = vmatpush1.msra.mxu0 %v141
  %2088 = vmatprep.subr.mxu0 0.0
  %2089 = vmatpush1.msra.mxu0 %v142
  %2090 = vmatprep.subr.mxu0 0.0
  %2091 = vmatpush1.msra.mxu0 %v143
  %2092 = vmatprep.subr.mxu0 0.0
  %2093 = vmatpush1.msra.mxu0 %v144
  %2094 = vmatprep.subr.mxu0 0.0
  %2095 = vmatpush1.msra.mxu0 %v145
  %2096 = vmatprep.subr.mxu0 0.0
  %2097 = vmatpush1.msra.mxu0 %v146
  %2098 = vmatprep.subr.mxu0 0.0
  %2099 = vmatpush1.msra.mxu0 0.0
  %2100 = vmatprep.subr.mxu0 0.0
  %2101 = vmatpush1.msra.mxu0 0.0
  %2102 = vmatprep.subr.mxu0 0.0
  %2103 = vmatpush1.msra.mxu0 0.0
  %2104 = vmatprep.subr.mxu0 0.0
  %2105 = vmatpush1.msra.mxu0 0.0
  %2106 = vmatprep.subr.mxu0 0.0
  %2107 = vmatpush1.msra.mxu0 0.0
  %2108 = vmatprep.subr.mxu0 0.0
  %2109 = vmatpush1.msra.mxu0 0.0
  %2110 = vmatprep.subr.mxu0 0.0
  %2111 = vmatpush1.msra.mxu0 0.0
  %2112 = vmatprep.subr.mxu0 0.0
  %2113 = vmatpush1.msra.mxu0 0.0
  %2114 = vmatprep.subr.mxu0 0.0
  %2115 = vmatpush1.msra.mxu0 0.0
  %2116 = vmatprep.subr.mxu0 0.0
  %2117 = vmatpush1.msra.mxu0 0.0
  %2118 = vmatprep.subr.mxu0 0.0
  %2119 = vmatpush1.msra.mxu0 0.0
  %2120 = vmatprep.subr.mxu0 0.0
  %2121 = vmatpush1.msra.mxu0 0.0
  %2122 = vmatprep.subr.mxu0 0.0
  %2123 = vmatpush1.msra.mxu0 0.0
  %2124 = vmatprep.subr.mxu0 0.0
  %2125 = vmatpush1.msra.mxu0 0.0
  %2126 = vmatprep.subr.mxu0 0.0
  %2127 = vmatpush1.msra.mxu0 0.0
  %2128 = vmatprep.subr.mxu0 0.0
  %2129 = vmatpush1.msra.mxu0 0.0
  %2130 = vmatprep.subr.mxu0 0.0
  %2131 = vmatpush1.msra.mxu0 0.0
  %2132 = vmatprep.subr.mxu0 0.0
  %2133 = vmatpush1.msra.mxu0 0.0
  %2134 = vmatprep.subr.mxu0 0.0
  %2135 = vmatpush1.msra.mxu0 0.0
  %2136 = vmatprep.subr.mxu0 0.0
  %2137 = vmatpush1.msra.mxu0 0.0
  %2138 = vmatprep.subr.mxu0 0.0
  %2139 = vmatpush1.msra.mxu0 0.0
  %2140 = vmatprep.subr.mxu0 0.0
  %2141 = vmatpush1.msra.mxu0 0.0
  %2142 = vmatprep.subr.mxu0 0.0
  %2143 = vmatpush1.msra.mxu0 0.0
  %2144 = vmatprep.subr.mxu0 0.0
  %2145 = vmatpush1.msra.mxu0 0.0
  %2146 = vmatprep.mubr.f32.mxu0 0.0
  %2147 = vmatmul.mubr.f32.gmra.mrb[0].mxu0 %v2000
  %v2148 = vpop.f32.mrb[0].mxu0
  %v2149 = vadd.f32 0.0, %v2148
  %v2150 = vpop.f32.mrb[0].mxu0
  %2151 = vdwg.mxu0
  %v2153 = vrot.slane %v2149, 4
  %v2155 = vadd.f32 %v439, %v2153
  %v2156 = vxor.u32 %v2155, 2147483648
  %v2157 = vmul.f32 %v2156, 1.442695
  %v2158 = vpow.pop %v2157
  %v2159 = vadd.f32 %v2158, 1.0
  %v2160 = vrcp.pop %v2159
  %v2161 = vmul.f32 1.0, %v2160
  %2162 = vmatprep.subr.mxu0 0.0
  %2163 = vmatpush1.msra.mxu0 %v147
  %2164 = vmatprep.subr.mxu0 0.0
  %2165 = vmatpush1.msra.mxu0 %v148
  %2166 = vmatprep.subr.mxu0 0.0
  %2167 = vmatpush1.msra.mxu0 %v149
  %2168 = vmatprep.subr.mxu0 0.0
  %2169 = vmatpush1.msra.mxu0 %v150
  %2170 = vmatprep.subr.mxu0 0.0
  %2171 = vmatpush1.msra.mxu0 %v151
  %2172 = vmatprep.subr.mxu0 0.0
  %2173 = vmatpush1.msra.mxu0 %v152
  %2174 = vmatprep.subr.mxu0 0.0
  %2175 = vmatpush1.msra.mxu0 %v153
  %2176 = vmatprep.subr.mxu0 0.0
  %2177 = vmatpush1.msra.mxu0 %v154
  %2178 = vmatprep.subr.mxu0 0.0
  %2179 = vmatpush1.msra.mxu0 0.0
  %2180 = vmatprep.subr.mxu0 0.0
  %2181 = vmatpush1.msra.mxu0 0.0
  %2182 = vmatprep.subr.mxu0 0.0
  %2183 = vmatpush1.msra.mxu0 0.0
  %2184 = vmatprep.subr.mxu0 0.0
  %2185 = vmatpush1.msra.mxu0 0.0
  %2186 = vmatprep.subr.mxu0 0.0
  %2187 = vmatpush1.msra.mxu0 0.0
  %2188 = vmatprep.subr.mxu0 0.0
  %2189 = vmatpush1.msra.mxu0 0.0
  %2190 = vmatprep.subr.mxu0 0.0
  %2191 = vmatpush1.msra.mxu0 0.0
  %2192 = vmatprep.subr.mxu0 0.0
  %2193 = vmatpush1.msra.mxu0 0.0
  %2194 = vmatprep.subr.mxu0 0.0
  %2195 = vmatpush1.msra.mxu0 0.0
  %2196 = vmatprep.subr.mxu0 0.0
  %2197 = vmatpush1.msra.mxu0 0.0
  %2198 = vmatprep.subr.mxu0 0.0
  %2199 = vmatpush1.msra.mxu0 0.0
  %2200 = vmatprep.subr.mxu0 0.0
  %2201 = vmatpush1.msra.mxu0 0.0
  %2202 = vmatprep.subr.mxu0 0.0
  %2203 = vmatpush1.msra.mxu0 0.0
  %2204 = vmatprep.subr.mxu0 0.0
  %2205 = vmatpush1.msra.mxu0 0.0
  %2206 = vmatprep.subr.mxu0 0.0
  %2207 = vmatpush1.msra.mxu0 0.0
  %2208 = vmatprep.subr.mxu0 0.0
  %2209 = vmatpush1.msra.mxu0 0.0
  %2210 = vmatprep.subr.mxu0 0.0
  %2211 = vmatpush1.msra.mxu0 0.0
  %2212 = vmatprep.subr.mxu0 0.0
  %2213 = vmatpush1.msra.mxu0 0.0
  %2214 = vmatprep.subr.mxu0 0.0
  %2215 = vmatpush1.msra.mxu0 0.0
  %2216 = vmatprep.subr.mxu0 0.0
  %2217 = vmatpush1.msra.mxu0 0.0
  %2218 = vmatprep.subr.mxu0 0.0
  %2219 = vmatpush1.msra.mxu0 0.0
  %2220 = vmatprep.subr.mxu0 0.0
  %2221 = vmatpush1.msra.mxu0 0.0
  %2222 = vmatprep.subr.mxu0 0.0
  %2223 = vmatpush1.msra.mxu0 0.0
  %2224 = vmatprep.subr.mxu0 0.0
  %2225 = vmatpush1.msra.mxu0 0.0
  %2226 = vmatprep.mubr.f32.mxu0 0.0
  %2227 = vmatmul.mubr.f32.gmra.mrb[0].mxu0 %v2000
  %v2228 = vpop.f32.mrb[0].mxu0
  %v2229 = vadd.f32 %v216, %v2228
  %v2230 = vpop.f32.mrb[0].mxu0
  %2231 = vdwg.mxu0
  %v2233 = vrot.slane %v2229, 4
  %v2235 = vmul.f32 %v2081, %v2233
  %v2236 = vadd.f32 %v532, %v2235
  %v2237 = vtanh.pop %v2236
  %v2238 = vsub.f32 1.0, %v2161
  %v2239 = vmul.f32 %v2238, %v2237
  %v2240 = vrot.slane %v1997, 6
  %v2242 = vmul.f32 %v2161, %v2240
  %v2243 = vadd.f32 %v2239, %v2242
  %v2245 = vrot.slane %v2243, 4
  %v2246 = vsel %vm545, %v2245, 0
  %2248 = vmatprep.subr.mxu0 0.0
  %2249 = vmatpush1.msra.mxu0 %v131
  %2250 = vmatprep.subr.mxu0 0.0
  %2251 = vmatpush1.msra.mxu0 %v132
  %2252 = vmatprep.subr.mxu0 0.0
  %2253 = vmatpush1.msra.mxu0 %v133
  %2254 = vmatprep.subr.mxu0 0.0
  %2255 = vmatpush1.msra.mxu0 %v134
  %2256 = vmatprep.subr.mxu0 0.0
  %2257 = vmatpush1.msra.mxu0 %v135
  %2258 = vmatprep.subr.mxu0 0.0
  %2259 = vmatpush1.msra.mxu0 %v136
  %2260 = vmatprep.subr.mxu0 0.0
  %2261 = vmatpush1.msra.mxu0 %v137
  %2262 = vmatprep.subr.mxu0 0.0
  %2263 = vmatpush1.msra.mxu0 %v138
  %2264 = vmatprep.subr.mxu0 0.0
  %2265 = vmatpush1.msra.mxu0 0.0
  %2266 = vmatprep.subr.mxu0 0.0
  %2267 = vmatpush1.msra.mxu0 0.0
  %2268 = vmatprep.subr.mxu0 0.0
  %2269 = vmatpush1.msra.mxu0 0.0
  %2270 = vmatprep.subr.mxu0 0.0
  %2271 = vmatpush1.msra.mxu0 0.0
  %2272 = vmatprep.subr.mxu0 0.0
  %2273 = vmatpush1.msra.mxu0 0.0
  %2274 = vmatprep.subr.mxu0 0.0
  %2275 = vmatpush1.msra.mxu0 0.0
  %2276 = vmatprep.subr.mxu0 0.0
  %2277 = vmatpush1.msra.mxu0 0.0
  %2278 = vmatprep.subr.mxu0 0.0
  %2279 = vmatpush1.msra.mxu0 0.0
  %2280 = vmatprep.subr.mxu0 0.0
  %2281 = vmatpush1.msra.mxu0 0.0
  %2282 = vmatprep.subr.mxu0 0.0
  %2283 = vmatpush1.msra.mxu0 0.0
  %2284 = vmatprep.subr.mxu0 0.0
  %2285 = vmatpush1.msra.mxu0 0.0
  %2286 = vmatprep.subr.mxu0 0.0
  %2287 = vmatpush1.msra.mxu0 0.0
  %2288 = vmatprep.subr.mxu0 0.0
  %2289 = vmatpush1.msra.mxu0 0.0
  %2290 = vmatprep.subr.mxu0 0.0
  %2291 = vmatpush1.msra.mxu0 0.0
  %2292 = vmatprep.subr.mxu0 0.0
  %2293 = vmatpush1.msra.mxu0 0.0
  %2294 = vmatprep.subr.mxu0 0.0
  %2295 = vmatpush1.msra.mxu0 0.0
  %2296 = vmatprep.subr.mxu0 0.0
  %2297 = vmatpush1.msra.mxu0 0.0
  %2298 = vmatprep.subr.mxu0 0.0
  %2299 = vmatpush1.msra.mxu0 0.0
  %2300 = vmatprep.subr.mxu0 0.0
  %2301 = vmatpush1.msra.mxu0 0.0
  %2302 = vmatprep.subr.mxu0 0.0
  %2303 = vmatpush1.msra.mxu0 0.0
  %2304 = vmatprep.subr.mxu0 0.0
  %2305 = vmatpush1.msra.mxu0 0.0
  %2306 = vmatprep.subr.mxu0 0.0
  %2307 = vmatpush1.msra.mxu0 0.0
  %2308 = vmatprep.subr.mxu0 0.0
  %2309 = vmatpush1.msra.mxu0 0.0
  %2310 = vmatprep.subr.mxu0 0.0
  %2311 = vmatpush1.msra.mxu0 0.0
  %2312 = vmatprep.mubr.f32.mxu0 0.0
  %2313 = vmatmul.mubr.f32.gmra.mrb[0].mxu0 %v2246
  %v2314 = vpop.f32.mrb[0].mxu0
  %v2315 = vadd.f32 0.0, %v2314
  %v2316 = vpop.f32.mrb[0].mxu0
  %2317 = vdwg.mxu0
  %v2319 = vrot.slane %v2315, 2
  %v2321 = vadd.f32 %v346, %v2319
  %v2322 = vxor.u32 %v2321, 2147483648
  %v2323 = vmul.f32 %v2322, 1.442695
  %v2324 = vpow.pop %v2323
  %v2325 = vadd.f32 %v2324, 1.0
  %v2326 = vrcp.pop %v2325
  %v2327 = vmul.f32 1.0, %v2326
  %2328 = vmatprep.subr.mxu0 0.0
  %2329 = vmatpush1.msra.mxu0 %v139
  %2330 = vmatprep.subr.mxu0 0.0
  %2331 = vmatpush1.msra.mxu0 %v140
  %2332 = vmatprep.subr.mxu0 0.0
  %2333 = vmatpush1.msra.mxu0 %v141
  %2334 = vmatprep.subr.mxu0 0.0
  %2335 = vmatpush1.msra.mxu0 %v142
  %2336 = vmatprep.subr.mxu0 0.0
  %2337 = vmatpush1.msra.mxu0 %v143
  %2338 = vmatprep.subr.mxu0 0.0
  %2339 = vmatpush1.msra.mxu0 %v144
  %2340 = vmatprep.subr.mxu0 0.0
  %2341 = vmatpush1.msra.mxu0 %v145
  %2342 = vmatprep.subr.mxu0 0.0
  %2343 = vmatpush1.msra.mxu0 %v146
  %2344 = vmatprep.subr.mxu0 0.0
  %2345 = vmatpush1.msra.mxu0 0.0
  %2346 = vmatprep.subr.mxu0 0.0
  %2347 = vmatpush1.msra.mxu0 0.0
  %2348 = vmatprep.subr.mxu0 0.0
  %2349 = vmatpush1.msra.mxu0 0.0
  %2350 = vmatprep.subr.mxu0 0.0
  %2351 = vmatpush1.msra.mxu0 0.0
  %2352 = vmatprep.subr.mxu0 0.0
  %2353 = vmatpush1.msra.mxu0 0.0
  %2354 = vmatprep.subr.mxu0 0.0
  %2355 = vmatpush1.msra.mxu0 0.0
  %2356 = vmatprep.subr.mxu0 0.0
  %2357 = vmatpush1.msra.mxu0 0.0
  %2358 = vmatprep.subr.mxu0 0.0
  %2359 = vmatpush1.msra.mxu0 0.0
  %2360 = vmatprep.subr.mxu0 0.0
  %2361 = vmatpush1.msra.mxu0 0.0
  %2362 = vmatprep.subr.mxu0 0.0
  %2363 = vmatpush1.msra.mxu0 0.0
  %2364 = vmatprep.subr.mxu0 0.0
  %2365 = vmatpush1.msra.mxu0 0.0
  %2366 = vmatprep.subr.mxu0 0.0
  %2367 = vmatpush1.msra.mxu0 0.0
  %2368 = vmatprep.subr.mxu0 0.0
  %2369 = vmatpush1.msra.mxu0 0.0
  %2370 = vmatprep.subr.mxu0 0.0
  %2371 = vmatpush1.msra.mxu0 0.0
  %2372 = vmatprep.subr.mxu0 0.0
  %2373 = vmatpush1.msra.mxu0 0.0
  %2374 = vmatprep.subr.mxu0 0.0
  %2375 = vmatpush1.msra.mxu0 0.0
  %2376 = vmatprep.subr.mxu0 0.0
  %2377 = vmatpush1.msra.mxu0 0.0
  %2378 = vmatprep.subr.mxu0 0.0
  %2379 = vmatpush1.msra.mxu0 0.0
  %2380 = vmatprep.subr.mxu0 0.0
  %2381 = vmatpush1.msra.mxu0 0.0
  %2382 = vmatprep.subr.mxu0 0.0
  %2383 = vmatpush1.msra.mxu0 0.0
  %2384 = vmatprep.subr.mxu0 0.0
  %2385 = vmatpush1.msra.mxu0 0.0
  %2386 = vmatprep.subr.mxu0 0.0
  %2387 = vmatpush1.msra.mxu0 0.0
  %2388 = vmatprep.subr.mxu0 0.0
  %2389 = vmatpush1.msra.mxu0 0.0
  %2390 = vmatprep.subr.mxu0 0.0
  %2391 = vmatpush1.msra.mxu0 0.0
  %2392 = vmatprep.mubr.f32.mxu0 0.0
  %2393 = vmatmul.mubr.f32.gmra.mrb[0].mxu0 %v2246
  %v2394 = vpop.f32.mrb[0].mxu0
  %v2395 = vadd.f32 0.0, %v2394
  %v2396 = vpop.f32.mrb[0].mxu0
  %2397 = vdwg.mxu0
  %v2399 = vrot.slane %v2395, 2
  %v2401 = vadd.f32 %v439, %v2399
  %v2402 = vxor.u32 %v2401, 2147483648
  %v2403 = vmul.f32 %v2402, 1.442695
  %v2404 = vpow.pop %v2403
  %v2405 = vadd.f32 %v2404, 1.0
  %v2406 = vrcp.pop %v2405
  %v2407 = vmul.f32 1.0, %v2406
  %2408 = vmatprep.subr.mxu0 0.0
  %2409 = vmatpush1.msra.mxu0 %v147
  %2410 = vmatprep.subr.mxu0 0.0
  %2411 = vmatpush1.msra.mxu0 %v148
  %2412 = vmatprep.subr.mxu0 0.0
  %2413 = vmatpush1.msra.mxu0 %v149
  %2414 = vmatprep.subr.mxu0 0.0
  %2415 = vmatpush1.msra.mxu0 %v150
  %2416 = vmatprep.subr.mxu0 0.0
  %2417 = vmatpush1.msra.mxu0 %v151
  %2418 = vmatprep.subr.mxu0 0.0
  %2419 = vmatpush1.msra.mxu0 %v152
  %2420 = vmatprep.subr.mxu0 0.0
  %2421 = vmatpush1.msra.mxu0 %v153
  %2422 = vmatprep.subr.mxu0 0.0
  %2423 = vmatpush1.msra.mxu0 %v154
  %2424 = vmatprep.subr.mxu0 0.0
  %2425 = vmatpush1.msra.mxu0 0.0
  %2426 = vmatprep.subr.mxu0 0.0
  %2427 = vmatpush1.msra.mxu0 0.0
  %2428 = vmatprep.subr.mxu0 0.0
  %2429 = vmatpush1.msra.mxu0 0.0
  %2430 = vmatprep.subr.mxu0 0.0
  %2431 = vmatpush1.msra.mxu0 0.0
  %2432 = vmatprep.subr.mxu0 0.0
  %2433 = vmatpush1.msra.mxu0 0.0
  %2434 = vmatprep.subr.mxu0 0.0
  %2435 = vmatpush1.msra.mxu0 0.0
  %2436 = vmatprep.subr.mxu0 0.0
  %2437 = vmatpush1.msra.mxu0 0.0
  %2438 = vmatprep.subr.mxu0 0.0
  %2439 = vmatpush1.msra.mxu0 0.0
  %2440 = vmatprep.subr.mxu0 0.0
  %2441 = vmatpush1.msra.mxu0 0.0
  %2442 = vmatprep.subr.mxu0 0.0
  %2443 = vmatpush1.msra.mxu0 0.0
  %2444 = vmatprep.subr.mxu0 0.0
  %2445 = vmatpush1.msra.mxu0 0.0
  %2446 = vmatprep.subr.mxu0 0.0
  %2447 = vmatpush1.msra.mxu0 0.0
  %2448 = vmatprep.subr.mxu0 0.0
  %2449 = vmatpush1.msra.mxu0 0.0
  %2450 = vmatprep.subr.mxu0 0.0
  %2451 = vmatpush1.msra.mxu0 0.0
  %2452 = vmatprep.subr.mxu0 0.0
  %2453 = vmatpush1.msra.mxu0 0.0
  %2454 = vmatprep.subr.mxu0 0.0
  %2455 = vmatpush1.msra.mxu0 0.0
  %2456 = vmatprep.subr.mxu0 0.0
  %2457 = vmatpush1.msra.mxu0 0.0
  %2458 = vmatprep.subr.mxu0 0.0
  %2459 = vmatpush1.msra.mxu0 0.0
  %2460 = vmatprep.subr.mxu0 0.0
  %2461 = vmatpush1.msra.mxu0 0.0
  %2462 = vmatprep.subr.mxu0 0.0
  %2463 = vmatpush1.msra.mxu0 0.0
  %2464 = vmatprep.subr.mxu0 0.0
  %2465 = vmatpush1.msra.mxu0 0.0
  %2466 = vmatprep.subr.mxu0 0.0
  %2467 = vmatpush1.msra.mxu0 0.0
  %2468 = vmatprep.subr.mxu0 0.0
  %2469 = vmatpush1.msra.mxu0 0.0
  %2470 = vmatprep.subr.mxu0 0.0
  %2471 = vmatpush1.msra.mxu0 0.0
  %2472 = vmatprep.mubr.f32.mxu0 0.0
  %2473 = vmatmul.mubr.f32.gmra.mrb[0].mxu0 %v2246
  %v2474 = vpop.f32.mrb[0].mxu0
  %v2475 = vadd.f32 %v216, %v2474
  %v2476 = vpop.f32.mrb[0].mxu0
  %2477 = vdwg.mxu0
  %v2479 = vrot.slane %v2475, 2
  %v2481 = vmul.f32 %v2327, %v2479
  %v2482 = vadd.f32 %v532, %v2481
  %v2483 = vtanh.pop %v2482
  %v2484 = vsub.f32 1.0, %v2407
  %v2485 = vmul.f32 %v2484, %v2483
  %v2486 = vrot.slane %v2243, 6
  %v2488 = vmul.f32 %v2407, %v2486
  %v2489 = vadd.f32 %v2485, %v2488
  %v2491 = vrot.slane %v2489, 6
  %v2492 = vsel %vm545, %v2491, 0
  %2494 = vmatprep.subr.mxu0 0.0
  %2495 = vmatpush1.msra.mxu0 %v131
  %2496 = vmatprep.subr.mxu0 0.0
  %2497 = vmatpush1.msra.mxu0 %v132
  %2498 = vmatprep.subr.mxu0 0.0
  %2499 = vmatpush1.msra.mxu0 %v133
  %2500 = vmatprep.subr.mxu0 0.0
  %2501 = vmatpush1.msra.mxu0 %v134
  %2502 = vmatprep.subr.mxu0 0.0
  %2503 = vmatpush1.msra.mxu0 %v135
  %2504 = vmatprep.subr.mxu0 0.0
  %2505 = vmatpush1.msra.mxu0 %v136
  %2506 = vmatprep.subr.mxu0 0.0
  %2507 = vmatpush1.msra.mxu0 %v137
  %2508 = vmatprep.subr.mxu0 0.0
  %2509 = vmatpush1.msra.mxu0 %v138
  %2510 = vmatprep.subr.mxu0 0.0
  %2511 = vmatpush1.msra.mxu0 0.0
  %2512 = vmatprep.subr.mxu0 0.0
  %2513 = vmatpush1.msra.mxu0 0.0
  %2514 = vmatprep.subr.mxu0 0.0
  %2515 = vmatpush1.msra.mxu0 0.0
  %2516 = vmatprep.subr.mxu0 0.0
  %2517 = vmatpush1.msra.mxu0 0.0
  %2518 = vmatprep.subr.mxu0 0.0
  %2519 = vmatpush1.msra.mxu0 0.0
  %2520 = vmatprep.subr.mxu0 0.0
  %2521 = vmatpush1.msra.mxu0 0.0
  %2522 = vmatprep.subr.mxu0 0.0
  %2523 = vmatpush1.msra.mxu0 0.0
  %2524 = vmatprep.subr.mxu0 0.0
  %2525 = vmatpush1.msra.mxu0 0.0
  %2526 = vmatprep.subr.mxu0 0.0
  %2527 = vmatpush1.msra.mxu0 0.0
  %2528 = vmatprep.subr.mxu0 0.0
  %2529 = vmatpush1.msra.mxu0 0.0
  %2530 = vmatprep.subr.mxu0 0.0
  %2531 = vmatpush1.msra.mxu0 0.0
  %2532 = vmatprep.subr.mxu0 0.0
  %2533 = vmatpush1.msra.mxu0 0.0
  %2534 = vmatprep.subr.mxu0 0.0
  %2535 = vmatpush1.msra.mxu0 0.0
  %2536 = vmatprep.subr.mxu0 0.0
  %2537 = vmatpush1.msra.mxu0 0.0
  %2538 = vmatprep.subr.mxu0 0.0
  %2539 = vmatpush1.msra.mxu0 0.0
  %2540 = vmatprep.subr.mxu0 0.0
  %2541 = vmatpush1.msra.mxu0 0.0
  %2542 = vmatprep.subr.mxu0 0.0
  %2543 = vmatpush1.msra.mxu0 0.0
  %2544 = vmatprep.subr.mxu0 0.0
  %2545 = vmatpush1.msra.mxu0 0.0
  %2546 = vmatprep.subr.mxu0 0.0
  %2547 = vmatpush1.msra.mxu0 0.0
  %2548 = vmatprep.subr.mxu0 0.0
  %2549 = vmatpush1.msra.mxu0 0.0
  %2550 = vmatprep.subr.mxu0 0.0
  %2551 = vmatpush1.msra.mxu0 0.0
  %2552 = vmatprep.subr.mxu0 0.0
  %2553 = vmatpush1.msra.mxu0 0.0
  %2554 = vmatprep.subr.mxu0 0.0
  %2555 = vmatpush1.msra.mxu0 0.0
  %2556 = vmatprep.subr.mxu0 0.0
  %2557 = vmatpush1.msra.mxu0 0.0
  %2558 = vmatprep.mubr.f32.mxu0 0.0
  %2559 = vmatmul.mubr.f32.gmra.mrb[0].mxu0 %v2492
  %v2560 = vpop.f32.mrb[0].mxu0
  %v2561 = vadd.f32 0.0, %v2560
  %v2562 = vpop.f32.mrb[0].mxu0
  %2563 = vdwg.mxu0
  %v2564 = vadd.f32 %v351, %v2561
  %v2565 = vxor.u32 %v2564, 2147483648
  %v2566 = vmul.f32 %v2565, 1.442695
  %v2567 = vpow.pop %v2566
  %v2568 = vadd.f32 %v2567, 1.0
  %v2569 = vrcp.pop %v2568
  %v2570 = vmul.f32 1.0, %v2569
  %2571 = vmatprep.subr.mxu0 0.0
  %2572 = vmatpush1.msra.mxu0 %v139
  %2573 = vmatprep.subr.mxu0 0.0
  %2574 = vmatpush1.msra.mxu0 %v140
  %2575 = vmatprep.subr.mxu0 0.0
  %2576 = vmatpush1.msra.mxu0 %v141
  %2577 = vmatprep.subr.mxu0 0.0
  %2578 = vmatpush1.msra.mxu0 %v142
  %2579 = vmatprep.subr.mxu0 0.0
  %2580 = vmatpush1.msra.mxu0 %v143
  %2581 = vmatprep.subr.mxu0 0.0
  %2582 = vmatpush1.msra.mxu0 %v144
  %2583 = vmatprep.subr.mxu0 0.0
  %2584 = vmatpush1.msra.mxu0 %v145
  %2585 = vmatprep.subr.mxu0 0.0
  %2586 = vmatpush1.msra.mxu0 %v146
  %2587 = vmatprep.subr.mxu0 0.0
  %2588 = vmatpush1.msra.mxu0 0.0
  %2589 = vmatprep.subr.mxu0 0.0
  %2590 = vmatpush1.msra.mxu0 0.0
  %2591 = vmatprep.subr.mxu0 0.0
  %2592 = vmatpush1.msra.mxu0 0.0
  %2593 = vmatprep.subr.mxu0 0.0
  %2594 = vmatpush1.msra.mxu0 0.0
  %2595 = vmatprep.subr.mxu0 0.0
  %2596 = vmatpush1.msra.mxu0 0.0
  %2597 = vmatprep.subr.mxu0 0.0
  %2598 = vmatpush1.msra.mxu0 0.0
  %2599 = vmatprep.subr.mxu0 0.0
  %2600 = vmatpush1.msra.mxu0 0.0
  %2601 = vmatprep.subr.mxu0 0.0
  %2602 = vmatpush1.msra.mxu0 0.0
  %2603 = vmatprep.subr.mxu0 0.0
  %2604 = vmatpush1.msra.mxu0 0.0
  %2605 = vmatprep.subr.mxu0 0.0
  %2606 = vmatpush1.msra.mxu0 0.0
  %2607 = vmatprep.subr.mxu0 0.0
  %2608 = vmatpush1.msra.mxu0 0.0
  %2609 = vmatprep.subr.mxu0 0.0
  %2610 = vmatpush1.msra.mxu0 0.0
  %2611 = vmatprep.subr.mxu0 0.0
  %2612 = vmatpush1.msra.mxu0 0.0
  %2613 = vmatprep.subr.mxu0 0.0
  %2614 = vmatpush1.msra.mxu0 0.0
  %2615 = vmatprep.subr.mxu0 0.0
  %2616 = vmatpush1.msra.mxu0 0.0
  %2617 = vmatprep.subr.mxu0 0.0
  %2618 = vmatpush1.msra.mxu0 0.0
  %2619 = vmatprep.subr.mxu0 0.0
  %2620 = vmatpush1.msra.mxu0 0.0
  %2621 = vmatprep.subr.mxu0 0.0
  %2622 = vmatpush1.msra.mxu0 0.0
  %2623 = vmatprep.subr.mxu0 0.0
  %2624 = vmatpush1.msra.mxu0 0.0
  %2625 = vmatprep.subr.mxu0 0.0
  %2626 = vmatpush1.msra.mxu0 0.0
  %2627 = vmatprep.subr.mxu0 0.0
  %2628 = vmatpush1.msra.mxu0 0.0
  %2629 = vmatprep.subr.mxu0 0.0
  %2630 = vmatpush1.msra.mxu0 0.0
  %2631 = vmatprep.subr.mxu0 0.0
  %2632 = vmatpush1.msra.mxu0 0.0
  %2633 = vmatprep.subr.mxu0 0.0
  %2634 = vmatpush1.msra.mxu0 0.0
  %2635 = vmatprep.mubr.f32.mxu0 0.0
  %2636 = vmatmul.mubr.f32.gmra.mrb[0].mxu0 %v2492
  %v2637 = vpop.f32.mrb[0].mxu0
  %v2638 = vadd.f32 0.0, %v2637
  %v2639 = vpop.f32.mrb[0].mxu0
  %2640 = vdwg.mxu0
  %v2641 = vadd.f32 %v444, %v2638
  %v2642 = vxor.u32 %v2641, 2147483648
  %v2643 = vmul.f32 %v2642, 1.442695
  %v2644 = vpow.pop %v2643
  %v2645 = vadd.f32 %v2644, 1.0
  %v2646 = vrcp.pop %v2645
  %v2647 = vmul.f32 1.0, %v2646
  %2648 = vmatprep.subr.mxu0 0.0
  %2649 = vmatpush1.msra.mxu0 %v147
  %2650 = vmatprep.subr.mxu0 0.0
  %2651 = vmatpush1.msra.mxu0 %v148
  %2652 = vmatprep.subr.mxu0 0.0
  %2653 = vmatpush1.msra.mxu0 %v149
  %2654 = vmatprep.subr.mxu0 0.0
  %2655 = vmatpush1.msra.mxu0 %v150
  %2656 = vmatprep.subr.mxu0 0.0
  %2657 = vmatpush1.msra.mxu0 %v151
  %2658 = vmatprep.subr.mxu0 0.0
  %2659 = vmatpush1.msra.mxu0 %v152
  %2660 = vmatprep.subr.mxu0 0.0
  %2661 = vmatpush1.msra.mxu0 %v153
  %2662 = vmatprep.subr.mxu0 0.0
  %2663 = vmatpush1.msra.mxu0 %v154
  %2664 = vmatprep.subr.mxu0 0.0
  %2665 = vmatpush1.msra.mxu0 0.0
  %2666 = vmatprep.subr.mxu0 0.0
  %2667 = vmatpush1.msra.mxu0 0.0
  %2668 = vmatprep.subr.mxu0 0.0
  %2669 = vmatpush1.msra.mxu0 0.0
  %2670 = vmatprep.subr.mxu0 0.0
  %2671 = vmatpush1.msra.mxu0 0.0
  %2672 = vmatprep.subr.mxu0 0.0
  %2673 = vmatpush1.msra.mxu0 0.0
  %2674 = vmatprep.subr.mxu0 0.0
  %2675 = vmatpush1.msra.mxu0 0.0
  %2676 = vmatprep.subr.mxu0 0.0
  %2677 = vmatpush1.msra.mxu0 0.0
  %2678 = vmatprep.subr.mxu0 0.0
  %2679 = vmatpush1.msra.mxu0 0.0
  %2680 = vmatprep.subr.mxu0 0.0
  %2681 = vmatpush1.msra.mxu0 0.0
  %2682 = vmatprep.subr.mxu0 0.0
  %2683 = vmatpush1.msra.mxu0 0.0
  %2684 = vmatprep.subr.mxu0 0.0
  %2685 = vmatpush1.msra.mxu0 0.0
  %2686 = vmatprep.subr.mxu0 0.0
  %2687 = vmatpush1.msra.mxu0 0.0
  %2688 = vmatprep.subr.mxu0 0.0
  %2689 = vmatpush1.msra.mxu0 0.0
  %2690 = vmatprep.subr.mxu0 0.0
  %2691 = vmatpush1.msra.mxu0 0.0
  %2692 = vmatprep.subr.mxu0 0.0
  %2693 = vmatpush1.msra.mxu0 0.0
  %2694 = vmatprep.subr.mxu0 0.0
  %2695 = vmatpush1.msra.mxu0 0.0
  %2696 = vmatprep.subr.mxu0 0.0
  %2697 = vmatpush1.msra.mxu0 0.0
  %2698 = vmatprep.subr.mxu0 0.0
  %2699 = vmatpush1.msra.mxu0 0.0
  %2700 = vmatprep.subr.mxu0 0.0
  %2701 = vmatpush1.msra.mxu0 0.0
  %2702 = vmatprep.subr.mxu0 0.0
  %2703 = vmatpush1.msra.mxu0 0.0
  %2704 = vmatprep.subr.mxu0 0.0
  %2705 = vmatpush1.msra.mxu0 0.0
  %2706 = vmatprep.subr.mxu0 0.0
  %2707 = vmatpush1.msra.mxu0 0.0
  %2708 = vmatprep.subr.mxu0 0.0
  %2709 = vmatpush1.msra.mxu0 0.0
  %2710 = vmatprep.subr.mxu0 0.0
  %2711 = vmatpush1.msra.mxu0 0.0
  %2712 = vmatprep.mubr.f32.mxu0 0.0
  %2713 = vmatmul.mubr.f32.gmra.mrb[0].mxu0 %v2492
  %v2714 = vpop.f32.mrb[0].mxu0
  %v2715 = vadd.f32 %v216, %v2714
  %v2716 = vpop.f32.mrb[0].mxu0
  %2717 = vdwg.mxu0
  %v2718 = vmul.f32 %v2570, %v2715
  %v2719 = vadd.f32 %v537, %v2718
  %v2720 = vtanh.pop %v2719
  %v2721 = vsub.f32 1.0, %v2647
  %v2722 = vmul.f32 %v2721, %v2720
  %v2724 = vmul.f32 %v2647, %v2491
  %v2725 = vadd.f32 %v2722, %v2724
  %v2727 = vsel %vm545, %v2725, 0
  %2729 = vmatprep.subr.mxu0 0.0
  %2730 = vmatpush1.msra.mxu0 %v131
  %2731 = vmatprep.subr.mxu0 0.0
  %2732 = vmatpush1.msra.mxu0 %v132
  %2733 = vmatprep.subr.mxu0 0.0
  %2734 = vmatpush1.msra.mxu0 %v133
  %2735 = vmatprep.subr.mxu0 0.0
  %2736 = vmatpush1.msra.mxu0 %v134
  %2737 = vmatprep.subr.mxu0 0.0
  %2738 = vmatpush1.msra.mxu0 %v135
  %2739 = vmatprep.subr.mxu0 0.0
  %2740 = vmatpush1.msra.mxu0 %v136
  %2741 = vmatprep.subr.mxu0 0.0
  %2742 = vmatpush1.msra.mxu0 %v137
  %2743 = vmatprep.subr.mxu0 0.0
  %2744 = vmatpush1.msra.mxu0 %v138
  %2745 = vmatprep.subr.mxu0 0.0
  %2746 = vmatpush1.msra.mxu0 0.0
  %2747 = vmatprep.subr.mxu0 0.0
  %2748 = vmatpush1.msra.mxu0 0.0
  %2749 = vmatprep.subr.mxu0 0.0
  %2750 = vmatpush1.msra.mxu0 0.0
  %2751 = vmatprep.subr.mxu0 0.0
  %2752 = vmatpush1.msra.mxu0 0.0
  %2753 = vmatprep.subr.mxu0 0.0
  %2754 = vmatpush1.msra.mxu0 0.0
  %2755 = vmatprep.subr.mxu0 0.0
  %2756 = vmatpush1.msra.mxu0 0.0
  %2757 = vmatprep.subr.mxu0 0.0
  %2758 = vmatpush1.msra.mxu0 0.0
  %2759 = vmatprep.subr.mxu0 0.0
  %2760 = vmatpush1.msra.mxu0 0.0
  %2761 = vmatprep.subr.mxu0 0.0
  %2762 = vmatpush1.msra.mxu0 0.0
  %2763 = vmatprep.subr.mxu0 0.0
  %2764 = vmatpush1.msra.mxu0 0.0
  %2765 = vmatprep.subr.mxu0 0.0
  %2766 = vmatpush1.msra.mxu0 0.0
  %2767 = vmatprep.subr.mxu0 0.0
  %2768 = vmatpush1.msra.mxu0 0.0
  %2769 = vmatprep.subr.mxu0 0.0
  %2770 = vmatpush1.msra.mxu0 0.0
  %2771 = vmatprep.subr.mxu0 0.0
  %2772 = vmatpush1.msra.mxu0 0.0
  %2773 = vmatprep.subr.mxu0 0.0
  %2774 = vmatpush1.msra.mxu0 0.0
  %2775 = vmatprep.subr.mxu0 0.0
  %2776 = vmatpush1.msra.mxu0 0.0
  %2777 = vmatprep.subr.mxu0 0.0
  %2778 = vmatpush1.msra.mxu0 0.0
  %2779 = vmatprep.subr.mxu0 0.0
  %2780 = vmatpush1.msra.mxu0 0.0
  %2781 = vmatprep.subr.mxu0 0.0
  %2782 = vmatpush1.msra.mxu0 0.0
  %2783 = vmatprep.subr.mxu0 0.0
  %2784 = vmatpush1.msra.mxu0 0.0
  %2785 = vmatprep.subr.mxu0 0.0
  %2786 = vmatpush1.msra.mxu0 0.0
  %2787 = vmatprep.subr.mxu0 0.0
  %2788 = vmatpush1.msra.mxu0 0.0
  %2789 = vmatprep.subr.mxu0 0.0
  %2790 = vmatpush1.msra.mxu0 0.0
  %2791 = vmatprep.subr.mxu0 0.0
  %2792 = vmatpush1.msra.mxu0 0.0
  %2793 = vmatprep.mubr.f32.mxu0 0.0
  %2794 = vmatmul.mubr.f32.gmra.mrb[0].mxu0 %v2727
  %v2795 = vpop.f32.mrb[0].mxu0
  %v2796 = vadd.f32 0.0, %v2795
  %v2797 = vpop.f32.mrb[0].mxu0
  %2798 = vdwg.mxu0
  %v2800 = vrot.slane %v2796, 6
  %v2802 = vadd.f32 %v351, %v2800
  %v2803 = vxor.u32 %v2802, 2147483648
  %v2804 = vmul.f32 %v2803, 1.442695
  %v2805 = vpow.pop %v2804
  %v2806 = vadd.f32 %v2805, 1.0
  %v2807 = vrcp.pop %v2806
  %v2808 = vmul.f32 1.0, %v2807
  %2809 = vmatprep.subr.mxu0 0.0
  %2810 = vmatpush1.msra.mxu0 %v139
  %2811 = vmatprep.subr.mxu0 0.0
  %2812 = vmatpush1.msra.mxu0 %v140
  %2813 = vmatprep.subr.mxu0 0.0
  %2814 = vmatpush1.msra.mxu0 %v141
  %2815 = vmatprep.subr.mxu0 0.0
  %2816 = vmatpush1.msra.mxu0 %v142
  %2817 = vmatprep.subr.mxu0 0.0
  %2818 = vmatpush1.msra.mxu0 %v143
  %2819 = vmatprep.subr.mxu0 0.0
  %2820 = vmatpush1.msra.mxu0 %v144
  %2821 = vmatprep.subr.mxu0 0.0
  %2822 = vmatpush1.msra.mxu0 %v145
  %2823 = vmatprep.subr.mxu0 0.0
  %2824 = vmatpush1.msra.mxu0 %v146
  %2825 = vmatprep.subr.mxu0 0.0
  %2826 = vmatpush1.msra.mxu0 0.0
  %2827 = vmatprep.subr.mxu0 0.0
  %2828 = vmatpush1.msra.mxu0 0.0
  %2829 = vmatprep.subr.mxu0 0.0
  %2830 = vmatpush1.msra.mxu0 0.0
  %2831 = vmatprep.subr.mxu0 0.0
  %2832 = vmatpush1.msra.mxu0 0.0
  %2833 = vmatprep.subr.mxu0 0.0
  %2834 = vmatpush1.msra.mxu0 0.0
  %2835 = vmatprep.subr.mxu0 0.0
  %2836 = vmatpush1.msra.mxu0 0.0
  %2837 = vmatprep.subr.mxu0 0.0
  %2838 = vmatpush1.msra.mxu0 0.0
  %2839 = vmatprep.subr.mxu0 0.0
  %2840 = vmatpush1.msra.mxu0 0.0
  %2841 = vmatprep.subr.mxu0 0.0
  %2842 = vmatpush1.msra.mxu0 0.0
  %2843 = vmatprep.subr.mxu0 0.0
  %2844 = vmatpush1.msra.mxu0 0.0
  %2845 = vmatprep.subr.mxu0 0.0
  %2846 = vmatpush1.msra.mxu0 0.0
  %2847 = vmatprep.subr.mxu0 0.0
  %2848 = vmatpush1.msra.mxu0 0.0
  %2849 = vmatprep.subr.mxu0 0.0
  %2850 = vmatpush1.msra.mxu0 0.0
  %2851 = vmatprep.subr.mxu0 0.0
  %2852 = vmatpush1.msra.mxu0 0.0
  %2853 = vmatprep.subr.mxu0 0.0
  %2854 = vmatpush1.msra.mxu0 0.0
  %2855 = vmatprep.subr.mxu0 0.0
  %2856 = vmatpush1.msra.mxu0 0.0
  %2857 = vmatprep.subr.mxu0 0.0
  %2858 = vmatpush1.msra.mxu0 0.0
  %2859 = vmatprep.subr.mxu0 0.0
  %2860 = vmatpush1.msra.mxu0 0.0
  %2861 = vmatprep.subr.mxu0 0.0
  %2862 = vmatpush1.msra.mxu0 0.0
  %2863 = vmatprep.subr.mxu0 0.0
  %2864 = vmatpush1.msra.mxu0 0.0
  %2865 = vmatprep.subr.mxu0 0.0
  %2866 = vmatpush1.msra.mxu0 0.0
  %2867 = vmatprep.subr.mxu0 0.0
  %2868 = vmatpush1.msra.mxu0 0.0
  %2869 = vmatprep.subr.mxu0 0.0
  %2870 = vmatpush1.msra.mxu0 0.0
  %2871 = vmatprep.subr.mxu0 0.0
  %2872 = vmatpush1.msra.mxu0 0.0
  %2873 = vmatprep.mubr.f32.mxu0 0.0
  %2874 = vmatmul.mubr.f32.gmra.mrb[0].mxu0 %v2727
  %v2875 = vpop.f32.mrb[0].mxu0
  %v2876 = vadd.f32 0.0, %v2875
  %v2877 = vpop.f32.mrb[0].mxu0
  %2878 = vdwg.mxu0
  %v2880 = vrot.slane %v2876, 6
  %v2882 = vadd.f32 %v444, %v2880
  %v2883 = vxor.u32 %v2882, 2147483648
  %v2884 = vmul.f32 %v2883, 1.442695
  %v2885 = vpow.pop %v2884
  %v2886 = vadd.f32 %v2885, 1.0
  %v2887 = vrcp.pop %v2886
  %v2888 = vmul.f32 1.0, %v2887
  %2889 = vmatprep.subr.mxu0 0.0
  %2890 = vmatpush1.msra.mxu0 %v147
  %2891 = vmatprep.subr.mxu0 0.0
  %2892 = vmatpush1.msra.mxu0 %v148
  %2893 = vmatprep.subr.mxu0 0.0
  %2894 = vmatpush1.msra.mxu0 %v149
  %2895 = vmatprep.subr.mxu0 0.0
  %2896 = vmatpush1.msra.mxu0 %v150
  %2897 = vmatprep.subr.mxu0 0.0
  %2898 = vmatpush1.msra.mxu0 %v151
  %2899 = vmatprep.subr.mxu0 0.0
  %2900 = vmatpush1.msra.mxu0 %v152
  %2901 = vmatprep.subr.mxu0 0.0
  %2902 = vmatpush1.msra.mxu0 %v153
  %2903 = vmatprep.subr.mxu0 0.0
  %2904 = vmatpush1.msra.mxu0 %v154
  %2905 = vmatprep.subr.mxu0 0.0
  %2906 = vmatpush1.msra.mxu0 0.0
  %2907 = vmatprep.subr.mxu0 0.0
  %2908 = vmatpush1.msra.mxu0 0.0
  %2909 = vmatprep.subr.mxu0 0.0
  %2910 = vmatpush1.msra.mxu0 0.0
  %2911 = vmatprep.subr.mxu0 0.0
  %2912 = vmatpush1.msra.mxu0 0.0
  %2913 = vmatprep.subr.mxu0 0.0
  %2914 = vmatpush1.msra.mxu0 0.0
  %2915 = vmatprep.subr.mxu0 0.0
  %2916 = vmatpush1.msra.mxu0 0.0
  %2917 = vmatprep.subr.mxu0 0.0
  %2918 = vmatpush1.msra.mxu0 0.0
  %2919 = vmatprep.subr.mxu0 0.0
  %2920 = vmatpush1.msra.mxu0 0.0
  %2921 = vmatprep.subr.mxu0 0.0
  %2922 = vmatpush1.msra.mxu0 0.0
  %2923 = vmatprep.subr.mxu0 0.0
  %2924 = vmatpush1.msra.mxu0 0.0
  %2925 = vmatprep.subr.mxu0 0.0
  %2926 = vmatpush1.msra.mxu0 0.0
  %2927 = vmatprep.subr.mxu0 0.0
  %2928 = vmatpush1.msra.mxu0 0.0
  %2929 = vmatprep.subr.mxu0 0.0
  %2930 = vmatpush1.msra.mxu0 0.0
  %2931 = vmatprep.subr.mxu0 0.0
  %2932 = vmatpush1.msra.mxu0 0.0
  %2933 = vmatprep.subr.mxu0 0.0
  %2934 = vmatpush1.msra.mxu0 0.0
  %2935 = vmatprep.subr.mxu0 0.0
  %2936 = vmatpush1.msra.mxu0 0.0
  %2937 = vmatprep.subr.mxu0 0.0
  %2938 = vmatpush1.msra.mxu0 0.0
  %2939 = vmatprep.subr.mxu0 0.0
  %2940 = vmatpush1.msra.mxu0 0.0
  %2941 = vmatprep.subr.mxu0 0.0
  %2942 = vmatpush1.msra.mxu0 0.0
  %2943 = vmatprep.subr.mxu0 0.0
  %2944 = vmatpush1.msra.mxu0 0.0
  %2945 = vmatprep.subr.mxu0 0.0
  %2946 = vmatpush1.msra.mxu0 0.0
  %2947 = vmatprep.subr.mxu0 0.0
  %2948 = vmatpush1.msra.mxu0 0.0
  %2949 = vmatprep.subr.mxu0 0.0
  %2950 = vmatpush1.msra.mxu0 0.0
  %2951 = vmatprep.subr.mxu0 0.0
  %2952 = vmatpush1.msra.mxu0 0.0
  %2953 = vmatprep.mubr.f32.mxu0 0.0
  %2954 = vmatmul.mubr.f32.gmra.mrb[0].mxu0 %v2727
  %v2955 = vpop.f32.mrb[0].mxu0
  %v2956 = vadd.f32 %v216, %v2955
  %v2957 = vpop.f32.mrb[0].mxu0
  %2958 = vdwg.mxu0
  %v2960 = vrot.slane %v2956, 6
  %v2962 = vmul.f32 %v2808, %v2960
  %v2963 = vadd.f32 %v537, %v2962
  %v2964 = vtanh.pop %v2963
  %v2965 = vsub.f32 1.0, %v2888
  %v2966 = vmul.f32 %v2965, %v2964
  %v2967 = vrot.slane %v2725, 6
  %v2969 = vmul.f32 %v2888, %v2967
  %v2970 = vadd.f32 %v2966, %v2969
  %v2972 = vrot.slane %v2970, 2
  %v2973 = vsel %vm545, %v2972, 0
  %2975 = vmatprep.subr.mxu0 0.0
  %2976 = vmatpush1.msra.mxu0 %v131
  %2977 = vmatprep.subr.mxu0 0.0
  %2978 = vmatpush1.msra.mxu0 %v132
  %2979 = vmatprep.subr.mxu0 0.0
  %2980 = vmatpush1.msra.mxu0 %v133
  %2981 = vmatprep.subr.mxu0 0.0
  %2982 = vmatpush1.msra.mxu0 %v134
  %2983 = vmatprep.subr.mxu0 0.0
  %2984 = vmatpush1.msra.mxu0 %v135
  %2985 = vmatprep.subr.mxu0 0.0
  %2986 = vmatpush1.msra.mxu0 %v136
  %2987 = vmatprep.subr.mxu0 0.0
  %2988 = vmatpush1.msra.mxu0 %v137
  %2989 = vmatprep.subr.mxu0 0.0
  %2990 = vmatpush1.msra.mxu0 %v138
  %2991 = vmatprep.subr.mxu0 0.0
  %2992 = vmatpush1.msra.mxu0 0.0
  %2993 = vmatprep.subr.mxu0 0.0
  %2994 = vmatpush1.msra.mxu0 0.0
  %2995 = vmatprep.subr.mxu0 0.0
  %2996 = vmatpush1.msra.mxu0 0.0
  %2997 = vmatprep.subr.mxu0 0.0
  %2998 = vmatpush1.msra.mxu0 0.0
  %2999 = vmatprep.subr.mxu0 0.0
  %3000 = vmatpush1.msra.mxu0 0.0
  %3001 = vmatprep.subr.mxu0 0.0
  %3002 = vmatpush1.msra.mxu0 0.0
  %3003 = vmatprep.subr.mxu0 0.0
  %3004 = vmatpush1.msra.mxu0 0.0
  %3005 = vmatprep.subr.mxu0 0.0
  %3006 = vmatpush1.msra.mxu0 0.0
  %3007 = vmatprep.subr.mxu0 0.0
  %3008 = vmatpush1.msra.mxu0 0.0
  %3009 = vmatprep.subr.mxu0 0.0
  %3010 = vmatpush1.msra.mxu0 0.0
  %3011 = vmatprep.subr.mxu0 0.0
  %3012 = vmatpush1.msra.mxu0 0.0
  %3013 = vmatprep.subr.mxu0 0.0
  %3014 = vmatpush1.msra.mxu0 0.0
  %3015 = vmatprep.subr.mxu0 0.0
  %3016 = vmatpush1.msra.mxu0 0.0
  %3017 = vmatprep.subr.mxu0 0.0
  %3018 = vmatpush1.msra.mxu0 0.0
  %3019 = vmatprep.subr.mxu0 0.0
  %3020 = vmatpush1.msra.mxu0 0.0
  %3021 = vmatprep.subr.mxu0 0.0
  %3022 = vmatpush1.msra.mxu0 0.0
  %3023 = vmatprep.subr.mxu0 0.0
  %3024 = vmatpush1.msra.mxu0 0.0
  %3025 = vmatprep.subr.mxu0 0.0
  %3026 = vmatpush1.msra.mxu0 0.0
  %3027 = vmatprep.subr.mxu0 0.0
  %3028 = vmatpush1.msra.mxu0 0.0
  %3029 = vmatprep.subr.mxu0 0.0
  %3030 = vmatpush1.msra.mxu0 0.0
  %3031 = vmatprep.subr.mxu0 0.0
  %3032 = vmatpush1.msra.mxu0 0.0
  %3033 = vmatprep.subr.mxu0 0.0
  %3034 = vmatpush1.msra.mxu0 0.0
  %3035 = vmatprep.subr.mxu0 0.0
  %3036 = vmatpush1.msra.mxu0 0.0
  %3037 = vmatprep.subr.mxu0 0.0
  %3038 = vmatpush1.msra.mxu0 0.0
  %3039 = vmatprep.mubr.f32.mxu0 0.0
  %3040 = vmatmul.mubr.f32.gmra.mrb[0].mxu0 %v2973
  %v3041 = vpop.f32.mrb[0].mxu0
  %v3042 = vadd.f32 0.0, %v3041
  %v3043 = vpop.f32.mrb[0].mxu0
  %3044 = vdwg.mxu0
  %v3046 = vrot.slane %v3042, 4
  %v3048 = vadd.f32 %v351, %v3046
  %v3049 = vxor.u32 %v3048, 2147483648
  %v3050 = vmul.f32 %v3049, 1.442695
  %v3051 = vpow.pop %v3050
  %v3052 = vadd.f32 %v3051, 1.0
  %v3053 = vrcp.pop %v3052
  %v3054 = vmul.f32 1.0, %v3053
  %3055 = vmatprep.subr.mxu0 0.0
  %3056 = vmatpush1.msra.mxu0 %v139
  %3057 = vmatprep.subr.mxu0 0.0
  %3058 = vmatpush1.msra.mxu0 %v140
  %3059 = vmatprep.subr.mxu0 0.0
  %3060 = vmatpush1.msra.mxu0 %v141
  %3061 = vmatprep.subr.mxu0 0.0
  %3062 = vmatpush1.msra.mxu0 %v142
  %3063 = vmatprep.subr.mxu0 0.0
  %3064 = vmatpush1.msra.mxu0 %v143
  %3065 = vmatprep.subr.mxu0 0.0
  %3066 = vmatpush1.msra.mxu0 %v144
  %3067 = vmatprep.subr.mxu0 0.0
  %3068 = vmatpush1.msra.mxu0 %v145
  %3069 = vmatprep.subr.mxu0 0.0
  %3070 = vmatpush1.msra.mxu0 %v146
  %3071 = vmatprep.subr.mxu0 0.0
  %3072 = vmatpush1.msra.mxu0 0.0
  %3073 = vmatprep.subr.mxu0 0.0
  %3074 = vmatpush1.msra.mxu0 0.0
  %3075 = vmatprep.subr.mxu0 0.0
  %3076 = vmatpush1.msra.mxu0 0.0
  %3077 = vmatprep.subr.mxu0 0.0
  %3078 = vmatpush1.msra.mxu0 0.0
  %3079 = vmatprep.subr.mxu0 0.0
  %3080 = vmatpush1.msra.mxu0 0.0
  %3081 = vmatprep.subr.mxu0 0.0
  %3082 = vmatpush1.msra.mxu0 0.0
  %3083 = vmatprep.subr.mxu0 0.0
  %3084 = vmatpush1.msra.mxu0 0.0
  %3085 = vmatprep.subr.mxu0 0.0
  %3086 = vmatpush1.msra.mxu0 0.0
  %3087 = vmatprep.subr.mxu0 0.0
  %3088 = vmatpush1.msra.mxu0 0.0
  %3089 = vmatprep.subr.mxu0 0.0
  %3090 = vmatpush1.msra.mxu0 0.0
  %3091 = vmatprep.subr.mxu0 0.0
  %3092 = vmatpush1.msra.mxu0 0.0
  %3093 = vmatprep.subr.mxu0 0.0
  %3094 = vmatpush1.msra.mxu0 0.0
  %3095 = vmatprep.subr.mxu0 0.0
  %3096 = vmatpush1.msra.mxu0 0.0
  %3097 = vmatprep.subr.mxu0 0.0
  %3098 = vmatpush1.msra.mxu0 0.0
  %3099 = vmatprep.subr.mxu0 0.0
  %3100 = vmatpush1.msra.mxu0 0.0
  %3101 = vmatprep.subr.mxu0 0.0
  %3102 = vmatpush1.msra.mxu0 0.0
  %3103 = vmatprep.subr.mxu0 0.0
  %3104 = vmatpush1.msra.mxu0 0.0
  %3105 = vmatprep.subr.mxu0 0.0
  %3106 = vmatpush1.msra.mxu0 0.0
  %3107 = vmatprep.subr.mxu0 0.0
  %3108 = vmatpush1.msra.mxu0 0.0
  %3109 = vmatprep.subr.mxu0 0.0
  %3110 = vmatpush1.msra.mxu0 0.0
  %3111 = vmatprep.subr.mxu0 0.0
  %3112 = vmatpush1.msra.mxu0 0.0
  %3113 = vmatprep.subr.mxu0 0.0
  %3114 = vmatpush1.msra.mxu0 0.0
  %3115 = vmatprep.subr.mxu0 0.0
  %3116 = vmatpush1.msra.mxu0 0.0
  %3117 = vmatprep.subr.mxu0 0.0
  %3118 = vmatpush1.msra.mxu0 0.0
  %3119 = vmatprep.mubr.f32.mxu0 0.0
  %3120 = vmatmul.mubr.f32.gmra.mrb[0].mxu0 %v2973
  %v3121 = vpop.f32.mrb[0].mxu0
  %v3122 = vadd.f32 0.0, %v3121
  %v3123 = vpop.f32.mrb[0].mxu0
  %3124 = vdwg.mxu0
  %v3126 = vrot.slane %v3122, 4
  %v3128 = vadd.f32 %v444, %v3126
  %v3129 = vxor.u32 %v3128, 2147483648
  %v3130 = vmul.f32 %v3129, 1.442695
  %v3131 = vpow.pop %v3130
  %v3132 = vadd.f32 %v3131, 1.0
  %v3133 = vrcp.pop %v3132
  %v3134 = vmul.f32 1.0, %v3133
  %3135 = vmatprep.subr.mxu0 0.0
  %3136 = vmatpush1.msra.mxu0 %v147
  %3137 = vmatprep.subr.mxu0 0.0
  %3138 = vmatpush1.msra.mxu0 %v148
  %3139 = vmatprep.subr.mxu0 0.0
  %3140 = vmatpush1.msra.mxu0 %v149
  %3141 = vmatprep.subr.mxu0 0.0
  %3142 = vmatpush1.msra.mxu0 %v150
  %3143 = vmatprep.subr.mxu0 0.0
  %3144 = vmatpush1.msra.mxu0 %v151
  %3145 = vmatprep.subr.mxu0 0.0
  %3146 = vmatpush1.msra.mxu0 %v152
  %3147 = vmatprep.subr.mxu0 0.0
  %3148 = vmatpush1.msra.mxu0 %v153
  %3149 = vmatprep.subr.mxu0 0.0
  %3150 = vmatpush1.msra.mxu0 %v154
  %3151 = vmatprep.subr.mxu0 0.0
  %3152 = vmatpush1.msra.mxu0 0.0
  %3153 = vmatprep.subr.mxu0 0.0
  %3154 = vmatpush1.msra.mxu0 0.0
  %3155 = vmatprep.subr.mxu0 0.0
  %3156 = vmatpush1.msra.mxu0 0.0
  %3157 = vmatprep.subr.mxu0 0.0
  %3158 = vmatpush1.msra.mxu0 0.0
  %3159 = vmatprep.subr.mxu0 0.0
  %3160 = vmatpush1.msra.mxu0 0.0
  %3161 = vmatprep.subr.mxu0 0.0
  %3162 = vmatpush1.msra.mxu0 0.0
  %3163 = vmatprep.subr.mxu0 0.0
  %3164 = vmatpush1.msra.mxu0 0.0
  %3165 = vmatprep.subr.mxu0 0.0
  %3166 = vmatpush1.msra.mxu0 0.0
  %3167 = vmatprep.subr.mxu0 0.0
  %3168 = vmatpush1.msra.mxu0 0.0
  %3169 = vmatprep.subr.mxu0 0.0
  %3170 = vmatpush1.msra.mxu0 0.0
  %3171 = vmatprep.subr.mxu0 0.0
  %3172 = vmatpush1.msra.mxu0 0.0
  %3173 = vmatprep.subr.mxu0 0.0
  %3174 = vmatpush1.msra.mxu0 0.0
  %3175 = vmatprep.subr.mxu0 0.0
  %3176 = vmatpush1.msra.mxu0 0.0
  %3177 = vmatprep.subr.mxu0 0.0
  %3178 = vmatpush1.msra.mxu0 0.0
  %3179 = vmatprep.subr.mxu0 0.0
  %3180 = vmatpush1.msra.mxu0 0.0
  %3181 = vmatprep.subr.mxu0 0.0
  %3182 = vmatpush1.msra.mxu0 0.0
  %3183 = vmatprep.subr.mxu0 0.0
  %3184 = vmatpush1.msra.mxu0 0.0
  %3185 = vmatprep.subr.mxu0 0.0
  %3186 = vmatpush1.msra.mxu0 0.0
  %3187 = vmatprep.subr.mxu0 0.0
  %3188 = vmatpush1.msra.mxu0 0.0
  %3189 = vmatprep.subr.mxu0 0.0
  %3190 = vmatpush1.msra.mxu0 0.0
  %3191 = vmatprep.subr.mxu0 0.0
  %3192 = vmatpush1.msra.mxu0 0.0
  %3193 = vmatprep.subr.mxu0 0.0
  %3194 = vmatpush1.msra.mxu0 0.0
  %3195 = vmatprep.subr.mxu0 0.0
  %3196 = vmatpush1.msra.mxu0 0.0
  %3197 = vmatprep.subr.mxu0 0.0
  %3198 = vmatpush1.msra.mxu0 0.0
  %3199 = vmatprep.mubr.f32.mxu0 0.0
  %3200 = vmatmul.mubr.f32.gmra.mrb[0].mxu0 %v2973
  %v3201 = vpop.f32.mrb[0].mxu0
  %v3202 = vadd.f32 %v216, %v3201
  %v3203 = vpop.f32.mrb[0].mxu0
  %3204 = vdwg.mxu0
  %v3206 = vrot.slane %v3202, 4
  %v3208 = vmul.f32 %v3054, %v3206
  %v3209 = vadd.f32 %v537, %v3208
  %v3210 = vtanh.pop %v3209
  %v3211 = vsub.f32 1.0, %v3134
  %v3212 = vmul.f32 %v3211, %v3210
  %v3213 = vrot.slane %v2970, 6
  %v3215 = vmul.f32 %v3134, %v3213
  %v3216 = vadd.f32 %v3212, %v3215
  %v3218 = vrot.slane %v3216, 4
  %v3219 = vsel %vm545, %v3218, 0
  %3221 = vmatprep.subr.mxu0 0.0
  %3222 = vmatpush1.msra.mxu0 %v131
  %3223 = vmatprep.subr.mxu0 0.0
  %3224 = vmatpush1.msra.mxu0 %v132
  %3225 = vmatprep.subr.mxu0 0.0
  %3226 = vmatpush1.msra.mxu0 %v133
  %3227 = vmatprep.subr.mxu0 0.0
  %3228 = vmatpush1.msra.mxu0 %v134
  %3229 = vmatprep.subr.mxu0 0.0
  %3230 = vmatpush1.msra.mxu0 %v135
  %3231 = vmatprep.subr.mxu0 0.0
  %3232 = vmatpush1.msra.mxu0 %v136
  %3233 = vmatprep.subr.mxu0 0.0
  %3234 = vmatpush1.msra.mxu0 %v137
  %3235 = vmatprep.subr.mxu0 0.0
  %3236 = vmatpush1.msra.mxu0 %v138
  %3237 = vmatprep.subr.mxu0 0.0
  %3238 = vmatpush1.msra.mxu0 0.0
  %3239 = vmatprep.subr.mxu0 0.0
  %3240 = vmatpush1.msra.mxu0 0.0
  %3241 = vmatprep.subr.mxu0 0.0
  %3242 = vmatpush1.msra.mxu0 0.0
  %3243 = vmatprep.subr.mxu0 0.0
  %3244 = vmatpush1.msra.mxu0 0.0
  %3245 = vmatprep.subr.mxu0 0.0
  %3246 = vmatpush1.msra.mxu0 0.0
  %3247 = vmatprep.subr.mxu0 0.0
  %3248 = vmatpush1.msra.mxu0 0.0
  %3249 = vmatprep.subr.mxu0 0.0
  %3250 = vmatpush1.msra.mxu0 0.0
  %3251 = vmatprep.subr.mxu0 0.0
  %3252 = vmatpush1.msra.mxu0 0.0
  %3253 = vmatprep.subr.mxu0 0.0
  %3254 = vmatpush1.msra.mxu0 0.0
  %3255 = vmatprep.subr.mxu0 0.0
  %3256 = vmatpush1.msra.mxu0 0.0
  %3257 = vmatprep.subr.mxu0 0.0
  %3258 = vmatpush1.msra.mxu0 0.0
  %3259 = vmatprep.subr.mxu0 0.0
  %3260 = vmatpush1.msra.mxu0 0.0
  %3261 = vmatprep.subr.mxu0 0.0
  %3262 = vmatpush1.msra.mxu0 0.0
  %3263 = vmatprep.subr.mxu0 0.0
  %3264 = vmatpush1.msra.mxu0 0.0
  %3265 = vmatprep.subr.mxu0 0.0
  %3266 = vmatpush1.msra.mxu0 0.0
  %3267 = vmatprep.subr.mxu0 0.0
  %3268 = vmatpush1.msra.mxu0 0.0
  %3269 = vmatprep.subr.mxu0 0.0
  %3270 = vmatpush1.msra.mxu0 0.0
  %3271 = vmatprep.subr.mxu0 0.0
  %3272 = vmatpush1.msra.mxu0 0.0
  %3273 = vmatprep.subr.mxu0 0.0
  %3274 = vmatpush1.msra.mxu0 0.0
  %3275 = vmatprep.subr.mxu0 0.0
  %3276 = vmatpush1.msra.mxu0 0.0
  %3277 = vmatprep.subr.mxu0 0.0
  %3278 = vmatpush1.msra.mxu0 0.0
  %3279 = vmatprep.subr.mxu0 0.0
  %3280 = vmatpush1.msra.mxu0 0.0
  %3281 = vmatprep.subr.mxu0 0.0
  %3282 = vmatpush1.msra.mxu0 0.0
  %3283 = vmatprep.subr.mxu0 0.0
  %3284 = vmatpush1.msra.mxu0 0.0
  %3285 = vmatprep.mubr.f32.mxu0 0.0
  %3286 = vmatmul.mubr.f32.gmra.mrb[0].mxu0 %v3219
  %v3287 = vpop.f32.mrb[0].mxu0
  %v3288 = vadd.f32 0.0, %v3287
  %v3289 = vpop.f32.mrb[0].mxu0
  %3290 = vdwg.mxu0
  %v3292 = vrot.slane %v3288, 2
  %v3294 = vadd.f32 %v351, %v3292
  %v3295 = vxor.u32 %v3294, 2147483648
  %v3296 = vmul.f32 %v3295, 1.442695
  %v3297 = vpow.pop %v3296
  %v3298 = vadd.f32 %v3297, 1.0
  %v3299 = vrcp.pop %v3298
  %v3300 = vmul.f32 1.0, %v3299
  %3301 = vmatprep.subr.mxu0 0.0
  %3302 = vmatpush1.msra.mxu0 %v139
  %3303 = vmatprep.subr.mxu0 0.0
  %3304 = vmatpush1.msra.mxu0 %v140
  %3305 = vmatprep.subr.mxu0 0.0
  %3306 = vmatpush1.msra.mxu0 %v141
  %3307 = vmatprep.subr.mxu0 0.0
  %3308 = vmatpush1.msra.mxu0 %v142
  %3309 = vmatprep.subr.mxu0 0.0
  %3310 = vmatpush1.msra.mxu0 %v143
  %3311 = vmatprep.subr.mxu0 0.0
  %3312 = vmatpush1.msra.mxu0 %v144
  %3313 = vmatprep.subr.mxu0 0.0
  %3314 = vmatpush1.msra.mxu0 %v145
  %3315 = vmatprep.subr.mxu0 0.0
  %3316 = vmatpush1.msra.mxu0 %v146
  %3317 = vmatprep.subr.mxu0 0.0
  %3318 = vmatpush1.msra.mxu0 0.0
  %3319 = vmatprep.subr.mxu0 0.0
  %3320 = vmatpush1.msra.mxu0 0.0
  %3321 = vmatprep.subr.mxu0 0.0
  %3322 = vmatpush1.msra.mxu0 0.0
  %3323 = vmatprep.subr.mxu0 0.0
  %3324 = vmatpush1.msra.mxu0 0.0
  %3325 = vmatprep.subr.mxu0 0.0
  %3326 = vmatpush1.msra.mxu0 0.0
  %3327 = vmatprep.subr.mxu0 0.0
  %3328 = vmatpush1.msra.mxu0 0.0
  %3329 = vmatprep.subr.mxu0 0.0
  %3330 = vmatpush1.msra.mxu0 0.0
  %3331 = vmatprep.subr.mxu0 0.0
  %3332 = vmatpush1.msra.mxu0 0.0
  %3333 = vmatprep.subr.mxu0 0.0
  %3334 = vmatpush1.msra.mxu0 0.0
  %3335 = vmatprep.subr.mxu0 0.0
  %3336 = vmatpush1.msra.mxu0 0.0
  %3337 = vmatprep.subr.mxu0 0.0
  %3338 = vmatpush1.msra.mxu0 0.0
  %3339 = vmatprep.subr.mxu0 0.0
  %3340 = vmatpush1.msra.mxu0 0.0
  %3341 = vmatprep.subr.mxu0 0.0
  %3342 = vmatpush1.msra.mxu0 0.0
  %3343 = vmatprep.subr.mxu0 0.0
  %3344 = vmatpush1.msra.mxu0 0.0
  %3345 = vmatprep.subr.mxu0 0.0
  %3346 = vmatpush1.msra.mxu0 0.0
  %3347 = vmatprep.subr.mxu0 0.0
  %3348 = vmatpush1.msra.mxu0 0.0
  %3349 = vmatprep.subr.mxu0 0.0
  %3350 = vmatpush1.msra.mxu0 0.0
  %3351 = vmatprep.subr.mxu0 0.0
  %3352 = vmatpush1.msra.mxu0 0.0
  %3353 = vmatprep.subr.mxu0 0.0
  %3354 = vmatpush1.msra.mxu0 0.0
  %3355 = vmatprep.subr.mxu0 0.0
  %3356 = vmatpush1.msra.mxu0 0.0
  %3357 = vmatprep.subr.mxu0 0.0
  %3358 = vmatpush1.msra.mxu0 0.0
  %3359 = vmatprep.subr.mxu0 0.0
  %3360 = vmatpush1.msra.mxu0 0.0
  %3361 = vmatprep.subr.mxu0 0.0
  %3362 = vmatpush1.msra.mxu0 0.0
  %3363 = vmatprep.subr.mxu0 0.0
  %3364 = vmatpush1.msra.mxu0 0.0
  %3365 = vmatprep.mubr.f32.mxu0 0.0
  %3366 = vmatmul.mubr.f32.gmra.mrb[0].mxu0 %v3219
  %v3367 = vpop.f32.mrb[0].mxu0
  %v3368 = vadd.f32 0.0, %v3367
  %v3369 = vpop.f32.mrb[0].mxu0
  %3370 = vdwg.mxu0
  %v3372 = vrot.slane %v3368, 2
  %v3374 = vadd.f32 %v444, %v3372
  %v3375 = vxor.u32 %v3374, 2147483648
  %v3376 = vmul.f32 %v3375, 1.442695
  %v3377 = vpow.pop %v3376
  %v3378 = vadd.f32 %v3377, 1.0
  %v3379 = vrcp.pop %v3378
  %v3380 = vmul.f32 1.0, %v3379
  %3381 = vmatprep.subr.mxu0 0.0
  %3382 = vmatpush1.msra.mxu0 %v147
  %3383 = vmatprep.subr.mxu0 0.0
  %3384 = vmatpush1.msra.mxu0 %v148
  %3385 = vmatprep.subr.mxu0 0.0
  %3386 = vmatpush1.msra.mxu0 %v149
  %3387 = vmatprep.subr.mxu0 0.0
  %3388 = vmatpush1.msra.mxu0 %v150
  %3389 = vmatprep.subr.mxu0 0.0
  %3390 = vmatpush1.msra.mxu0 %v151
  %3391 = vmatprep.subr.mxu0 0.0
  %3392 = vmatpush1.msra.mxu0 %v152
  %3393 = vmatprep.subr.mxu0 0.0
  %3394 = vmatpush1.msra.mxu0 %v153
  %3395 = vmatprep.subr.mxu0 0.0
  %3396 = vmatpush1.msra.mxu0 %v154
  %3397 = vmatprep.subr.mxu0 0.0
  %3398 = vmatpush1.msra.mxu0 0.0
  %3399 = vmatprep.subr.mxu0 0.0
  %3400 = vmatpush1.msra.mxu0 0.0
  %3401 = vmatprep.subr.mxu0 0.0
  %3402 = vmatpush1.msra.mxu0 0.0
  %3403 = vmatprep.subr.mxu0 0.0
  %3404 = vmatpush1.msra.mxu0 0.0
  %3405 = vmatprep.subr.mxu0 0.0
  %3406 = vmatpush1.msra.mxu0 0.0
  %3407 = vmatprep.subr.mxu0 0.0
  %3408 = vmatpush1.msra.mxu0 0.0
  %3409 = vmatprep.subr.mxu0 0.0
  %3410 = vmatpush1.msra.mxu0 0.0
  %3411 = vmatprep.subr.mxu0 0.0
  %3412 = vmatpush1.msra.mxu0 0.0
  %3413 = vmatprep.subr.mxu0 0.0
  %3414 = vmatpush1.msra.mxu0 0.0
  %3415 = vmatprep.subr.mxu0 0.0
  %3416 = vmatpush1.msra.mxu0 0.0
  %3417 = vmatprep.subr.mxu0 0.0
  %3418 = vmatpush1.msra.mxu0 0.0
  %3419 = vmatprep.subr.mxu0 0.0
  %3420 = vmatpush1.msra.mxu0 0.0
  %3421 = vmatprep.subr.mxu0 0.0
  %3422 = vmatpush1.msra.mxu0 0.0
  %3423 = vmatprep.subr.mxu0 0.0
  %3424 = vmatpush1.msra.mxu0 0.0
  %3425 = vmatprep.subr.mxu0 0.0
  %3426 = vmatpush1.msra.mxu0 0.0
  %3427 = vmatprep.subr.mxu0 0.0
  %3428 = vmatpush1.msra.mxu0 0.0
  %3429 = vmatprep.subr.mxu0 0.0
  %3430 = vmatpush1.msra.mxu0 0.0
  %3431 = vmatprep.subr.mxu0 0.0
  %3432 = vmatpush1.msra.mxu0 0.0
  %3433 = vmatprep.subr.mxu0 0.0
  %3434 = vmatpush1.msra.mxu0 0.0
  %3435 = vmatprep.subr.mxu0 0.0
  %3436 = vmatpush1.msra.mxu0 0.0
  %3437 = vmatprep.subr.mxu0 0.0
  %3438 = vmatpush1.msra.mxu0 0.0
  %3439 = vmatprep.subr.mxu0 0.0
  %3440 = vmatpush1.msra.mxu0 0.0
  %3441 = vmatprep.subr.mxu0 0.0
  %3442 = vmatpush1.msra.mxu0 0.0
  %3443 = vmatprep.subr.mxu0 0.0
  %3444 = vmatpush1.msra.mxu0 0.0
  %3445 = vmatprep.mubr.f32.mxu0 0.0
  %3446 = vmatmul.mubr.f32.gmra.mrb[0].mxu0 %v3219
  %v3447 = vpop.f32.mrb[0].mxu0
  %v3448 = vadd.f32 %v216, %v3447
  %v3449 = vpop.f32.mrb[0].mxu0
  %3450 = vdwg.mxu0
  %v3452 = vrot.slane %v3448, 2
  %v3454 = vmul.f32 %v3300, %v3452
  %v3455 = vadd.f32 %v537, %v3454
  %v3456 = vtanh.pop %v3455
  %v3457 = vsub.f32 1.0, %v3380
  %v3458 = vmul.f32 %v3457, %v3456
  %v3459 = vrot.slane %v3216, 6
  %v3461 = vmul.f32 %v3380, %v3459
  %v3462 = vadd.f32 %v3458, %v3461
  %v3464 = vrot.slane %v3462, 6
  %v3465 = vsel %vm545, %v3464, 0
  %3467 = vmatprep.subr.mxu0 0.0
  %3468 = vmatpush1.msra.mxu0 %v131
  %3469 = vmatprep.subr.mxu0 0.0
  %3470 = vmatpush1.msra.mxu0 %v132
  %3471 = vmatprep.subr.mxu0 0.0
  %3472 = vmatpush1.msra.mxu0 %v133
  %3473 = vmatprep.subr.mxu0 0.0
  %3474 = vmatpush1.msra.mxu0 %v134
  %3475 = vmatprep.subr.mxu0 0.0
  %3476 = vmatpush1.msra.mxu0 %v135
  %3477 = vmatprep.subr.mxu0 0.0
  %3478 = vmatpush1.msra.mxu0 %v136
  %3479 = vmatprep.subr.mxu0 0.0
  %3480 = vmatpush1.msra.mxu0 %v137
  %3481 = vmatprep.subr.mxu0 0.0
  %3482 = vmatpush1.msra.mxu0 %v138
  %3483 = vmatprep.subr.mxu0 0.0
  %3484 = vmatpush1.msra.mxu0 0.0
  %3485 = vmatprep.subr.mxu0 0.0
  %3486 = vmatpush1.msra.mxu0 0.0
  %3487 = vmatprep.subr.mxu0 0.0
  %3488 = vmatpush1.msra.mxu0 0.0
  %3489 = vmatprep.subr.mxu0 0.0
  %3490 = vmatpush1.msra.mxu0 0.0
  %3491 = vmatprep.subr.mxu0 0.0
  %3492 = vmatpush1.msra.mxu0 0.0
  %3493 = vmatprep.subr.mxu0 0.0
  %3494 = vmatpush1.msra.mxu0 0.0
  %3495 = vmatprep.subr.mxu0 0.0
  %3496 = vmatpush1.msra.mxu0 0.0
  %3497 = vmatprep.subr.mxu0 0.0
  %3498 = vmatpush1.msra.mxu0 0.0
  %3499 = vmatprep.subr.mxu0 0.0
  %3500 = vmatpush1.msra.mxu0 0.0
  %3501 = vmatprep.subr.mxu0 0.0
  %3502 = vmatpush1.msra.mxu0 0.0
  %3503 = vmatprep.subr.mxu0 0.0
  %3504 = vmatpush1.msra.mxu0 0.0
  %3505 = vmatprep.subr.mxu0 0.0
  %3506 = vmatpush1.msra.mxu0 0.0
  %3507 = vmatprep.subr.mxu0 0.0
  %3508 = vmatpush1.msra.mxu0 0.0
  %3509 = vmatprep.subr.mxu0 0.0
  %3510 = vmatpush1.msra.mxu0 0.0
  %3511 = vmatprep.subr.mxu0 0.0
  %3512 = vmatpush1.msra.mxu0 0.0
  %3513 = vmatprep.subr.mxu0 0.0
  %3514 = vmatpush1.msra.mxu0 0.0
  %3515 = vmatprep.subr.mxu0 0.0
  %3516 = vmatpush1.msra.mxu0 0.0
  %3517 = vmatprep.subr.mxu0 0.0
  %3518 = vmatpush1.msra.mxu0 0.0
  %3519 = vmatprep.subr.mxu0 0.0
  %3520 = vmatpush1.msra.mxu0 0.0
  %3521 = vmatprep.subr.mxu0 0.0
  %3522 = vmatpush1.msra.mxu0 0.0
  %3523 = vmatprep.subr.mxu0 0.0
  %3524 = vmatpush1.msra.mxu0 0.0
  %3525 = vmatprep.subr.mxu0 0.0
  %3526 = vmatpush1.msra.mxu0 0.0
  %3527 = vmatprep.subr.mxu0 0.0
  %3528 = vmatpush1.msra.mxu0 0.0
  %3529 = vmatprep.subr.mxu0 0.0
  %3530 = vmatpush1.msra.mxu0 0.0
  %3531 = vmatprep.mubr.f32.mxu0 0.0
  %3532 = vmatmul.mubr.f32.gmra.mrb[0].mxu0 %v3465
  %v3533 = vpop.f32.mrb[0].mxu0
  %v3534 = vadd.f32 0.0, %v3533
  %v3535 = vpop.f32.mrb[0].mxu0
  %3536 = vdwg.mxu0
  %v3537 = vadd.f32 %v356, %v3534
  %v3538 = vxor.u32 %v3537, 2147483648
  %v3539 = vmul.f32 %v3538, 1.442695
  %v3540 = vpow.pop %v3539
  %v3541 = vadd.f32 %v3540, 1.0
  %v3542 = vrcp.pop %v3541
  %v3543 = vmul.f32 1.0, %v3542
  %3544 = vmatprep.subr.mxu0 0.0
  %3545 = vmatpush1.msra.mxu0 %v139
  %3546 = vmatprep.subr.mxu0 0.0
  %3547 = vmatpush1.msra.mxu0 %v140
  %3548 = vmatprep.subr.mxu0 0.0
  %3549 = vmatpush1.msra.mxu0 %v141
  %3550 = vmatprep.subr.mxu0 0.0
  %3551 = vmatpush1.msra.mxu0 %v142
  %3552 = vmatprep.subr.mxu0 0.0
  %3553 = vmatpush1.msra.mxu0 %v143
  %3554 = vmatprep.subr.mxu0 0.0
  %3555 = vmatpush1.msra.mxu0 %v144
  %3556 = vmatprep.subr.mxu0 0.0
  %3557 = vmatpush1.msra.mxu0 %v145
  %3558 = vmatprep.subr.mxu0 0.0
  %3559 = vmatpush1.msra.mxu0 %v146
  %3560 = vmatprep.subr.mxu0 0.0
  %3561 = vmatpush1.msra.mxu0 0.0
  %3562 = vmatprep.subr.mxu0 0.0
  %3563 = vmatpush1.msra.mxu0 0.0
  %3564 = vmatprep.subr.mxu0 0.0
  %3565 = vmatpush1.msra.mxu0 0.0
  %3566 = vmatprep.subr.mxu0 0.0
  %3567 = vmatpush1.msra.mxu0 0.0
  %3568 = vmatprep.subr.mxu0 0.0
  %3569 = vmatpush1.msra.mxu0 0.0
  %3570 = vmatprep.subr.mxu0 0.0
  %3571 = vmatpush1.msra.mxu0 0.0
  %3572 = vmatprep.subr.mxu0 0.0
  %3573 = vmatpush1.msra.mxu0 0.0
  %3574 = vmatprep.subr.mxu0 0.0
  %3575 = vmatpush1.msra.mxu0 0.0
  %3576 = vmatprep.subr.mxu0 0.0
  %3577 = vmatpush1.msra.mxu0 0.0
  %3578 = vmatprep.subr.mxu0 0.0
  %3579 = vmatpush1.msra.mxu0 0.0
  %3580 = vmatprep.subr.mxu0 0.0
  %3581 = vmatpush1.msra.mxu0 0.0
  %3582 = vmatprep.subr.mxu0 0.0
  %3583 = vmatpush1.msra.mxu0 0.0
  %3584 = vmatprep.subr.mxu0 0.0
  %3585 = vmatpush1.msra.mxu0 0.0
  %3586 = vmatprep.subr.mxu0 0.0
  %3587 = vmatpush1.msra.mxu0 0.0
  %3588 = vmatprep.subr.mxu0 0.0
  %3589 = vmatpush1.msra.mxu0 0.0
  %3590 = vmatprep.subr.mxu0 0.0
  %3591 = vmatpush1.msra.mxu0 0.0
  %3592 = vmatprep.subr.mxu0 0.0
  %3593 = vmatpush1.msra.mxu0 0.0
  %3594 = vmatprep.subr.mxu0 0.0
  %3595 = vmatpush1.msra.mxu0 0.0
  %3596 = vmatprep.subr.mxu0 0.0
  %3597 = vmatpush1.msra.mxu0 0.0
  %3598 = vmatprep.subr.mxu0 0.0
  %3599 = vmatpush1.msra.mxu0 0.0
  %3600 = vmatprep.subr.mxu0 0.0
  %3601 = vmatpush1.msra.mxu0 0.0
  %3602 = vmatprep.subr.mxu0 0.0
  %3603 = vmatpush1.msra.mxu0 0.0
  %3604 = vmatprep.subr.mxu0 0.0
  %3605 = vmatpush1.msra.mxu0 0.0
  %3606 = vmatprep.subr.mxu0 0.0
  %3607 = vmatpush1.msra.mxu0 0.0
  %3608 = vmatprep.mubr.f32.mxu0 0.0
  %3609 = vmatmul.mubr.f32.gmra.mrb[0].mxu0 %v3465
  %v3610 = vpop.f32.mrb[0].mxu0
  %v3611 = vadd.f32 0.0, %v3610
  %v3612 = vpop.f32.mrb[0].mxu0
  %3613 = vdwg.mxu0
  %v3614 = vadd.f32 %v449, %v3611
  %v3615 = vxor.u32 %v3614, 2147483648
  %v3616 = vmul.f32 %v3615, 1.442695
  %v3617 = vpow.pop %v3616
  %v3618 = vadd.f32 %v3617, 1.0
  %v3619 = vrcp.pop %v3618
  %v3620 = vmul.f32 1.0, %v3619
  %3621 = vmatprep.subr.mxu0 0.0
  %3622 = vmatpush1.msra.mxu0 %v147
  %3623 = vmatprep.subr.mxu0 0.0
  %3624 = vmatpush1.msra.mxu0 %v148
  %3625 = vmatprep.subr.mxu0 0.0
  %3626 = vmatpush1.msra.mxu0 %v149
  %3627 = vmatprep.subr.mxu0 0.0
  %3628 = vmatpush1.msra.mxu0 %v150
  %3629 = vmatprep.subr.mxu0 0.0
  %3630 = vmatpush1.msra.mxu0 %v151
  %3631 = vmatprep.subr.mxu0 0.0
  %3632 = vmatpush1.msra.mxu0 %v152
  %3633 = vmatprep.subr.mxu0 0.0
  %3634 = vmatpush1.msra.mxu0 %v153
  %3635 = vmatprep.subr.mxu0 0.0
  %3636 = vmatpush1.msra.mxu0 %v154
  %3637 = vmatprep.subr.mxu0 0.0
  %3638 = vmatpush1.msra.mxu0 0.0
  %3639 = vmatprep.subr.mxu0 0.0
  %3640 = vmatpush1.msra.mxu0 0.0
  %3641 = vmatprep.subr.mxu0 0.0
  %3642 = vmatpush1.msra.mxu0 0.0
  %3643 = vmatprep.subr.mxu0 0.0
  %3644 = vmatpush1.msra.mxu0 0.0
  %3645 = vmatprep.subr.mxu0 0.0
  %3646 = vmatpush1.msra.mxu0 0.0
  %3647 = vmatprep.subr.mxu0 0.0
  %3648 = vmatpush1.msra.mxu0 0.0
  %3649 = vmatprep.subr.mxu0 0.0
  %3650 = vmatpush1.msra.mxu0 0.0
  %3651 = vmatprep.subr.mxu0 0.0
  %3652 = vmatpush1.msra.mxu0 0.0
  %3653 = vmatprep.subr.mxu0 0.0
  %3654 = vmatpush1.msra.mxu0 0.0
  %3655 = vmatprep.subr.mxu0 0.0
  %3656 = vmatpush1.msra.mxu0 0.0
  %3657 = vmatprep.subr.mxu0 0.0
  %3658 = vmatpush1.msra.mxu0 0.0
  %3659 = vmatprep.subr.mxu0 0.0
  %3660 = vmatpush1.msra.mxu0 0.0
  %3661 = vmatprep.subr.mxu0 0.0
  %3662 = vmatpush1.msra.mxu0 0.0
  %3663 = vmatprep.subr.mxu0 0.0
  %3664 = vmatpush1.msra.mxu0 0.0
  %3665 = vmatprep.subr.mxu0 0.0
  %3666 = vmatpush1.msra.mxu0 0.0
  %3667 = vmatprep.subr.mxu0 0.0
  %3668 = vmatpush1.msra.mxu0 0.0
  %3669 = vmatprep.subr.mxu0 0.0
  %3670 = vmatpush1.msra.mxu0 0.0
  %3671 = vmatprep.subr.mxu0 0.0
  %3672 = vmatpush1.msra.mxu0 0.0
  %3673 = vmatprep.subr.mxu0 0.0
  %3674 = vmatpush1.msra.mxu0 0.0
  %3675 = vmatprep.subr.mxu0 0.0
  %3676 = vmatpush1.msra.mxu0 0.0
  %3677 = vmatprep.subr.mxu0 0.0
  %3678 = vmatpush1.msra.mxu0 0.0
  %3679 = vmatprep.subr.mxu0 0.0
  %3680 = vmatpush1.msra.mxu0 0.0
  %3681 = vmatprep.subr.mxu0 0.0
  %3682 = vmatpush1.msra.mxu0 0.0
  %3683 = vmatprep.subr.mxu0 0.0
  %3684 = vmatpush1.msra.mxu0 0.0
  %3685 = vmatprep.mubr.f32.mxu0 0.0
  %3686 = vmatmul.mubr.f32.gmra.mrb[0].mxu0 %v3465
  %v3687 = vpop.f32.mrb[0].mxu0
  %v3688 = vadd.f32 %v216, %v3687
  %v3689 = vpop.f32.mrb[0].mxu0
  %3690 = vdwg.mxu0
  %v3691 = vmul.f32 %v3543, %v3688
  %v3692 = vadd.f32 %v542, %v3691
  %v3693 = vtanh.pop %v3692
  %v3694 = vsub.f32 1.0, %v3620
  %v3695 = vmul.f32 %v3694, %v3693
  %v3697 = vmul.f32 %v3620, %v3464
  %v3698 = vadd.f32 %v3695, %v3697
  %v3700 = vsel %vm545, %v3698, 0
  %3702 = vmatprep.subr.mxu0 0.0
  %3703 = vmatpush1.msra.mxu0 %v131
  %3704 = vmatprep.subr.mxu0 0.0
  %3705 = vmatpush1.msra.mxu0 %v132
  %3706 = vmatprep.subr.mxu0 0.0
  %3707 = vmatpush1.msra.mxu0 %v133
  %3708 = vmatprep.subr.mxu0 0.0
  %3709 = vmatpush1.msra.mxu0 %v134
  %3710 = vmatprep.subr.mxu0 0.0
  %3711 = vmatpush1.msra.mxu0 %v135
  %3712 = vmatprep.subr.mxu0 0.0
  %3713 = vmatpush1.msra.mxu0 %v136
  %3714 = vmatprep.subr.mxu0 0.0
  %3715 = vmatpush1.msra.mxu0 %v137
  %3716 = vmatprep.subr.mxu0 0.0
  %3717 = vmatpush1.msra.mxu0 %v138
  %3718 = vmatprep.subr.mxu0 0.0
  %3719 = vmatpush1.msra.mxu0 0.0
  %3720 = vmatprep.subr.mxu0 0.0
  %3721 = vmatpush1.msra.mxu0 0.0
  %3722 = vmatprep.subr.mxu0 0.0
  %3723 = vmatpush1.msra.mxu0 0.0
  %3724 = vmatprep.subr.mxu0 0.0
  %3725 = vmatpush1.msra.mxu0 0.0
  %3726 = vmatprep.subr.mxu0 0.0
  %3727 = vmatpush1.msra.mxu0 0.0
  %3728 = vmatprep.subr.mxu0 0.0
  %3729 = vmatpush1.msra.mxu0 0.0
  %3730 = vmatprep.subr.mxu0 0.0
  %3731 = vmatpush1.msra.mxu0 0.0
  %3732 = vmatprep.subr.mxu0 0.0
  %3733 = vmatpush1.msra.mxu0 0.0
  %3734 = vmatprep.subr.mxu0 0.0
  %3735 = vmatpush1.msra.mxu0 0.0
  %3736 = vmatprep.subr.mxu0 0.0
  %3737 = vmatpush1.msra.mxu0 0.0
  %3738 = vmatprep.subr.mxu0 0.0
  %3739 = vmatpush1.msra.mxu0 0.0
  %3740 = vmatprep.subr.mxu0 0.0
  %3741 = vmatpush1.msra.mxu0 0.0
  %3742 = vmatprep.subr.mxu0 0.0
  %3743 = vmatpush1.msra.mxu0 0.0
  %3744 = vmatprep.subr.mxu0 0.0
  %3745 = vmatpush1.msra.mxu0 0.0
  %3746 = vmatprep.subr.mxu0 0.0
  %3747 = vmatpush1.msra.mxu0 0.0
  %3748 = vmatprep.subr.mxu0 0.0
  %3749 = vmatpush1.msra.mxu0 0.0
  %3750 = vmatprep.subr.mxu0 0.0
  %3751 = vmatpush1.msra.mxu0 0.0
  %3752 = vmatprep.subr.mxu0 0.0
  %3753 = vmatpush1.msra.mxu0 0.0
  %3754 = vmatprep.subr.mxu0 0.0
  %3755 = vmatpush1.msra.mxu0 0.0
  %3756 = vmatprep.subr.mxu0 0.0
  %3757 = vmatpush1.msra.mxu0 0.0
  %3758 = vmatprep.subr.mxu0 0.0
  %3759 = vmatpush1.msra.mxu0 0.0
  %3760 = vmatprep.subr.mxu0 0.0
  %3761 = vmatpush1.msra.mxu0 0.0
  %3762 = vmatprep.subr.mxu0 0.0
  %3763 = vmatpush1.msra.mxu0 0.0
  %3764 = vmatprep.subr.mxu0 0.0
  %3765 = vmatpush1.msra.mxu0 0.0
  %3766 = vmatprep.mubr.f32.mxu0 0.0
  %3767 = vmatmul.mubr.f32.gmra.mrb[0].mxu0 %v3700
  %v3768 = vpop.f32.mrb[0].mxu0
  %v3769 = vadd.f32 0.0, %v3768
  %v3770 = vpop.f32.mrb[0].mxu0
  %3771 = vdwg.mxu0
  %v3773 = vrot.slane %v3769, 6
  %v3775 = vadd.f32 %v356, %v3773
  %v3776 = vxor.u32 %v3775, 2147483648
  %v3777 = vmul.f32 %v3776, 1.442695
  %v3778 = vpow.pop %v3777
  %v3779 = vadd.f32 %v3778, 1.0
  %v3780 = vrcp.pop %v3779
  %v3781 = vmul.f32 1.0, %v3780
  %3782 = vmatprep.subr.mxu0 0.0
  %3783 = vmatpush1.msra.mxu0 %v139
  %3784 = vmatprep.subr.mxu0 0.0
  %3785 = vmatpush1.msra.mxu0 %v140
  %3786 = vmatprep.subr.mxu0 0.0
  %3787 = vmatpush1.msra.mxu0 %v141
  %3788 = vmatprep.subr.mxu0 0.0
  %3789 = vmatpush1.msra.mxu0 %v142
  %3790 = vmatprep.subr.mxu0 0.0
  %3791 = vmatpush1.msra.mxu0 %v143
  %3792 = vmatprep.subr.mxu0 0.0
  %3793 = vmatpush1.msra.mxu0 %v144
  %3794 = vmatprep.subr.mxu0 0.0
  %3795 = vmatpush1.msra.mxu0 %v145
  %3796 = vmatprep.subr.mxu0 0.0
  %3797 = vmatpush1.msra.mxu0 %v146
  %3798 = vmatprep.subr.mxu0 0.0
  %3799 = vmatpush1.msra.mxu0 0.0
  %3800 = vmatprep.subr.mxu0 0.0
  %3801 = vmatpush1.msra.mxu0 0.0
  %3802 = vmatprep.subr.mxu0 0.0
  %3803 = vmatpush1.msra.mxu0 0.0
  %3804 = vmatprep.subr.mxu0 0.0
  %3805 = vmatpush1.msra.mxu0 0.0
  %3806 = vmatprep.subr.mxu0 0.0
  %3807 = vmatpush1.msra.mxu0 0.0
  %3808 = vmatprep.subr.mxu0 0.0
  %3809 = vmatpush1.msra.mxu0 0.0
  %3810 = vmatprep.subr.mxu0 0.0
  %3811 = vmatpush1.msra.mxu0 0.0
  %3812 = vmatprep.subr.mxu0 0.0
  %3813 = vmatpush1.msra.mxu0 0.0
  %3814 = vmatprep.subr.mxu0 0.0
  %3815 = vmatpush1.msra.mxu0 0.0
  %3816 = vmatprep.subr.mxu0 0.0
  %3817 = vmatpush1.msra.mxu0 0.0
  %3818 = vmatprep.subr.mxu0 0.0
  %3819 = vmatpush1.msra.mxu0 0.0
  %3820 = vmatprep.subr.mxu0 0.0
  %3821 = vmatpush1.msra.mxu0 0.0
  %3822 = vmatprep.subr.mxu0 0.0
  %3823 = vmatpush1.msra.mxu0 0.0
  %3824 = vmatprep.subr.mxu0 0.0
  %3825 = vmatpush1.msra.mxu0 0.0
  %3826 = vmatprep.subr.mxu0 0.0
  %3827 = vmatpush1.msra.mxu0 0.0
  %3828 = vmatprep.subr.mxu0 0.0
  %3829 = vmatpush1.msra.mxu0 0.0
  %3830 = vmatprep.subr.mxu0 0.0
  %3831 = vmatpush1.msra.mxu0 0.0
  %3832 = vmatprep.subr.mxu0 0.0
  %3833 = vmatpush1.msra.mxu0 0.0
  %3834 = vmatprep.subr.mxu0 0.0
  %3835 = vmatpush1.msra.mxu0 0.0
  %3836 = vmatprep.subr.mxu0 0.0
  %3837 = vmatpush1.msra.mxu0 0.0
  %3838 = vmatprep.subr.mxu0 0.0
  %3839 = vmatpush1.msra.mxu0 0.0
  %3840 = vmatprep.subr.mxu0 0.0
  %3841 = vmatpush1.msra.mxu0 0.0
  %3842 = vmatprep.subr.mxu0 0.0
  %3843 = vmatpush1.msra.mxu0 0.0
  %3844 = vmatprep.subr.mxu0 0.0
  %3845 = vmatpush1.msra.mxu0 0.0
  %3846 = vmatprep.mubr.f32.mxu0 0.0
  %3847 = vmatmul.mubr.f32.gmra.mrb[0].mxu0 %v3700
  %v3848 = vpop.f32.mrb[0].mxu0
  %v3849 = vadd.f32 0.0, %v3848
  %v3850 = vpop.f32.mrb[0].mxu0
  %3851 = vdwg.mxu0
  %v3853 = vrot.slane %v3849, 6
  %v3855 = vadd.f32 %v449, %v3853
  %v3856 = vxor.u32 %v3855, 2147483648
  %v3857 = vmul.f32 %v3856, 1.442695
  %v3858 = vpow.pop %v3857
  %v3859 = vadd.f32 %v3858, 1.0
  %v3860 = vrcp.pop %v3859
  %v3861 = vmul.f32 1.0, %v3860
  %3862 = vmatprep.subr.mxu0 0.0
  %3863 = vmatpush1.msra.mxu0 %v147
  %3864 = vmatprep.subr.mxu0 0.0
  %3865 = vmatpush1.msra.mxu0 %v148
  %3866 = vmatprep.subr.mxu0 0.0
  %3867 = vmatpush1.msra.mxu0 %v149
  %3868 = vmatprep.subr.mxu0 0.0
  %3869 = vmatpush1.msra.mxu0 %v150
  %3870 = vmatprep.subr.mxu0 0.0
  %3871 = vmatpush1.msra.mxu0 %v151
  %3872 = vmatprep.subr.mxu0 0.0
  %3873 = vmatpush1.msra.mxu0 %v152
  %3874 = vmatprep.subr.mxu0 0.0
  %3875 = vmatpush1.msra.mxu0 %v153
  %3876 = vmatprep.subr.mxu0 0.0
  %3877 = vmatpush1.msra.mxu0 %v154
  %3878 = vmatprep.subr.mxu0 0.0
  %3879 = vmatpush1.msra.mxu0 0.0
  %3880 = vmatprep.subr.mxu0 0.0
  %3881 = vmatpush1.msra.mxu0 0.0
  %3882 = vmatprep.subr.mxu0 0.0
  %3883 = vmatpush1.msra.mxu0 0.0
  %3884 = vmatprep.subr.mxu0 0.0
  %3885 = vmatpush1.msra.mxu0 0.0
  %3886 = vmatprep.subr.mxu0 0.0
  %3887 = vmatpush1.msra.mxu0 0.0
  %3888 = vmatprep.subr.mxu0 0.0
  %3889 = vmatpush1.msra.mxu0 0.0
  %3890 = vmatprep.subr.mxu0 0.0
  %3891 = vmatpush1.msra.mxu0 0.0
  %3892 = vmatprep.subr.mxu0 0.0
  %3893 = vmatpush1.msra.mxu0 0.0
  %3894 = vmatprep.subr.mxu0 0.0
  %3895 = vmatpush1.msra.mxu0 0.0
  %3896 = vmatprep.subr.mxu0 0.0
  %3897 = vmatpush1.msra.mxu0 0.0
  %3898 = vmatprep.subr.mxu0 0.0
  %3899 = vmatpush1.msra.mxu0 0.0
  %3900 = vmatprep.subr.mxu0 0.0
  %3901 = vmatpush1.msra.mxu0 0.0
  %3902 = vmatprep.subr.mxu0 0.0
  %3903 = vmatpush1.msra.mxu0 0.0
  %3904 = vmatprep.subr.mxu0 0.0
  %3905 = vmatpush1.msra.mxu0 0.0
  %3906 = vmatprep.subr.mxu0 0.0
  %3907 = vmatpush1.msra.mxu0 0.0
  %3908 = vmatprep.subr.mxu0 0.0
  %3909 = vmatpush1.msra.mxu0 0.0
  %3910 = vmatprep.subr.mxu0 0.0
  %3911 = vmatpush1.msra.mxu0 0.0
  %3912 = vmatprep.subr.mxu0 0.0
  %3913 = vmatpush1.msra.mxu0 0.0
  %3914 = vmatprep.subr.mxu0 0.0
  %3915 = vmatpush1.msra.mxu0 0.0
  %3916 = vmatprep.subr.mxu0 0.0
  %3917 = vmatpush1.msra.mxu0 0.0
  %3918 = vmatprep.subr.mxu0 0.0
  %3919 = vmatpush1.msra.mxu0 0.0
  %3920 = vmatprep.subr.mxu0 0.0
  %3921 = vmatpush1.msra.mxu0 0.0
  %3922 = vmatprep.subr.mxu0 0.0
  %3923 = vmatpush1.msra.mxu0 0.0
  %3924 = vmatprep.subr.mxu0 0.0
  %3925 = vmatpush1.msra.mxu0 0.0
  %3926 = vmatprep.mubr.f32.mxu0 0.0
  %3927 = vmatmul.mubr.f32.gmra.mrb[0].mxu0 %v3700
  %v3928 = vpop.f32.mrb[0].mxu0
  %v3929 = vadd.f32 %v216, %v3928
  %v3930 = vpop.f32.mrb[0].mxu0
  %3931 = vdwg.mxu0
  %v3933 = vrot.slane %v3929, 6
  %v3935 = vmul.f32 %v3781, %v3933
  %v3936 = vadd.f32 %v542, %v3935
  %v3937 = vtanh.pop %v3936
  %v3938 = vsub.f32 1.0, %v3861
  %v3939 = vmul.f32 %v3938, %v3937
  %v3940 = vrot.slane %v3698, 6
  %v3942 = vmul.f32 %v3861, %v3940
  %v3943 = vadd.f32 %v3939, %v3942
  %v3945 = vrot.slane %v3943, 2
  %v3946 = vsel %vm545, %v3945, 0
  %3948 = vmatprep.subr.mxu0 0.0
  %3949 = vmatpush1.msra.mxu0 %v131
  %3950 = vmatprep.subr.mxu0 0.0
  %3951 = vmatpush1.msra.mxu0 %v132
  %3952 = vmatprep.subr.mxu0 0.0
  %3953 = vmatpush1.msra.mxu0 %v133
  %3954 = vmatprep.subr.mxu0 0.0
  %3955 = vmatpush1.msra.mxu0 %v134
  %3956 = vmatprep.subr.mxu0 0.0
  %3957 = vmatpush1.msra.mxu0 %v135
  %3958 = vmatprep.subr.mxu0 0.0
  %3959 = vmatpush1.msra.mxu0 %v136
  %3960 = vmatprep.subr.mxu0 0.0
  %3961 = vmatpush1.msra.mxu0 %v137
  %3962 = vmatprep.subr.mxu0 0.0
  %3963 = vmatpush1.msra.mxu0 %v138
  %3964 = vmatprep.subr.mxu0 0.0
  %3965 = vmatpush1.msra.mxu0 0.0
  %3966 = vmatprep.subr.mxu0 0.0
  %3967 = vmatpush1.msra.mxu0 0.0
  %3968 = vmatprep.subr.mxu0 0.0
  %3969 = vmatpush1.msra.mxu0 0.0
  %3970 = vmatprep.subr.mxu0 0.0
  %3971 = vmatpush1.msra.mxu0 0.0
  %3972 = vmatprep.subr.mxu0 0.0
  %3973 = vmatpush1.msra.mxu0 0.0
  %3974 = vmatprep.subr.mxu0 0.0
  %3975 = vmatpush1.msra.mxu0 0.0
  %3976 = vmatprep.subr.mxu0 0.0
  %3977 = vmatpush1.msra.mxu0 0.0
  %3978 = vmatprep.subr.mxu0 0.0
  %3979 = vmatpush1.msra.mxu0 0.0
  %3980 = vmatprep.subr.mxu0 0.0
  %3981 = vmatpush1.msra.mxu0 0.0
  %3982 = vmatprep.subr.mxu0 0.0
  %3983 = vmatpush1.msra.mxu0 0.0
  %3984 = vmatprep.subr.mxu0 0.0
  %3985 = vmatpush1.msra.mxu0 0.0
  %3986 = vmatprep.subr.mxu0 0.0
  %3987 = vmatpush1.msra.mxu0 0.0
  %3988 = vmatprep.subr.mxu0 0.0
  %3989 = vmatpush1.msra.mxu0 0.0
  %3990 = vmatprep.subr.mxu0 0.0
  %3991 = vmatpush1.msra.mxu0 0.0
  %3992 = vmatprep.subr.mxu0 0.0
  %3993 = vmatpush1.msra.mxu0 0.0
  %3994 = vmatprep.subr.mxu0 0.0
  %3995 = vmatpush1.msra.mxu0 0.0
  %3996 = vmatprep.subr.mxu0 0.0
  %3997 = vmatpush1.msra.mxu0 0.0
  %3998 = vmatprep.subr.mxu0 0.0
  %3999 = vmatpush1.msra.mxu0 0.0
  %4000 = vmatprep.subr.mxu0 0.0
  %4001 = vmatpush1.msra.mxu0 0.0
  %4002 = vmatprep.subr.mxu0 0.0
  %4003 = vmatpush1.msra.mxu0 0.0
  %4004 = vmatprep.subr.mxu0 0.0
  %4005 = vmatpush1.msra.mxu0 0.0
  %4006 = vmatprep.subr.mxu0 0.0
  %4007 = vmatpush1.msra.mxu0 0.0
  %4008 = vmatprep.subr.mxu0 0.0
  %4009 = vmatpush1.msra.mxu0 0.0
  %4010 = vmatprep.subr.mxu0 0.0
  %4011 = vmatpush1.msra.mxu0 0.0
  %4012 = vmatprep.mubr.f32.mxu0 0.0
  %4013 = vmatmul.mubr.f32.gmra.mrb[0].mxu0 %v3946
  %v4014 = vpop.f32.mrb[0].mxu0
  %v4015 = vadd.f32 0.0, %v4014
  %v4016 = vpop.f32.mrb[0].mxu0
  %4017 = vdwg.mxu0
  %v4019 = vrot.slane %v4015, 4
  %v4021 = vadd.f32 %v356, %v4019
  %v4022 = vxor.u32 %v4021, 2147483648
  %v4023 = vmul.f32 %v4022, 1.442695
  %v4024 = vpow.pop %v4023
  %v4025 = vadd.f32 %v4024, 1.0
  %v4026 = vrcp.pop %v4025
  %v4027 = vmul.f32 1.0, %v4026
  %4028 = vmatprep.subr.mxu0 0.0
  %4029 = vmatpush1.msra.mxu0 %v139
  %4030 = vmatprep.subr.mxu0 0.0
  %4031 = vmatpush1.msra.mxu0 %v140
  %4032 = vmatprep.subr.mxu0 0.0
  %4033 = vmatpush1.msra.mxu0 %v141
  %4034 = vmatprep.subr.mxu0 0.0
  %4035 = vmatpush1.msra.mxu0 %v142
  %4036 = vmatprep.subr.mxu0 0.0
  %4037 = vmatpush1.msra.mxu0 %v143
  %4038 = vmatprep.subr.mxu0 0.0
  %4039 = vmatpush1.msra.mxu0 %v144
  %4040 = vmatprep.subr.mxu0 0.0
  %4041 = vmatpush1.msra.mxu0 %v145
  %4042 = vmatprep.subr.mxu0 0.0
  %4043 = vmatpush1.msra.mxu0 %v146
  %4044 = vmatprep.subr.mxu0 0.0
  %4045 = vmatpush1.msra.mxu0 0.0
  %4046 = vmatprep.subr.mxu0 0.0
  %4047 = vmatpush1.msra.mxu0 0.0
  %4048 = vmatprep.subr.mxu0 0.0
  %4049 = vmatpush1.msra.mxu0 0.0
  %4050 = vmatprep.subr.mxu0 0.0
  %4051 = vmatpush1.msra.mxu0 0.0
  %4052 = vmatprep.subr.mxu0 0.0
  %4053 = vmatpush1.msra.mxu0 0.0
  %4054 = vmatprep.subr.mxu0 0.0
  %4055 = vmatpush1.msra.mxu0 0.0
  %4056 = vmatprep.subr.mxu0 0.0
  %4057 = vmatpush1.msra.mxu0 0.0
  %4058 = vmatprep.subr.mxu0 0.0
  %4059 = vmatpush1.msra.mxu0 0.0
  %4060 = vmatprep.subr.mxu0 0.0
  %4061 = vmatpush1.msra.mxu0 0.0
  %4062 = vmatprep.subr.mxu0 0.0
  %4063 = vmatpush1.msra.mxu0 0.0
  %4064 = vmatprep.subr.mxu0 0.0
  %4065 = vmatpush1.msra.mxu0 0.0
  %4066 = vmatprep.subr.mxu0 0.0
  %4067 = vmatpush1.msra.mxu0 0.0
  %4068 = vmatprep.subr.mxu0 0.0
  %4069 = vmatpush1.msra.mxu0 0.0
  %4070 = vmatprep.subr.mxu0 0.0
  %4071 = vmatpush1.msra.mxu0 0.0
  %4072 = vmatprep.subr.mxu0 0.0
  %4073 = vmatpush1.msra.mxu0 0.0
  %4074 = vmatprep.subr.mxu0 0.0
  %4075 = vmatpush1.msra.mxu0 0.0
  %4076 = vmatprep.subr.mxu0 0.0
  %4077 = vmatpush1.msra.mxu0 0.0
  %4078 = vmatprep.subr.mxu0 0.0
  %4079 = vmatpush1.msra.mxu0 0.0
  %4080 = vmatprep.subr.mxu0 0.0
  %4081 = vmatpush1.msra.mxu0 0.0
  %4082 = vmatprep.subr.mxu0 0.0
  %4083 = vmatpush1.msra.mxu0 0.0
  %4084 = vmatprep.subr.mxu0 0.0
  %4085 = vmatpush1.msra.mxu0 0.0
  %4086 = vmatprep.subr.mxu0 0.0
  %4087 = vmatpush1.msra.mxu0 0.0
  %4088 = vmatprep.subr.mxu0 0.0
  %4089 = vmatpush1.msra.mxu0 0.0
  %4090 = vmatprep.subr.mxu0 0.0
  %4091 = vmatpush1.msra.mxu0 0.0
  %4092 = vmatprep.mubr.f32.mxu0 0.0
  %4093 = vmatmul.mubr.f32.gmra.mrb[0].mxu0 %v3946
  %v4094 = vpop.f32.mrb[0].mxu0
  %v4095 = vadd.f32 0.0, %v4094
  %v4096 = vpop.f32.mrb[0].mxu0
  %4097 = vdwg.mxu0
  %v4099 = vrot.slane %v4095, 4
  %v4101 = vadd.f32 %v449, %v4099
  %v4102 = vxor.u32 %v4101, 2147483648
  %v4103 = vmul.f32 %v4102, 1.442695
  %v4104 = vpow.pop %v4103
  %v4105 = vadd.f32 %v4104, 1.0
  %v4106 = vrcp.pop %v4105
  %v4107 = vmul.f32 1.0, %v4106
  %4108 = vmatprep.subr.mxu0 0.0
  %4109 = vmatpush1.msra.mxu0 %v147
  %4110 = vmatprep.subr.mxu0 0.0
  %4111 = vmatpush1.msra.mxu0 %v148
  %4112 = vmatprep.subr.mxu0 0.0
  %4113 = vmatpush1.msra.mxu0 %v149
  %4114 = vmatprep.subr.mxu0 0.0
  %4115 = vmatpush1.msra.mxu0 %v150
  %4116 = vmatprep.subr.mxu0 0.0
  %4117 = vmatpush1.msra.mxu0 %v151
  %4118 = vmatprep.subr.mxu0 0.0
  %4119 = vmatpush1.msra.mxu0 %v152
  %4120 = vmatprep.subr.mxu0 0.0
  %4121 = vmatpush1.msra.mxu0 %v153
  %4122 = vmatprep.subr.mxu0 0.0
  %4123 = vmatpush1.msra.mxu0 %v154
  %4124 = vmatprep.subr.mxu0 0.0
  %4125 = vmatpush1.msra.mxu0 0.0
  %4126 = vmatprep.subr.mxu0 0.0
  %4127 = vmatpush1.msra.mxu0 0.0
  %4128 = vmatprep.subr.mxu0 0.0
  %4129 = vmatpush1.msra.mxu0 0.0
  %4130 = vmatprep.subr.mxu0 0.0
  %4131 = vmatpush1.msra.mxu0 0.0
  %4132 = vmatprep.subr.mxu0 0.0
  %4133 = vmatpush1.msra.mxu0 0.0
  %4134 = vmatprep.subr.mxu0 0.0
  %4135 = vmatpush1.msra.mxu0 0.0
  %4136 = vmatprep.subr.mxu0 0.0
  %4137 = vmatpush1.msra.mxu0 0.0
  %4138 = vmatprep.subr.mxu0 0.0
  %4139 = vmatpush1.msra.mxu0 0.0
  %4140 = vmatprep.subr.mxu0 0.0
  %4141 = vmatpush1.msra.mxu0 0.0
  %4142 = vmatprep.subr.mxu0 0.0
  %4143 = vmatpush1.msra.mxu0 0.0
  %4144 = vmatprep.subr.mxu0 0.0
  %4145 = vmatpush1.msra.mxu0 0.0
  %4146 = vmatprep.subr.mxu0 0.0
  %4147 = vmatpush1.msra.mxu0 0.0
  %4148 = vmatprep.subr.mxu0 0.0
  %4149 = vmatpush1.msra.mxu0 0.0
  %4150 = vmatprep.subr.mxu0 0.0
  %4151 = vmatpush1.msra.mxu0 0.0
  %4152 = vmatprep.subr.mxu0 0.0
  %4153 = vmatpush1.msra.mxu0 0.0
  %4154 = vmatprep.subr.mxu0 0.0
  %4155 = vmatpush1.msra.mxu0 0.0
  %4156 = vmatprep.subr.mxu0 0.0
  %4157 = vmatpush1.msra.mxu0 0.0
  %4158 = vmatprep.subr.mxu0 0.0
  %4159 = vmatpush1.msra.mxu0 0.0
  %4160 = vmatprep.subr.mxu0 0.0
  %4161 = vmatpush1.msra.mxu0 0.0
  %4162 = vmatprep.subr.mxu0 0.0
  %4163 = vmatpush1.msra.mxu0 0.0
  %4164 = vmatprep.subr.mxu0 0.0
  %4165 = vmatpush1.msra.mxu0 0.0
  %4166 = vmatprep.subr.mxu0 0.0
  %4167 = vmatpush1.msra.mxu0 0.0
  %4168 = vmatprep.subr.mxu0 0.0
  %4169 = vmatpush1.msra.mxu0 0.0
  %4170 = vmatprep.subr.mxu0 0.0
  %4171 = vmatpush1.msra.mxu0 0.0
  %4172 = vmatprep.mubr.f32.mxu0 0.0
  %4173 = vmatmul.mubr.f32.gmra.mrb[0].mxu0 %v3946
  %v4174 = vpop.f32.mrb[0].mxu0
  %v4175 = vadd.f32 %v216, %v4174
  %v4176 = vpop.f32.mrb[0].mxu0
  %4177 = vdwg.mxu0
  %v4179 = vrot.slane %v4175, 4
  %v4181 = vmul.f32 %v4027, %v4179
  %v4182 = vadd.f32 %v542, %v4181
  %v4183 = vtanh.pop %v4182
  %v4184 = vsub.f32 1.0, %v4107
  %v4185 = vmul.f32 %v4184, %v4183
  %v4186 = vrot.slane %v3943, 6
  %v4188 = vmul.f32 %v4107, %v4186
  %v4189 = vadd.f32 %v4185, %v4188
  %v4190 = vld [vmem:[%s25] sm:$0xff]
  %v4191 = vld [vmem:[%s37] sm:$0x1]
  %v4193 = vlaneseq
  %v4194 = vshrl.u32 %v4193, 7
  %v4195 = vsub.s32 0, %v4194
  %v4196 = vrot.slane %v4191, %v4195
  %v4199 = vsel %vm261, %v130, 0
  %4201 = vmatprep.subr.mxu0 0.0
  %4202 = vmatpush1.msra.mxu0 %v4190
  %4203 = vmatprep.subr.mxu0 0.0
  %4204 = vmatpush1.msra.mxu0 0.0
  %4205 = vmatprep.subr.mxu0 0.0
  %4206 = vmatpush1.msra.mxu0 0.0
  %4207 = vmatprep.subr.mxu0 0.0
  %4208 = vmatpush1.msra.mxu0 0.0
  %4209 = vmatprep.subr.mxu0 0.0
  %4210 = vmatpush1.msra.mxu0 0.0
  %4211 = vmatprep.subr.mxu0 0.0
  %4212 = vmatpush1.msra.mxu0 0.0
  %4213 = vmatprep.subr.mxu0 0.0
  %4214 = vmatpush1.msra.mxu0 0.0
  %4215 = vmatprep.subr.mxu0 0.0
  %4216 = vmatpush1.msra.mxu0 0.0
  %4217 = vmatprep.subr.mxu0 0.0
  %4218 = vmatpush1.msra.mxu0 0.0
  %4219 = vmatprep.subr.mxu0 0.0
  %4220 = vmatpush1.msra.mxu0 0.0
  %4221 = vmatprep.subr.mxu0 0.0
  %4222 = vmatpush1.msra.mxu0 0.0
  %4223 = vmatprep.subr.mxu0 0.0
  %4224 = vmatpush1.msra.mxu0 0.0
  %4225 = vmatprep.subr.mxu0 0.0
  %4226 = vmatpush1.msra.mxu0 0.0
  %4227 = vmatprep.subr.mxu0 0.0
  %4228 = vmatpush1.msra.mxu0 0.0
  %4229 = vmatprep.subr.mxu0 0.0
  %4230 = vmatpush1.msra.mxu0 0.0
  %4231 = vmatprep.subr.mxu0 0.0
  %4232 = vmatpush1.msra.mxu0 0.0
  %4233 = vmatprep.subr.mxu0 0.0
  %4234 = vmatpush1.msra.mxu0 0.0
  %4235 = vmatprep.subr.mxu0 0.0
  %4236 = vmatpush1.msra.mxu0 0.0
  %4237 = vmatprep.subr.mxu0 0.0
  %4238 = vmatpush1.msra.mxu0 0.0
  %4239 = vmatprep.subr.mxu0 0.0
  %4240 = vmatpush1.msra.mxu0 0.0
  %4241 = vmatprep.subr.mxu0 0.0
  %4242 = vmatpush1.msra.mxu0 0.0
  %4243 = vmatprep.subr.mxu0 0.0
  %4244 = vmatpush1.msra.mxu0 0.0
  %4245 = vmatprep.subr.mxu0 0.0
  %4246 = vmatpush1.msra.mxu0 0.0
  %4247 = vmatprep.subr.mxu0 0.0
  %4248 = vmatpush1.msra.mxu0 0.0
  %4249 = vmatprep.subr.mxu0 0.0
  %4250 = vmatpush1.msra.mxu0 0.0
  %4251 = vmatprep.subr.mxu0 0.0
  %4252 = vmatpush1.msra.mxu0 0.0
  %4253 = vmatprep.subr.mxu0 0.0
  %4254 = vmatpush1.msra.mxu0 0.0
  %4255 = vmatprep.subr.mxu0 0.0
  %4256 = vmatpush1.msra.mxu0 0.0
  %4257 = vmatprep.subr.mxu0 0.0
  %4258 = vmatpush1.msra.mxu0 0.0
  %4259 = vmatprep.subr.mxu0 0.0
  %4260 = vmatpush1.msra.mxu0 0.0
  %4261 = vmatprep.subr.mxu0 0.0
  %4262 = vmatpush1.msra.mxu0 0.0
  %4263 = vmatprep.subr.mxu0 0.0
  %4264 = vmatpush1.msra.mxu0 0.0
  %4265 = vmatprep.mubr.f32.mxu0 0.0
  %4266 = vmatmul.mubr.f32.gmra.mrb[0].mxu0 %v4199
  %v4267 = vpop.f32.mrb[0].mxu0
  %v4268 = vadd.f32 %v4196, %v4267
  %v4269 = vpop.f32.mrb[0].mxu0
  %4270 = vdwg.mxu0
  %v4271 = vld [vmem:[%s27] sm:$0xff]
  %v4272 = vld [vmem:[%s39] sm:$0x1]
  %v4274 = vlaneseq
  %v4275 = vshrl.u32 %v4274, 7
  %v4276 = vsub.s32 0, %v4275
  %v4277 = vrot.slane %v4272, %v4276
  %4279 = vmatprep.subr.mxu0 0.0
  %4280 = vmatpush1.msra.mxu0 %v4271
  %4281 = vmatprep.subr.mxu0 0.0
  %4282 = vmatpush1.msra.mxu0 0.0
  %4283 = vmatprep.subr.mxu0 0.0
  %4284 = vmatpush1.msra.mxu0 0.0
  %4285 = vmatprep.subr.mxu0 0.0
  %4286 = vmatpush1.msra.mxu0 0.0
  %4287 = vmatprep.subr.mxu0 0.0
  %4288 = vmatpush1.msra.mxu0 0.0
  %4289 = vmatprep.subr.mxu0 0.0
  %4290 = vmatpush1.msra.mxu0 0.0
  %4291 = vmatprep.subr.mxu0 0.0
  %4292 = vmatpush1.msra.mxu0 0.0
  %4293 = vmatprep.subr.mxu0 0.0
  %4294 = vmatpush1.msra.mxu0 0.0
  %4295 = vmatprep.subr.mxu0 0.0
  %4296 = vmatpush1.msra.mxu0 0.0
  %4297 = vmatprep.subr.mxu0 0.0
  %4298 = vmatpush1.msra.mxu0 0.0
  %4299 = vmatprep.subr.mxu0 0.0
  %4300 = vmatpush1.msra.mxu0 0.0
  %4301 = vmatprep.subr.mxu0 0.0
  %4302 = vmatpush1.msra.mxu0 0.0
  %4303 = vmatprep.subr.mxu0 0.0
  %4304 = vmatpush1.msra.mxu0 0.0
  %4305 = vmatprep.subr.mxu0 0.0
  %4306 = vmatpush1.msra.mxu0 0.0
  %4307 = vmatprep.subr.mxu0 0.0
  %4308 = vmatpush1.msra.mxu0 0.0
  %4309 = vmatprep.subr.mxu0 0.0
  %4310 = vmatpush1.msra.mxu0 0.0
  %4311 = vmatprep.subr.mxu0 0.0
  %4312 = vmatpush1.msra.mxu0 0.0
  %4313 = vmatprep.subr.mxu0 0.0
  %4314 = vmatpush1.msra.mxu0 0.0
  %4315 = vmatprep.subr.mxu0 0.0
  %4316 = vmatpush1.msra.mxu0 0.0
  %4317 = vmatprep.subr.mxu0 0.0
  %4318 = vmatpush1.msra.mxu0 0.0
  %4319 = vmatprep.subr.mxu0 0.0
  %4320 = vmatpush1.msra.mxu0 0.0
  %4321 = vmatprep.subr.mxu0 0.0
  %4322 = vmatpush1.msra.mxu0 0.0
  %4323 = vmatprep.subr.mxu0 0.0
  %4324 = vmatpush1.msra.mxu0 0.0
  %4325 = vmatprep.subr.mxu0 0.0
  %4326 = vmatpush1.msra.mxu0 0.0
  %4327 = vmatprep.subr.mxu0 0.0
  %4328 = vmatpush1.msra.mxu0 0.0
  %4329 = vmatprep.subr.mxu0 0.0
  %4330 = vmatpush1.msra.mxu0 0.0
  %4331 = vmatprep.subr.mxu0 0.0
  %4332 = vmatpush1.msra.mxu0 0.0
  %4333 = vmatprep.subr.mxu0 0.0
  %4334 = vmatpush1.msra.mxu0 0.0
  %4335 = vmatprep.subr.mxu0 0.0
  %4336 = vmatpush1.msra.mxu0 0.0
  %4337 = vmatprep.subr.mxu0 0.0
  %4338 = vmatpush1.msra.mxu0 0.0
  %4339 = vmatprep.subr.mxu0 0.0
  %4340 = vmatpush1.msra.mxu0 0.0
  %4341 = vmatprep.subr.mxu0 0.0
  %4342 = vmatpush1.msra.mxu0 0.0
  %4343 = vmatprep.mubr.f32.mxu0 0.0
  %4344 = vmatmul.mubr.f32.gmra.mrb[0].mxu0 %v4199
  %v4345 = vpop.f32.mrb[0].mxu0
  %v4346 = vadd.f32 %v4277, %v4345
  %v4347 = vpop.f32.mrb[0].mxu0
  %4348 = vdwg.mxu0
  %v4349 = vld [vmem:[%s29] sm:$0xff]
  %v4350 = vld [vmem:[%s41] sm:$0x1]
  %v4352 = vlaneseq
  %v4353 = vshrl.u32 %v4352, 7
  %v4354 = vsub.s32 0, %v4353
  %v4355 = vrot.slane %v4350, %v4354
  %4357 = vmatprep.subr.mxu0 0.0
  %4358 = vmatpush1.msra.mxu0 %v4349
  %4359 = vmatprep.subr.mxu0 0.0
  %4360 = vmatpush1.msra.mxu0 0.0
  %4361 = vmatprep.subr.mxu0 0.0
  %4362 = vmatpush1.msra.mxu0 0.0
  %4363 = vmatprep.subr.mxu0 0.0
  %4364 = vmatpush1.msra.mxu0 0.0
  %4365 = vmatprep.subr.mxu0 0.0
  %4366 = vmatpush1.msra.mxu0 0.0
  %4367 = vmatprep.subr.mxu0 0.0
  %4368 = vmatpush1.msra.mxu0 0.0
  %4369 = vmatprep.subr.mxu0 0.0
  %4370 = vmatpush1.msra.mxu0 0.0
  %4371 = vmatprep.subr.mxu0 0.0
  %4372 = vmatpush1.msra.mxu0 0.0
  %4373 = vmatprep.subr.mxu0 0.0
  %4374 = vmatpush1.msra.mxu0 0.0
  %4375 = vmatprep.subr.mxu0 0.0
  %4376 = vmatpush1.msra.mxu0 0.0
  %4377 = vmatprep.subr.mxu0 0.0
  %4378 = vmatpush1.msra.mxu0 0.0
  %4379 = vmatprep.subr.mxu0 0.0
  %4380 = vmatpush1.msra.mxu0 0.0
  %4381 = vmatprep.subr.mxu0 0.0
  %4382 = vmatpush1.msra.mxu0 0.0
  %4383 = vmatprep.subr.mxu0 0.0
  %4384 = vmatpush1.msra.mxu0 0.0
  %4385 = vmatprep.subr.mxu0 0.0
  %4386 = vmatpush1.msra.mxu0 0.0
  %4387 = vmatprep.subr.mxu0 0.0
  %4388 = vmatpush1.msra.mxu0 0.0
  %4389 = vmatprep.subr.mxu0 0.0
  %4390 = vmatpush1.msra.mxu0 0.0
  %4391 = vmatprep.subr.mxu0 0.0
  %4392 = vmatpush1.msra.mxu0 0.0
  %4393 = vmatprep.subr.mxu0 0.0
  %4394 = vmatpush1.msra.mxu0 0.0
  %4395 = vmatprep.subr.mxu0 0.0
  %4396 = vmatpush1.msra.mxu0 0.0
  %4397 = vmatprep.subr.mxu0 0.0
  %4398 = vmatpush1.msra.mxu0 0.0
  %4399 = vmatprep.subr.mxu0 0.0
  %4400 = vmatpush1.msra.mxu0 0.0
  %4401 = vmatprep.subr.mxu0 0.0
  %4402 = vmatpush1.msra.mxu0 0.0
  %4403 = vmatprep.subr.mxu0 0.0
  %4404 = vmatpush1.msra.mxu0 0.0
  %4405 = vmatprep.subr.mxu0 0.0
  %4406 = vmatpush1.msra.mxu0 0.0
  %4407 = vmatprep.subr.mxu0 0.0
  %4408 = vmatpush1.msra.mxu0 0.0
  %4409 = vmatprep.subr.mxu0 0.0
  %4410 = vmatpush1.msra.mxu0 0.0
  %4411 = vmatprep.subr.mxu0 0.0
  %4412 = vmatpush1.msra.mxu0 0.0
  %4413 = vmatprep.subr.mxu0 0.0
  %4414 = vmatpush1.msra.mxu0 0.0
  %4415 = vmatprep.subr.mxu0 0.0
  %4416 = vmatpush1.msra.mxu0 0.0
  %4417 = vmatprep.subr.mxu0 0.0
  %4418 = vmatpush1.msra.mxu0 0.0
  %4419 = vmatprep.subr.mxu0 0.0
  %4420 = vmatpush1.msra.mxu0 0.0
  %4421 = vmatprep.mubr.f32.mxu0 0.0
  %4422 = vmatmul.mubr.f32.gmra.mrb[0].mxu0 %v4199
  %v4423 = vpop.f32.mrb[0].mxu0
  %v4424 = vadd.f32 %v4355, %v4423
  %v4425 = vpop.f32.mrb[0].mxu0
  %4426 = vdwg.mxu0
  %v4428 = vrot.slane %v4189, 4
  %v4429 = vsel %vm545, %v4428, 0
  %4431 = vmatprep.subr.mxu0 0.0
  %4432 = vmatpush1.msra.mxu0 %v155
  %4433 = vmatprep.subr.mxu0 0.0
  %4434 = vmatpush1.msra.mxu0 %v156
  %4435 = vmatprep.subr.mxu0 0.0
  %4436 = vmatpush1.msra.mxu0 %v157
  %4437 = vmatprep.subr.mxu0 0.0
  %4438 = vmatpush1.msra.mxu0 %v158
  %4439 = vmatprep.subr.mxu0 0.0
  %4440 = vmatpush1.msra.mxu0 %v159
  %4441 = vmatprep.subr.mxu0 0.0
  %4442 = vmatpush1.msra.mxu0 %v160
  %4443 = vmatprep.subr.mxu0 0.0
  %4444 = vmatpush1.msra.mxu0 %v161
  %4445 = vmatprep.subr.mxu0 0.0
  %4446 = vmatpush1.msra.mxu0 %v162
  %4447 = vmatprep.subr.mxu0 0.0
  %4448 = vmatpush1.msra.mxu0 0.0
  %4449 = vmatprep.subr.mxu0 0.0
  %4450 = vmatpush1.msra.mxu0 0.0
  %4451 = vmatprep.subr.mxu0 0.0
  %4452 = vmatpush1.msra.mxu0 0.0
  %4453 = vmatprep.subr.mxu0 0.0
  %4454 = vmatpush1.msra.mxu0 0.0
  %4455 = vmatprep.subr.mxu0 0.0
  %4456 = vmatpush1.msra.mxu0 0.0
  %4457 = vmatprep.subr.mxu0 0.0
  %4458 = vmatpush1.msra.mxu0 0.0
  %4459 = vmatprep.subr.mxu0 0.0
  %4460 = vmatpush1.msra.mxu0 0.0
  %4461 = vmatprep.subr.mxu0 0.0
  %4462 = vmatpush1.msra.mxu0 0.0
  %4463 = vmatprep.subr.mxu0 0.0
  %4464 = vmatpush1.msra.mxu0 0.0
  %4465 = vmatprep.subr.mxu0 0.0
  %4466 = vmatpush1.msra.mxu0 0.0
  %4467 = vmatprep.subr.mxu0 0.0
  %4468 = vmatpush1.msra.mxu0 0.0
  %4469 = vmatprep.subr.mxu0 0.0
  %4470 = vmatpush1.msra.mxu0 0.0
  %4471 = vmatprep.subr.mxu0 0.0
  %4472 = vmatpush1.msra.mxu0 0.0
  %4473 = vmatprep.subr.mxu0 0.0
  %4474 = vmatpush1.msra.mxu0 0.0
  %4475 = vmatprep.subr.mxu0 0.0
  %4476 = vmatpush1.msra.mxu0 0.0
  %4477 = vmatprep.subr.mxu0 0.0
  %4478 = vmatpush1.msra.mxu0 0.0
  %4479 = vmatprep.subr.mxu0 0.0
  %4480 = vmatpush1.msra.mxu0 0.0
  %4481 = vmatprep.subr.mxu0 0.0
  %4482 = vmatpush1.msra.mxu0 0.0
  %4483 = vmatprep.subr.mxu0 0.0
  %4484 = vmatpush1.msra.mxu0 0.0
  %4485 = vmatprep.subr.mxu0 0.0
  %4486 = vmatpush1.msra.mxu0 0.0
  %4487 = vmatprep.subr.mxu0 0.0
  %4488 = vmatpush1.msra.mxu0 0.0
  %4489 = vmatprep.subr.mxu0 0.0
  %4490 = vmatpush1.msra.mxu0 0.0
  %4491 = vmatprep.subr.mxu0 0.0
  %4492 = vmatpush1.msra.mxu0 0.0
  %4493 = vmatprep.subr.mxu0 0.0
  %4494 = vmatpush1.msra.mxu0 0.0
  %4495 = vmatprep.mubr.f32.mxu0 0.0
  %4496 = vmatmul.mubr.f32.gmra.mrb[0].mxu0 %v4429
  %v4497 = vpop.f32.mrb[0].mxu0
  %v4498 = vadd.f32 0.0, %v4497
  %v4499 = vpop.f32.mrb[0].mxu0
  %4500 = vdwg.mxu0
  %v4501 = vadd.f32 %v4268, %v4498
  %v4502 = vxor.u32 %v4501, 2147483648
  %v4503 = vmul.f32 %v4502, 1.442695
  %v4504 = vpow.pop %v4503
  %v4505 = vadd.f32 %v4504, 1.0
  %v4506 = vrcp.pop %v4505
  %v4507 = vmul.f32 1.0, %v4506
  %4508 = vmatprep.subr.mxu0 0.0
  %4509 = vmatpush1.msra.mxu0 %v163
  %4510 = vmatprep.subr.mxu0 0.0
  %4511 = vmatpush1.msra.mxu0 %v164
  %4512 = vmatprep.subr.mxu0 0.0
  %4513 = vmatpush1.msra.mxu0 %v165
  %4514 = vmatprep.subr.mxu0 0.0
  %4515 = vmatpush1.msra.mxu0 %v166
  %4516 = vmatprep.subr.mxu0 0.0
  %4517 = vmatpush1.msra.mxu0 %v167
  %4518 = vmatprep.subr.mxu0 0.0
  %4519 = vmatpush1.msra.mxu0 %v168
  %4520 = vmatprep.subr.mxu0 0.0
  %4521 = vmatpush1.msra.mxu0 %v169
  %4522 = vmatprep.subr.mxu0 0.0
  %4523 = vmatpush1.msra.mxu0 %v170
  %4524 = vmatprep.subr.mxu0 0.0
  %4525 = vmatpush1.msra.mxu0 0.0
  %4526 = vmatprep.subr.mxu0 0.0
  %4527 = vmatpush1.msra.mxu0 0.0
  %4528 = vmatprep.subr.mxu0 0.0
  %4529 = vmatpush1.msra.mxu0 0.0
  %4530 = vmatprep.subr.mxu0 0.0
  %4531 = vmatpush1.msra.mxu0 0.0
  %4532 = vmatprep.subr.mxu0 0.0
  %4533 = vmatpush1.msra.mxu0 0.0
  %4534 = vmatprep.subr.mxu0 0.0
  %4535 = vmatpush1.msra.mxu0 0.0
  %4536 = vmatprep.subr.mxu0 0.0
  %4537 = vmatpush1.msra.mxu0 0.0
  %4538 = vmatprep.subr.mxu0 0.0
  %4539 = vmatpush1.msra.mxu0 0.0
  %4540 = vmatprep.subr.mxu0 0.0
  %4541 = vmatpush1.msra.mxu0 0.0
  %4542 = vmatprep.subr.mxu0 0.0
  %4543 = vmatpush1.msra.mxu0 0.0
  %4544 = vmatprep.subr.mxu0 0.0
  %4545 = vmatpush1.msra.mxu0 0.0
  %4546 = vmatprep.subr.mxu0 0.0
  %4547 = vmatpush1.msra.mxu0 0.0
  %4548 = vmatprep.subr.mxu0 0.0
  %4549 = vmatpush1.msra.mxu0 0.0
  %4550 = vmatprep.subr.mxu0 0.0
  %4551 = vmatpush1.msra.mxu0 0.0
  %4552 = vmatprep.subr.mxu0 0.0
  %4553 = vmatpush1.msra.mxu0 0.0
  %4554 = vmatprep.subr.mxu0 0.0
  %4555 = vmatpush1.msra.mxu0 0.0
  %4556 = vmatprep.subr.mxu0 0.0
  %4557 = vmatpush1.msra.mxu0 0.0
  %4558 = vmatprep.subr.mxu0 0.0
  %4559 = vmatpush1.msra.mxu0 0.0
  %4560 = vmatprep.subr.mxu0 0.0
  %4561 = vmatpush1.msra.mxu0 0.0
  %4562 = vmatprep.subr.mxu0 0.0
  %4563 = vmatpush1.msra.mxu0 0.0
  %4564 = vmatprep.subr.mxu0 0.0
  %4565 = vmatpush1.msra.mxu0 0.0
  %4566 = vmatprep.subr.mxu0 0.0
  %4567 = vmatpush1.msra.mxu0 0.0
  %4568 = vmatprep.subr.mxu0 0.0
  %4569 = vmatpush1.msra.mxu0 0.0
  %4570 = vmatprep.subr.mxu0 0.0
  %4571 = vmatpush1.msra.mxu0 0.0
  %4572 = vmatprep.mubr.f32.mxu0 0.0
  %4573 = vmatmul.mubr.f32.gmra.mrb[0].mxu0 %v4429
  %v4574 = vpop.f32.mrb[0].mxu0
  %v4575 = vadd.f32 0.0, %v4574
  %v4576 = vpop.f32.mrb[0].mxu0
  %4577 = vdwg.mxu0
  %v4578 = vadd.f32 %v4346, %v4575
  %v4579 = vxor.u32 %v4578, 2147483648
  %v4580 = vmul.f32 %v4579, 1.442695
  %v4581 = vpow.pop %v4580
  %v4582 = vadd.f32 %v4581, 1.0
  %v4583 = vrcp.pop %v4582
  %v4584 = vmul.f32 1.0, %v4583
  %4585 = vmatprep.subr.mxu0 0.0
  %4586 = vmatpush1.msra.mxu0 %v171
  %4587 = vmatprep.subr.mxu0 0.0
  %4588 = vmatpush1.msra.mxu0 %v172
  %4589 = vmatprep.subr.mxu0 0.0
  %4590 = vmatpush1.msra.mxu0 %v173
  %4591 = vmatprep.subr.mxu0 0.0
  %4592 = vmatpush1.msra.mxu0 %v174
  %4593 = vmatprep.subr.mxu0 0.0
  %4594 = vmatpush1.msra.mxu0 %v175
  %4595 = vmatprep.subr.mxu0 0.0
  %4596 = vmatpush1.msra.mxu0 %v176
  %4597 = vmatprep.subr.mxu0 0.0
  %4598 = vmatpush1.msra.mxu0 %v177
  %4599 = vmatprep.subr.mxu0 0.0
  %4600 = vmatpush1.msra.mxu0 %v178
  %4601 = vmatprep.subr.mxu0 0.0
  %4602 = vmatpush1.msra.mxu0 0.0
  %4603 = vmatprep.subr.mxu0 0.0
  %4604 = vmatpush1.msra.mxu0 0.0
  %4605 = vmatprep.subr.mxu0 0.0
  %4606 = vmatpush1.msra.mxu0 0.0
  %4607 = vmatprep.subr.mxu0 0.0
  %4608 = vmatpush1.msra.mxu0 0.0
  %4609 = vmatprep.subr.mxu0 0.0
  %4610 = vmatpush1.msra.mxu0 0.0
  %4611 = vmatprep.subr.mxu0 0.0
  %4612 = vmatpush1.msra.mxu0 0.0
  %4613 = vmatprep.subr.mxu0 0.0
  %4614 = vmatpush1.msra.mxu0 0.0
  %4615 = vmatprep.subr.mxu0 0.0
  %4616 = vmatpush1.msra.mxu0 0.0
  %4617 = vmatprep.subr.mxu0 0.0
  %4618 = vmatpush1.msra.mxu0 0.0
  %4619 = vmatprep.subr.mxu0 0.0
  %4620 = vmatpush1.msra.mxu0 0.0
  %4621 = vmatprep.subr.mxu0 0.0
  %4622 = vmatpush1.msra.mxu0 0.0
  %4623 = vmatprep.subr.mxu0 0.0
  %4624 = vmatpush1.msra.mxu0 0.0
  %4625 = vmatprep.subr.mxu0 0.0
  %4626 = vmatpush1.msra.mxu0 0.0
  %4627 = vmatprep.subr.mxu0 0.0
  %4628 = vmatpush1.msra.mxu0 0.0
  %4629 = vmatprep.subr.mxu0 0.0
  %4630 = vmatpush1.msra.mxu0 0.0
  %4631 = vmatprep.subr.mxu0 0.0
  %4632 = vmatpush1.msra.mxu0 0.0
  %4633 = vmatprep.subr.mxu0 0.0
  %4634 = vmatpush1.msra.mxu0 0.0
  %4635 = vmatprep.subr.mxu0 0.0
  %4636 = vmatpush1.msra.mxu0 0.0
  %4637 = vmatprep.subr.mxu0 0.0
  %4638 = vmatpush1.msra.mxu0 0.0
  %4639 = vmatprep.subr.mxu0 0.0
  %4640 = vmatpush1.msra.mxu0 0.0
  %4641 = vmatprep.subr.mxu0 0.0
  %4642 = vmatpush1.msra.mxu0 0.0
  %4643 = vmatprep.subr.mxu0 0.0
  %4644 = vmatpush1.msra.mxu0 0.0
  %4645 = vmatprep.subr.mxu0 0.0
  %4646 = vmatpush1.msra.mxu0 0.0
  %4647 = vmatprep.subr.mxu0 0.0
  %4648 = vmatpush1.msra.mxu0 0.0
  %4649 = vmatprep.mubr.f32.mxu0 0.0
  %4650 = vmatmul.mubr.f32.gmra.mrb[0].mxu0 %v4429
  %v4651 = vpop.f32.mrb[0].mxu0
  %v4652 = vadd.f32 %v223, %v4651
  %v4653 = vpop.f32.mrb[0].mxu0
  %4654 = vdwg.mxu0
  %v4655 = vmul.f32 %v4507, %v4652
  %v4656 = vadd.f32 %v4424, %v4655
  %v4657 = vtanh.pop %v4656
  %v4658 = vsub.f32 1.0, %v4584
  %v4659 = vmul.f32 %v4658, %v4657
  %v4661 = vmul.f32 %v4584, %v4428
  %v4662 = vadd.f32 %v4659, %v4661
  %v4664 = vsel %vm545, %v4662, 0
  %4666 = vmatprep.subr.mxu0 0.0
  %4667 = vmatpush1.msra.mxu0 %v203
  %4668 = vmatprep.subr.mxu0 0.0
  %4669 = vmatpush1.msra.mxu0 %v204
  %4670 = vmatprep.subr.mxu0 0.0
  %4671 = vmatpush1.msra.mxu0 %v205
  %4672 = vmatprep.subr.mxu0 0.0
  %4673 = vmatpush1.msra.mxu0 %v206
  %4674 = vmatprep.subr.mxu0 0.0
  %4675 = vmatpush1.msra.mxu0 %v207
  %4676 = vmatprep.subr.mxu0 0.0
  %4677 = vmatpush1.msra.mxu0 %v208
  %4678 = vmatprep.subr.mxu0 0.0
  %4679 = vmatpush1.msra.mxu0 %v209
  %4680 = vmatprep.subr.mxu0 0.0
  %4681 = vmatpush1.msra.mxu0 %v210
  %4682 = vmatprep.subr.mxu0 0.0
  %4683 = vmatpush1.msra.mxu0 0.0
  %4684 = vmatprep.subr.mxu0 0.0
  %4685 = vmatpush1.msra.mxu0 0.0
  %4686 = vmatprep.subr.mxu0 0.0
  %4687 = vmatpush1.msra.mxu0 0.0
  %4688 = vmatprep.subr.mxu0 0.0
  %4689 = vmatpush1.msra.mxu0 0.0
  %4690 = vmatprep.subr.mxu0 0.0
  %4691 = vmatpush1.msra.mxu0 0.0
  %4692 = vmatprep.subr.mxu0 0.0
  %4693 = vmatpush1.msra.mxu0 0.0
  %4694 = vmatprep.subr.mxu0 0.0
  %4695 = vmatpush1.msra.mxu0 0.0
  %4696 = vmatprep.subr.mxu0 0.0
  %4697 = vmatpush1.msra.mxu0 0.0
  %4698 = vmatprep.subr.mxu0 0.0
  %4699 = vmatpush1.msra.mxu0 0.0
  %4700 = vmatprep.subr.mxu0 0.0
  %4701 = vmatpush1.msra.mxu0 0.0
  %4702 = vmatprep.subr.mxu0 0.0
  %4703 = vmatpush1.msra.mxu0 0.0
  %4704 = vmatprep.subr.mxu0 0.0
  %4705 = vmatpush1.msra.mxu0 0.0
  %4706 = vmatprep.subr.mxu0 0.0
  %4707 = vmatpush1.msra.mxu0 0.0
  %4708 = vmatprep.subr.mxu0 0.0
  %4709 = vmatpush1.msra.mxu0 0.0
  %4710 = vmatprep.subr.mxu0 0.0
  %4711 = vmatpush1.msra.mxu0 0.0
  %4712 = vmatprep.subr.mxu0 0.0
  %4713 = vmatpush1.msra.mxu0 0.0
  %4714 = vmatprep.subr.mxu0 0.0
  %4715 = vmatpush1.msra.mxu0 0.0
  %4716 = vmatprep.subr.mxu0 0.0
  %4717 = vmatpush1.msra.mxu0 0.0
  %4718 = vmatprep.subr.mxu0 0.0
  %4719 = vmatpush1.msra.mxu0 0.0
  %4720 = vmatprep.subr.mxu0 0.0
  %4721 = vmatpush1.msra.mxu0 0.0
  %4722 = vmatprep.subr.mxu0 0.0
  %4723 = vmatpush1.msra.mxu0 0.0
  %4724 = vmatprep.subr.mxu0 0.0
  %4725 = vmatpush1.msra.mxu0 0.0
  %4726 = vmatprep.subr.mxu0 0.0
  %4727 = vmatpush1.msra.mxu0 0.0
  %4728 = vmatprep.subr.mxu0 0.0
  %4729 = vmatpush1.msra.mxu0 0.0
  %4730 = vmatprep.mubr.f32.mxu0 0.0
  %4731 = vmatmul.mubr.f32.gmra.mrb[0].mxu0 %v4664
  %v4732 = vpop.f32.mrb[0].mxu0
  %v4733 = vadd.f32 %v251, %v4732
  %v4734 = vpop.f32.mrb[0].mxu0
  %4735 = vdwg.mxu0
  %4736 = vmatprep.subr.mxu0 0.0
  %4737 = vmatpush1.msra.mxu0 %v179
  %4738 = vmatprep.subr.mxu0 0.0
  %4739 = vmatpush1.msra.mxu0 %v180
  %4740 = vmatprep.subr.mxu0 0.0
  %4741 = vmatpush1.msra.mxu0 %v181
  %4742 = vmatprep.subr.mxu0 0.0
  %4743 = vmatpush1.msra.mxu0 %v182
  %4744 = vmatprep.subr.mxu0 0.0
  %4745 = vmatpush1.msra.mxu0 %v183
  %4746 = vmatprep.subr.mxu0 0.0
  %4747 = vmatpush1.msra.mxu0 %v184
  %4748 = vmatprep.subr.mxu0 0.0
  %4749 = vmatpush1.msra.mxu0 %v185
  %4750 = vmatprep.subr.mxu0 0.0
  %4751 = vmatpush1.msra.mxu0 %v186
  %4752 = vmatprep.subr.mxu0 0.0
  %4753 = vmatpush1.msra.mxu0 0.0
  %4754 = vmatprep.subr.mxu0 0.0
  %4755 = vmatpush1.msra.mxu0 0.0
  %4756 = vmatprep.subr.mxu0 0.0
  %4757 = vmatpush1.msra.mxu0 0.0
  %4758 = vmatprep.subr.mxu0 0.0
  %4759 = vmatpush1.msra.mxu0 0.0
  %4760 = vmatprep.subr.mxu0 0.0
  %4761 = vmatpush1.msra.mxu0 0.0
  %4762 = vmatprep.subr.mxu0 0.0
  %4763 = vmatpush1.msra.mxu0 0.0
  %4764 = vmatprep.subr.mxu0 0.0
  %4765 = vmatpush1.msra.mxu0 0.0
  %4766 = vmatprep.subr.mxu0 0.0
  %4767 = vmatpush1.msra.mxu0 0.0
  %4768 = vmatprep.subr.mxu0 0.0
  %4769 = vmatpush1.msra.mxu0 0.0
  %4770 = vmatprep.subr.mxu0 0.0
  %4771 = vmatpush1.msra.mxu0 0.0
  %4772 = vmatprep.subr.mxu0 0.0
  %4773 = vmatpush1.msra.mxu0 0.0
  %4774 = vmatprep.subr.mxu0 0.0
  %4775 = vmatpush1.msra.mxu0 0.0
  %4776 = vmatprep.subr.mxu0 0.0
  %4777 = vmatpush1.msra.mxu0 0.0
  %4778 = vmatprep.subr.mxu0 0.0
  %4779 = vmatpush1.msra.mxu0 0.0
  %4780 = vmatprep.subr.mxu0 0.0
  %4781 = vmatpush1.msra.mxu0 0.0
  %4782 = vmatprep.subr.mxu0 0.0
  %4783 = vmatpush1.msra.mxu0 0.0
  %4784 = vmatprep.subr.mxu0 0.0
  %4785 = vmatpush1.msra.mxu0 0.0
  %4786 = vmatprep.subr.mxu0 0.0
  %4787 = vmatpush1.msra.mxu0 0.0
  %4788 = vmatprep.subr.mxu0 0.0
  %4789 = vmatpush1.msra.mxu0 0.0
  %4790 = vmatprep.subr.mxu0 0.0
  %4791 = vmatpush1.msra.mxu0 0.0
  %4792 = vmatprep.subr.mxu0 0.0
  %4793 = vmatpush1.msra.mxu0 0.0
  %4794 = vmatprep.subr.mxu0 0.0
  %4795 = vmatpush1.msra.mxu0 0.0
  %4796 = vmatprep.subr.mxu0 0.0
  %4797 = vmatpush1.msra.mxu0 0.0
  %4798 = vmatprep.subr.mxu0 0.0
  %4799 = vmatpush1.msra.mxu0 0.0
  %4800 = vmatprep.mubr.f32.mxu0 0.0
  %4801 = vmatmul.mubr.f32.gmra.mrb[0].mxu0 %v4664
  %v4802 = vpop.f32.mrb[0].mxu0
  %v4803 = vadd.f32 %v230, %v4802
  %v4804 = vpop.f32.mrb[0].mxu0
  %4805 = vdwg.mxu0
  %v4806 = vxor.u32 %v4803, 2147483648
  %v4807 = vmul.f32 %v4806, 1.442695
  %v4808 = vpow.pop %v4807
  %v4809 = vadd.f32 %v4808, 1.0
  %v4810 = vrcp.pop %v4809
  %v4811 = vmul.f32 1.0, %v4810
  %4812 = vmatprep.subr.mxu0 0.0
  %4813 = vmatpush1.msra.mxu0 %v187
  %4814 = vmatprep.subr.mxu0 0.0
  %4815 = vmatpush1.msra.mxu0 %v188
  %4816 = vmatprep.subr.mxu0 0.0
  %4817 = vmatpush1.msra.mxu0 %v189
  %4818 = vmatprep.subr.mxu0 0.0
  %4819 = vmatpush1.msra.mxu0 %v190
  %4820 = vmatprep.subr.mxu0 0.0
  %4821 = vmatpush1.msra.mxu0 %v191
  %4822 = vmatprep.subr.mxu0 0.0
  %4823 = vmatpush1.msra.mxu0 %v192
  %4824 = vmatprep.subr.mxu0 0.0
  %4825 = vmatpush1.msra.mxu0 %v193
  %4826 = vmatprep.subr.mxu0 0.0
  %4827 = vmatpush1.msra.mxu0 %v194
  %4828 = vmatprep.subr.mxu0 0.0
  %4829 = vmatpush1.msra.mxu0 0.0
  %4830 = vmatprep.subr.mxu0 0.0
  %4831 = vmatpush1.msra.mxu0 0.0
  %4832 = vmatprep.subr.mxu0 0.0
  %4833 = vmatpush1.msra.mxu0 0.0
  %4834 = vmatprep.subr.mxu0 0.0
  %4835 = vmatpush1.msra.mxu0 0.0
  %4836 = vmatprep.subr.mxu0 0.0
  %4837 = vmatpush1.msra.mxu0 0.0
  %4838 = vmatprep.subr.mxu0 0.0
  %4839 = vmatpush1.msra.mxu0 0.0
  %4840 = vmatprep.subr.mxu0 0.0
  %4841 = vmatpush1.msra.mxu0 0.0
  %4842 = vmatprep.subr.mxu0 0.0
  %4843 = vmatpush1.msra.mxu0 0.0
  %4844 = vmatprep.subr.mxu0 0.0
  %4845 = vmatpush1.msra.mxu0 0.0
  %4846 = vmatprep.subr.mxu0 0.0
  %4847 = vmatpush1.msra.mxu0 0.0
  %4848 = vmatprep.subr.mxu0 0.0
  %4849 = vmatpush1.msra.mxu0 0.0
  %4850 = vmatprep.subr.mxu0 0.0
  %4851 = vmatpush1.msra.mxu0 0.0
  %4852 = vmatprep.subr.mxu0 0.0
  %4853 = vmatpush1.msra.mxu0 0.0
  %4854 = vmatprep.subr.mxu0 0.0
  %4855 = vmatpush1.msra.mxu0 0.0
  %4856 = vmatprep.subr.mxu0 0.0
  %4857 = vmatpush1.msra.mxu0 0.0
  %4858 = vmatprep.subr.mxu0 0.0
  %4859 = vmatpush1.msra.mxu0 0.0
  %4860 = vmatprep.subr.mxu0 0.0
  %4861 = vmatpush1.msra.mxu0 0.0
  %4862 = vmatprep.subr.mxu0 0.0
  %4863 = vmatpush1.msra.mxu0 0.0
  %4864 = vmatprep.subr.mxu0 0.0
  %4865 = vmatpush1.msra.mxu0 0.0
  %4866 = vmatprep.subr.mxu0 0.0
  %4867 = vmatpush1.msra.mxu0 0.0
  %4868 = vmatprep.subr.mxu0 0.0
  %4869 = vmatpush1.msra.mxu0 0.0
  %4870 = vmatprep.subr.mxu0 0.0
  %4871 = vmatpush1.msra.mxu0 0.0
  %4872 = vmatprep.subr.mxu0 0.0
  %4873 = vmatpush1.msra.mxu0 0.0
  %4874 = vmatprep.subr.mxu0 0.0
  %4875 = vmatpush1.msra.mxu0 0.0
  %4876 = vmatprep.mubr.f32.mxu0 0.0
  %4877 = vmatmul.mubr.f32.gmra.mrb[0].mxu0 %v4664
  %v4878 = vpop.f32.mrb[0].mxu0
  %v4879 = vadd.f32 %v237, %v4878
  %v4880 = vpop.f32.mrb[0].mxu0
  %4881 = vdwg.mxu0
  %v4882 = vxor.u32 %v4879, 2147483648
  %v4883 = vmul.f32 %v4882, 1.442695
  %v4884 = vpow.pop %v4883
  %v4885 = vadd.f32 %v4884, 1.0
  %v4886 = vrcp.pop %v4885
  %v4887 = vmul.f32 1.0, %v4886
  %4888 = vmatprep.subr.mxu0 0.0
  %4889 = vmatpush1.msra.mxu0 %v195
  %4890 = vmatprep.subr.mxu0 0.0
  %4891 = vmatpush1.msra.mxu0 %v196
  %4892 = vmatprep.subr.mxu0 0.0
  %4893 = vmatpush1.msra.mxu0 %v197
  %4894 = vmatprep.subr.mxu0 0.0
  %4895 = vmatpush1.msra.mxu0 %v198
  %4896 = vmatprep.subr.mxu0 0.0
  %4897 = vmatpush1.msra.mxu0 %v199
  %4898 = vmatprep.subr.mxu0 0.0
  %4899 = vmatpush1.msra.mxu0 %v200
  %4900 = vmatprep.subr.mxu0 0.0
  %4901 = vmatpush1.msra.mxu0 %v201
  %4902 = vmatprep.subr.mxu0 0.0
  %4903 = vmatpush1.msra.mxu0 %v202
  %4904 = vmatprep.subr.mxu0 0.0
  %4905 = vmatpush1.msra.mxu0 0.0
  %4906 = vmatprep.subr.mxu0 0.0
  %4907 = vmatpush1.msra.mxu0 0.0
  %4908 = vmatprep.subr.mxu0 0.0
  %4909 = vmatpush1.msra.mxu0 0.0
  %4910 = vmatprep.subr.mxu0 0.0
  %4911 = vmatpush1.msra.mxu0 0.0
  %4912 = vmatprep.subr.mxu0 0.0
  %4913 = vmatpush1.msra.mxu0 0.0
  %4914 = vmatprep.subr.mxu0 0.0
  %4915 = vmatpush1.msra.mxu0 0.0
  %4916 = vmatprep.subr.mxu0 0.0
  %4917 = vmatpush1.msra.mxu0 0.0
  %4918 = vmatprep.subr.mxu0 0.0
  %4919 = vmatpush1.msra.mxu0 0.0
  %4920 = vmatprep.subr.mxu0 0.0
  %4921 = vmatpush1.msra.mxu0 0.0
  %4922 = vmatprep.subr.mxu0 0.0
  %4923 = vmatpush1.msra.mxu0 0.0
  %4924 = vmatprep.subr.mxu0 0.0
  %4925 = vmatpush1.msra.mxu0 0.0
  %4926 = vmatprep.subr.mxu0 0.0
  %4927 = vmatpush1.msra.mxu0 0.0
  %4928 = vmatprep.subr.mxu0 0.0
  %4929 = vmatpush1.msra.mxu0 0.0
  %4930 = vmatprep.subr.mxu0 0.0
  %4931 = vmatpush1.msra.mxu0 0.0
  %4932 = vmatprep.subr.mxu0 0.0
  %4933 = vmatpush1.msra.mxu0 0.0
  %4934 = vmatprep.subr.mxu0 0.0
  %4935 = vmatpush1.msra.mxu0 0.0
  %4936 = vmatprep.subr.mxu0 0.0
  %4937 = vmatpush1.msra.mxu0 0.0
  %4938 = vmatprep.subr.mxu0 0.0
  %4939 = vmatpush1.msra.mxu0 0.0
  %4940 = vmatprep.subr.mxu0 0.0
  %4941 = vmatpush1.msra.mxu0 0.0
  %4942 = vmatprep.subr.mxu0 0.0
  %4943 = vmatpush1.msra.mxu0 0.0
  %4944 = vmatprep.subr.mxu0 0.0
  %4945 = vmatpush1.msra.mxu0 0.0
  %4946 = vmatprep.subr.mxu0 0.0
  %4947 = vmatpush1.msra.mxu0 0.0
  %4948 = vmatprep.subr.mxu0 0.0
  %4949 = vmatpush1.msra.mxu0 0.0
  %4950 = vmatprep.subr.mxu0 0.0
  %4951 = vmatpush1.msra.mxu0 0.0
  %4952 = vmatprep.mubr.f32.mxu0 0.0
  %4953 = vmatmul.mubr.f32.gmra.mrb[0].mxu0 %v4664
  %v4954 = vpop.f32.mrb[0].mxu0
  %v4955 = vadd.f32 %v244, %v4954
  %v4956 = vpop.f32.mrb[0].mxu0
  %4957 = vdwg.mxu0
  %4958 = vmatprep.subr.mxu0 0.0
  %4959 = vmatpush1.msra.mxu0 %v171
  %4960 = vmatprep.subr.mxu0 0.0
  %4961 = vmatpush1.msra.mxu0 %v172
  %4962 = vmatprep.subr.mxu0 0.0
  %4963 = vmatpush1.msra.mxu0 %v173
  %4964 = vmatprep.subr.mxu0 0.0
  %4965 = vmatpush1.msra.mxu0 %v174
  %4966 = vmatprep.subr.mxu0 0.0
  %4967 = vmatpush1.msra.mxu0 %v175
  %4968 = vmatprep.subr.mxu0 0.0
  %4969 = vmatpush1.msra.mxu0 %v176
  %4970 = vmatprep.subr.mxu0 0.0
  %4971 = vmatpush1.msra.mxu0 %v177
  %4972 = vmatprep.subr.mxu0 0.0
  %4973 = vmatpush1.msra.mxu0 %v178
  %4974 = vmatprep.subr.mxu0 0.0
  %4975 = vmatpush1.msra.mxu0 0.0
  %4976 = vmatprep.subr.mxu0 0.0
  %4977 = vmatpush1.msra.mxu0 0.0
  %4978 = vmatprep.subr.mxu0 0.0
  %4979 = vmatpush1.msra.mxu0 0.0
  %4980 = vmatprep.subr.mxu0 0.0
  %4981 = vmatpush1.msra.mxu0 0.0
  %4982 = vmatprep.subr.mxu0 0.0
  %4983 = vmatpush1.msra.mxu0 0.0
  %4984 = vmatprep.subr.mxu0 0.0
  %4985 = vmatpush1.msra.mxu0 0.0
  %4986 = vmatprep.subr.mxu0 0.0
  %4987 = vmatpush1.msra.mxu0 0.0
  %4988 = vmatprep.subr.mxu0 0.0
  %4989 = vmatpush1.msra.mxu0 0.0
  %4990 = vmatprep.subr.mxu0 0.0
  %4991 = vmatpush1.msra.mxu0 0.0
  %4992 = vmatprep.subr.mxu0 0.0
  %4993 = vmatpush1.msra.mxu0 0.0
  %4994 = vmatprep.subr.mxu0 0.0
  %4995 = vmatpush1.msra.mxu0 0.0
  %4996 = vmatprep.subr.mxu0 0.0
  %4997 = vmatpush1.msra.mxu0 0.0
  %4998 = vmatprep.subr.mxu0 0.0
  %4999 = vmatpush1.msra.mxu0 0.0
  %5000 = vmatprep.subr.mxu0 0.0
  %5001 = vmatpush1.msra.mxu0 0.0
  %5002 = vmatprep.subr.mxu0 0.0
  %5003 = vmatpush1.msra.mxu0 0.0
  %5004 = vmatprep.subr.mxu0 0.0
  %5005 = vmatpush1.msra.mxu0 0.0
  %5006 = vmatprep.subr.mxu0 0.0
  %5007 = vmatpush1.msra.mxu0 0.0
  %5008 = vmatprep.subr.mxu0 0.0
  %5009 = vmatpush1.msra.mxu0 0.0
  %5010 = vmatprep.subr.mxu0 0.0
  %5011 = vmatpush1.msra.mxu0 0.0
  %5012 = vmatprep.subr.mxu0 0.0
  %5013 = vmatpush1.msra.mxu0 0.0
  %5014 = vmatprep.subr.mxu0 0.0
  %5015 = vmatpush1.msra.mxu0 0.0
  %5016 = vmatprep.subr.mxu0 0.0
  %5017 = vmatpush1.msra.mxu0 0.0
  %5018 = vmatprep.subr.mxu0 0.0
  %5019 = vmatpush1.msra.mxu0 0.0
  %5020 = vmatprep.subr.mxu0 0.0
  %5021 = vmatpush1.msra.mxu0 0.0
  %5022 = vmatprep.mubr.f32.mxu0 0.0
  %5023 = vmatmul.mubr.f32.gmra.mrb[0].mxu0 %v4664
  %v5024 = vpop.f32.mrb[0].mxu0
  %v5025 = vadd.f32 %v223, %v5024
  %v5026 = vpop.f32.mrb[0].mxu0
  %5027 = vdwg.mxu0
  %v5028 = vmul.f32 %v4811, %v5025
  %v5029 = vadd.f32 %v4955, %v5028
  %v5030 = vtanh.pop %v5029
  %v5031 = vsub.f32 1.0, %v4887
  %v5032 = vmul.f32 %v5031, %v5030
  %v5033 = vmul.f32 %v4887, %v4662
  %v5034 = vadd.f32 %v5032, %v5033
  %v5036 = vsel %vm545, %v5034, 0
  %5038 = vmatprep.subr.mxu0 0.0
  %5039 = vmatpush1.msra.mxu0 %v203
  %5040 = vmatprep.subr.mxu0 0.0
  %5041 = vmatpush1.msra.mxu0 %v204
  %5042 = vmatprep.subr.mxu0 0.0
  %5043 = vmatpush1.msra.mxu0 %v205
  %5044 = vmatprep.subr.mxu0 0.0
  %5045 = vmatpush1.msra.mxu0 %v206
  %5046 = vmatprep.subr.mxu0 0.0
  %5047 = vmatpush1.msra.mxu0 %v207
  %5048 = vmatprep.subr.mxu0 0.0
  %5049 = vmatpush1.msra.mxu0 %v208
  %5050 = vmatprep.subr.mxu0 0.0
  %5051 = vmatpush1.msra.mxu0 %v209
  %5052 = vmatprep.subr.mxu0 0.0
  %5053 = vmatpush1.msra.mxu0 %v210
  %5054 = vmatprep.subr.mxu0 0.0
  %5055 = vmatpush1.msra.mxu0 0.0
  %5056 = vmatprep.subr.mxu0 0.0
  %5057 = vmatpush1.msra.mxu0 0.0
  %5058 = vmatprep.subr.mxu0 0.0
  %5059 = vmatpush1.msra.mxu0 0.0
  %5060 = vmatprep.subr.mxu0 0.0
  %5061 = vmatpush1.msra.mxu0 0.0
  %5062 = vmatprep.subr.mxu0 0.0
  %5063 = vmatpush1.msra.mxu0 0.0
  %5064 = vmatprep.subr.mxu0 0.0
  %5065 = vmatpush1.msra.mxu0 0.0
  %5066 = vmatprep.subr.mxu0 0.0
  %5067 = vmatpush1.msra.mxu0 0.0
  %5068 = vmatprep.subr.mxu0 0.0
  %5069 = vmatpush1.msra.mxu0 0.0
  %5070 = vmatprep.subr.mxu0 0.0
  %5071 = vmatpush1.msra.mxu0 0.0
  %5072 = vmatprep.subr.mxu0 0.0
  %5073 = vmatpush1.msra.mxu0 0.0
  %5074 = vmatprep.subr.mxu0 0.0
  %5075 = vmatpush1.msra.mxu0 0.0
  %5076 = vmatprep.subr.mxu0 0.0
  %5077 = vmatpush1.msra.mxu0 0.0
  %5078 = vmatprep.subr.mxu0 0.0
  %5079 = vmatpush1.msra.mxu0 0.0
  %5080 = vmatprep.subr.mxu0 0.0
  %5081 = vmatpush1.msra.mxu0 0.0
  %5082 = vmatprep.subr.mxu0 0.0
  %5083 = vmatpush1.msra.mxu0 0.0
  %5084 = vmatprep.subr.mxu0 0.0
  %5085 = vmatpush1.msra.mxu0 0.0
  %5086 = vmatprep.subr.mxu0 0.0
  %5087 = vmatpush1.msra.mxu0 0.0
  %5088 = vmatprep.subr.mxu0 0.0
  %5089 = vmatpush1.msra.mxu0 0.0
  %5090 = vmatprep.subr.mxu0 0.0
  %5091 = vmatpush1.msra.mxu0 0.0
  %5092 = vmatprep.subr.mxu0 0.0
  %5093 = vmatpush1.msra.mxu0 0.0
  %5094 = vmatprep.subr.mxu0 0.0
  %5095 = vmatpush1.msra.mxu0 0.0
  %5096 = vmatprep.subr.mxu0 0.0
  %5097 = vmatpush1.msra.mxu0 0.0
  %5098 = vmatprep.subr.mxu0 0.0
  %5099 = vmatpush1.msra.mxu0 0.0
  %5100 = vmatprep.subr.mxu0 0.0
  %5101 = vmatpush1.msra.mxu0 0.0
  %5102 = vmatprep.mubr.f32.mxu0 0.0
  %5103 = vmatmul.mubr.f32.gmra.mrb[0].mxu0 %v5036
  %v5104 = vpop.f32.mrb[0].mxu0
  %v5105 = vadd.f32 %v251, %v5104
  %v5106 = vpop.f32.mrb[0].mxu0
  %5107 = vdwg.mxu0
  %5108 = vmatprep.subr.mxu0 0.0
  %5109 = vmatpush1.msra.mxu0 %v179
  %5110 = vmatprep.subr.mxu0 0.0
  %5111 = vmatpush1.msra.mxu0 %v180
  %5112 = vmatprep.subr.mxu0 0.0
  %5113 = vmatpush1.msra.mxu0 %v181
  %5114 = vmatprep.subr.mxu0 0.0
  %5115 = vmatpush1.msra.mxu0 %v182
  %5116 = vmatprep.subr.mxu0 0.0
  %5117 = vmatpush1.msra.mxu0 %v183
  %5118 = vmatprep.subr.mxu0 0.0
  %5119 = vmatpush1.msra.mxu0 %v184
  %5120 = vmatprep.subr.mxu0 0.0
  %5121 = vmatpush1.msra.mxu0 %v185
  %5122 = vmatprep.subr.mxu0 0.0
  %5123 = vmatpush1.msra.mxu0 %v186
  %5124 = vmatprep.subr.mxu0 0.0
  %5125 = vmatpush1.msra.mxu0 0.0
  %5126 = vmatprep.subr.mxu0 0.0
  %5127 = vmatpush1.msra.mxu0 0.0
  %5128 = vmatprep.subr.mxu0 0.0
  %5129 = vmatpush1.msra.mxu0 0.0
  %5130 = vmatprep.subr.mxu0 0.0
  %5131 = vmatpush1.msra.mxu0 0.0
  %5132 = vmatprep.subr.mxu0 0.0
  %5133 = vmatpush1.msra.mxu0 0.0
  %5134 = vmatprep.subr.mxu0 0.0
  %5135 = vmatpush1.msra.mxu0 0.0
  %5136 = vmatprep.subr.mxu0 0.0
  %5137 = vmatpush1.msra.mxu0 0.0
  %5138 = vmatprep.subr.mxu0 0.0
  %5139 = vmatpush1.msra.mxu0 0.0
  %5140 = vmatprep.subr.mxu0 0.0
  %5141 = vmatpush1.msra.mxu0 0.0
  %5142 = vmatprep.subr.mxu0 0.0
  %5143 = vmatpush1.msra.mxu0 0.0
  %5144 = vmatprep.subr.mxu0 0.0
  %5145 = vmatpush1.msra.mxu0 0.0
  %5146 = vmatprep.subr.mxu0 0.0
  %5147 = vmatpush1.msra.mxu0 0.0
  %5148 = vmatprep.subr.mxu0 0.0
  %5149 = vmatpush1.msra.mxu0 0.0
  %5150 = vmatprep.subr.mxu0 0.0
  %5151 = vmatpush1.msra.mxu0 0.0
  %5152 = vmatprep.subr.mxu0 0.0
  %5153 = vmatpush1.msra.mxu0 0.0
  %5154 = vmatprep.subr.mxu0 0.0
  %5155 = vmatpush1.msra.mxu0 0.0
  %5156 = vmatprep.subr.mxu0 0.0
  %5157 = vmatpush1.msra.mxu0 0.0
  %5158 = vmatprep.subr.mxu0 0.0
  %5159 = vmatpush1.msra.mxu0 0.0
  %5160 = vmatprep.subr.mxu0 0.0
  %5161 = vmatpush1.msra.mxu0 0.0
  %5162 = vmatprep.subr.mxu0 0.0
  %5163 = vmatpush1.msra.mxu0 0.0
  %5164 = vmatprep.subr.mxu0 0.0
  %5165 = vmatpush1.msra.mxu0 0.0
  %5166 = vmatprep.subr.mxu0 0.0
  %5167 = vmatpush1.msra.mxu0 0.0
  %5168 = vmatprep.subr.mxu0 0.0
  %5169 = vmatpush1.msra.mxu0 0.0
  %5170 = vmatprep.subr.mxu0 0.0
  %5171 = vmatpush1.msra.mxu0 0.0
  %5172 = vmatprep.mubr.f32.mxu0 0.0
  %5173 = vmatmul.mubr.f32.gmra.mrb[0].mxu0 %v5036
  %v5174 = vpop.f32.mrb[0].mxu0
  %v5175 = vadd.f32 %v230, %v5174
  %v5176 = vpop.f32.mrb[0].mxu0
  %5177 = vdwg.mxu0
  %v5178 = vxor.u32 %v5175, 2147483648
  %v5179 = vmul.f32 %v5178, 1.442695
  %v5180 = vpow.pop %v5179
  %v5181 = vadd.f32 %v5180, 1.0
  %v5182 = vrcp.pop %v5181
  %v5183 = vmul.f32 1.0, %v5182
  %5184 = vmatprep.subr.mxu0 0.0
  %5185 = vmatpush1.msra.mxu0 %v187
  %5186 = vmatprep.subr.mxu0 0.0
  %5187 = vmatpush1.msra.mxu0 %v188
  %5188 = vmatprep.subr.mxu0 0.0
  %5189 = vmatpush1.msra.mxu0 %v189
  %5190 = vmatprep.subr.mxu0 0.0
  %5191 = vmatpush1.msra.mxu0 %v190
  %5192 = vmatprep.subr.mxu0 0.0
  %5193 = vmatpush1.msra.mxu0 %v191
  %5194 = vmatprep.subr.mxu0 0.0
  %5195 = vmatpush1.msra.mxu0 %v192
  %5196 = vmatprep.subr.mxu0 0.0
  %5197 = vmatpush1.msra.mxu0 %v193
  %5198 = vmatprep.subr.mxu0 0.0
  %5199 = vmatpush1.msra.mxu0 %v194
  %5200 = vmatprep.subr.mxu0 0.0
  %5201 = vmatpush1.msra.mxu0 0.0
  %5202 = vmatprep.subr.mxu0 0.0
  %5203 = vmatpush1.msra.mxu0 0.0
  %5204 = vmatprep.subr.mxu0 0.0
  %5205 = vmatpush1.msra.mxu0 0.0
  %5206 = vmatprep.subr.mxu0 0.0
  %5207 = vmatpush1.msra.mxu0 0.0
  %5208 = vmatprep.subr.mxu0 0.0
  %5209 = vmatpush1.msra.mxu0 0.0
  %5210 = vmatprep.subr.mxu0 0.0
  %5211 = vmatpush1.msra.mxu0 0.0
  %5212 = vmatprep.subr.mxu0 0.0
  %5213 = vmatpush1.msra.mxu0 0.0
  %5214 = vmatprep.subr.mxu0 0.0
  %5215 = vmatpush1.msra.mxu0 0.0
  %5216 = vmatprep.subr.mxu0 0.0
  %5217 = vmatpush1.msra.mxu0 0.0
  %5218 = vmatprep.subr.mxu0 0.0
  %5219 = vmatpush1.msra.mxu0 0.0
  %5220 = vmatprep.subr.mxu0 0.0
  %5221 = vmatpush1.msra.mxu0 0.0
  %5222 = vmatprep.subr.mxu0 0.0
  %5223 = vmatpush1.msra.mxu0 0.0
  %5224 = vmatprep.subr.mxu0 0.0
  %5225 = vmatpush1.msra.mxu0 0.0
  %5226 = vmatprep.subr.mxu0 0.0
  %5227 = vmatpush1.msra.mxu0 0.0
  %5228 = vmatprep.subr.mxu0 0.0
  %5229 = vmatpush1.msra.mxu0 0.0
  %5230 = vmatprep.subr.mxu0 0.0
  %5231 = vmatpush1.msra.mxu0 0.0
  %5232 = vmatprep.subr.mxu0 0.0
  %5233 = vmatpush1.msra.mxu0 0.0
  %5234 = vmatprep.subr.mxu0 0.0
  %5235 = vmatpush1.msra.mxu0 0.0
  %5236 = vmatprep.subr.mxu0 0.0
  %5237 = vmatpush1.msra.mxu0 0.0
  %5238 = vmatprep.subr.mxu0 0.0
  %5239 = vmatpush1.msra.mxu0 0.0
  %5240 = vmatprep.subr.mxu0 0.0
  %5241 = vmatpush1.msra.mxu0 0.0
  %5242 = vmatprep.subr.mxu0 0.0
  %5243 = vmatpush1.msra.mxu0 0.0
  %5244 = vmatprep.subr.mxu0 0.0
  %5245 = vmatpush1.msra.mxu0 0.0
  %5246 = vmatprep.subr.mxu0 0.0
  %5247 = vmatpush1.msra.mxu0 0.0
  %5248 = vmatprep.mubr.f32.mxu0 0.0
  %5249 = vmatmul.mubr.f32.gmra.mrb[0].mxu0 %v5036
  %v5250 = vpop.f32.mrb[0].mxu0
  %v5251 = vadd.f32 %v237, %v5250
  %v5252 = vpop.f32.mrb[0].mxu0
  %5253 = vdwg.mxu0
  %v5254 = vxor.u32 %v5251, 2147483648
  %v5255 = vmul.f32 %v5254, 1.442695
  %v5256 = vpow.pop %v5255
  %v5257 = vadd.f32 %v5256, 1.0
  %v5258 = vrcp.pop %v5257
  %v5259 = vmul.f32 1.0, %v5258
  %5260 = vmatprep.subr.mxu0 0.0
  %5261 = vmatpush1.msra.mxu0 %v195
  %5262 = vmatprep.subr.mxu0 0.0
  %5263 = vmatpush1.msra.mxu0 %v196
  %5264 = vmatprep.subr.mxu0 0.0
  %5265 = vmatpush1.msra.mxu0 %v197
  %5266 = vmatprep.subr.mxu0 0.0
  %5267 = vmatpush1.msra.mxu0 %v198
  %5268 = vmatprep.subr.mxu0 0.0
  %5269 = vmatpush1.msra.mxu0 %v199
  %5270 = vmatprep.subr.mxu0 0.0
  %5271 = vmatpush1.msra.mxu0 %v200
  %5272 = vmatprep.subr.mxu0 0.0
  %5273 = vmatpush1.msra.mxu0 %v201
  %5274 = vmatprep.subr.mxu0 0.0
  %5275 = vmatpush1.msra.mxu0 %v202
  %5276 = vmatprep.subr.mxu0 0.0
  %5277 = vmatpush1.msra.mxu0 0.0
  %5278 = vmatprep.subr.mxu0 0.0
  %5279 = vmatpush1.msra.mxu0 0.0
  %5280 = vmatprep.subr.mxu0 0.0
  %5281 = vmatpush1.msra.mxu0 0.0
  %5282 = vmatprep.subr.mxu0 0.0
  %5283 = vmatpush1.msra.mxu0 0.0
  %5284 = vmatprep.subr.mxu0 0.0
  %5285 = vmatpush1.msra.mxu0 0.0
  %5286 = vmatprep.subr.mxu0 0.0
  %5287 = vmatpush1.msra.mxu0 0.0
  %5288 = vmatprep.subr.mxu0 0.0
  %5289 = vmatpush1.msra.mxu0 0.0
  %5290 = vmatprep.subr.mxu0 0.0
  %5291 = vmatpush1.msra.mxu0 0.0
  %5292 = vmatprep.subr.mxu0 0.0
  %5293 = vmatpush1.msra.mxu0 0.0
  %5294 = vmatprep.subr.mxu0 0.0
  %5295 = vmatpush1.msra.mxu0 0.0
  %5296 = vmatprep.subr.mxu0 0.0
  %5297 = vmatpush1.msra.mxu0 0.0
  %5298 = vmatprep.subr.mxu0 0.0
  %5299 = vmatpush1.msra.mxu0 0.0
  %5300 = vmatprep.subr.mxu0 0.0
  %5301 = vmatpush1.msra.mxu0 0.0
  %5302 = vmatprep.subr.mxu0 0.0
  %5303 = vmatpush1.msra.mxu0 0.0
  %5304 = vmatprep.subr.mxu0 0.0
  %5305 = vmatpush1.msra.mxu0 0.0
  %5306 = vmatprep.subr.mxu0 0.0
  %5307 = vmatpush1.msra.mxu0 0.0
  %5308 = vmatprep.subr.mxu0 0.0
  %5309 = vmatpush1.msra.mxu0 0.0
  %5310 = vmatprep.subr.mxu0 0.0
  %5311 = vmatpush1.msra.mxu0 0.0
  %5312 = vmatprep.subr.mxu0 0.0
  %5313 = vmatpush1.msra.mxu0 0.0
  %5314 = vmatprep.subr.mxu0 0.0
  %5315 = vmatpush1.msra.mxu0 0.0
  %5316 = vmatprep.subr.mxu0 0.0
  %5317 = vmatpush1.msra.mxu0 0.0
  %5318 = vmatprep.subr.mxu0 0.0
  %5319 = vmatpush1.msra.mxu0 0.0
  %5320 = vmatprep.subr.mxu0 0.0
  %5321 = vmatpush1.msra.mxu0 0.0
  %5322 = vmatprep.subr.mxu0 0.0
  %5323 = vmatpush1.msra.mxu0 0.0
  %5324 = vmatprep.mubr.f32.mxu0 0.0
  %5325 = vmatmul.mubr.f32.gmra.mrb[0].mxu0 %v5036
  %v5326 = vpop.f32.mrb[0].mxu0
  %v5327 = vadd.f32 %v244, %v5326
  %v5328 = vpop.f32.mrb[0].mxu0
  %5329 = vdwg.mxu0
  %5330 = vmatprep.subr.mxu0 0.0
  %5331 = vmatpush1.msra.mxu0 %v171
  %5332 = vmatprep.subr.mxu0 0.0
  %5333 = vmatpush1.msra.mxu0 %v172
  %5334 = vmatprep.subr.mxu0 0.0
  %5335 = vmatpush1.msra.mxu0 %v173
  %5336 = vmatprep.subr.mxu0 0.0
  %5337 = vmatpush1.msra.mxu0 %v174
  %5338 = vmatprep.subr.mxu0 0.0
  %5339 = vmatpush1.msra.mxu0 %v175
  %5340 = vmatprep.subr.mxu0 0.0
  %5341 = vmatpush1.msra.mxu0 %v176
  %5342 = vmatprep.subr.mxu0 0.0
  %5343 = vmatpush1.msra.mxu0 %v177
  %5344 = vmatprep.subr.mxu0 0.0
  %5345 = vmatpush1.msra.mxu0 %v178
  %5346 = vmatprep.subr.mxu0 0.0
  %5347 = vmatpush1.msra.mxu0 0.0
  %5348 = vmatprep.subr.mxu0 0.0
  %5349 = vmatpush1.msra.mxu0 0.0
  %5350 = vmatprep.subr.mxu0 0.0
  %5351 = vmatpush1.msra.mxu0 0.0
  %5352 = vmatprep.subr.mxu0 0.0
  %5353 = vmatpush1.msra.mxu0 0.0
  %5354 = vmatprep.subr.mxu0 0.0
  %5355 = vmatpush1.msra.mxu0 0.0
  %5356 = vmatprep.subr.mxu0 0.0
  %5357 = vmatpush1.msra.mxu0 0.0
  %5358 = vmatprep.subr.mxu0 0.0
  %5359 = vmatpush1.msra.mxu0 0.0
  %5360 = vmatprep.subr.mxu0 0.0
  %5361 = vmatpush1.msra.mxu0 0.0
  %5362 = vmatprep.subr.mxu0 0.0
  %5363 = vmatpush1.msra.mxu0 0.0
  %5364 = vmatprep.subr.mxu0 0.0
  %5365 = vmatpush1.msra.mxu0 0.0
  %5366 = vmatprep.subr.mxu0 0.0
  %5367 = vmatpush1.msra.mxu0 0.0
  %5368 = vmatprep.subr.mxu0 0.0
  %5369 = vmatpush1.msra.mxu0 0.0
  %5370 = vmatprep.subr.mxu0 0.0
  %5371 = vmatpush1.msra.mxu0 0.0
  %5372 = vmatprep.subr.mxu0 0.0
  %5373 = vmatpush1.msra.mxu0 0.0
  %5374 = vmatprep.subr.mxu0 0.0
  %5375 = vmatpush1.msra.mxu0 0.0
  %5376 = vmatprep.subr.mxu0 0.0
  %5377 = vmatpush1.msra.mxu0 0.0
  %5378 = vmatprep.subr.mxu0 0.0
  %5379 = vmatpush1.msra.mxu0 0.0
  %5380 = vmatprep.subr.mxu0 0.0
  %5381 = vmatpush1.msra.mxu0 0.0
  %5382 = vmatprep.subr.mxu0 0.0
  %5383 = vmatpush1.msra.mxu0 0.0
  %5384 = vmatprep.subr.mxu0 0.0
  %5385 = vmatpush1.msra.mxu0 0.0
  %5386 = vmatprep.subr.mxu0 0.0
  %5387 = vmatpush1.msra.mxu0 0.0
  %5388 = vmatprep.subr.mxu0 0.0
  %5389 = vmatpush1.msra.mxu0 0.0
  %5390 = vmatprep.subr.mxu0 0.0
  %5391 = vmatpush1.msra.mxu0 0.0
  %5392 = vmatprep.subr.mxu0 0.0
  %5393 = vmatpush1.msra.mxu0 0.0
  %5394 = vmatprep.mubr.f32.mxu0 0.0
  %5395 = vmatmul.mubr.f32.gmra.mrb[0].mxu0 %v5036
  %v5396 = vpop.f32.mrb[0].mxu0
  %v5397 = vadd.f32 %v223, %v5396
  %v5398 = vpop.f32.mrb[0].mxu0
  %5399 = vdwg.mxu0
  %v5400 = vmul.f32 %v5183, %v5397
  %v5401 = vadd.f32 %v5327, %v5400
  %v5402 = vtanh.pop %v5401
  %v5403 = vsub.f32 1.0, %v5259
  %v5404 = vmul.f32 %v5403, %v5402
  %v5405 = vmul.f32 %v5259, %v5034
  %v5406 = vadd.f32 %v5404, %v5405
  %v5408 = vsel %vm545, %v5406, 0
  %5410 = vmatprep.subr.mxu0 0.0
  %5411 = vmatpush1.msra.mxu0 %v203
  %5412 = vmatprep.subr.mxu0 0.0
  %5413 = vmatpush1.msra.mxu0 %v204
  %5414 = vmatprep.subr.mxu0 0.0
  %5415 = vmatpush1.msra.mxu0 %v205
  %5416 = vmatprep.subr.mxu0 0.0
  %5417 = vmatpush1.msra.mxu0 %v206
  %5418 = vmatprep.subr.mxu0 0.0
  %5419 = vmatpush1.msra.mxu0 %v207
  %5420 = vmatprep.subr.mxu0 0.0
  %5421 = vmatpush1.msra.mxu0 %v208
  %5422 = vmatprep.subr.mxu0 0.0
  %5423 = vmatpush1.msra.mxu0 %v209
  %5424 = vmatprep.subr.mxu0 0.0
  %5425 = vmatpush1.msra.mxu0 %v210
  %5426 = vmatprep.subr.mxu0 0.0
  %5427 = vmatpush1.msra.mxu0 0.0
  %5428 = vmatprep.subr.mxu0 0.0
  %5429 = vmatpush1.msra.mxu0 0.0
  %5430 = vmatprep.subr.mxu0 0.0
  %5431 = vmatpush1.msra.mxu0 0.0
  %5432 = vmatprep.subr.mxu0 0.0
  %5433 = vmatpush1.msra.mxu0 0.0
  %5434 = vmatprep.subr.mxu0 0.0
  %5435 = vmatpush1.msra.mxu0 0.0
  %5436 = vmatprep.subr.mxu0 0.0
  %5437 = vmatpush1.msra.mxu0 0.0
  %5438 = vmatprep.subr.mxu0 0.0
  %5439 = vmatpush1.msra.mxu0 0.0
  %5440 = vmatprep.subr.mxu0 0.0
  %5441 = vmatpush1.msra.mxu0 0.0
  %5442 = vmatprep.subr.mxu0 0.0
  %5443 = vmatpush1.msra.mxu0 0.0
  %5444 = vmatprep.subr.mxu0 0.0
  %5445 = vmatpush1.msra.mxu0 0.0
  %5446 = vmatprep.subr.mxu0 0.0
  %5447 = vmatpush1.msra.mxu0 0.0
  %5448 = vmatprep.subr.mxu0 0.0
  %5449 = vmatpush1.msra.mxu0 0.0
  %5450 = vmatprep.subr.mxu0 0.0
  %5451 = vmatpush1.msra.mxu0 0.0
  %5452 = vmatprep.subr.mxu0 0.0
  %5453 = vmatpush1.msra.mxu0 0.0
  %5454 = vmatprep.subr.mxu0 0.0
  %5455 = vmatpush1.msra.mxu0 0.0
  %5456 = vmatprep.subr.mxu0 0.0
  %5457 = vmatpush1.msra.mxu0 0.0
  %5458 = vmatprep.subr.mxu0 0.0
  %5459 = vmatpush1.msra.mxu0 0.0
  %5460 = vmatprep.subr.mxu0 0.0
  %5461 = vmatpush1.msra.mxu0 0.0
  %5462 = vmatprep.subr.mxu0 0.0
  %5463 = vmatpush1.msra.mxu0 0.0
  %5464 = vmatprep.subr.mxu0 0.0
  %5465 = vmatpush1.msra.mxu0 0.0
  %5466 = vmatprep.subr.mxu0 0.0
  %5467 = vmatpush1.msra.mxu0 0.0
  %5468 = vmatprep.subr.mxu0 0.0
  %5469 = vmatpush1.msra.mxu0 0.0
  %5470 = vmatprep.subr.mxu0 0.0
  %5471 = vmatpush1.msra.mxu0 0.0
  %5472 = vmatprep.subr.mxu0 0.0
  %5473 = vmatpush1.msra.mxu0 0.0
  %5474 = vmatprep.mubr.f32.mxu0 0.0
  %5475 = vmatmul.mubr.f32.gmra.mrb[0].mxu0 %v5408
  %v5476 = vpop.f32.mrb[0].mxu0
  %v5477 = vadd.f32 %v251, %v5476
  %v5478 = vpop.f32.mrb[0].mxu0
  %5479 = vdwg.mxu0
  %5480 = vmatprep.subr.mxu0 0.0
  %5481 = vmatpush1.msra.mxu0 %v179
  %5482 = vmatprep.subr.mxu0 0.0
  %5483 = vmatpush1.msra.mxu0 %v180
  %5484 = vmatprep.subr.mxu0 0.0
  %5485 = vmatpush1.msra.mxu0 %v181
  %5486 = vmatprep.subr.mxu0 0.0
  %5487 = vmatpush1.msra.mxu0 %v182
  %5488 = vmatprep.subr.mxu0 0.0
  %5489 = vmatpush1.msra.mxu0 %v183
  %5490 = vmatprep.subr.mxu0 0.0
  %5491 = vmatpush1.msra.mxu0 %v184
  %5492 = vmatprep.subr.mxu0 0.0
  %5493 = vmatpush1.msra.mxu0 %v185
  %5494 = vmatprep.subr.mxu0 0.0
  %5495 = vmatpush1.msra.mxu0 %v186
  %5496 = vmatprep.subr.mxu0 0.0
  %5497 = vmatpush1.msra.mxu0 0.0
  %5498 = vmatprep.subr.mxu0 0.0
  %5499 = vmatpush1.msra.mxu0 0.0
  %5500 = vmatprep.subr.mxu0 0.0
  %5501 = vmatpush1.msra.mxu0 0.0
  %5502 = vmatprep.subr.mxu0 0.0
  %5503 = vmatpush1.msra.mxu0 0.0
  %5504 = vmatprep.subr.mxu0 0.0
  %5505 = vmatpush1.msra.mxu0 0.0
  %5506 = vmatprep.subr.mxu0 0.0
  %5507 = vmatpush1.msra.mxu0 0.0
  %5508 = vmatprep.subr.mxu0 0.0
  %5509 = vmatpush1.msra.mxu0 0.0
  %5510 = vmatprep.subr.mxu0 0.0
  %5511 = vmatpush1.msra.mxu0 0.0
  %5512 = vmatprep.subr.mxu0 0.0
  %5513 = vmatpush1.msra.mxu0 0.0
  %5514 = vmatprep.subr.mxu0 0.0
  %5515 = vmatpush1.msra.mxu0 0.0
  %5516 = vmatprep.subr.mxu0 0.0
  %5517 = vmatpush1.msra.mxu0 0.0
  %5518 = vmatprep.subr.mxu0 0.0
  %5519 = vmatpush1.msra.mxu0 0.0
  %5520 = vmatprep.subr.mxu0 0.0
  %5521 = vmatpush1.msra.mxu0 0.0
  %5522 = vmatprep.subr.mxu0 0.0
  %5523 = vmatpush1.msra.mxu0 0.0
  %5524 = vmatprep.subr.mxu0 0.0
  %5525 = vmatpush1.msra.mxu0 0.0
  %5526 = vmatprep.subr.mxu0 0.0
  %5527 = vmatpush1.msra.mxu0 0.0
  %5528 = vmatprep.subr.mxu0 0.0
  %5529 = vmatpush1.msra.mxu0 0.0
  %5530 = vmatprep.subr.mxu0 0.0
  %5531 = vmatpush1.msra.mxu0 0.0
  %5532 = vmatprep.subr.mxu0 0.0
  %5533 = vmatpush1.msra.mxu0 0.0
  %5534 = vmatprep.subr.mxu0 0.0
  %5535 = vmatpush1.msra.mxu0 0.0
  %5536 = vmatprep.subr.mxu0 0.0
  %5537 = vmatpush1.msra.mxu0 0.0
  %5538 = vmatprep.subr.mxu0 0.0
  %5539 = vmatpush1.msra.mxu0 0.0
  %5540 = vmatprep.subr.mxu0 0.0
  %5541 = vmatpush1.msra.mxu0 0.0
  %5542 = vmatprep.subr.mxu0 0.0
  %5543 = vmatpush1.msra.mxu0 0.0
  %5544 = vmatprep.mubr.f32.mxu0 0.0
  %5545 = vmatmul.mubr.f32.gmra.mrb[0].mxu0 %v5408
  %v5546 = vpop.f32.mrb[0].mxu0
  %v5547 = vadd.f32 %v230, %v5546
  %v5548 = vpop.f32.mrb[0].mxu0
  %5549 = vdwg.mxu0
  %v5550 = vxor.u32 %v5547, 2147483648
  %v5551 = vmul.f32 %v5550, 1.442695
  %v5552 = vpow.pop %v5551
  %v5553 = vadd.f32 %v5552, 1.0
  %v5554 = vrcp.pop %v5553
  %v5555 = vmul.f32 1.0, %v5554
  %5556 = vmatprep.subr.mxu0 0.0
  %5557 = vmatpush1.msra.mxu0 %v187
  %5558 = vmatprep.subr.mxu0 0.0
  %5559 = vmatpush1.msra.mxu0 %v188
  %5560 = vmatprep.subr.mxu0 0.0
  %5561 = vmatpush1.msra.mxu0 %v189
  %5562 = vmatprep.subr.mxu0 0.0
  %5563 = vmatpush1.msra.mxu0 %v190
  %5564 = vmatprep.subr.mxu0 0.0
  %5565 = vmatpush1.msra.mxu0 %v191
  %5566 = vmatprep.subr.mxu0 0.0
  %5567 = vmatpush1.msra.mxu0 %v192
  %5568 = vmatprep.subr.mxu0 0.0
  %5569 = vmatpush1.msra.mxu0 %v193
  %5570 = vmatprep.subr.mxu0 0.0
  %5571 = vmatpush1.msra.mxu0 %v194
  %5572 = vmatprep.subr.mxu0 0.0
  %5573 = vmatpush1.msra.mxu0 0.0
  %5574 = vmatprep.subr.mxu0 0.0
  %5575 = vmatpush1.msra.mxu0 0.0
  %5576 = vmatprep.subr.mxu0 0.0
  %5577 = vmatpush1.msra.mxu0 0.0
  %5578 = vmatprep.subr.mxu0 0.0
  %5579 = vmatpush1.msra.mxu0 0.0
  %5580 = vmatprep.subr.mxu0 0.0
  %5581 = vmatpush1.msra.mxu0 0.0
  %5582 = vmatprep.subr.mxu0 0.0
  %5583 = vmatpush1.msra.mxu0 0.0
  %5584 = vmatprep.subr.mxu0 0.0
  %5585 = vmatpush1.msra.mxu0 0.0
  %5586 = vmatprep.subr.mxu0 0.0
  %5587 = vmatpush1.msra.mxu0 0.0
  %5588 = vmatprep.subr.mxu0 0.0
  %5589 = vmatpush1.msra.mxu0 0.0
  %5590 = vmatprep.subr.mxu0 0.0
  %5591 = vmatpush1.msra.mxu0 0.0
  %5592 = vmatprep.subr.mxu0 0.0
  %5593 = vmatpush1.msra.mxu0 0.0
  %5594 = vmatprep.subr.mxu0 0.0
  %5595 = vmatpush1.msra.mxu0 0.0
  %5596 = vmatprep.subr.mxu0 0.0
  %5597 = vmatpush1.msra.mxu0 0.0
  %5598 = vmatprep.subr.mxu0 0.0
  %5599 = vmatpush1.msra.mxu0 0.0
  %5600 = vmatprep.subr.mxu0 0.0
  %5601 = vmatpush1.msra.mxu0 0.0
  %5602 = vmatprep.subr.mxu0 0.0
  %5603 = vmatpush1.msra.mxu0 0.0
  %5604 = vmatprep.subr.mxu0 0.0
  %5605 = vmatpush1.msra.mxu0 0.0
  %5606 = vmatprep.subr.mxu0 0.0
  %5607 = vmatpush1.msra.mxu0 0.0
  %5608 = vmatprep.subr.mxu0 0.0
  %5609 = vmatpush1.msra.mxu0 0.0
  %5610 = vmatprep.subr.mxu0 0.0
  %5611 = vmatpush1.msra.mxu0 0.0
  %5612 = vmatprep.subr.mxu0 0.0
  %5613 = vmatpush1.msra.mxu0 0.0
  %5614 = vmatprep.subr.mxu0 0.0
  %5615 = vmatpush1.msra.mxu0 0.0
  %5616 = vmatprep.subr.mxu0 0.0
  %5617 = vmatpush1.msra.mxu0 0.0
  %5618 = vmatprep.subr.mxu0 0.0
  %5619 = vmatpush1.msra.mxu0 0.0
  %5620 = vmatprep.mubr.f32.mxu0 0.0
  %5621 = vmatmul.mubr.f32.gmra.mrb[0].mxu0 %v5408
  %v5622 = vpop.f32.mrb[0].mxu0
  %v5623 = vadd.f32 %v237, %v5622
  %v5624 = vpop.f32.mrb[0].mxu0
  %5625 = vdwg.mxu0
  %v5626 = vxor.u32 %v5623, 2147483648
  %v5627 = vmul.f32 %v5626, 1.442695
  %v5628 = vpow.pop %v5627
  %v5629 = vadd.f32 %v5628, 1.0
  %v5630 = vrcp.pop %v5629
  %v5631 = vmul.f32 1.0, %v5630
  %5632 = vmatprep.subr.mxu0 0.0
  %5633 = vmatpush1.msra.mxu0 %v195
  %5634 = vmatprep.subr.mxu0 0.0
  %5635 = vmatpush1.msra.mxu0 %v196
  %5636 = vmatprep.subr.mxu0 0.0
  %5637 = vmatpush1.msra.mxu0 %v197
  %5638 = vmatprep.subr.mxu0 0.0
  %5639 = vmatpush1.msra.mxu0 %v198
  %5640 = vmatprep.subr.mxu0 0.0
  %5641 = vmatpush1.msra.mxu0 %v199
  %5642 = vmatprep.subr.mxu0 0.0
  %5643 = vmatpush1.msra.mxu0 %v200
  %5644 = vmatprep.subr.mxu0 0.0
  %5645 = vmatpush1.msra.mxu0 %v201
  %5646 = vmatprep.subr.mxu0 0.0
  %5647 = vmatpush1.msra.mxu0 %v202
  %5648 = vmatprep.subr.mxu0 0.0
  %5649 = vmatpush1.msra.mxu0 0.0
  %5650 = vmatprep.subr.mxu0 0.0
  %5651 = vmatpush1.msra.mxu0 0.0
  %5652 = vmatprep.subr.mxu0 0.0
  %5653 = vmatpush1.msra.mxu0 0.0
  %5654 = vmatprep.subr.mxu0 0.0
  %5655 = vmatpush1.msra.mxu0 0.0
  %5656 = vmatprep.subr.mxu0 0.0
  %5657 = vmatpush1.msra.mxu0 0.0
  %5658 = vmatprep.subr.mxu0 0.0
  %5659 = vmatpush1.msra.mxu0 0.0
  %5660 = vmatprep.subr.mxu0 0.0
  %5661 = vmatpush1.msra.mxu0 0.0
  %5662 = vmatprep.subr.mxu0 0.0
  %5663 = vmatpush1.msra.mxu0 0.0
  %5664 = vmatprep.subr.mxu0 0.0
  %5665 = vmatpush1.msra.mxu0 0.0
  %5666 = vmatprep.subr.mxu0 0.0
  %5667 = vmatpush1.msra.mxu0 0.0
  %5668 = vmatprep.subr.mxu0 0.0
  %5669 = vmatpush1.msra.mxu0 0.0
  %5670 = vmatprep.subr.mxu0 0.0
  %5671 = vmatpush1.msra.mxu0 0.0
  %5672 = vmatprep.subr.mxu0 0.0
  %5673 = vmatpush1.msra.mxu0 0.0
  %5674 = vmatprep.subr.mxu0 0.0
  %5675 = vmatpush1.msra.mxu0 0.0
  %5676 = vmatprep.subr.mxu0 0.0
  %5677 = vmatpush1.msra.mxu0 0.0
  %5678 = vmatprep.subr.mxu0 0.0
  %5679 = vmatpush1.msra.mxu0 0.0
  %5680 = vmatprep.subr.mxu0 0.0
  %5681 = vmatpush1.msra.mxu0 0.0
  %5682 = vmatprep.subr.mxu0 0.0
  %5683 = vmatpush1.msra.mxu0 0.0
  %5684 = vmatprep.subr.mxu0 0.0
  %5685 = vmatpush1.msra.mxu0 0.0
  %5686 = vmatprep.subr.mxu0 0.0
  %5687 = vmatpush1.msra.mxu0 0.0
  %5688 = vmatprep.subr.mxu0 0.0
  %5689 = vmatpush1.msra.mxu0 0.0
  %5690 = vmatprep.subr.mxu0 0.0
  %5691 = vmatpush1.msra.mxu0 0.0
  %5692 = vmatprep.subr.mxu0 0.0
  %5693 = vmatpush1.msra.mxu0 0.0
  %5694 = vmatprep.subr.mxu0 0.0
  %5695 = vmatpush1.msra.mxu0 0.0
  %5696 = vmatprep.mubr.f32.mxu0 0.0
  %5697 = vmatmul.mubr.f32.gmra.mrb[0].mxu0 %v5408
  %v5698 = vpop.f32.mrb[0].mxu0
  %v5699 = vadd.f32 %v244, %v5698
  %v5700 = vpop.f32.mrb[0].mxu0
  %5701 = vdwg.mxu0
  %5702 = vmatprep.subr.mxu0 0.0
  %5703 = vmatpush1.msra.mxu0 %v171
  %5704 = vmatprep.subr.mxu0 0.0
  %5705 = vmatpush1.msra.mxu0 %v172
  %5706 = vmatprep.subr.mxu0 0.0
  %5707 = vmatpush1.msra.mxu0 %v173
  %5708 = vmatprep.subr.mxu0 0.0
  %5709 = vmatpush1.msra.mxu0 %v174
  %5710 = vmatprep.subr.mxu0 0.0
  %5711 = vmatpush1.msra.mxu0 %v175
  %5712 = vmatprep.subr.mxu0 0.0
  %5713 = vmatpush1.msra.mxu0 %v176
  %5714 = vmatprep.subr.mxu0 0.0
  %5715 = vmatpush1.msra.mxu0 %v177
  %5716 = vmatprep.subr.mxu0 0.0
  %5717 = vmatpush1.msra.mxu0 %v178
  %5718 = vmatprep.subr.mxu0 0.0
  %5719 = vmatpush1.msra.mxu0 0.0
  %5720 = vmatprep.subr.mxu0 0.0
  %5721 = vmatpush1.msra.mxu0 0.0
  %5722 = vmatprep.subr.mxu0 0.0
  %5723 = vmatpush1.msra.mxu0 0.0
  %5724 = vmatprep.subr.mxu0 0.0
  %5725 = vmatpush1.msra.mxu0 0.0
  %5726 = vmatprep.subr.mxu0 0.0
  %5727 = vmatpush1.msra.mxu0 0.0
  %5728 = vmatprep.subr.mxu0 0.0
  %5729 = vmatpush1.msra.mxu0 0.0
  %5730 = vmatprep.subr.mxu0 0.0
  %5731 = vmatpush1.msra.mxu0 0.0
  %5732 = vmatprep.subr.mxu0 0.0
  %5733 = vmatpush1.msra.mxu0 0.0
  %5734 = vmatprep.subr.mxu0 0.0
  %5735 = vmatpush1.msra.mxu0 0.0
  %5736 = vmatprep.subr.mxu0 0.0
  %5737 = vmatpush1.msra.mxu0 0.0
  %5738 = vmatprep.subr.mxu0 0.0
  %5739 = vmatpush1.msra.mxu0 0.0
  %5740 = vmatprep.subr.mxu0 0.0
  %5741 = vmatpush1.msra.mxu0 0.0
  %5742 = vmatprep.subr.mxu0 0.0
  %5743 = vmatpush1.msra.mxu0 0.0
  %5744 = vmatprep.subr.mxu0 0.0
  %5745 = vmatpush1.msra.mxu0 0.0
  %5746 = vmatprep.subr.mxu0 0.0
  %5747 = vmatpush1.msra.mxu0 0.0
  %5748 = vmatprep.subr.mxu0 0.0
  %5749 = vmatpush1.msra.mxu0 0.0
  %5750 = vmatprep.subr.mxu0 0.0
  %5751 = vmatpush1.msra.mxu0 0.0
  %5752 = vmatprep.subr.mxu0 0.0
  %5753 = vmatpush1.msra.mxu0 0.0
  %5754 = vmatprep.subr.mxu0 0.0
  %5755 = vmatpush1.msra.mxu0 0.0
  %5756 = vmatprep.subr.mxu0 0.0
  %5757 = vmatpush1.msra.mxu0 0.0
  %5758 = vmatprep.subr.mxu0 0.0
  %5759 = vmatpush1.msra.mxu0 0.0
  %5760 = vmatprep.subr.mxu0 0.0
  %5761 = vmatpush1.msra.mxu0 0.0
  %5762 = vmatprep.subr.mxu0 0.0
  %5763 = vmatpush1.msra.mxu0 0.0
  %5764 = vmatprep.subr.mxu0 0.0
  %5765 = vmatpush1.msra.mxu0 0.0
  %5766 = vmatprep.mubr.f32.mxu0 0.0
  %5767 = vmatmul.mubr.f32.gmra.mrb[0].mxu0 %v5408
  %v5768 = vpop.f32.mrb[0].mxu0
  %v5769 = vadd.f32 %v223, %v5768
  %v5770 = vpop.f32.mrb[0].mxu0
  %5771 = vdwg.mxu0
  %v5772 = vmul.f32 %v5555, %v5769
  %v5773 = vadd.f32 %v5699, %v5772
  %v5774 = vtanh.pop %v5773
  %v5775 = vsub.f32 1.0, %v5631
  %v5776 = vmul.f32 %v5775, %v5774
  %v5777 = vmul.f32 %v5631, %v5406
  %v5778 = vadd.f32 %v5776, %v5777
  %v5780 = vsel %vm545, %v5778, 0
  %5782 = vmatprep.subr.mxu0 0.0
  %5783 = vmatpush1.msra.mxu0 %v203
  %5784 = vmatprep.subr.mxu0 0.0
  %5785 = vmatpush1.msra.mxu0 %v204
  %5786 = vmatprep.subr.mxu0 0.0
  %5787 = vmatpush1.msra.mxu0 %v205
  %5788 = vmatprep.subr.mxu0 0.0
  %5789 = vmatpush1.msra.mxu0 %v206
  %5790 = vmatprep.subr.mxu0 0.0
  %5791 = vmatpush1.msra.mxu0 %v207
  %5792 = vmatprep.subr.mxu0 0.0
  %5793 = vmatpush1.msra.mxu0 %v208
  %5794 = vmatprep.subr.mxu0 0.0
  %5795 = vmatpush1.msra.mxu0 %v209
  %5796 = vmatprep.subr.mxu0 0.0
  %5797 = vmatpush1.msra.mxu0 %v210
  %5798 = vmatprep.subr.mxu0 0.0
  %5799 = vmatpush1.msra.mxu0 0.0
  %5800 = vmatprep.subr.mxu0 0.0
  %5801 = vmatpush1.msra.mxu0 0.0
  %5802 = vmatprep.subr.mxu0 0.0
  %5803 = vmatpush1.msra.mxu0 0.0
  %5804 = vmatprep.subr.mxu0 0.0
  %5805 = vmatpush1.msra.mxu0 0.0
  %5806 = vmatprep.subr.mxu0 0.0
  %5807 = vmatpush1.msra.mxu0 0.0
  %5808 = vmatprep.subr.mxu0 0.0
  %5809 = vmatpush1.msra.mxu0 0.0
  %5810 = vmatprep.subr.mxu0 0.0
  %5811 = vmatpush1.msra.mxu0 0.0
  %5812 = vmatprep.subr.mxu0 0.0
  %5813 = vmatpush1.msra.mxu0 0.0
  %5814 = vmatprep.subr.mxu0 0.0
  %5815 = vmatpush1.msra.mxu0 0.0
  %5816 = vmatprep.subr.mxu0 0.0
  %5817 = vmatpush1.msra.mxu0 0.0
  %5818 = vmatprep.subr.mxu0 0.0
  %5819 = vmatpush1.msra.mxu0 0.0
  %5820 = vmatprep.subr.mxu0 0.0
  %5821 = vmatpush1.msra.mxu0 0.0
  %5822 = vmatprep.subr.mxu0 0.0
  %5823 = vmatpush1.msra.mxu0 0.0
  %5824 = vmatprep.subr.mxu0 0.0
  %5825 = vmatpush1.msra.mxu0 0.0
  %5826 = vmatprep.subr.mxu0 0.0
  %5827 = vmatpush1.msra.mxu0 0.0
  %5828 = vmatprep.subr.mxu0 0.0
  %5829 = vmatpush1.msra.mxu0 0.0
  %5830 = vmatprep.subr.mxu0 0.0
  %5831 = vmatpush1.msra.mxu0 0.0
  %5832 = vmatprep.subr.mxu0 0.0
  %5833 = vmatpush1.msra.mxu0 0.0
  %5834 = vmatprep.subr.mxu0 0.0
  %5835 = vmatpush1.msra.mxu0 0.0
  %5836 = vmatprep.subr.mxu0 0.0
  %5837 = vmatpush1.msra.mxu0 0.0
  %5838 = vmatprep.subr.mxu0 0.0
  %5839 = vmatpush1.msra.mxu0 0.0
  %5840 = vmatprep.subr.mxu0 0.0
  %5841 = vmatpush1.msra.mxu0 0.0
  %5842 = vmatprep.subr.mxu0 0.0
  %5843 = vmatpush1.msra.mxu0 0.0
  %5844 = vmatprep.subr.mxu0 0.0
  %5845 = vmatpush1.msra.mxu0 0.0
  %5846 = vmatprep.mubr.f32.mxu0 0.0
  %5847 = vmatmul.mubr.f32.gmra.mrb[0].mxu0 %v5780
  %v5848 = vpop.f32.mrb[0].mxu0
  %v5849 = vadd.f32 %v251, %v5848
  %v5850 = vpop.f32.mrb[0].mxu0
  %5851 = vdwg.mxu0
  %5852 = vmatprep.subr.mxu0 0.0
  %5853 = vmatpush1.msra.mxu0 %v179
  %5854 = vmatprep.subr.mxu0 0.0
  %5855 = vmatpush1.msra.mxu0 %v180
  %5856 = vmatprep.subr.mxu0 0.0
  %5857 = vmatpush1.msra.mxu0 %v181
  %5858 = vmatprep.subr.mxu0 0.0
  %5859 = vmatpush1.msra.mxu0 %v182
  %5860 = vmatprep.subr.mxu0 0.0
  %5861 = vmatpush1.msra.mxu0 %v183
  %5862 = vmatprep.subr.mxu0 0.0
  %5863 = vmatpush1.msra.mxu0 %v184
  %5864 = vmatprep.subr.mxu0 0.0
  %5865 = vmatpush1.msra.mxu0 %v185
  %5866 = vmatprep.subr.mxu0 0.0
  %5867 = vmatpush1.msra.mxu0 %v186
  %5868 = vmatprep.subr.mxu0 0.0
  %5869 = vmatpush1.msra.mxu0 0.0
  %5870 = vmatprep.subr.mxu0 0.0
  %5871 = vmatpush1.msra.mxu0 0.0
  %5872 = vmatprep.subr.mxu0 0.0
  %5873 = vmatpush1.msra.mxu0 0.0
  %5874 = vmatprep.subr.mxu0 0.0
  %5875 = vmatpush1.msra.mxu0 0.0
  %5876 = vmatprep.subr.mxu0 0.0
  %5877 = vmatpush1.msra.mxu0 0.0
  %5878 = vmatprep.subr.mxu0 0.0
  %5879 = vmatpush1.msra.mxu0 0.0
  %5880 = vmatprep.subr.mxu0 0.0
  %5881 = vmatpush1.msra.mxu0 0.0
  %5882 = vmatprep.subr.mxu0 0.0
  %5883 = vmatpush1.msra.mxu0 0.0
  %5884 = vmatprep.subr.mxu0 0.0
  %5885 = vmatpush1.msra.mxu0 0.0
  %5886 = vmatprep.subr.mxu0 0.0
  %5887 = vmatpush1.msra.mxu0 0.0
  %5888 = vmatprep.subr.mxu0 0.0
  %5889 = vmatpush1.msra.mxu0 0.0
  %5890 = vmatprep.subr.mxu0 0.0
  %5891 = vmatpush1.msra.mxu0 0.0
  %5892 = vmatprep.subr.mxu0 0.0
  %5893 = vmatpush1.msra.mxu0 0.0
  %5894 = vmatprep.subr.mxu0 0.0
  %5895 = vmatpush1.msra.mxu0 0.0
  %5896 = vmatprep.subr.mxu0 0.0
  %5897 = vmatpush1.msra.mxu0 0.0
  %5898 = vmatprep.subr.mxu0 0.0
  %5899 = vmatpush1.msra.mxu0 0.0
  %5900 = vmatprep.subr.mxu0 0.0
  %5901 = vmatpush1.msra.mxu0 0.0
  %5902 = vmatprep.subr.mxu0 0.0
  %5903 = vmatpush1.msra.mxu0 0.0
  %5904 = vmatprep.subr.mxu0 0.0
  %5905 = vmatpush1.msra.mxu0 0.0
  %5906 = vmatprep.subr.mxu0 0.0
  %5907 = vmatpush1.msra.mxu0 0.0
  %5908 = vmatprep.subr.mxu0 0.0
  %5909 = vmatpush1.msra.mxu0 0.0
  %5910 = vmatprep.subr.mxu0 0.0
  %5911 = vmatpush1.msra.mxu0 0.0
  %5912 = vmatprep.subr.mxu0 0.0
  %5913 = vmatpush1.msra.mxu0 0.0
  %5914 = vmatprep.subr.mxu0 0.0
  %5915 = vmatpush1.msra.mxu0 0.0
  %5916 = vmatprep.mubr.f32.mxu0 0.0
  %5917 = vmatmul.mubr.f32.gmra.mrb[0].mxu0 %v5780
  %v5918 = vpop.f32.mrb[0].mxu0
  %v5919 = vadd.f32 %v230, %v5918
  %v5920 = vpop.f32.mrb[0].mxu0
  %5921 = vdwg.mxu0
  %v5922 = vxor.u32 %v5919, 2147483648
  %v5923 = vmul.f32 %v5922, 1.442695
  %v5924 = vpow.pop %v5923
  %v5925 = vadd.f32 %v5924, 1.0
  %v5926 = vrcp.pop %v5925
  %v5927 = vmul.f32 1.0, %v5926
  %5928 = vmatprep.subr.mxu0 0.0
  %5929 = vmatpush1.msra.mxu0 %v187
  %5930 = vmatprep.subr.mxu0 0.0
  %5931 = vmatpush1.msra.mxu0 %v188
  %5932 = vmatprep.subr.mxu0 0.0
  %5933 = vmatpush1.msra.mxu0 %v189
  %5934 = vmatprep.subr.mxu0 0.0
  %5935 = vmatpush1.msra.mxu0 %v190
  %5936 = vmatprep.subr.mxu0 0.0
  %5937 = vmatpush1.msra.mxu0 %v191
  %5938 = vmatprep.subr.mxu0 0.0
  %5939 = vmatpush1.msra.mxu0 %v192
  %5940 = vmatprep.subr.mxu0 0.0
  %5941 = vmatpush1.msra.mxu0 %v193
  %5942 = vmatprep.subr.mxu0 0.0
  %5943 = vmatpush1.msra.mxu0 %v194
  %5944 = vmatprep.subr.mxu0 0.0
  %5945 = vmatpush1.msra.mxu0 0.0
  %5946 = vmatprep.subr.mxu0 0.0
  %5947 = vmatpush1.msra.mxu0 0.0
  %5948 = vmatprep.subr.mxu0 0.0
  %5949 = vmatpush1.msra.mxu0 0.0
  %5950 = vmatprep.subr.mxu0 0.0
  %5951 = vmatpush1.msra.mxu0 0.0
  %5952 = vmatprep.subr.mxu0 0.0
  %5953 = vmatpush1.msra.mxu0 0.0
  %5954 = vmatprep.subr.mxu0 0.0
  %5955 = vmatpush1.msra.mxu0 0.0
  %5956 = vmatprep.subr.mxu0 0.0
  %5957 = vmatpush1.msra.mxu0 0.0
  %5958 = vmatprep.subr.mxu0 0.0
  %5959 = vmatpush1.msra.mxu0 0.0
  %5960 = vmatprep.subr.mxu0 0.0
  %5961 = vmatpush1.msra.mxu0 0.0
  %5962 = vmatprep.subr.mxu0 0.0
  %5963 = vmatpush1.msra.mxu0 0.0
  %5964 = vmatprep.subr.mxu0 0.0
  %5965 = vmatpush1.msra.mxu0 0.0
  %5966 = vmatprep.subr.mxu0 0.0
  %5967 = vmatpush1.msra.mxu0 0.0
  %5968 = vmatprep.subr.mxu0 0.0
  %5969 = vmatpush1.msra.mxu0 0.0
  %5970 = vmatprep.subr.mxu0 0.0
  %5971 = vmatpush1.msra.mxu0 0.0
  %5972 = vmatprep.subr.mxu0 0.0
  %5973 = vmatpush1.msra.mxu0 0.0
  %5974 = vmatprep.subr.mxu0 0.0
  %5975 = vmatpush1.msra.mxu0 0.0
  %5976 = vmatprep.subr.mxu0 0.0
  %5977 = vmatpush1.msra.mxu0 0.0
  %5978 = vmatprep.subr.mxu0 0.0
  %5979 = vmatpush1.msra.mxu0 0.0
  %5980 = vmatprep.subr.mxu0 0.0
  %5981 = vmatpush1.msra.mxu0 0.0
  %5982 = vmatprep.subr.mxu0 0.0
  %5983 = vmatpush1.msra.mxu0 0.0
  %5984 = vmatprep.subr.mxu0 0.0
  %5985 = vmatpush1.msra.mxu0 0.0
  %5986 = vmatprep.subr.mxu0 0.0
  %5987 = vmatpush1.msra.mxu0 0.0
  %5988 = vmatprep.subr.mxu0 0.0
  %5989 = vmatpush1.msra.mxu0 0.0
  %5990 = vmatprep.subr.mxu0 0.0
  %5991 = vmatpush1.msra.mxu0 0.0
  %5992 = vmatprep.mubr.f32.mxu0 0.0
  %5993 = vmatmul.mubr.f32.gmra.mrb[0].mxu0 %v5780
  %v5994 = vpop.f32.mrb[0].mxu0
  %v5995 = vadd.f32 %v237, %v5994
  %v5996 = vpop.f32.mrb[0].mxu0
  %5997 = vdwg.mxu0
  %v5998 = vxor.u32 %v5995, 2147483648
  %v5999 = vmul.f32 %v5998, 1.442695
  %v6000 = vpow.pop %v5999
  %v6001 = vadd.f32 %v6000, 1.0
  %v6002 = vrcp.pop %v6001
  %v6003 = vmul.f32 1.0, %v6002
  %6004 = vmatprep.subr.mxu0 0.0
  %6005 = vmatpush1.msra.mxu0 %v195
  %6006 = vmatprep.subr.mxu0 0.0
  %6007 = vmatpush1.msra.mxu0 %v196
  %6008 = vmatprep.subr.mxu0 0.0
  %6009 = vmatpush1.msra.mxu0 %v197
  %6010 = vmatprep.subr.mxu0 0.0
  %6011 = vmatpush1.msra.mxu0 %v198
  %6012 = vmatprep.subr.mxu0 0.0
  %6013 = vmatpush1.msra.mxu0 %v199
  %6014 = vmatprep.subr.mxu0 0.0
  %6015 = vmatpush1.msra.mxu0 %v200
  %6016 = vmatprep.subr.mxu0 0.0
  %6017 = vmatpush1.msra.mxu0 %v201
  %6018 = vmatprep.subr.mxu0 0.0
  %6019 = vmatpush1.msra.mxu0 %v202
  %6020 = vmatprep.subr.mxu0 0.0
  %6021 = vmatpush1.msra.mxu0 0.0
  %6022 = vmatprep.subr.mxu0 0.0
  %6023 = vmatpush1.msra.mxu0 0.0
  %6024 = vmatprep.subr.mxu0 0.0
  %6025 = vmatpush1.msra.mxu0 0.0
  %6026 = vmatprep.subr.mxu0 0.0
  %6027 = vmatpush1.msra.mxu0 0.0
  %6028 = vmatprep.subr.mxu0 0.0
  %6029 = vmatpush1.msra.mxu0 0.0
  %6030 = vmatprep.subr.mxu0 0.0
  %6031 = vmatpush1.msra.mxu0 0.0
  %6032 = vmatprep.subr.mxu0 0.0
  %6033 = vmatpush1.msra.mxu0 0.0
  %6034 = vmatprep.subr.mxu0 0.0
  %6035 = vmatpush1.msra.mxu0 0.0
  %6036 = vmatprep.subr.mxu0 0.0
  %6037 = vmatpush1.msra.mxu0 0.0
  %6038 = vmatprep.subr.mxu0 0.0
  %6039 = vmatpush1.msra.mxu0 0.0
  %6040 = vmatprep.subr.mxu0 0.0
  %6041 = vmatpush1.msra.mxu0 0.0
  %6042 = vmatprep.subr.mxu0 0.0
  %6043 = vmatpush1.msra.mxu0 0.0
  %6044 = vmatprep.subr.mxu0 0.0
  %6045 = vmatpush1.msra.mxu0 0.0
  %6046 = vmatprep.subr.mxu0 0.0
  %6047 = vmatpush1.msra.mxu0 0.0
  %6048 = vmatprep.subr.mxu0 0.0
  %6049 = vmatpush1.msra.mxu0 0.0
  %6050 = vmatprep.subr.mxu0 0.0
  %6051 = vmatpush1.msra.mxu0 0.0
  %6052 = vmatprep.subr.mxu0 0.0
  %6053 = vmatpush1.msra.mxu0 0.0
  %6054 = vmatprep.subr.mxu0 0.0
  %6055 = vmatpush1.msra.mxu0 0.0
  %6056 = vmatprep.subr.mxu0 0.0
  %6057 = vmatpush1.msra.mxu0 0.0
  %6058 = vmatprep.subr.mxu0 0.0
  %6059 = vmatpush1.msra.mxu0 0.0
  %6060 = vmatprep.subr.mxu0 0.0
  %6061 = vmatpush1.msra.mxu0 0.0
  %6062 = vmatprep.subr.mxu0 0.0
  %6063 = vmatpush1.msra.mxu0 0.0
  %6064 = vmatprep.subr.mxu0 0.0
  %6065 = vmatpush1.msra.mxu0 0.0
  %6066 = vmatprep.subr.mxu0 0.0
  %6067 = vmatpush1.msra.mxu0 0.0
  %6068 = vmatprep.mubr.f32.mxu0 0.0
  %6069 = vmatmul.mubr.f32.gmra.mrb[0].mxu0 %v5780
  %v6070 = vpop.f32.mrb[0].mxu0
  %v6071 = vadd.f32 %v244, %v6070
  %v6072 = vpop.f32.mrb[0].mxu0
  %6073 = vdwg.mxu0
  %6074 = vmatprep.subr.mxu0 0.0
  %6075 = vmatpush1.msra.mxu0 %v171
  %6076 = vmatprep.subr.mxu0 0.0
  %6077 = vmatpush1.msra.mxu0 %v172
  %6078 = vmatprep.subr.mxu0 0.0
  %6079 = vmatpush1.msra.mxu0 %v173
  %6080 = vmatprep.subr.mxu0 0.0
  %6081 = vmatpush1.msra.mxu0 %v174
  %6082 = vmatprep.subr.mxu0 0.0
  %6083 = vmatpush1.msra.mxu0 %v175
  %6084 = vmatprep.subr.mxu0 0.0
  %6085 = vmatpush1.msra.mxu0 %v176
  %6086 = vmatprep.subr.mxu0 0.0
  %6087 = vmatpush1.msra.mxu0 %v177
  %6088 = vmatprep.subr.mxu0 0.0
  %6089 = vmatpush1.msra.mxu0 %v178
  %6090 = vmatprep.subr.mxu0 0.0
  %6091 = vmatpush1.msra.mxu0 0.0
  %6092 = vmatprep.subr.mxu0 0.0
  %6093 = vmatpush1.msra.mxu0 0.0
  %6094 = vmatprep.subr.mxu0 0.0
  %6095 = vmatpush1.msra.mxu0 0.0
  %6096 = vmatprep.subr.mxu0 0.0
  %6097 = vmatpush1.msra.mxu0 0.0
  %6098 = vmatprep.subr.mxu0 0.0
  %6099 = vmatpush1.msra.mxu0 0.0
  %6100 = vmatprep.subr.mxu0 0.0
  %6101 = vmatpush1.msra.mxu0 0.0
  %6102 = vmatprep.subr.mxu0 0.0
  %6103 = vmatpush1.msra.mxu0 0.0
  %6104 = vmatprep.subr.mxu0 0.0
  %6105 = vmatpush1.msra.mxu0 0.0
  %6106 = vmatprep.subr.mxu0 0.0
  %6107 = vmatpush1.msra.mxu0 0.0
  %6108 = vmatprep.subr.mxu0 0.0
  %6109 = vmatpush1.msra.mxu0 0.0
  %6110 = vmatprep.subr.mxu0 0.0
  %6111 = vmatpush1.msra.mxu0 0.0
  %6112 = vmatprep.subr.mxu0 0.0
  %6113 = vmatpush1.msra.mxu0 0.0
  %6114 = vmatprep.subr.mxu0 0.0
  %6115 = vmatpush1.msra.mxu0 0.0
  %6116 = vmatprep.subr.mxu0 0.0
  %6117 = vmatpush1.msra.mxu0 0.0
  %6118 = vmatprep.subr.mxu0 0.0
  %6119 = vmatpush1.msra.mxu0 0.0
  %6120 = vmatprep.subr.mxu0 0.0
  %6121 = vmatpush1.msra.mxu0 0.0
  %6122 = vmatprep.subr.mxu0 0.0
  %6123 = vmatpush1.msra.mxu0 0.0
  %6124 = vmatprep.subr.mxu0 0.0
  %6125 = vmatpush1.msra.mxu0 0.0
  %6126 = vmatprep.subr.mxu0 0.0
  %6127 = vmatpush1.msra.mxu0 0.0
  %6128 = vmatprep.subr.mxu0 0.0
  %6129 = vmatpush1.msra.mxu0 0.0
  %6130 = vmatprep.subr.mxu0 0.0
  %6131 = vmatpush1.msra.mxu0 0.0
  %6132 = vmatprep.subr.mxu0 0.0
  %6133 = vmatpush1.msra.mxu0 0.0
  %6134 = vmatprep.subr.mxu0 0.0
  %6135 = vmatpush1.msra.mxu0 0.0
  %6136 = vmatprep.subr.mxu0 0.0
  %6137 = vmatpush1.msra.mxu0 0.0
  %6138 = vmatprep.mubr.f32.mxu0 0.0
  %6139 = vmatmul.mubr.f32.gmra.mrb[0].mxu0 %v5780
  %v6140 = vpop.f32.mrb[0].mxu0
  %v6141 = vadd.f32 %v223, %v6140
  %v6142 = vpop.f32.mrb[0].mxu0
  %6143 = vdwg.mxu0
  %v6144 = vmul.f32 %v5927, %v6141
  %v6145 = vadd.f32 %v6071, %v6144
  %v6146 = vtanh.pop %v6145
  %v6147 = vsub.f32 1.0, %v6003
  %v6148 = vmul.f32 %v6147, %v6146
  %v6149 = vmul.f32 %v6003, %v5778
  %v6150 = vadd.f32 %v6148, %v6149
  %v6152 = vsel %vm545, %v6150, 0
  %6154 = vmatprep.subr.mxu0 0.0
  %6155 = vmatpush1.msra.mxu0 %v203
  %6156 = vmatprep.subr.mxu0 0.0
  %6157 = vmatpush1.msra.mxu0 %v204
  %6158 = vmatprep.subr.mxu0 0.0
  %6159 = vmatpush1.msra.mxu0 %v205
  %6160 = vmatprep.subr.mxu0 0.0
  %6161 = vmatpush1.msra.mxu0 %v206
  %6162 = vmatprep.subr.mxu0 0.0
  %6163 = vmatpush1.msra.mxu0 %v207
  %6164 = vmatprep.subr.mxu0 0.0
  %6165 = vmatpush1.msra.mxu0 %v208
  %6166 = vmatprep.subr.mxu0 0.0
  %6167 = vmatpush1.msra.mxu0 %v209
  %6168 = vmatprep.subr.mxu0 0.0
  %6169 = vmatpush1.msra.mxu0 %v210
  %6170 = vmatprep.subr.mxu0 0.0
  %6171 = vmatpush1.msra.mxu0 0.0
  %6172 = vmatprep.subr.mxu0 0.0
  %6173 = vmatpush1.msra.mxu0 0.0
  %6174 = vmatprep.subr.mxu0 0.0
  %6175 = vmatpush1.msra.mxu0 0.0
  %6176 = vmatprep.subr.mxu0 0.0
  %6177 = vmatpush1.msra.mxu0 0.0
  %6178 = vmatprep.subr.mxu0 0.0
  %6179 = vmatpush1.msra.mxu0 0.0
  %6180 = vmatprep.subr.mxu0 0.0
  %6181 = vmatpush1.msra.mxu0 0.0
  %6182 = vmatprep.subr.mxu0 0.0
  %6183 = vmatpush1.msra.mxu0 0.0
  %6184 = vmatprep.subr.mxu0 0.0
  %6185 = vmatpush1.msra.mxu0 0.0
  %6186 = vmatprep.subr.mxu0 0.0
  %6187 = vmatpush1.msra.mxu0 0.0
  %6188 = vmatprep.subr.mxu0 0.0
  %6189 = vmatpush1.msra.mxu0 0.0
  %6190 = vmatprep.subr.mxu0 0.0
  %6191 = vmatpush1.msra.mxu0 0.0
  %6192 = vmatprep.subr.mxu0 0.0
  %6193 = vmatpush1.msra.mxu0 0.0
  %6194 = vmatprep.subr.mxu0 0.0
  %6195 = vmatpush1.msra.mxu0 0.0
  %6196 = vmatprep.subr.mxu0 0.0
  %6197 = vmatpush1.msra.mxu0 0.0
  %6198 = vmatprep.subr.mxu0 0.0
  %6199 = vmatpush1.msra.mxu0 0.0
  %6200 = vmatprep.subr.mxu0 0.0
  %6201 = vmatpush1.msra.mxu0 0.0
  %6202 = vmatprep.subr.mxu0 0.0
  %6203 = vmatpush1.msra.mxu0 0.0
  %6204 = vmatprep.subr.mxu0 0.0
  %6205 = vmatpush1.msra.mxu0 0.0
  %6206 = vmatprep.subr.mxu0 0.0
  %6207 = vmatpush1.msra.mxu0 0.0
  %6208 = vmatprep.subr.mxu0 0.0
  %6209 = vmatpush1.msra.mxu0 0.0
  %6210 = vmatprep.subr.mxu0 0.0
  %6211 = vmatpush1.msra.mxu0 0.0
  %6212 = vmatprep.subr.mxu0 0.0
  %6213 = vmatpush1.msra.mxu0 0.0
  %6214 = vmatprep.subr.mxu0 0.0
  %6215 = vmatpush1.msra.mxu0 0.0
  %6216 = vmatprep.subr.mxu0 0.0
  %6217 = vmatpush1.msra.mxu0 0.0
  %6218 = vmatprep.mubr.f32.mxu0 0.0
  %6219 = vmatmul.mubr.f32.gmra.mrb[0].mxu0 %v6152
  %v6220 = vpop.f32.mrb[0].mxu0
  %v6221 = vadd.f32 %v251, %v6220
  %v6222 = vpop.f32.mrb[0].mxu0
  %6223 = vdwg.mxu0
  %6224 = vmatprep.subr.mxu0 0.0
  %6225 = vmatpush1.msra.mxu0 %v179
  %6226 = vmatprep.subr.mxu0 0.0
  %6227 = vmatpush1.msra.mxu0 %v180
  %6228 = vmatprep.subr.mxu0 0.0
  %6229 = vmatpush1.msra.mxu0 %v181
  %6230 = vmatprep.subr.mxu0 0.0
  %6231 = vmatpush1.msra.mxu0 %v182
  %6232 = vmatprep.subr.mxu0 0.0
  %6233 = vmatpush1.msra.mxu0 %v183
  %6234 = vmatprep.subr.mxu0 0.0
  %6235 = vmatpush1.msra.mxu0 %v184
  %6236 = vmatprep.subr.mxu0 0.0
  %6237 = vmatpush1.msra.mxu0 %v185
  %6238 = vmatprep.subr.mxu0 0.0
  %6239 = vmatpush1.msra.mxu0 %v186
  %6240 = vmatprep.subr.mxu0 0.0
  %6241 = vmatpush1.msra.mxu0 0.0
  %6242 = vmatprep.subr.mxu0 0.0
  %6243 = vmatpush1.msra.mxu0 0.0
  %6244 = vmatprep.subr.mxu0 0.0
  %6245 = vmatpush1.msra.mxu0 0.0
  %6246 = vmatprep.subr.mxu0 0.0
  %6247 = vmatpush1.msra.mxu0 0.0
  %6248 = vmatprep.subr.mxu0 0.0
  %6249 = vmatpush1.msra.mxu0 0.0
  %6250 = vmatprep.subr.mxu0 0.0
  %6251 = vmatpush1.msra.mxu0 0.0
  %6252 = vmatprep.subr.mxu0 0.0
  %6253 = vmatpush1.msra.mxu0 0.0
  %6254 = vmatprep.subr.mxu0 0.0
  %6255 = vmatpush1.msra.mxu0 0.0
  %6256 = vmatprep.subr.mxu0 0.0
  %6257 = vmatpush1.msra.mxu0 0.0
  %6258 = vmatprep.subr.mxu0 0.0
  %6259 = vmatpush1.msra.mxu0 0.0
  %6260 = vmatprep.subr.mxu0 0.0
  %6261 = vmatpush1.msra.mxu0 0.0
  %6262 = vmatprep.subr.mxu0 0.0
  %6263 = vmatpush1.msra.mxu0 0.0
  %6264 = vmatprep.subr.mxu0 0.0
  %6265 = vmatpush1.msra.mxu0 0.0
  %6266 = vmatprep.subr.mxu0 0.0
  %6267 = vmatpush1.msra.mxu0 0.0
  %6268 = vmatprep.subr.mxu0 0.0
  %6269 = vmatpush1.msra.mxu0 0.0
  %6270 = vmatprep.subr.mxu0 0.0
  %6271 = vmatpush1.msra.mxu0 0.0
  %6272 = vmatprep.subr.mxu0 0.0
  %6273 = vmatpush1.msra.mxu0 0.0
  %6274 = vmatprep.subr.mxu0 0.0
  %6275 = vmatpush1.msra.mxu0 0.0
  %6276 = vmatprep.subr.mxu0 0.0
  %6277 = vmatpush1.msra.mxu0 0.0
  %6278 = vmatprep.subr.mxu0 0.0
  %6279 = vmatpush1.msra.mxu0 0.0
  %6280 = vmatprep.subr.mxu0 0.0
  %6281 = vmatpush1.msra.mxu0 0.0
  %6282 = vmatprep.subr.mxu0 0.0
  %6283 = vmatpush1.msra.mxu0 0.0
  %6284 = vmatprep.subr.mxu0 0.0
  %6285 = vmatpush1.msra.mxu0 0.0
  %6286 = vmatprep.subr.mxu0 0.0
  %6287 = vmatpush1.msra.mxu0 0.0
  %6288 = vmatprep.mubr.f32.mxu0 0.0
  %6289 = vmatmul.mubr.f32.gmra.mrb[0].mxu0 %v6152
  %v6290 = vpop.f32.mrb[0].mxu0
  %v6291 = vadd.f32 %v230, %v6290
  %v6292 = vpop.f32.mrb[0].mxu0
  %6293 = vdwg.mxu0
  %v6294 = vxor.u32 %v6291, 2147483648
  %v6295 = vmul.f32 %v6294, 1.442695
  %v6296 = vpow.pop %v6295
  %v6297 = vadd.f32 %v6296, 1.0
  %v6298 = vrcp.pop %v6297
  %v6299 = vmul.f32 1.0, %v6298
  %6300 = vmatprep.subr.mxu0 0.0
  %6301 = vmatpush1.msra.mxu0 %v187
  %6302 = vmatprep.subr.mxu0 0.0
  %6303 = vmatpush1.msra.mxu0 %v188
  %6304 = vmatprep.subr.mxu0 0.0
  %6305 = vmatpush1.msra.mxu0 %v189
  %6306 = vmatprep.subr.mxu0 0.0
  %6307 = vmatpush1.msra.mxu0 %v190
  %6308 = vmatprep.subr.mxu0 0.0
  %6309 = vmatpush1.msra.mxu0 %v191
  %6310 = vmatprep.subr.mxu0 0.0
  %6311 = vmatpush1.msra.mxu0 %v192
  %6312 = vmatprep.subr.mxu0 0.0
  %6313 = vmatpush1.msra.mxu0 %v193
  %6314 = vmatprep.subr.mxu0 0.0
  %6315 = vmatpush1.msra.mxu0 %v194
  %6316 = vmatprep.subr.mxu0 0.0
  %6317 = vmatpush1.msra.mxu0 0.0
  %6318 = vmatprep.subr.mxu0 0.0
  %6319 = vmatpush1.msra.mxu0 0.0
  %6320 = vmatprep.subr.mxu0 0.0
  %6321 = vmatpush1.msra.mxu0 0.0
  %6322 = vmatprep.subr.mxu0 0.0
  %6323 = vmatpush1.msra.mxu0 0.0
  %6324 = vmatprep.subr.mxu0 0.0
  %6325 = vmatpush1.msra.mxu0 0.0
  %6326 = vmatprep.subr.mxu0 0.0
  %6327 = vmatpush1.msra.mxu0 0.0
  %6328 = vmatprep.subr.mxu0 0.0
  %6329 = vmatpush1.msra.mxu0 0.0
  %6330 = vmatprep.subr.mxu0 0.0
  %6331 = vmatpush1.msra.mxu0 0.0
  %6332 = vmatprep.subr.mxu0 0.0
  %6333 = vmatpush1.msra.mxu0 0.0
  %6334 = vmatprep.subr.mxu0 0.0
  %6335 = vmatpush1.msra.mxu0 0.0
  %6336 = vmatprep.subr.mxu0 0.0
  %6337 = vmatpush1.msra.mxu0 0.0
  %6338 = vmatprep.subr.mxu0 0.0
  %6339 = vmatpush1.msra.mxu0 0.0
  %6340 = vmatprep.subr.mxu0 0.0
  %6341 = vmatpush1.msra.mxu0 0.0
  %6342 = vmatprep.subr.mxu0 0.0
  %6343 = vmatpush1.msra.mxu0 0.0
  %6344 = vmatprep.subr.mxu0 0.0
  %6345 = vmatpush1.msra.mxu0 0.0
  %6346 = vmatprep.subr.mxu0 0.0
  %6347 = vmatpush1.msra.mxu0 0.0
  %6348 = vmatprep.subr.mxu0 0.0
  %6349 = vmatpush1.msra.mxu0 0.0
  %6350 = vmatprep.subr.mxu0 0.0
  %6351 = vmatpush1.msra.mxu0 0.0
  %6352 = vmatprep.subr.mxu0 0.0
  %6353 = vmatpush1.msra.mxu0 0.0
  %6354 = vmatprep.subr.mxu0 0.0
  %6355 = vmatpush1.msra.mxu0 0.0
  %6356 = vmatprep.subr.mxu0 0.0
  %6357 = vmatpush1.msra.mxu0 0.0
  %6358 = vmatprep.subr.mxu0 0.0
  %6359 = vmatpush1.msra.mxu0 0.0
  %6360 = vmatprep.subr.mxu0 0.0
  %6361 = vmatpush1.msra.mxu0 0.0
  %6362 = vmatprep.subr.mxu0 0.0
  %6363 = vmatpush1.msra.mxu0 0.0
  %6364 = vmatprep.mubr.f32.mxu0 0.0
  %6365 = vmatmul.mubr.f32.gmra.mrb[0].mxu0 %v6152
  %v6366 = vpop.f32.mrb[0].mxu0
  %v6367 = vadd.f32 %v237, %v6366
  %v6368 = vpop.f32.mrb[0].mxu0
  %6369 = vdwg.mxu0
  %v6370 = vxor.u32 %v6367, 2147483648
  %v6371 = vmul.f32 %v6370, 1.442695
  %v6372 = vpow.pop %v6371
  %v6373 = vadd.f32 %v6372, 1.0
  %v6374 = vrcp.pop %v6373
  %v6375 = vmul.f32 1.0, %v6374
  %6376 = vmatprep.subr.mxu0 0.0
  %6377 = vmatpush1.msra.mxu0 %v195
  %6378 = vmatprep.subr.mxu0 0.0
  %6379 = vmatpush1.msra.mxu0 %v196
  %6380 = vmatprep.subr.mxu0 0.0
  %6381 = vmatpush1.msra.mxu0 %v197
  %6382 = vmatprep.subr.mxu0 0.0
  %6383 = vmatpush1.msra.mxu0 %v198
  %6384 = vmatprep.subr.mxu0 0.0
  %6385 = vmatpush1.msra.mxu0 %v199
  %6386 = vmatprep.subr.mxu0 0.0
  %6387 = vmatpush1.msra.mxu0 %v200
  %6388 = vmatprep.subr.mxu0 0.0
  %6389 = vmatpush1.msra.mxu0 %v201
  %6390 = vmatprep.subr.mxu0 0.0
  %6391 = vmatpush1.msra.mxu0 %v202
  %6392 = vmatprep.subr.mxu0 0.0
  %6393 = vmatpush1.msra.mxu0 0.0
  %6394 = vmatprep.subr.mxu0 0.0
  %6395 = vmatpush1.msra.mxu0 0.0
  %6396 = vmatprep.subr.mxu0 0.0
  %6397 = vmatpush1.msra.mxu0 0.0
  %6398 = vmatprep.subr.mxu0 0.0
  %6399 = vmatpush1.msra.mxu0 0.0
  %6400 = vmatprep.subr.mxu0 0.0
  %6401 = vmatpush1.msra.mxu0 0.0
  %6402 = vmatprep.subr.mxu0 0.0
  %6403 = vmatpush1.msra.mxu0 0.0
  %6404 = vmatprep.subr.mxu0 0.0
  %6405 = vmatpush1.msra.mxu0 0.0
  %6406 = vmatprep.subr.mxu0 0.0
  %6407 = vmatpush1.msra.mxu0 0.0
  %6408 = vmatprep.subr.mxu0 0.0
  %6409 = vmatpush1.msra.mxu0 0.0
  %6410 = vmatprep.subr.mxu0 0.0
  %6411 = vmatpush1.msra.mxu0 0.0
  %6412 = vmatprep.subr.mxu0 0.0
  %6413 = vmatpush1.msra.mxu0 0.0
  %6414 = vmatprep.subr.mxu0 0.0
  %6415 = vmatpush1.msra.mxu0 0.0
  %6416 = vmatprep.subr.mxu0 0.0
  %6417 = vmatpush1.msra.mxu0 0.0
  %6418 = vmatprep.subr.mxu0 0.0
  %6419 = vmatpush1.msra.mxu0 0.0
  %6420 = vmatprep.subr.mxu0 0.0
  %6421 = vmatpush1.msra.mxu0 0.0
  %6422 = vmatprep.subr.mxu0 0.0
  %6423 = vmatpush1.msra.mxu0 0.0
  %6424 = vmatprep.subr.mxu0 0.0
  %6425 = vmatpush1.msra.mxu0 0.0
  %6426 = vmatprep.subr.mxu0 0.0
  %6427 = vmatpush1.msra.mxu0 0.0
  %6428 = vmatprep.subr.mxu0 0.0
  %6429 = vmatpush1.msra.mxu0 0.0
  %6430 = vmatprep.subr.mxu0 0.0
  %6431 = vmatpush1.msra.mxu0 0.0
  %6432 = vmatprep.subr.mxu0 0.0
  %6433 = vmatpush1.msra.mxu0 0.0
  %6434 = vmatprep.subr.mxu0 0.0
  %6435 = vmatpush1.msra.mxu0 0.0
  %6436 = vmatprep.subr.mxu0 0.0
  %6437 = vmatpush1.msra.mxu0 0.0
  %6438 = vmatprep.subr.mxu0 0.0
  %6439 = vmatpush1.msra.mxu0 0.0
  %6440 = vmatprep.mubr.f32.mxu0 0.0
  %6441 = vmatmul.mubr.f32.gmra.mrb[0].mxu0 %v6152
  %v6442 = vpop.f32.mrb[0].mxu0
  %v6443 = vadd.f32 %v244, %v6442
  %v6444 = vpop.f32.mrb[0].mxu0
  %6445 = vdwg.mxu0
  %6446 = vmatprep.subr.mxu0 0.0
  %6447 = vmatpush1.msra.mxu0 %v171
  %6448 = vmatprep.subr.mxu0 0.0
  %6449 = vmatpush1.msra.mxu0 %v172
  %6450 = vmatprep.subr.mxu0 0.0
  %6451 = vmatpush1.msra.mxu0 %v173
  %6452 = vmatprep.subr.mxu0 0.0
  %6453 = vmatpush1.msra.mxu0 %v174
  %6454 = vmatprep.subr.mxu0 0.0
  %6455 = vmatpush1.msra.mxu0 %v175
  %6456 = vmatprep.subr.mxu0 0.0
  %6457 = vmatpush1.msra.mxu0 %v176
  %6458 = vmatprep.subr.mxu0 0.0
  %6459 = vmatpush1.msra.mxu0 %v177
  %6460 = vmatprep.subr.mxu0 0.0
  %6461 = vmatpush1.msra.mxu0 %v178
  %6462 = vmatprep.subr.mxu0 0.0
  %6463 = vmatpush1.msra.mxu0 0.0
  %6464 = vmatprep.subr.mxu0 0.0
  %6465 = vmatpush1.msra.mxu0 0.0
  %6466 = vmatprep.subr.mxu0 0.0
  %6467 = vmatpush1.msra.mxu0 0.0
  %6468 = vmatprep.subr.mxu0 0.0
  %6469 = vmatpush1.msra.mxu0 0.0
  %6470 = vmatprep.subr.mxu0 0.0
  %6471 = vmatpush1.msra.mxu0 0.0
  %6472 = vmatprep.subr.mxu0 0.0
  %6473 = vmatpush1.msra.mxu0 0.0
  %6474 = vmatprep.subr.mxu0 0.0
  %6475 = vmatpush1.msra.mxu0 0.0
  %6476 = vmatprep.subr.mxu0 0.0
  %6477 = vmatpush1.msra.mxu0 0.0
  %6478 = vmatprep.subr.mxu0 0.0
  %6479 = vmatpush1.msra.mxu0 0.0
  %6480 = vmatprep.subr.mxu0 0.0
  %6481 = vmatpush1.msra.mxu0 0.0
  %6482 = vmatprep.subr.mxu0 0.0
  %6483 = vmatpush1.msra.mxu0 0.0
  %6484 = vmatprep.subr.mxu0 0.0
  %6485 = vmatpush1.msra.mxu0 0.0
  %6486 = vmatprep.subr.mxu0 0.0
  %6487 = vmatpush1.msra.mxu0 0.0
  %6488 = vmatprep.subr.mxu0 0.0
  %6489 = vmatpush1.msra.mxu0 0.0
  %6490 = vmatprep.subr.mxu0 0.0
  %6491 = vmatpush1.msra.mxu0 0.0
  %6492 = vmatprep.subr.mxu0 0.0
  %6493 = vmatpush1.msra.mxu0 0.0
  %6494 = vmatprep.subr.mxu0 0.0
  %6495 = vmatpush1.msra.mxu0 0.0
  %6496 = vmatprep.subr.mxu0 0.0
  %6497 = vmatpush1.msra.mxu0 0.0
  %6498 = vmatprep.subr.mxu0 0.0
  %6499 = vmatpush1.msra.mxu0 0.0
  %6500 = vmatprep.subr.mxu0 0.0
  %6501 = vmatpush1.msra.mxu0 0.0
  %6502 = vmatprep.subr.mxu0 0.0
  %6503 = vmatpush1.msra.mxu0 0.0
  %6504 = vmatprep.subr.mxu0 0.0
  %6505 = vmatpush1.msra.mxu0 0.0
  %6506 = vmatprep.subr.mxu0 0.0
  %6507 = vmatpush1.msra.mxu0 0.0
  %6508 = vmatprep.subr.mxu0 0.0
  %6509 = vmatpush1.msra.mxu0 0.0
  %6510 = vmatprep.mubr.f32.mxu0 0.0
  %6511 = vmatmul.mubr.f32.gmra.mrb[0].mxu0 %v6152
  %v6512 = vpop.f32.mrb[0].mxu0
  %v6513 = vadd.f32 %v223, %v6512
  %v6514 = vpop.f32.mrb[0].mxu0
  %6515 = vdwg.mxu0
  %v6516 = vmul.f32 %v6299, %v6513
  %v6517 = vadd.f32 %v6443, %v6516
  %v6518 = vtanh.pop %v6517
  %v6519 = vsub.f32 1.0, %v6375
  %v6520 = vmul.f32 %v6519, %v6518
  %v6521 = vmul.f32 %v6375, %v6150
  %v6522 = vadd.f32 %v6520, %v6521
  %v6524 = vsel %vm545, %v6522, 0
  %6526 = vmatprep.subr.mxu0 0.0
  %6527 = vmatpush1.msra.mxu0 %v203
  %6528 = vmatprep.subr.mxu0 0.0
  %6529 = vmatpush1.msra.mxu0 %v204
  %6530 = vmatprep.subr.mxu0 0.0
  %6531 = vmatpush1.msra.mxu0 %v205
  %6532 = vmatprep.subr.mxu0 0.0
  %6533 = vmatpush1.msra.mxu0 %v206
  %6534 = vmatprep.subr.mxu0 0.0
  %6535 = vmatpush1.msra.mxu0 %v207
  %6536 = vmatprep.subr.mxu0 0.0
  %6537 = vmatpush1.msra.mxu0 %v208
  %6538 = vmatprep.subr.mxu0 0.0
  %6539 = vmatpush1.msra.mxu0 %v209
  %6540 = vmatprep.subr.mxu0 0.0
  %6541 = vmatpush1.msra.mxu0 %v210
  %6542 = vmatprep.subr.mxu0 0.0
  %6543 = vmatpush1.msra.mxu0 0.0
  %6544 = vmatprep.subr.mxu0 0.0
  %6545 = vmatpush1.msra.mxu0 0.0
  %6546 = vmatprep.subr.mxu0 0.0
  %6547 = vmatpush1.msra.mxu0 0.0
  %6548 = vmatprep.subr.mxu0 0.0
  %6549 = vmatpush1.msra.mxu0 0.0
  %6550 = vmatprep.subr.mxu0 0.0
  %6551 = vmatpush1.msra.mxu0 0.0
  %6552 = vmatprep.subr.mxu0 0.0
  %6553 = vmatpush1.msra.mxu0 0.0
  %6554 = vmatprep.subr.mxu0 0.0
  %6555 = vmatpush1.msra.mxu0 0.0
  %6556 = vmatprep.subr.mxu0 0.0
  %6557 = vmatpush1.msra.mxu0 0.0
  %6558 = vmatprep.subr.mxu0 0.0
  %6559 = vmatpush1.msra.mxu0 0.0
  %6560 = vmatprep.subr.mxu0 0.0
  %6561 = vmatpush1.msra.mxu0 0.0
  %6562 = vmatprep.subr.mxu0 0.0
  %6563 = vmatpush1.msra.mxu0 0.0
  %6564 = vmatprep.subr.mxu0 0.0
  %6565 = vmatpush1.msra.mxu0 0.0
  %6566 = vmatprep.subr.mxu0 0.0
  %6567 = vmatpush1.msra.mxu0 0.0
  %6568 = vmatprep.subr.mxu0 0.0
  %6569 = vmatpush1.msra.mxu0 0.0
  %6570 = vmatprep.subr.mxu0 0.0
  %6571 = vmatpush1.msra.mxu0 0.0
  %6572 = vmatprep.subr.mxu0 0.0
  %6573 = vmatpush1.msra.mxu0 0.0
  %6574 = vmatprep.subr.mxu0 0.0
  %6575 = vmatpush1.msra.mxu0 0.0
  %6576 = vmatprep.subr.mxu0 0.0
  %6577 = vmatpush1.msra.mxu0 0.0
  %6578 = vmatprep.subr.mxu0 0.0
  %6579 = vmatpush1.msra.mxu0 0.0
  %6580 = vmatprep.subr.mxu0 0.0
  %6581 = vmatpush1.msra.mxu0 0.0
  %6582 = vmatprep.subr.mxu0 0.0
  %6583 = vmatpush1.msra.mxu0 0.0
  %6584 = vmatprep.subr.mxu0 0.0
  %6585 = vmatpush1.msra.mxu0 0.0
  %6586 = vmatprep.subr.mxu0 0.0
  %6587 = vmatpush1.msra.mxu0 0.0
  %6588 = vmatprep.subr.mxu0 0.0
  %6589 = vmatpush1.msra.mxu0 0.0
  %6590 = vmatprep.mubr.f32.mxu0 0.0
  %6591 = vmatmul.mubr.f32.gmra.mrb[0].mxu0 %v6524
  %v6592 = vpop.f32.mrb[0].mxu0
  %v6593 = vadd.f32 %v251, %v6592
  %v6594 = vpop.f32.mrb[0].mxu0
  %6595 = vdwg.mxu0
  %6596 = vmatprep.subr.mxu0 0.0
  %6597 = vmatpush1.msra.mxu0 %v179
  %6598 = vmatprep.subr.mxu0 0.0
  %6599 = vmatpush1.msra.mxu0 %v180
  %6600 = vmatprep.subr.mxu0 0.0
  %6601 = vmatpush1.msra.mxu0 %v181
  %6602 = vmatprep.subr.mxu0 0.0
  %6603 = vmatpush1.msra.mxu0 %v182
  %6604 = vmatprep.subr.mxu0 0.0
  %6605 = vmatpush1.msra.mxu0 %v183
  %6606 = vmatprep.subr.mxu0 0.0
  %6607 = vmatpush1.msra.mxu0 %v184
  %6608 = vmatprep.subr.mxu0 0.0
  %6609 = vmatpush1.msra.mxu0 %v185
  %6610 = vmatprep.subr.mxu0 0.0
  %6611 = vmatpush1.msra.mxu0 %v186
  %6612 = vmatprep.subr.mxu0 0.0
  %6613 = vmatpush1.msra.mxu0 0.0
  %6614 = vmatprep.subr.mxu0 0.0
  %6615 = vmatpush1.msra.mxu0 0.0
  %6616 = vmatprep.subr.mxu0 0.0
  %6617 = vmatpush1.msra.mxu0 0.0
  %6618 = vmatprep.subr.mxu0 0.0
  %6619 = vmatpush1.msra.mxu0 0.0
  %6620 = vmatprep.subr.mxu0 0.0
  %6621 = vmatpush1.msra.mxu0 0.0
  %6622 = vmatprep.subr.mxu0 0.0
  %6623 = vmatpush1.msra.mxu0 0.0
  %6624 = vmatprep.subr.mxu0 0.0
  %6625 = vmatpush1.msra.mxu0 0.0
  %6626 = vmatprep.subr.mxu0 0.0
  %6627 = vmatpush1.msra.mxu0 0.0
  %6628 = vmatprep.subr.mxu0 0.0
  %6629 = vmatpush1.msra.mxu0 0.0
  %6630 = vmatprep.subr.mxu0 0.0
  %6631 = vmatpush1.msra.mxu0 0.0
  %6632 = vmatprep.subr.mxu0 0.0
  %6633 = vmatpush1.msra.mxu0 0.0
  %6634 = vmatprep.subr.mxu0 0.0
  %6635 = vmatpush1.msra.mxu0 0.0
  %6636 = vmatprep.subr.mxu0 0.0
  %6637 = vmatpush1.msra.mxu0 0.0
  %6638 = vmatprep.subr.mxu0 0.0
  %6639 = vmatpush1.msra.mxu0 0.0
  %6640 = vmatprep.subr.mxu0 0.0
  %6641 = vmatpush1.msra.mxu0 0.0
  %6642 = vmatprep.subr.mxu0 0.0
  %6643 = vmatpush1.msra.mxu0 0.0
  %6644 = vmatprep.subr.mxu0 0.0
  %6645 = vmatpush1.msra.mxu0 0.0
  %6646 = vmatprep.subr.mxu0 0.0
  %6647 = vmatpush1.msra.mxu0 0.0
  %6648 = vmatprep.subr.mxu0 0.0
  %6649 = vmatpush1.msra.mxu0 0.0
  %6650 = vmatprep.subr.mxu0 0.0
  %6651 = vmatpush1.msra.mxu0 0.0
  %6652 = vmatprep.subr.mxu0 0.0
  %6653 = vmatpush1.msra.mxu0 0.0
  %6654 = vmatprep.subr.mxu0 0.0
  %6655 = vmatpush1.msra.mxu0 0.0
  %6656 = vmatprep.subr.mxu0 0.0
  %6657 = vmatpush1.msra.mxu0 0.0
  %6658 = vmatprep.subr.mxu0 0.0
  %6659 = vmatpush1.msra.mxu0 0.0
  %6660 = vmatprep.mubr.f32.mxu0 0.0
  %6661 = vmatmul.mubr.f32.gmra.mrb[0].mxu0 %v6524
  %v6662 = vpop.f32.mrb[0].mxu0
  %v6663 = vadd.f32 %v230, %v6662
  %v6664 = vpop.f32.mrb[0].mxu0
  %6665 = vdwg.mxu0
  %v6666 = vxor.u32 %v6663, 2147483648
  %v6667 = vmul.f32 %v6666, 1.442695
  %v6668 = vpow.pop %v6667
  %v6669 = vadd.f32 %v6668, 1.0
  %v6670 = vrcp.pop %v6669
  %v6671 = vmul.f32 1.0, %v6670
  %6672 = vmatprep.subr.mxu0 0.0
  %6673 = vmatpush1.msra.mxu0 %v187
  %6674 = vmatprep.subr.mxu0 0.0
  %6675 = vmatpush1.msra.mxu0 %v188
  %6676 = vmatprep.subr.mxu0 0.0
  %6677 = vmatpush1.msra.mxu0 %v189
  %6678 = vmatprep.subr.mxu0 0.0
  %6679 = vmatpush1.msra.mxu0 %v190
  %6680 = vmatprep.subr.mxu0 0.0
  %6681 = vmatpush1.msra.mxu0 %v191
  %6682 = vmatprep.subr.mxu0 0.0
  %6683 = vmatpush1.msra.mxu0 %v192
  %6684 = vmatprep.subr.mxu0 0.0
  %6685 = vmatpush1.msra.mxu0 %v193
  %6686 = vmatprep.subr.mxu0 0.0
  %6687 = vmatpush1.msra.mxu0 %v194
  %6688 = vmatprep.subr.mxu0 0.0
  %6689 = vmatpush1.msra.mxu0 0.0
  %6690 = vmatprep.subr.mxu0 0.0
  %6691 = vmatpush1.msra.mxu0 0.0
  %6692 = vmatprep.subr.mxu0 0.0
  %6693 = vmatpush1.msra.mxu0 0.0
  %6694 = vmatprep.subr.mxu0 0.0
  %6695 = vmatpush1.msra.mxu0 0.0
  %6696 = vmatprep.subr.mxu0 0.0
  %6697 = vmatpush1.msra.mxu0 0.0
  %6698 = vmatprep.subr.mxu0 0.0
  %6699 = vmatpush1.msra.mxu0 0.0
  %6700 = vmatprep.subr.mxu0 0.0
  %6701 = vmatpush1.msra.mxu0 0.0
  %6702 = vmatprep.subr.mxu0 0.0
  %6703 = vmatpush1.msra.mxu0 0.0
  %6704 = vmatprep.subr.mxu0 0.0
  %6705 = vmatpush1.msra.mxu0 0.0
  %6706 = vmatprep.subr.mxu0 0.0
  %6707 = vmatpush1.msra.mxu0 0.0
  %6708 = vmatprep.subr.mxu0 0.0
  %6709 = vmatpush1.msra.mxu0 0.0
  %6710 = vmatprep.subr.mxu0 0.0
  %6711 = vmatpush1.msra.mxu0 0.0
  %6712 = vmatprep.subr.mxu0 0.0
  %6713 = vmatpush1.msra.mxu0 0.0
  %6714 = vmatprep.subr.mxu0 0.0
  %6715 = vmatpush1.msra.mxu0 0.0
  %6716 = vmatprep.subr.mxu0 0.0
  %6717 = vmatpush1.msra.mxu0 0.0
  %6718 = vmatprep.subr.mxu0 0.0
  %6719 = vmatpush1.msra.mxu0 0.0
  %6720 = vmatprep.subr.mxu0 0.0
  %6721 = vmatpush1.msra.mxu0 0.0
  %6722 = vmatprep.subr.mxu0 0.0
  %6723 = vmatpush1.msra.mxu0 0.0
  %6724 = vmatprep.subr.mxu0 0.0
  %6725 = vmatpush1.msra.mxu0 0.0
  %6726 = vmatprep.subr.mxu0 0.0
  %6727 = vmatpush1.msra.mxu0 0.0
  %6728 = vmatprep.subr.mxu0 0.0
  %6729 = vmatpush1.msra.mxu0 0.0
  %6730 = vmatprep.subr.mxu0 0.0
  %6731 = vmatpush1.msra.mxu0 0.0
  %6732 = vmatprep.subr.mxu0 0.0
  %6733 = vmatpush1.msra.mxu0 0.0
  %6734 = vmatprep.subr.mxu0 0.0
  %6735 = vmatpush1.msra.mxu0 0.0
  %6736 = vmatprep.mubr.f32.mxu0 0.0
  %6737 = vmatmul.mubr.f32.gmra.mrb[0].mxu0 %v6524
  %v6738 = vpop.f32.mrb[0].mxu0
  %v6739 = vadd.f32 %v237, %v6738
  %v6740 = vpop.f32.mrb[0].mxu0
  %6741 = vdwg.mxu0
  %v6742 = vxor.u32 %v6739, 2147483648
  %v6743 = vmul.f32 %v6742, 1.442695
  %v6744 = vpow.pop %v6743
  %v6745 = vadd.f32 %v6744, 1.0
  %v6746 = vrcp.pop %v6745
  %v6747 = vmul.f32 1.0, %v6746
  %6748 = vmatprep.subr.mxu0 0.0
  %6749 = vmatpush1.msra.mxu0 %v195
  %6750 = vmatprep.subr.mxu0 0.0
  %6751 = vmatpush1.msra.mxu0 %v196
  %6752 = vmatprep.subr.mxu0 0.0
  %6753 = vmatpush1.msra.mxu0 %v197
  %6754 = vmatprep.subr.mxu0 0.0
  %6755 = vmatpush1.msra.mxu0 %v198
  %6756 = vmatprep.subr.mxu0 0.0
  %6757 = vmatpush1.msra.mxu0 %v199
  %6758 = vmatprep.subr.mxu0 0.0
  %6759 = vmatpush1.msra.mxu0 %v200
  %6760 = vmatprep.subr.mxu0 0.0
  %6761 = vmatpush1.msra.mxu0 %v201
  %6762 = vmatprep.subr.mxu0 0.0
  %6763 = vmatpush1.msra.mxu0 %v202
  %6764 = vmatprep.subr.mxu0 0.0
  %6765 = vmatpush1.msra.mxu0 0.0
  %6766 = vmatprep.subr.mxu0 0.0
  %6767 = vmatpush1.msra.mxu0 0.0
  %6768 = vmatprep.subr.mxu0 0.0
  %6769 = vmatpush1.msra.mxu0 0.0
  %6770 = vmatprep.subr.mxu0 0.0
  %6771 = vmatpush1.msra.mxu0 0.0
  %6772 = vmatprep.subr.mxu0 0.0
  %6773 = vmatpush1.msra.mxu0 0.0
  %6774 = vmatprep.subr.mxu0 0.0
  %6775 = vmatpush1.msra.mxu0 0.0
  %6776 = vmatprep.subr.mxu0 0.0
  %6777 = vmatpush1.msra.mxu0 0.0
  %6778 = vmatprep.subr.mxu0 0.0
  %6779 = vmatpush1.msra.mxu0 0.0
  %6780 = vmatprep.subr.mxu0 0.0
  %6781 = vmatpush1.msra.mxu0 0.0
  %6782 = vmatprep.subr.mxu0 0.0
  %6783 = vmatpush1.msra.mxu0 0.0
  %6784 = vmatprep.subr.mxu0 0.0
  %6785 = vmatpush1.msra.mxu0 0.0
  %6786 = vmatprep.subr.mxu0 0.0
  %6787 = vmatpush1.msra.mxu0 0.0
  %6788 = vmatprep.subr.mxu0 0.0
  %6789 = vmatpush1.msra.mxu0 0.0
  %6790 = vmatprep.subr.mxu0 0.0
  %6791 = vmatpush1.msra.mxu0 0.0
  %6792 = vmatprep.subr.mxu0 0.0
  %6793 = vmatpush1.msra.mxu0 0.0
  %6794 = vmatprep.subr.mxu0 0.0
  %6795 = vmatpush1.msra.mxu0 0.0
  %6796 = vmatprep.subr.mxu0 0.0
  %6797 = vmatpush1.msra.mxu0 0.0
  %6798 = vmatprep.subr.mxu0 0.0
  %6799 = vmatpush1.msra.mxu0 0.0
  %6800 = vmatprep.subr.mxu0 0.0
  %6801 = vmatpush1.msra.mxu0 0.0
  %6802 = vmatprep.subr.mxu0 0.0
  %6803 = vmatpush1.msra.mxu0 0.0
  %6804 = vmatprep.subr.mxu0 0.0
  %6805 = vmatpush1.msra.mxu0 0.0
  %6806 = vmatprep.subr.mxu0 0.0
  %6807 = vmatpush1.msra.mxu0 0.0
  %6808 = vmatprep.subr.mxu0 0.0
  %6809 = vmatpush1.msra.mxu0 0.0
  %6810 = vmatprep.subr.mxu0 0.0
  %6811 = vmatpush1.msra.mxu0 0.0
  %6812 = vmatprep.mubr.f32.mxu0 0.0
  %6813 = vmatmul.mubr.f32.gmra.mrb[0].mxu0 %v6524
  %v6814 = vpop.f32.mrb[0].mxu0
  %v6815 = vadd.f32 %v244, %v6814
  %v6816 = vpop.f32.mrb[0].mxu0
  %6817 = vdwg.mxu0
  %6818 = vmatprep.subr.mxu0 0.0
  %6819 = vmatpush1.msra.mxu0 %v171
  %6820 = vmatprep.subr.mxu0 0.0
  %6821 = vmatpush1.msra.mxu0 %v172
  %6822 = vmatprep.subr.mxu0 0.0
  %6823 = vmatpush1.msra.mxu0 %v173
  %6824 = vmatprep.subr.mxu0 0.0
  %6825 = vmatpush1.msra.mxu0 %v174
  %6826 = vmatprep.subr.mxu0 0.0
  %6827 = vmatpush1.msra.mxu0 %v175
  %6828 = vmatprep.subr.mxu0 0.0
  %6829 = vmatpush1.msra.mxu0 %v176
  %6830 = vmatprep.subr.mxu0 0.0
  %6831 = vmatpush1.msra.mxu0 %v177
  %6832 = vmatprep.subr.mxu0 0.0
  %6833 = vmatpush1.msra.mxu0 %v178
  %6834 = vmatprep.subr.mxu0 0.0
  %6835 = vmatpush1.msra.mxu0 0.0
  %6836 = vmatprep.subr.mxu0 0.0
  %6837 = vmatpush1.msra.mxu0 0.0
  %6838 = vmatprep.subr.mxu0 0.0
  %6839 = vmatpush1.msra.mxu0 0.0
  %6840 = vmatprep.subr.mxu0 0.0
  %6841 = vmatpush1.msra.mxu0 0.0
  %6842 = vmatprep.subr.mxu0 0.0
  %6843 = vmatpush1.msra.mxu0 0.0
  %6844 = vmatprep.subr.mxu0 0.0
  %6845 = vmatpush1.msra.mxu0 0.0
  %6846 = vmatprep.subr.mxu0 0.0
  %6847 = vmatpush1.msra.mxu0 0.0
  %6848 = vmatprep.subr.mxu0 0.0
  %6849 = vmatpush1.msra.mxu0 0.0
  %6850 = vmatprep.subr.mxu0 0.0
  %6851 = vmatpush1.msra.mxu0 0.0
  %6852 = vmatprep.subr.mxu0 0.0
  %6853 = vmatpush1.msra.mxu0 0.0
  %6854 = vmatprep.subr.mxu0 0.0
  %6855 = vmatpush1.msra.mxu0 0.0
  %6856 = vmatprep.subr.mxu0 0.0
  %6857 = vmatpush1.msra.mxu0 0.0
  %6858 = vmatprep.subr.mxu0 0.0
  %6859 = vmatpush1.msra.mxu0 0.0
  %6860 = vmatprep.subr.mxu0 0.0
  %6861 = vmatpush1.msra.mxu0 0.0
  %6862 = vmatprep.subr.mxu0 0.0
  %6863 = vmatpush1.msra.mxu0 0.0
  %6864 = vmatprep.subr.mxu0 0.0
  %6865 = vmatpush1.msra.mxu0 0.0
  %6866 = vmatprep.subr.mxu0 0.0
  %6867 = vmatpush1.msra.mxu0 0.0
  %6868 = vmatprep.subr.mxu0 0.0
  %6869 = vmatpush1.msra.mxu0 0.0
  %6870 = vmatprep.subr.mxu0 0.0
  %6871 = vmatpush1.msra.mxu0 0.0
  %6872 = vmatprep.subr.mxu0 0.0
  %6873 = vmatpush1.msra.mxu0 0.0
  %6874 = vmatprep.subr.mxu0 0.0
  %6875 = vmatpush1.msra.mxu0 0.0
  %6876 = vmatprep.subr.mxu0 0.0
  %6877 = vmatpush1.msra.mxu0 0.0
  %6878 = vmatprep.subr.mxu0 0.0
  %6879 = vmatpush1.msra.mxu0 0.0
  %6880 = vmatprep.subr.mxu0 0.0
  %6881 = vmatpush1.msra.mxu0 0.0
  %6882 = vmatprep.mubr.f32.mxu0 0.0
  %6883 = vmatmul.mubr.f32.gmra.mrb[0].mxu0 %v6524
  %v6884 = vpop.f32.mrb[0].mxu0
  %v6885 = vadd.f32 %v223, %v6884
  %v6886 = vpop.f32.mrb[0].mxu0
  %6887 = vdwg.mxu0
  %v6888 = vmul.f32 %v6671, %v6885
  %v6889 = vadd.f32 %v6815, %v6888
  %v6890 = vtanh.pop %v6889
  %v6891 = vsub.f32 1.0, %v6747
  %v6892 = vmul.f32 %v6891, %v6890
  %v6893 = vmul.f32 %v6747, %v6522
  %v6894 = vadd.f32 %v6892, %v6893
  %v6896 = vsel %vm545, %v6894, 0
  %6898 = vmatprep.subr.mxu0 0.0
  %6899 = vmatpush1.msra.mxu0 %v203
  %6900 = vmatprep.subr.mxu0 0.0
  %6901 = vmatpush1.msra.mxu0 %v204
  %6902 = vmatprep.subr.mxu0 0.0
  %6903 = vmatpush1.msra.mxu0 %v205
  %6904 = vmatprep.subr.mxu0 0.0
  %6905 = vmatpush1.msra.mxu0 %v206
  %6906 = vmatprep.subr.mxu0 0.0
  %6907 = vmatpush1.msra.mxu0 %v207
  %6908 = vmatprep.subr.mxu0 0.0
  %6909 = vmatpush1.msra.mxu0 %v208
  %6910 = vmatprep.subr.mxu0 0.0
  %6911 = vmatpush1.msra.mxu0 %v209
  %6912 = vmatprep.subr.mxu0 0.0
  %6913 = vmatpush1.msra.mxu0 %v210
  %6914 = vmatprep.subr.mxu0 0.0
  %6915 = vmatpush1.msra.mxu0 0.0
  %6916 = vmatprep.subr.mxu0 0.0
  %6917 = vmatpush1.msra.mxu0 0.0
  %6918 = vmatprep.subr.mxu0 0.0
  %6919 = vmatpush1.msra.mxu0 0.0
  %6920 = vmatprep.subr.mxu0 0.0
  %6921 = vmatpush1.msra.mxu0 0.0
  %6922 = vmatprep.subr.mxu0 0.0
  %6923 = vmatpush1.msra.mxu0 0.0
  %6924 = vmatprep.subr.mxu0 0.0
  %6925 = vmatpush1.msra.mxu0 0.0
  %6926 = vmatprep.subr.mxu0 0.0
  %6927 = vmatpush1.msra.mxu0 0.0
  %6928 = vmatprep.subr.mxu0 0.0
  %6929 = vmatpush1.msra.mxu0 0.0
  %6930 = vmatprep.subr.mxu0 0.0
  %6931 = vmatpush1.msra.mxu0 0.0
  %6932 = vmatprep.subr.mxu0 0.0
  %6933 = vmatpush1.msra.mxu0 0.0
  %6934 = vmatprep.subr.mxu0 0.0
  %6935 = vmatpush1.msra.mxu0 0.0
  %6936 = vmatprep.subr.mxu0 0.0
  %6937 = vmatpush1.msra.mxu0 0.0
  %6938 = vmatprep.subr.mxu0 0.0
  %6939 = vmatpush1.msra.mxu0 0.0
  %6940 = vmatprep.subr.mxu0 0.0
  %6941 = vmatpush1.msra.mxu0 0.0
  %6942 = vmatprep.subr.mxu0 0.0
  %6943 = vmatpush1.msra.mxu0 0.0
  %6944 = vmatprep.subr.mxu0 0.0
  %6945 = vmatpush1.msra.mxu0 0.0
  %6946 = vmatprep.subr.mxu0 0.0
  %6947 = vmatpush1.msra.mxu0 0.0
  %6948 = vmatprep.subr.mxu0 0.0
  %6949 = vmatpush1.msra.mxu0 0.0
  %6950 = vmatprep.subr.mxu0 0.0
  %6951 = vmatpush1.msra.mxu0 0.0
  %6952 = vmatprep.subr.mxu0 0.0
  %6953 = vmatpush1.msra.mxu0 0.0
  %6954 = vmatprep.subr.mxu0 0.0
  %6955 = vmatpush1.msra.mxu0 0.0
  %6956 = vmatprep.subr.mxu0 0.0
  %6957 = vmatpush1.msra.mxu0 0.0
  %6958 = vmatprep.subr.mxu0 0.0
  %6959 = vmatpush1.msra.mxu0 0.0
  %6960 = vmatprep.subr.mxu0 0.0
  %6961 = vmatpush1.msra.mxu0 0.0
  %6962 = vmatprep.mubr.f32.mxu0 0.0
  %6963 = vmatmul.mubr.f32.gmra.mrb[0].mxu0 %v6896
  %v6964 = vpop.f32.mrb[0].mxu0
  %v6965 = vadd.f32 %v251, %v6964
  %v6966 = vpop.f32.mrb[0].mxu0
  %6967 = vdwg.mxu0
  %6968 = vmatprep.subr.mxu0 0.0
  %6969 = vmatpush1.msra.mxu0 %v179
  %6970 = vmatprep.subr.mxu0 0.0
  %6971 = vmatpush1.msra.mxu0 %v180
  %6972 = vmatprep.subr.mxu0 0.0
  %6973 = vmatpush1.msra.mxu0 %v181
  %6974 = vmatprep.subr.mxu0 0.0
  %6975 = vmatpush1.msra.mxu0 %v182
  %6976 = vmatprep.subr.mxu0 0.0
  %6977 = vmatpush1.msra.mxu0 %v183
  %6978 = vmatprep.subr.mxu0 0.0
  %6979 = vmatpush1.msra.mxu0 %v184
  %6980 = vmatprep.subr.mxu0 0.0
  %6981 = vmatpush1.msra.mxu0 %v185
  %6982 = vmatprep.subr.mxu0 0.0
  %6983 = vmatpush1.msra.mxu0 %v186
  %6984 = vmatprep.subr.mxu0 0.0
  %6985 = vmatpush1.msra.mxu0 0.0
  %6986 = vmatprep.subr.mxu0 0.0
  %6987 = vmatpush1.msra.mxu0 0.0
  %6988 = vmatprep.subr.mxu0 0.0
  %6989 = vmatpush1.msra.mxu0 0.0
  %6990 = vmatprep.subr.mxu0 0.0
  %6991 = vmatpush1.msra.mxu0 0.0
  %6992 = vmatprep.subr.mxu0 0.0
  %6993 = vmatpush1.msra.mxu0 0.0
  %6994 = vmatprep.subr.mxu0 0.0
  %6995 = vmatpush1.msra.mxu0 0.0
  %6996 = vmatprep.subr.mxu0 0.0
  %6997 = vmatpush1.msra.mxu0 0.0
  %6998 = vmatprep.subr.mxu0 0.0
  %6999 = vmatpush1.msra.mxu0 0.0
  %7000 = vmatprep.subr.mxu0 0.0
  %7001 = vmatpush1.msra.mxu0 0.0
  %7002 = vmatprep.subr.mxu0 0.0
  %7003 = vmatpush1.msra.mxu0 0.0
  %7004 = vmatprep.subr.mxu0 0.0
  %7005 = vmatpush1.msra.mxu0 0.0
  %7006 = vmatprep.subr.mxu0 0.0
  %7007 = vmatpush1.msra.mxu0 0.0
  %7008 = vmatprep.subr.mxu0 0.0
  %7009 = vmatpush1.msra.mxu0 0.0
  %7010 = vmatprep.subr.mxu0 0.0
  %7011 = vmatpush1.msra.mxu0 0.0
  %7012 = vmatprep.subr.mxu0 0.0
  %7013 = vmatpush1.msra.mxu0 0.0
  %7014 = vmatprep.subr.mxu0 0.0
  %7015 = vmatpush1.msra.mxu0 0.0
  %7016 = vmatprep.subr.mxu0 0.0
  %7017 = vmatpush1.msra.mxu0 0.0
  %7018 = vmatprep.subr.mxu0 0.0
  %7019 = vmatpush1.msra.mxu0 0.0
  %7020 = vmatprep.subr.mxu0 0.0
  %7021 = vmatpush1.msra.mxu0 0.0
  %7022 = vmatprep.subr.mxu0 0.0
  %7023 = vmatpush1.msra.mxu0 0.0
  %7024 = vmatprep.subr.mxu0 0.0
  %7025 = vmatpush1.msra.mxu0 0.0
  %7026 = vmatprep.subr.mxu0 0.0
  %7027 = vmatpush1.msra.mxu0 0.0
  %7028 = vmatprep.subr.mxu0 0.0
  %7029 = vmatpush1.msra.mxu0 0.0
  %7030 = vmatprep.subr.mxu0 0.0
  %7031 = vmatpush1.msra.mxu0 0.0
  %7032 = vmatprep.mubr.f32.mxu0 0.0
  %7033 = vmatmul.mubr.f32.gmra.mrb[0].mxu0 %v6896
  %v7034 = vpop.f32.mrb[0].mxu0
  %v7035 = vadd.f32 %v230, %v7034
  %v7036 = vpop.f32.mrb[0].mxu0
  %7037 = vdwg.mxu0
  %v7038 = vxor.u32 %v7035, 2147483648
  %v7039 = vmul.f32 %v7038, 1.442695
  %v7040 = vpow.pop %v7039
  %v7041 = vadd.f32 %v7040, 1.0
  %v7042 = vrcp.pop %v7041
  %v7043 = vmul.f32 1.0, %v7042
  %7044 = vmatprep.subr.mxu0 0.0
  %7045 = vmatpush1.msra.mxu0 %v187
  %7046 = vmatprep.subr.mxu0 0.0
  %7047 = vmatpush1.msra.mxu0 %v188
  %7048 = vmatprep.subr.mxu0 0.0
  %7049 = vmatpush1.msra.mxu0 %v189
  %7050 = vmatprep.subr.mxu0 0.0
  %7051 = vmatpush1.msra.mxu0 %v190
  %7052 = vmatprep.subr.mxu0 0.0
  %7053 = vmatpush1.msra.mxu0 %v191
  %7054 = vmatprep.subr.mxu0 0.0
  %7055 = vmatpush1.msra.mxu0 %v192
  %7056 = vmatprep.subr.mxu0 0.0
  %7057 = vmatpush1.msra.mxu0 %v193
  %7058 = vmatprep.subr.mxu0 0.0
  %7059 = vmatpush1.msra.mxu0 %v194
  %7060 = vmatprep.subr.mxu0 0.0
  %7061 = vmatpush1.msra.mxu0 0.0
  %7062 = vmatprep.subr.mxu0 0.0
  %7063 = vmatpush1.msra.mxu0 0.0
  %7064 = vmatprep.subr.mxu0 0.0
  %7065 = vmatpush1.msra.mxu0 0.0
  %7066 = vmatprep.subr.mxu0 0.0
  %7067 = vmatpush1.msra.mxu0 0.0
  %7068 = vmatprep.subr.mxu0 0.0
  %7069 = vmatpush1.msra.mxu0 0.0
  %7070 = vmatprep.subr.mxu0 0.0
  %7071 = vmatpush1.msra.mxu0 0.0
  %7072 = vmatprep.subr.mxu0 0.0
  %7073 = vmatpush1.msra.mxu0 0.0
  %7074 = vmatprep.subr.mxu0 0.0
  %7075 = vmatpush1.msra.mxu0 0.0
  %7076 = vmatprep.subr.mxu0 0.0
  %7077 = vmatpush1.msra.mxu0 0.0
  %7078 = vmatprep.subr.mxu0 0.0
  %7079 = vmatpush1.msra.mxu0 0.0
  %7080 = vmatprep.subr.mxu0 0.0
  %7081 = vmatpush1.msra.mxu0 0.0
  %7082 = vmatprep.subr.mxu0 0.0
  %7083 = vmatpush1.msra.mxu0 0.0
  %7084 = vmatprep.subr.mxu0 0.0
  %7085 = vmatpush1.msra.mxu0 0.0
  %7086 = vmatprep.subr.mxu0 0.0
  %7087 = vmatpush1.msra.mxu0 0.0
  %7088 = vmatprep.subr.mxu0 0.0
  %7089 = vmatpush1.msra.mxu0 0.0
  %7090 = vmatprep.subr.mxu0 0.0
  %7091 = vmatpush1.msra.mxu0 0.0
  %7092 = vmatprep.subr.mxu0 0.0
  %7093 = vmatpush1.msra.mxu0 0.0
  %7094 = vmatprep.subr.mxu0 0.0
  %7095 = vmatpush1.msra.mxu0 0.0
  %7096 = vmatprep.subr.mxu0 0.0
  %7097 = vmatpush1.msra.mxu0 0.0
  %7098 = vmatprep.subr.mxu0 0.0
  %7099 = vmatpush1.msra.mxu0 0.0
  %7100 = vmatprep.subr.mxu0 0.0
  %7101 = vmatpush1.msra.mxu0 0.0
  %7102 = vmatprep.subr.mxu0 0.0
  %7103 = vmatpush1.msra.mxu0 0.0
  %7104 = vmatprep.subr.mxu0 0.0
  %7105 = vmatpush1.msra.mxu0 0.0
  %7106 = vmatprep.subr.mxu0 0.0
  %7107 = vmatpush1.msra.mxu0 0.0
  %7108 = vmatprep.mubr.f32.mxu0 0.0
  %7109 = vmatmul.mubr.f32.gmra.mrb[0].mxu0 %v6896
  %v7110 = vpop.f32.mrb[0].mxu0
  %v7111 = vadd.f32 %v237, %v7110
  %v7112 = vpop.f32.mrb[0].mxu0
  %7113 = vdwg.mxu0
  %v7114 = vxor.u32 %v7111, 2147483648
  %v7115 = vmul.f32 %v7114, 1.442695
  %v7116 = vpow.pop %v7115
  %v7117 = vadd.f32 %v7116, 1.0
  %v7118 = vrcp.pop %v7117
  %v7119 = vmul.f32 1.0, %v7118
  %7120 = vmatprep.subr.mxu0 0.0
  %7121 = vmatpush1.msra.mxu0 %v195
  %7122 = vmatprep.subr.mxu0 0.0
  %7123 = vmatpush1.msra.mxu0 %v196
  %7124 = vmatprep.subr.mxu0 0.0
  %7125 = vmatpush1.msra.mxu0 %v197
  %7126 = vmatprep.subr.mxu0 0.0
  %7127 = vmatpush1.msra.mxu0 %v198
  %7128 = vmatprep.subr.mxu0 0.0
  %7129 = vmatpush1.msra.mxu0 %v199
  %7130 = vmatprep.subr.mxu0 0.0
  %7131 = vmatpush1.msra.mxu0 %v200
  %7132 = vmatprep.subr.mxu0 0.0
  %7133 = vmatpush1.msra.mxu0 %v201
  %7134 = vmatprep.subr.mxu0 0.0
  %7135 = vmatpush1.msra.mxu0 %v202
  %7136 = vmatprep.subr.mxu0 0.0
  %7137 = vmatpush1.msra.mxu0 0.0
  %7138 = vmatprep.subr.mxu0 0.0
  %7139 = vmatpush1.msra.mxu0 0.0
  %7140 = vmatprep.subr.mxu0 0.0
  %7141 = vmatpush1.msra.mxu0 0.0
  %7142 = vmatprep.subr.mxu0 0.0
  %7143 = vmatpush1.msra.mxu0 0.0
  %7144 = vmatprep.subr.mxu0 0.0
  %7145 = vmatpush1.msra.mxu0 0.0
  %7146 = vmatprep.subr.mxu0 0.0
  %7147 = vmatpush1.msra.mxu0 0.0
  %7148 = vmatprep.subr.mxu0 0.0
  %7149 = vmatpush1.msra.mxu0 0.0
  %7150 = vmatprep.subr.mxu0 0.0
  %7151 = vmatpush1.msra.mxu0 0.0
  %7152 = vmatprep.subr.mxu0 0.0
  %7153 = vmatpush1.msra.mxu0 0.0
  %7154 = vmatprep.subr.mxu0 0.0
  %7155 = vmatpush1.msra.mxu0 0.0
  %7156 = vmatprep.subr.mxu0 0.0
  %7157 = vmatpush1.msra.mxu0 0.0
  %7158 = vmatprep.subr.mxu0 0.0
  %7159 = vmatpush1.msra.mxu0 0.0
  %7160 = vmatprep.subr.mxu0 0.0
  %7161 = vmatpush1.msra.mxu0 0.0
  %7162 = vmatprep.subr.mxu0 0.0
  %7163 = vmatpush1.msra.mxu0 0.0
  %7164 = vmatprep.subr.mxu0 0.0
  %7165 = vmatpush1.msra.mxu0 0.0
  %7166 = vmatprep.subr.mxu0 0.0
  %7167 = vmatpush1.msra.mxu0 0.0
  %7168 = vmatprep.subr.mxu0 0.0
  %7169 = vmatpush1.msra.mxu0 0.0
  %7170 = vmatprep.subr.mxu0 0.0
  %7171 = vmatpush1.msra.mxu0 0.0
  %7172 = vmatprep.subr.mxu0 0.0
  %7173 = vmatpush1.msra.mxu0 0.0
  %7174 = vmatprep.subr.mxu0 0.0
  %7175 = vmatpush1.msra.mxu0 0.0
  %7176 = vmatprep.subr.mxu0 0.0
  %7177 = vmatpush1.msra.mxu0 0.0
  %7178 = vmatprep.subr.mxu0 0.0
  %7179 = vmatpush1.msra.mxu0 0.0
  %7180 = vmatprep.subr.mxu0 0.0
  %7181 = vmatpush1.msra.mxu0 0.0
  %7182 = vmatprep.subr.mxu0 0.0
  %7183 = vmatpush1.msra.mxu0 0.0
  %7184 = vmatprep.mubr.f32.mxu0 0.0
  %7185 = vmatmul.mubr.f32.gmra.mrb[0].mxu0 %v6896
  %v7186 = vpop.f32.mrb[0].mxu0
  %v7187 = vadd.f32 %v244, %v7186
  %v7188 = vpop.f32.mrb[0].mxu0
  %7189 = vdwg.mxu0
  %7190 = vmatprep.subr.mxu0 0.0
  %7191 = vmatpush1.msra.mxu0 %v171
  %7192 = vmatprep.subr.mxu0 0.0
  %7193 = vmatpush1.msra.mxu0 %v172
  %7194 = vmatprep.subr.mxu0 0.0
  %7195 = vmatpush1.msra.mxu0 %v173
  %7196 = vmatprep.subr.mxu0 0.0
  %7197 = vmatpush1.msra.mxu0 %v174
  %7198 = vmatprep.subr.mxu0 0.0
  %7199 = vmatpush1.msra.mxu0 %v175
  %7200 = vmatprep.subr.mxu0 0.0
  %7201 = vmatpush1.msra.mxu0 %v176
  %7202 = vmatprep.subr.mxu0 0.0
  %7203 = vmatpush1.msra.mxu0 %v177
  %7204 = vmatprep.subr.mxu0 0.0
  %7205 = vmatpush1.msra.mxu0 %v178
  %7206 = vmatprep.subr.mxu0 0.0
  %7207 = vmatpush1.msra.mxu0 0.0
  %7208 = vmatprep.subr.mxu0 0.0
  %7209 = vmatpush1.msra.mxu0 0.0
  %7210 = vmatprep.subr.mxu0 0.0
  %7211 = vmatpush1.msra.mxu0 0.0
  %7212 = vmatprep.subr.mxu0 0.0
  %7213 = vmatpush1.msra.mxu0 0.0
  %7214 = vmatprep.subr.mxu0 0.0
  %7215 = vmatpush1.msra.mxu0 0.0
  %7216 = vmatprep.subr.mxu0 0.0
  %7217 = vmatpush1.msra.mxu0 0.0
  %7218 = vmatprep.subr.mxu0 0.0
  %7219 = vmatpush1.msra.mxu0 0.0
  %7220 = vmatprep.subr.mxu0 0.0
  %7221 = vmatpush1.msra.mxu0 0.0
  %7222 = vmatprep.subr.mxu0 0.0
  %7223 = vmatpush1.msra.mxu0 0.0
  %7224 = vmatprep.subr.mxu0 0.0
  %7225 = vmatpush1.msra.mxu0 0.0
  %7226 = vmatprep.subr.mxu0 0.0
  %7227 = vmatpush1.msra.mxu0 0.0
  %7228 = vmatprep.subr.mxu0 0.0
  %7229 = vmatpush1.msra.mxu0 0.0
  %7230 = vmatprep.subr.mxu0 0.0
  %7231 = vmatpush1.msra.mxu0 0.0
  %7232 = vmatprep.subr.mxu0 0.0
  %7233 = vmatpush1.msra.mxu0 0.0
  %7234 = vmatprep.subr.mxu0 0.0
  %7235 = vmatpush1.msra.mxu0 0.0
  %7236 = vmatprep.subr.mxu0 0.0
  %7237 = vmatpush1.msra.mxu0 0.0
  %7238 = vmatprep.subr.mxu0 0.0
  %7239 = vmatpush1.msra.mxu0 0.0
  %7240 = vmatprep.subr.mxu0 0.0
  %7241 = vmatpush1.msra.mxu0 0.0
  %7242 = vmatprep.subr.mxu0 0.0
  %7243 = vmatpush1.msra.mxu0 0.0
  %7244 = vmatprep.subr.mxu0 0.0
  %7245 = vmatpush1.msra.mxu0 0.0
  %7246 = vmatprep.subr.mxu0 0.0
  %7247 = vmatpush1.msra.mxu0 0.0
  %7248 = vmatprep.subr.mxu0 0.0
  %7249 = vmatpush1.msra.mxu0 0.0
  %7250 = vmatprep.subr.mxu0 0.0
  %7251 = vmatpush1.msra.mxu0 0.0
  %7252 = vmatprep.subr.mxu0 0.0
  %7253 = vmatpush1.msra.mxu0 0.0
  %7254 = vmatprep.mubr.f32.mxu0 0.0
  %7255 = vmatmul.mubr.f32.gmra.mrb[0].mxu0 %v6896
  %v7256 = vpop.f32.mrb[0].mxu0
  %v7257 = vadd.f32 %v223, %v7256
  %v7258 = vpop.f32.mrb[0].mxu0
  %7259 = vdwg.mxu0
  %v7260 = vmul.f32 %v7043, %v7257
  %v7261 = vadd.f32 %v7187, %v7260
  %v7262 = vtanh.pop %v7261
  %v7263 = vsub.f32 1.0, %v7119
  %v7264 = vmul.f32 %v7263, %v7262
  %v7265 = vmul.f32 %v7119, %v6894
  %v7266 = vadd.f32 %v7264, %v7265
  %v7268 = vsel %vm545, %v7266, 0
  %7270 = vmatprep.subr.mxu0 0.0
  %7271 = vmatpush1.msra.mxu0 %v203
  %7272 = vmatprep.subr.mxu0 0.0
  %7273 = vmatpush1.msra.mxu0 %v204
  %7274 = vmatprep.subr.mxu0 0.0
  %7275 = vmatpush1.msra.mxu0 %v205
  %7276 = vmatprep.subr.mxu0 0.0
  %7277 = vmatpush1.msra.mxu0 %v206
  %7278 = vmatprep.subr.mxu0 0.0
  %7279 = vmatpush1.msra.mxu0 %v207
  %7280 = vmatprep.subr.mxu0 0.0
  %7281 = vmatpush1.msra.mxu0 %v208
  %7282 = vmatprep.subr.mxu0 0.0
  %7283 = vmatpush1.msra.mxu0 %v209
  %7284 = vmatprep.subr.mxu0 0.0
  %7285 = vmatpush1.msra.mxu0 %v210
  %7286 = vmatprep.subr.mxu0 0.0
  %7287 = vmatpush1.msra.mxu0 0.0
  %7288 = vmatprep.subr.mxu0 0.0
  %7289 = vmatpush1.msra.mxu0 0.0
  %7290 = vmatprep.subr.mxu0 0.0
  %7291 = vmatpush1.msra.mxu0 0.0
  %7292 = vmatprep.subr.mxu0 0.0
  %7293 = vmatpush1.msra.mxu0 0.0
  %7294 = vmatprep.subr.mxu0 0.0
  %7295 = vmatpush1.msra.mxu0 0.0
  %7296 = vmatprep.subr.mxu0 0.0
  %7297 = vmatpush1.msra.mxu0 0.0
  %7298 = vmatprep.subr.mxu0 0.0
  %7299 = vmatpush1.msra.mxu0 0.0
  %7300 = vmatprep.subr.mxu0 0.0
  %7301 = vmatpush1.msra.mxu0 0.0
  %7302 = vmatprep.subr.mxu0 0.0
  %7303 = vmatpush1.msra.mxu0 0.0
  %7304 = vmatprep.subr.mxu0 0.0
  %7305 = vmatpush1.msra.mxu0 0.0
  %7306 = vmatprep.subr.mxu0 0.0
  %7307 = vmatpush1.msra.mxu0 0.0
  %7308 = vmatprep.subr.mxu0 0.0
  %7309 = vmatpush1.msra.mxu0 0.0
  %7310 = vmatprep.subr.mxu0 0.0
  %7311 = vmatpush1.msra.mxu0 0.0
  %7312 = vmatprep.subr.mxu0 0.0
  %7313 = vmatpush1.msra.mxu0 0.0
  %7314 = vmatprep.subr.mxu0 0.0
  %7315 = vmatpush1.msra.mxu0 0.0
  %7316 = vmatprep.subr.mxu0 0.0
  %7317 = vmatpush1.msra.mxu0 0.0
  %7318 = vmatprep.subr.mxu0 0.0
  %7319 = vmatpush1.msra.mxu0 0.0
  %7320 = vmatprep.subr.mxu0 0.0
  %7321 = vmatpush1.msra.mxu0 0.0
  %7322 = vmatprep.subr.mxu0 0.0
  %7323 = vmatpush1.msra.mxu0 0.0
  %7324 = vmatprep.subr.mxu0 0.0
  %7325 = vmatpush1.msra.mxu0 0.0
  %7326 = vmatprep.subr.mxu0 0.0
  %7327 = vmatpush1.msra.mxu0 0.0
  %7328 = vmatprep.subr.mxu0 0.0
  %7329 = vmatpush1.msra.mxu0 0.0
  %7330 = vmatprep.subr.mxu0 0.0
  %7331 = vmatpush1.msra.mxu0 0.0
  %7332 = vmatprep.subr.mxu0 0.0
  %7333 = vmatpush1.msra.mxu0 0.0
  %7334 = vmatprep.mubr.f32.mxu0 0.0
  %7335 = vmatmul.mubr.f32.gmra.mrb[0].mxu0 %v7268
  %v7336 = vpop.f32.mrb[0].mxu0
  %v7337 = vadd.f32 %v251, %v7336
  %v7338 = vpop.f32.mrb[0].mxu0
  %7339 = vdwg.mxu0
  %vm7340 = vcmask 25600
  %7341 = vst.msk [vmem:[%s61] sm:$0x3] %vm7340, %v4733
  %7342 = vst.msk [vmem:[%s61 + $0x2] sm:$0x3] %vm7340, %v5105
  %7343 = vst.msk [vmem:[%s61 + $0x4] sm:$0x3] %vm7340, %v5477
  %7344 = vst.msk [vmem:[%s61 + $0x6] sm:$0x3] %vm7340, %v5849
  %7345 = vst.msk [vmem:[%s61 + $0x8] sm:$0x3] %vm7340, %v6221
  %7346 = vst.msk [vmem:[%s61 + $0xa] sm:$0x3] %vm7340, %v6593
  %7347 = vst.msk [vmem:[%s61 + $0xc] sm:$0x3] %vm7340, %v6965
  %7348 = vst.msk [vmem:[%s61 + $0xe] sm:$0x3] %vm7340, %v7337
  // Predicated region
  $region122: #{stdrnn_forward.1} parent=0 // pred_check
    _
  $region123: #{stdrnn_forward.1} parent=0 // pred_check_branch
    %7350 = sbr.rel (0) target = $region125
  $region124: #{stdrnn_forward.1} parent=0 // pred_region
    _
  $region125: #{stdrnn_forward.1} parent=0 // pred_fallthru
    _
  // Predicated region
  $region126: #{stdrnn_forward.1} parent=0 // pred_check
    _
  $region127: #{stdrnn_forward.1} parent=0 // pred_check_branch
    %7352 = sbr.rel (0) target = $region129
  $region128: #{stdrnn_forward.1} parent=0 // pred_region
    _
  $region129: #{stdrnn_forward.1} parent=0 // pred_fallthru
    _

</llo_original>
